<compile_context>
chip_gen: v6e
topology: v6e:2x2x1
jax: 0.10.0
libtpu: 0.0.40
codegen_flags: <defaults>
</compile_context>

<pallas_src>
import functools
import math

import jax
import jax.numpy as jnp
from jax.experimental import pallas as pl
from jax.experimental.pallas import tpu as pltpu


# ---------------------------------------------------------------------------
# In-kernel helpers (2-D f32 slabs in VMEM / vregs)
# ---------------------------------------------------------------------------

def _layer_norm(x, g, b, eps=1e-6):
    # a_2 * (x - mean) / (std + eps) + b_2, unbiased std (torch .std default).
    d = x.shape[-1]
    mean = jnp.mean(x, axis=-1, keepdims=True)
    diff = x - mean
    var = jnp.sum(diff * diff, axis=-1, keepdims=True) * (1.0 / (d - 1))
    return g * diff / (jnp.sqrt(var) + eps) + b


def _proj(x, w_ref, b_ref):
    # f32 matmul on MXU with f32 accumulation + bias add.
    return jnp.dot(x, w_ref[...], preferred_element_type=jnp.float32) + b_ref[...]


def _mha(q, k, v, mask_zero, ctx_scratch, h):
    # q:(Sq,D)  k,v:(Sk,D)  f32;  mask_zero:(Mq,Sk) bool, Mq in {1, Sq}.
    # 1/sqrt(dk) is already folded into the q projection weights.
    # Each head's context is written to the VMEM scratch at its lane offset
    # instead of building a list + concatenate (keeps vreg live ranges short).
    D = q.shape[-1]
    dk = D // h
    for i in range(h):                       # static unroll over heads
        sl = slice(i * dk, (i + 1) * dk)
        s = jax.lax.dot_general(q[:, sl], k[:, sl],
                                (((1,), (1,)), ((), ())),
                                preferred_element_type=jnp.float32)
        s = jnp.where(mask_zero, jnp.float32(-1e9), s)
        m = jnp.max(s, axis=-1, keepdims=True)
        p = jnp.exp(s - m)
        p = p / jnp.sum(p, axis=-1, keepdims=True)      # exact softmax
        ctx_scratch[:, sl] = jnp.dot(p, v[:, sl],
                                     preferred_element_type=jnp.float32)
    return ctx_scratch[...]


# ---------------------------------------------------------------------------
# Fused whole-decoder kernel (one pallas_call, grid over batch)
# ---------------------------------------------------------------------------

def _decoder_kernel(x_ref, mem_ref, tmask_ref, smask_ref,
                    ln_g_ref, ln_b_ref, fg_ref, fb_ref,
                    wqkv_ref, bqkv_ref, wos_ref, bos_ref,
                    wq_ref, bq_ref, wkv_ref, bkv_ref, woc_ref, boc_ref,
                    w1_ref, b1_ref, w2_ref, b2_ref,
                    o_ref, ctx_scratch, *, h, n_layers):
    x = x_ref[0]                                       # (S, D) f32
    D = x.shape[-1]

    # Hoisted src-attn K/V projection of memory: the src_attn module (hence
    # its weights) is shared across layers, so this is identical every layer.
    kv_mem = _proj(mem_ref[0], wkv_ref, bkv_ref)       # (Sm, 2D)
    k_mem, v_mem = kv_mem[:, :D], kv_mem[:, D:]

    tmask_zero = tmask_ref[0] == 0                     # (S, S)
    smask_zero = smask_ref[0] == 0                     # (1, Sm)

    ln_g = ln_g_ref[...]                               # (N, 3, D), tiny
    ln_b = ln_b_ref[...]

    # Static unroll over layers (N is small).  TODO(synk): lax.fori_loop with
    # dynamic indexing into the stacked LN params for large N.
    for layer in range(n_layers):
        # --- sublayer 0: self-attention -----------------------------------
        y = _layer_norm(x, ln_g[layer, 0], ln_b[layer, 0])
        qkv = _proj(y, wqkv_ref, bqkv_ref)             # fused QKV projection
        ctx = _mha(qkv[:, :D], qkv[:, D:2 * D], qkv[:, 2 * D:],
                   tmask_zero, ctx_scratch, h)
        x = x + _proj(ctx, wos_ref, bos_ref)           # fused residual

        # --- sublayer 1: source-attention ----------------------------------
        y = _layer_norm(x, ln_g[layer, 1], ln_b[layer, 1])
        q = _proj(y, wq_ref, bq_ref)
        ctx = _mha(q, k_mem, v_mem, smask_zero, ctx_scratch, h)
        x = x + _proj(ctx, woc_ref, boc_ref)

        # --- sublayer 2: feed-forward --------------------------------------
        y = _layer_norm(x, ln_g[layer, 2], ln_b[layer, 2])
        hdn = jnp.maximum(_proj(y, w1_ref, b1_ref), 0.0)
        x = x + _proj(hdn, w2_ref, b2_ref)

    # final LayerNorm, fused
    o_ref[0] = _layer_norm(x, fg_ref[...], fb_ref[...]).astype(o_ref.dtype)


# ---------------------------------------------------------------------------
# BlockSpec helpers + pallas_call wrapper
# ---------------------------------------------------------------------------

def _batch_spec(shape):
    # Per-batch block: grid index selects dim 0.
    pad = (0,) * (len(shape) - 1)
    return pl.BlockSpec(shape, lambda i, _p=pad: (i,) + _p)


def _bcast_spec(shape):
    # Whole array as one block; constant block index for every grid step so
    # shared weights are fetched once and stay resident in VMEM.
    zero = (0,) * len(shape)
    return pl.BlockSpec(shape, lambda i, _z=zero: _z)


def decoder_forward(params, x, memory, source_mask, target_mask, *, h):
    B, S, D = x.shape
    Sm = memory.shape[1]
    Dff = params["w1"].shape[1]
    N = params["ln_g"].shape[0]
    Mq_t, Sk_t = target_mask.shape[1], target_mask.shape[2]
    Mq_s, Sk_s = source_mask.shape[1], source_mask.shape[2]

    kernel = functools.partial(_decoder_kernel, h=h, n_layers=N)
    return pl.pallas_call(
        kernel,
        grid=(B,),
        in_specs=[
            _batch_spec((1, S, D)),                      # x
            _batch_spec((1, Sm, D)),                     # memory
            _batch_spec((1, Mq_t, Sk_t)),                # target_mask
            _batch_spec((1, Mq_s, Sk_s)),                # source_mask
            _bcast_spec((N, 3, D)), _bcast_spec((N, 3, D)),    # per-layer LN
            _bcast_spec((1, D)), _bcast_spec((1, D)),          # final LN
            _bcast_spec((D, 3 * D)), _bcast_spec((1, 3 * D)),  # self-attn qkv
            _bcast_spec((D, D)), _bcast_spec((1, D)),          # self-attn out
            _bcast_spec((D, D)), _bcast_spec((1, D)),          # src-attn q
            _bcast_spec((D, 2 * D)), _bcast_spec((1, 2 * D)),  # src-attn kv
            _bcast_spec((D, D)), _bcast_spec((1, D)),          # src-attn out
            _bcast_spec((D, Dff)), _bcast_spec((1, Dff)),      # ffn w1
            _bcast_spec((Dff, D)), _bcast_spec((1, D)),        # ffn w2
        ],
        out_specs=_batch_spec((1, S, D)),
        out_shape=jax.ShapeDtypeStruct((B, S, D), jnp.float32),
        scratch_shapes=[pltpu.VMEM((S, D), jnp.float32)],      # per-head ctx
        compiler_params=pltpu.CompilerParams(
            dimension_semantics=("parallel",),        # batch steps -> both TCs
            vmem_limit_bytes=32 * 1024 * 1024,        # explicit, fits v7x 64MiB
        ),
    )(x, memory, target_mask, source_mask,
      params["ln_g"], params["ln_b"],
      params["final_g"].reshape(1, D), params["final_b"].reshape(1, D),
      params["wqkv"], params["bqkv"].reshape(1, 3 * D),
      params["wo_self"], params["bo_self"].reshape(1, D),
      params["wq"], params["bq"].reshape(1, D),
      params["wkv"], params["bkv"].reshape(1, 2 * D),
      params["wo_src"], params["bo_src"].reshape(1, D),
      params["w1"], params["b1"].reshape(1, Dff),
      params["w2"], params["b2"].reshape(1, D))


# ---------------------------------------------------------------------------
# Deterministic parameter init (attn / ff weights SHARED across layers).
# 1/sqrt(d_k) is folded into the q-projection weights/bias here (one-time
# parameter transform, not a per-call op).
# ---------------------------------------------------------------------------

def init_params(key, d_model, h, d_ff, N):
    dk = d_model // h
    q_scale = 1.0 / math.sqrt(dk)

    def lin(k, din, dout):
        kw, kb = jax.random.split(k)
        return (jax.random.normal(kw, (din, dout), jnp.float32) * 0.1,
                jax.random.normal(kb, (dout,), jnp.float32) * 0.1)

    ks = jax.random.split(key, 10)
    # shared self-attention
    wq_s, bq_s = lin(ks[0], d_model, d_model)
    wk_s, bk_s = lin(ks[1], d_model, d_model)
    wv_s, bv_s = lin(ks[2], d_model, d_model)
    wo_s, bo_s = lin(ks[3], d_model, d_model)
    # shared source-attention
    wq_c, bq_c = lin(ks[4], d_model, d_model)
    wk_c, bk_c = lin(ks[5], d_model, d_model)
    wv_c, bv_c = lin(ks[6], d_model, d_model)
    wo_c, bo_c = lin(ks[7], d_model, d_model)
    # shared feed-forward
    w1, b1 = lin(ks[8], d_model, d_ff)
    w2, b2 = lin(ks[9], d_ff, d_model)

    return dict(
        wqkv=jnp.concatenate([wq_s * q_scale, wk_s, wv_s], axis=1),
        bqkv=jnp.concatenate([bq_s * q_scale, bk_s, bv_s], axis=0),
        wo_self=wo_s, bo_self=bo_s,
        wq=wq_c * q_scale, bq=bq_c * q_scale,
        wkv=jnp.concatenate([wk_c, wv_c], axis=1),
        bkv=jnp.concatenate([bk_c, bv_c], axis=0),
        wo_src=wo_c, bo_src=bo_c,
        w1=w1, b1=b1, w2=w2, b2=b2,
        ln_g=jnp.ones((N, 3, d_model), jnp.float32),
        ln_b=jnp.zeros((N, 3, d_model), jnp.float32),
        final_g=jnp.ones((d_model,), jnp.float32),
        final_b=jnp.zeros((d_model,), jnp.float32),
    )


if __name__ == "__main__":
    B, S_tgt, S_src = 2, 8, 8
    d_model, h, d_ff, N = 32, 4, 64, 2

    key = jax.random.PRNGKey(0)
    kx, km, kp = jax.random.split(key, 3)

    x = jax.random.normal(kx, (B, S_tgt, d_model), jnp.float32)
    memory = jax.random.normal(km, (B, S_src, d_model), jnp.float32)
    # source mask: all positions valid; target mask: causal (subsequent) mask
    source_mask = jnp.ones((B, 1, S_src), jnp.float32)
    target_mask = jnp.broadcast_to(
        jnp.tril(jnp.ones((S_tgt, S_tgt), jnp.float32)), (B, S_tgt, S_tgt))

    params = init_params(kp, d_model, h, d_ff, N)

    fwd = jax.jit(functools.partial(decoder_forward, h=h))
    out = fwd(params, x, memory, source_mask, target_mask)
    out = jax.block_until_ready(out)
    assert out.shape == (B, S_tgt, d_model)
    assert bool(jnp.all(jnp.isfinite(out)))
    print("KERNEL_OK")
</pallas_src>

<mosaic_0001>
module attributes {stable_mosaic.version = 11 : i64} {
  func.func @_decoder_kernel(%arg0: i32, %arg1: memref<1x8x32xf32, #tpu.memory_space<vmem>>, %arg2: memref<1x8x32xf32, #tpu.memory_space<vmem>>, %arg3: memref<1x8x8xf32, #tpu.memory_space<vmem>>, %arg4: memref<1x1x8xf32, #tpu.memory_space<vmem>>, %arg5: memref<2x3x32xf32, #tpu.memory_space<vmem>>, %arg6: memref<2x3x32xf32, #tpu.memory_space<vmem>>, %arg7: memref<1x32xf32, #tpu.memory_space<vmem>>, %arg8: memref<1x32xf32, #tpu.memory_space<vmem>>, %arg9: memref<32x96xf32, #tpu.memory_space<vmem>>, %arg10: memref<1x96xf32, #tpu.memory_space<vmem>>, %arg11: memref<32x32xf32, #tpu.memory_space<vmem>>, %arg12: memref<1x32xf32, #tpu.memory_space<vmem>>, %arg13: memref<32x32xf32, #tpu.memory_space<vmem>>, %arg14: memref<1x32xf32, #tpu.memory_space<vmem>>, %arg15: memref<32x64xf32, #tpu.memory_space<vmem>>, %arg16: memref<1x64xf32, #tpu.memory_space<vmem>>, %arg17: memref<32x32xf32, #tpu.memory_space<vmem>>, %arg18: memref<1x32xf32, #tpu.memory_space<vmem>>, %arg19: memref<32x64xf32, #tpu.memory_space<vmem>>, %arg20: memref<1x64xf32, #tpu.memory_space<vmem>>, %arg21: memref<64x32xf32, #tpu.memory_space<vmem>>, %arg22: memref<1x32xf32, #tpu.memory_space<vmem>>, %arg23: memref<1x8x32xf32, #tpu.memory_space<vmem>>, %arg24: memref<8x32xf32, #tpu.memory_space<vmem>>) attributes {dimension_semantics = [#tpu.dimension_semantics<parallel>], iteration_bounds = array<i64: 2>, scalar_prefetch = 0 : i64, scratch_operands = 1 : i64, tpu.core_type = #tpu.core_type<tc>, window_params = [{transform_indices = @transform_0, window_bounds = array<i64: 1, 8, 32>}, {transform_indices = @transform_1, window_bounds = array<i64: 1, 8, 32>}, {transform_indices = @transform_2, window_bounds = array<i64: 1, 8, 8>}, {transform_indices = @transform_3, window_bounds = array<i64: 1, 1, 8>}, {pipeline_mode = #tpu.pipeline_mode<synchronous>, transform_indices = @transform_4, window_bounds = array<i64: 2, 3, 32>}, {pipeline_mode = #tpu.pipeline_mode<synchronous>, transform_indices = @transform_5, window_bounds = array<i64: 2, 3, 32>}, {pipeline_mode = #tpu.pipeline_mode<synchronous>, transform_indices = @transform_6, window_bounds = array<i64: 1, 32>}, {pipeline_mode = #tpu.pipeline_mode<synchronous>, transform_indices = @transform_7, window_bounds = array<i64: 1, 32>}, {pipeline_mode = #tpu.pipeline_mode<synchronous>, transform_indices = @transform_8, window_bounds = array<i64: 32, 96>}, {pipeline_mode = #tpu.pipeline_mode<synchronous>, transform_indices = @transform_9, window_bounds = array<i64: 1, 96>}, {pipeline_mode = #tpu.pipeline_mode<synchronous>, transform_indices = @transform_10, window_bounds = array<i64: 32, 32>}, {pipeline_mode = #tpu.pipeline_mode<synchronous>, transform_indices = @transform_11, window_bounds = array<i64: 1, 32>}, {pipeline_mode = #tpu.pipeline_mode<synchronous>, transform_indices = @transform_12, window_bounds = array<i64: 32, 32>}, {pipeline_mode = #tpu.pipeline_mode<synchronous>, transform_indices = @transform_13, window_bounds = array<i64: 1, 32>}, {pipeline_mode = #tpu.pipeline_mode<synchronous>, transform_indices = @transform_14, window_bounds = array<i64: 32, 64>}, {pipeline_mode = #tpu.pipeline_mode<synchronous>, transform_indices = @transform_15, window_bounds = array<i64: 1, 64>}, {pipeline_mode = #tpu.pipeline_mode<synchronous>, transform_indices = @transform_16, window_bounds = array<i64: 32, 32>}, {pipeline_mode = #tpu.pipeline_mode<synchronous>, transform_indices = @transform_17, window_bounds = array<i64: 1, 32>}, {pipeline_mode = #tpu.pipeline_mode<synchronous>, transform_indices = @transform_18, window_bounds = array<i64: 32, 64>}, {pipeline_mode = #tpu.pipeline_mode<synchronous>, transform_indices = @transform_19, window_bounds = array<i64: 1, 64>}, {pipeline_mode = #tpu.pipeline_mode<synchronous>, transform_indices = @transform_20, window_bounds = array<i64: 64, 32>}, {pipeline_mode = #tpu.pipeline_mode<synchronous>, transform_indices = @transform_21, window_bounds = array<i64: 1, 32>}, {transform_indices = @transform_22, window_bounds = array<i64: 1, 8, 32>}]} {
    %c0 = arith.constant 0 : index
    %c0_0 = arith.constant 0 : index
    %c0_1 = arith.constant 0 : index
    %0 = vector.load %arg1[%c0, %c0_0, %c0_1] : memref<1x8x32xf32, #tpu.memory_space<vmem>>, vector<1x8x32xf32>
    %1 = vector.shape_cast %0 : vector<1x8x32xf32> to vector<8x32xf32>
    %c0_2 = arith.constant 0 : index
    %c0_3 = arith.constant 0 : index
    %c0_4 = arith.constant 0 : index
    %2 = vector.load %arg2[%c0_2, %c0_3, %c0_4] : memref<1x8x32xf32, #tpu.memory_space<vmem>>, vector<1x8x32xf32>
    %3 = vector.shape_cast %2 : vector<1x8x32xf32> to vector<8x32xf32>
    %c0_5 = arith.constant 0 : index
    %c0_6 = arith.constant 0 : index
    %4 = vector.load %arg15[%c0_5, %c0_6] : memref<32x64xf32, #tpu.memory_space<vmem>>, vector<32x64xf32>
    %cst = arith.constant dense<0.000000e+00> : vector<8x64xf32>
    %5 = tpu.matmul %3, %4, %cst {dimension_numbers = #tpu.dot_dimension_numbers<[1], [0], [0], [1], [0, 0, 1, 1], [], []>} : vector<8x32xf32>, vector<32x64xf32>, vector<8x64xf32> -> vector<8x64xf32>
    %c0_7 = arith.constant 0 : index
    %c0_8 = arith.constant 0 : index
    %6 = vector.load %arg16[%c0_7, %c0_8] : memref<1x64xf32, #tpu.memory_space<vmem>>, vector<1x64xf32>
    %7 = vector.broadcast %6 : vector<1x64xf32> to vector<8x64xf32>
    %8 = arith.addf %5, %7 : vector<8x64xf32>
    %9 = vector.extract_strided_slice %8 {offsets = [0, 0], sizes = [8, 32], strides = [1, 1]} : vector<8x64xf32> to vector<8x32xf32>
    %10 = vector.extract_strided_slice %8 {offsets = [0, 32], sizes = [8, 32], strides = [1, 1]} : vector<8x64xf32> to vector<8x32xf32>
    %c0_9 = arith.constant 0 : index
    %c0_10 = arith.constant 0 : index
    %c0_11 = arith.constant 0 : index
    %11 = vector.load %arg3[%c0_9, %c0_10, %c0_11] : memref<1x8x8xf32, #tpu.memory_space<vmem>>, vector<1x8x8xf32>
    %12 = vector.shape_cast %11 : vector<1x8x8xf32> to vector<8x8xf32>
    %cst_12 = arith.constant 0.000000e+00 : f32
    %13 = vector.broadcast %cst_12 : f32 to vector<8x8xf32>
    %14 = arith.cmpf oeq, %12, %13 : vector<8x8xf32>
    %c0_13 = arith.constant 0 : index
    %c0_14 = arith.constant 0 : index
    %c0_15 = arith.constant 0 : index
    %15 = vector.load %arg4[%c0_13, %c0_14, %c0_15] : memref<1x1x8xf32, #tpu.memory_space<vmem>>, vector<1x1x8xf32>
    %16 = vector.shape_cast %15 : vector<1x1x8xf32> to vector<1x8xf32>
    %cst_16 = arith.constant 0.000000e+00 : f32
    %17 = vector.broadcast %cst_16 : f32 to vector<1x8xf32>
    %18 = arith.cmpf oeq, %16, %17 : vector<1x8xf32>
    %c0_17 = arith.constant 0 : index
    %c0_18 = arith.constant 0 : index
    %c0_19 = arith.constant 0 : index
    %19 = vector.load %arg5[%c0_17, %c0_18, %c0_19] : memref<2x3x32xf32, #tpu.memory_space<vmem>>, vector<2x3x32xf32>
    %c0_20 = arith.constant 0 : index
    %c0_21 = arith.constant 0 : index
    %c0_22 = arith.constant 0 : index
    %20 = vector.load %arg6[%c0_20, %c0_21, %c0_22] : memref<2x3x32xf32, #tpu.memory_space<vmem>>, vector<2x3x32xf32>
    %21 = vector.extract_strided_slice %19 {offsets = [0, 0, 0], sizes = [1, 1, 32], strides = [1, 1, 1]} : vector<2x3x32xf32> to vector<1x1x32xf32>
    %22 = vector.shape_cast %21 : vector<1x1x32xf32> to vector<32xf32>
    %23 = vector.extract_strided_slice %20 {offsets = [0, 0, 0], sizes = [1, 1, 32], strides = [1, 1, 1]} : vector<2x3x32xf32> to vector<1x1x32xf32>
    %24 = vector.shape_cast %23 : vector<1x1x32xf32> to vector<32xf32>
    %cst_23 = arith.constant dense<0.000000e+00> : vector<8xf32>
    %25 = vector.multi_reduction <add>, %1, %cst_23 [1] : vector<8x32xf32> to vector<8xf32>
    %26 = vector.shape_cast %25 : vector<8xf32> to vector<8x1xf32>
    %cst_24 = arith.constant 3.200000e+01 : f32
    %27 = vector.broadcast %cst_24 : f32 to vector<8x1xf32>
    %28 = arith.divf %26, %27 : vector<8x1xf32>
    %29 = vector.broadcast %28 : vector<8x1xf32> to vector<8x32xf32>
    %30 = arith.subf %1, %29 : vector<8x32xf32>
    %31 = arith.mulf %30, %30 : vector<8x32xf32>
    %cst_25 = arith.constant dense<0.000000e+00> : vector<8xf32>
    %32 = vector.multi_reduction <add>, %31, %cst_25 [1] : vector<8x32xf32> to vector<8xf32>
    %33 = vector.shape_cast %32 : vector<8xf32> to vector<8x1xf32>
    %cst_26 = arith.constant 0.0322580636 : f32
    %34 = vector.broadcast %cst_26 : f32 to vector<8x1xf32>
    %35 = arith.mulf %33, %34 : vector<8x1xf32>
    %36 = vector.shape_cast %22 : vector<32xf32> to vector<1x32xf32>
    %37 = vector.broadcast %36 : vector<1x32xf32> to vector<8x32xf32>
    %38 = arith.mulf %37, %30 : vector<8x32xf32>
    %39 = math.sqrt %35 : vector<8x1xf32>
    %cst_27 = arith.constant 9.99999997E-7 : f32
    %40 = vector.broadcast %cst_27 : f32 to vector<8x1xf32>
    %41 = arith.addf %39, %40 : vector<8x1xf32>
    %42 = vector.broadcast %41 : vector<8x1xf32> to vector<8x32xf32>
    %43 = arith.divf %38, %42 : vector<8x32xf32>
    %44 = vector.shape_cast %24 : vector<32xf32> to vector<1x32xf32>
    %45 = vector.broadcast %44 : vector<1x32xf32> to vector<8x32xf32>
    %46 = arith.addf %43, %45 : vector<8x32xf32>
    %c0_28 = arith.constant 0 : index
    %c0_29 = arith.constant 0 : index
    %47 = vector.load %arg9[%c0_28, %c0_29] : memref<32x96xf32, #tpu.memory_space<vmem>>, vector<32x96xf32>
    %cst_30 = arith.constant dense<0.000000e+00> : vector<8x96xf32>
    %48 = tpu.matmul %46, %47, %cst_30 {dimension_numbers = #tpu.dot_dimension_numbers<[1], [0], [0], [1], [0, 0, 1, 1], [], []>} : vector<8x32xf32>, vector<32x96xf32>, vector<8x96xf32> -> vector<8x96xf32>
    %c0_31 = arith.constant 0 : index
    %c0_32 = arith.constant 0 : index
    %49 = vector.load %arg10[%c0_31, %c0_32] : memref<1x96xf32, #tpu.memory_space<vmem>>, vector<1x96xf32>
    %50 = vector.broadcast %49 : vector<1x96xf32> to vector<8x96xf32>
    %51 = arith.addf %48, %50 : vector<8x96xf32>
    %52 = vector.extract_strided_slice %51 {offsets = [0, 0], sizes = [8, 32], strides = [1, 1]} : vector<8x96xf32> to vector<8x32xf32>
    %53 = vector.extract_strided_slice %51 {offsets = [0, 32], sizes = [8, 32], strides = [1, 1]} : vector<8x96xf32> to vector<8x32xf32>
    %54 = vector.extract_strided_slice %51 {offsets = [0, 64], sizes = [8, 32], strides = [1, 1]} : vector<8x96xf32> to vector<8x32xf32>
    %55 = vector.extract_strided_slice %52 {offsets = [0, 0], sizes = [8, 8], strides = [1, 1]} : vector<8x32xf32> to vector<8x8xf32>
    %56 = vector.extract_strided_slice %53 {offsets = [0, 0], sizes = [8, 8], strides = [1, 1]} : vector<8x32xf32> to vector<8x8xf32>
    %cst_33 = arith.constant dense<0.000000e+00> : vector<8x8xf32>
    %57 = tpu.matmul %55, %56, %cst_33 {dimension_numbers = #tpu.dot_dimension_numbers<[1], [1], [0], [0], [0, 0, 1, 0], [], []>} : vector<8x8xf32>, vector<8x8xf32>, vector<8x8xf32> -> vector<8x8xf32>
    %cst_34 = arith.constant -1.000000e+09 : f32
    %58 = vector.broadcast %cst_34 : f32 to vector<8x8xf32>
    %59 = arith.select %14, %58, %57 : vector<8x8xi1>, vector<8x8xf32>
    %cst_35 = arith.constant dense<0xFF800000> : vector<8xf32>
    %60 = vector.multi_reduction <maximumf>, %59, %cst_35 [1] : vector<8x8xf32> to vector<8xf32>
    %61 = vector.shape_cast %60 : vector<8xf32> to vector<8x1xf32>
    %62 = vector.broadcast %61 : vector<8x1xf32> to vector<8x8xf32>
    %63 = arith.subf %59, %62 : vector<8x8xf32>
    %64 = math.exp %63 : vector<8x8xf32>
    %cst_36 = arith.constant dense<0.000000e+00> : vector<8xf32>
    %65 = vector.multi_reduction <add>, %64, %cst_36 [1] : vector<8x8xf32> to vector<8xf32>
    %66 = vector.shape_cast %65 : vector<8xf32> to vector<8x1xf32>
    %67 = vector.broadcast %66 : vector<8x1xf32> to vector<8x8xf32>
    %68 = arith.divf %64, %67 : vector<8x8xf32>
    %69 = vector.extract_strided_slice %54 {offsets = [0, 0], sizes = [8, 8], strides = [1, 1]} : vector<8x32xf32> to vector<8x8xf32>
    %cst_37 = arith.constant dense<0.000000e+00> : vector<8x8xf32>
    %70 = tpu.matmul %68, %69, %cst_37 {dimension_numbers = #tpu.dot_dimension_numbers<[1], [0], [0], [1], [0, 0, 1, 1], [], []>} : vector<8x8xf32>, vector<8x8xf32>, vector<8x8xf32> -> vector<8x8xf32>
    %c0_38 = arith.constant 0 : index
    %c0_39 = arith.constant 0 : index
    %71 = vector.load %arg24[%c0_38, %c0_39] : memref<8x32xf32, #tpu.memory_space<vmem>>, vector<8x8xf32>
    tpu.vector_store %arg24[%c0_38, %c0_39], %70 {strides = array<i32>} : memref<8x32xf32, #tpu.memory_space<vmem>>, vector<8x8xf32>,
    %72 = vector.extract_strided_slice %52 {offsets = [0, 8], sizes = [8, 8], strides = [1, 1]} : vector<8x32xf32> to vector<8x8xf32>
    %73 = vector.extract_strided_slice %53 {offsets = [0, 8], sizes = [8, 8], strides = [1, 1]} : vector<8x32xf32> to vector<8x8xf32>
    %cst_40 = arith.constant dense<0.000000e+00> : vector<8x8xf32>
    %74 = tpu.matmul %72, %73, %cst_40 {dimension_numbers = #tpu.dot_dimension_numbers<[1], [1], [0], [0], [0, 0, 1, 0], [], []>} : vector<8x8xf32>, vector<8x8xf32>, vector<8x8xf32> -> vector<8x8xf32>
    %cst_41 = arith.constant -1.000000e+09 : f32
    %75 = vector.broadcast %cst_41 : f32 to vector<8x8xf32>
    %76 = arith.select %14, %75, %74 : vector<8x8xi1>, vector<8x8xf32>
    %cst_42 = arith.constant dense<0xFF800000> : vector<8xf32>
    %77 = vector.multi_reduction <maximumf>, %76, %cst_42 [1] : vector<8x8xf32> to vector<8xf32>
    %78 = vector.shape_cast %77 : vector<8xf32> to vector<8x1xf32>
    %79 = vector.broadcast %78 : vector<8x1xf32> to vector<8x8xf32>
    %80 = arith.subf %76, %79 : vector<8x8xf32>
    %81 = math.exp %80 : vector<8x8xf32>
    %cst_43 = arith.constant dense<0.000000e+00> : vector<8xf32>
    %82 = vector.multi_reduction <add>, %81, %cst_43 [1] : vector<8x8xf32> to vector<8xf32>
    %83 = vector.shape_cast %82 : vector<8xf32> to vector<8x1xf32>
    %84 = vector.broadcast %83 : vector<8x1xf32> to vector<8x8xf32>
    %85 = arith.divf %81, %84 : vector<8x8xf32>
    %86 = vector.extract_strided_slice %54 {offsets = [0, 8], sizes = [8, 8], strides = [1, 1]} : vector<8x32xf32> to vector<8x8xf32>
    %cst_44 = arith.constant dense<0.000000e+00> : vector<8x8xf32>
    %87 = tpu.matmul %85, %86, %cst_44 {dimension_numbers = #tpu.dot_dimension_numbers<[1], [0], [0], [1], [0, 0, 1, 1], [], []>} : vector<8x8xf32>, vector<8x8xf32>, vector<8x8xf32> -> vector<8x8xf32>
    %c0_45 = arith.constant 0 : index
    %c8 = arith.constant 8 : index
    %88 = vector.load %arg24[%c0_45, %c8] : memref<8x32xf32, #tpu.memory_space<vmem>>, vector<8x8xf32>
    tpu.vector_store %arg24[%c0_45, %c8], %87 {strides = array<i32>} : memref<8x32xf32, #tpu.memory_space<vmem>>, vector<8x8xf32>,
    %89 = vector.extract_strided_slice %52 {offsets = [0, 16], sizes = [8, 8], strides = [1, 1]} : vector<8x32xf32> to vector<8x8xf32>
    %90 = vector.extract_strided_slice %53 {offsets = [0, 16], sizes = [8, 8], strides = [1, 1]} : vector<8x32xf32> to vector<8x8xf32>
    %cst_46 = arith.constant dense<0.000000e+00> : vector<8x8xf32>
    %91 = tpu.matmul %89, %90, %cst_46 {dimension_numbers = #tpu.dot_dimension_numbers<[1], [1], [0], [0], [0, 0, 1, 0], [], []>} : vector<8x8xf32>, vector<8x8xf32>, vector<8x8xf32> -> vector<8x8xf32>
    %cst_47 = arith.constant -1.000000e+09 : f32
    %92 = vector.broadcast %cst_47 : f32 to vector<8x8xf32>
    %93 = arith.select %14, %92, %91 : vector<8x8xi1>, vector<8x8xf32>
    %cst_48 = arith.constant dense<0xFF800000> : vector<8xf32>
    %94 = vector.multi_reduction <maximumf>, %93, %cst_48 [1] : vector<8x8xf32> to vector<8xf32>
    %95 = vector.shape_cast %94 : vector<8xf32> to vector<8x1xf32>
    %96 = vector.broadcast %95 : vector<8x1xf32> to vector<8x8xf32>
    %97 = arith.subf %93, %96 : vector<8x8xf32>
    %98 = math.exp %97 : vector<8x8xf32>
    %cst_49 = arith.constant dense<0.000000e+00> : vector<8xf32>
    %99 = vector.multi_reduction <add>, %98, %cst_49 [1] : vector<8x8xf32> to vector<8xf32>
    %100 = vector.shape_cast %99 : vector<8xf32> to vector<8x1xf32>
    %101 = vector.broadcast %100 : vector<8x1xf32> to vector<8x8xf32>
    %102 = arith.divf %98, %101 : vector<8x8xf32>
    %103 = vector.extract_strided_slice %54 {offsets = [0, 16], sizes = [8, 8], strides = [1, 1]} : vector<8x32xf32> to vector<8x8xf32>
    %cst_50 = arith.constant dense<0.000000e+00> : vector<8x8xf32>
    %104 = tpu.matmul %102, %103, %cst_50 {dimension_numbers = #tpu.dot_dimension_numbers<[1], [0], [0], [1], [0, 0, 1, 1], [], []>} : vector<8x8xf32>, vector<8x8xf32>, vector<8x8xf32> -> vector<8x8xf32>
    %c0_51 = arith.constant 0 : index
    %c16 = arith.constant 16 : index
    %105 = vector.load %arg24[%c0_51, %c16] : memref<8x32xf32, #tpu.memory_space<vmem>>, vector<8x8xf32>
    tpu.vector_store %arg24[%c0_51, %c16], %104 {strides = array<i32>} : memref<8x32xf32, #tpu.memory_space<vmem>>, vector<8x8xf32>,
    %106 = vector.extract_strided_slice %52 {offsets = [0, 24], sizes = [8, 8], strides = [1, 1]} : vector<8x32xf32> to vector<8x8xf32>
    %107 = vector.extract_strided_slice %53 {offsets = [0, 24], sizes = [8, 8], strides = [1, 1]} : vector<8x32xf32> to vector<8x8xf32>
    %cst_52 = arith.constant dense<0.000000e+00> : vector<8x8xf32>
    %108 = tpu.matmul %106, %107, %cst_52 {dimension_numbers = #tpu.dot_dimension_numbers<[1], [1], [0], [0], [0, 0, 1, 0], [], []>} : vector<8x8xf32>, vector<8x8xf32>, vector<8x8xf32> -> vector<8x8xf32>
    %cst_53 = arith.constant -1.000000e+09 : f32
    %109 = vector.broadcast %cst_53 : f32 to vector<8x8xf32>
    %110 = arith.select %14, %109, %108 : vector<8x8xi1>, vector<8x8xf32>
    %cst_54 = arith.constant dense<0xFF800000> : vector<8xf32>
    %111 = vector.multi_reduction <maximumf>, %110, %cst_54 [1] : vector<8x8xf32> to vector<8xf32>
    %112 = vector.shape_cast %111 : vector<8xf32> to vector<8x1xf32>
    %113 = vector.broadcast %112 : vector<8x1xf32> to vector<8x8xf32>
    %114 = arith.subf %110, %113 : vector<8x8xf32>
    %115 = math.exp %114 : vector<8x8xf32>
    %cst_55 = arith.constant dense<0.000000e+00> : vector<8xf32>
    %116 = vector.multi_reduction <add>, %115, %cst_55 [1] : vector<8x8xf32> to vector<8xf32>
    %117 = vector.shape_cast %116 : vector<8xf32> to vector<8x1xf32>
    %118 = vector.broadcast %117 : vector<8x1xf32> to vector<8x8xf32>
    %119 = arith.divf %115, %118 : vector<8x8xf32>
    %120 = vector.extract_strided_slice %54 {offsets = [0, 24], sizes = [8, 8], strides = [1, 1]} : vector<8x32xf32> to vector<8x8xf32>
    %cst_56 = arith.constant dense<0.000000e+00> : vector<8x8xf32>
    %121 = tpu.matmul %119, %120, %cst_56 {dimension_numbers = #tpu.dot_dimension_numbers<[1], [0], [0], [1], [0, 0, 1, 1], [], []>} : vector<8x8xf32>, vector<8x8xf32>, vector<8x8xf32> -> vector<8x8xf32>
    %c0_57 = arith.constant 0 : index
    %c24 = arith.constant 24 : index
    %122 = vector.load %arg24[%c0_57, %c24] : memref<8x32xf32, #tpu.memory_space<vmem>>, vector<8x8xf32>
    tpu.vector_store %arg24[%c0_57, %c24], %121 {strides = array<i32>} : memref<8x32xf32, #tpu.memory_space<vmem>>, vector<8x8xf32>,
    %c0_58 = arith.constant 0 : index
    %c0_59 = arith.constant 0 : index
    %123 = vector.load %arg24[%c0_58, %c0_59] : memref<8x32xf32, #tpu.memory_space<vmem>>, vector<8x32xf32>
    %c0_60 = arith.constant 0 : index
    %c0_61 = arith.constant 0 : index
    %124 = vector.load %arg11[%c0_60, %c0_61] : memref<32x32xf32, #tpu.memory_space<vmem>>, vector<32x32xf32>
    %cst_62 = arith.constant dense<0.000000e+00> : vector<8x32xf32>
    %125 = tpu.matmul %123, %124, %cst_62 {dimension_numbers = #tpu.dot_dimension_numbers<[1], [0], [0], [1], [0, 0, 1, 1], [], []>} : vector<8x32xf32>, vector<32x32xf32>, vector<8x32xf32> -> vector<8x32xf32>
    %c0_63 = arith.constant 0 : index
    %c0_64 = arith.constant 0 : index
    %126 = vector.load %arg12[%c0_63, %c0_64] : memref<1x32xf32, #tpu.memory_space<vmem>>, vector<1x32xf32>
    %127 = vector.broadcast %126 : vector<1x32xf32> to vector<8x32xf32>
    %128 = arith.addf %125, %127 : vector<8x32xf32>
    %129 = arith.addf %1, %128 : vector<8x32xf32>
    %130 = vector.extract_strided_slice %19 {offsets = [0, 1, 0], sizes = [1, 1, 32], strides = [1, 1, 1]} : vector<2x3x32xf32> to vector<1x1x32xf32>
    %131 = vector.shape_cast %130 : vector<1x1x32xf32> to vector<32xf32>
    %132 = vector.extract_strided_slice %20 {offsets = [0, 1, 0], sizes = [1, 1, 32], strides = [1, 1, 1]} : vector<2x3x32xf32> to vector<1x1x32xf32>
    %133 = vector.shape_cast %132 : vector<1x1x32xf32> to vector<32xf32>
    %cst_65 = arith.constant dense<0.000000e+00> : vector<8xf32>
    %134 = vector.multi_reduction <add>, %129, %cst_65 [1] : vector<8x32xf32> to vector<8xf32>
    %135 = vector.shape_cast %134 : vector<8xf32> to vector<8x1xf32>
    %cst_66 = arith.constant 3.200000e+01 : f32
    %136 = vector.broadcast %cst_66 : f32 to vector<8x1xf32>
    %137 = arith.divf %135, %136 : vector<8x1xf32>
    %138 = vector.broadcast %137 : vector<8x1xf32> to vector<8x32xf32>
    %139 = arith.subf %129, %138 : vector<8x32xf32>
    %140 = arith.mulf %139, %139 : vector<8x32xf32>
    %cst_67 = arith.constant dense<0.000000e+00> : vector<8xf32>
    %141 = vector.multi_reduction <add>, %140, %cst_67 [1] : vector<8x32xf32> to vector<8xf32>
    %142 = vector.shape_cast %141 : vector<8xf32> to vector<8x1xf32>
    %cst_68 = arith.constant 0.0322580636 : f32
    %143 = vector.broadcast %cst_68 : f32 to vector<8x1xf32>
    %144 = arith.mulf %142, %143 : vector<8x1xf32>
    %145 = vector.shape_cast %131 : vector<32xf32> to vector<1x32xf32>
    %146 = vector.broadcast %145 : vector<1x32xf32> to vector<8x32xf32>
    %147 = arith.mulf %146, %139 : vector<8x32xf32>
    %148 = math.sqrt %144 : vector<8x1xf32>
    %cst_69 = arith.constant 9.99999997E-7 : f32
    %149 = vector.broadcast %cst_69 : f32 to vector<8x1xf32>
    %150 = arith.addf %148, %149 : vector<8x1xf32>
    %151 = vector.broadcast %150 : vector<8x1xf32> to vector<8x32xf32>
    %152 = arith.divf %147, %151 : vector<8x32xf32>
    %153 = vector.shape_cast %133 : vector<32xf32> to vector<1x32xf32>
    %154 = vector.broadcast %153 : vector<1x32xf32> to vector<8x32xf32>
    %155 = arith.addf %152, %154 : vector<8x32xf32>
    %c0_70 = arith.constant 0 : index
    %c0_71 = arith.constant 0 : index
    %156 = vector.load %arg13[%c0_70, %c0_71] : memref<32x32xf32, #tpu.memory_space<vmem>>, vector<32x32xf32>
    %cst_72 = arith.constant dense<0.000000e+00> : vector<8x32xf32>
    %157 = tpu.matmul %155, %156, %cst_72 {dimension_numbers = #tpu.dot_dimension_numbers<[1], [0], [0], [1], [0, 0, 1, 1], [], []>} : vector<8x32xf32>, vector<32x32xf32>, vector<8x32xf32> -> vector<8x32xf32>
    %c0_73 = arith.constant 0 : index
    %c0_74 = arith.constant 0 : index
    %158 = vector.load %arg14[%c0_73, %c0_74] : memref<1x32xf32, #tpu.memory_space<vmem>>, vector<1x32xf32>
    %159 = vector.broadcast %158 : vector<1x32xf32> to vector<8x32xf32>
    %160 = arith.addf %157, %159 : vector<8x32xf32>
    %161 = vector.extract_strided_slice %160 {offsets = [0, 0], sizes = [8, 8], strides = [1, 1]} : vector<8x32xf32> to vector<8x8xf32>
    %162 = vector.extract_strided_slice %9 {offsets = [0, 0], sizes = [8, 8], strides = [1, 1]} : vector<8x32xf32> to vector<8x8xf32>
    %cst_75 = arith.constant dense<0.000000e+00> : vector<8x8xf32>
    %163 = tpu.matmul %161, %162, %cst_75 {dimension_numbers = #tpu.dot_dimension_numbers<[1], [1], [0], [0], [0, 0, 1, 0], [], []>} : vector<8x8xf32>, vector<8x8xf32>, vector<8x8xf32> -> vector<8x8xf32>
    %cst_76 = arith.constant -1.000000e+09 : f32
    %164 = vector.shape_cast %18 : vector<1x8xi1> to vector<1x8xi1>
    %165 = vector.broadcast %164 : vector<1x8xi1> to vector<8x8xi1>
    %166 = vector.broadcast %cst_76 : f32 to vector<8x8xf32>
    %167 = arith.select %165, %166, %163 : vector<8x8xi1>, vector<8x8xf32>
    %cst_77 = arith.constant dense<0xFF800000> : vector<8xf32>
    %168 = vector.multi_reduction <maximumf>, %167, %cst_77 [1] : vector<8x8xf32> to vector<8xf32>
    %169 = vector.shape_cast %168 : vector<8xf32> to vector<8x1xf32>
    %170 = vector.broadcast %169 : vector<8x1xf32> to vector<8x8xf32>
    %171 = arith.subf %167, %170 : vector<8x8xf32>
    %172 = math.exp %171 : vector<8x8xf32>
    %cst_78 = arith.constant dense<0.000000e+00> : vector<8xf32>
    %173 = vector.multi_reduction <add>, %172, %cst_78 [1] : vector<8x8xf32> to vector<8xf32>
    %174 = vector.shape_cast %173 : vector<8xf32> to vector<8x1xf32>
    %175 = vector.broadcast %174 : vector<8x1xf32> to vector<8x8xf32>
    %176 = arith.divf %172, %175 : vector<8x8xf32>
    %177 = vector.extract_strided_slice %10 {offsets = [0, 0], sizes = [8, 8], strides = [1, 1]} : vector<8x32xf32> to vector<8x8xf32>
    %cst_79 = arith.constant dense<0.000000e+00> : vector<8x8xf32>
    %178 = tpu.matmul %176, %177, %cst_79 {dimension_numbers = #tpu.dot_dimension_numbers<[1], [0], [0], [1], [0, 0, 1, 1], [], []>} : vector<8x8xf32>, vector<8x8xf32>, vector<8x8xf32> -> vector<8x8xf32>
    %c0_80 = arith.constant 0 : index
    %c0_81 = arith.constant 0 : index
    %179 = vector.load %arg24[%c0_80, %c0_81] : memref<8x32xf32, #tpu.memory_space<vmem>>, vector<8x8xf32>
    tpu.vector_store %arg24[%c0_80, %c0_81], %178 {strides = array<i32>} : memref<8x32xf32, #tpu.memory_space<vmem>>, vector<8x8xf32>,
    %180 = vector.extract_strided_slice %160 {offsets = [0, 8], sizes = [8, 8], strides = [1, 1]} : vector<8x32xf32> to vector<8x8xf32>
    %181 = vector.extract_strided_slice %9 {offsets = [0, 8], sizes = [8, 8], strides = [1, 1]} : vector<8x32xf32> to vector<8x8xf32>
    %cst_82 = arith.constant dense<0.000000e+00> : vector<8x8xf32>
    %182 = tpu.matmul %180, %181, %cst_82 {dimension_numbers = #tpu.dot_dimension_numbers<[1], [1], [0], [0], [0, 0, 1, 0], [], []>} : vector<8x8xf32>, vector<8x8xf32>, vector<8x8xf32> -> vector<8x8xf32>
    %cst_83 = arith.constant -1.000000e+09 : f32
    %183 = vector.shape_cast %18 : vector<1x8xi1> to vector<1x8xi1>
    %184 = vector.broadcast %183 : vector<1x8xi1> to vector<8x8xi1>
    %185 = vector.broadcast %cst_83 : f32 to vector<8x8xf32>
    %186 = arith.select %184, %185, %182 : vector<8x8xi1>, vector<8x8xf32>
    %cst_84 = arith.constant dense<0xFF800000> : vector<8xf32>
    %187 = vector.multi_reduction <maximumf>, %186, %cst_84 [1] : vector<8x8xf32> to vector<8xf32>
    %188 = vector.shape_cast %187 : vector<8xf32> to vector<8x1xf32>
    %189 = vector.broadcast %188 : vector<8x1xf32> to vector<8x8xf32>
    %190 = arith.subf %186, %189 : vector<8x8xf32>
    %191 = math.exp %190 : vector<8x8xf32>
    %cst_85 = arith.constant dense<0.000000e+00> : vector<8xf32>
    %192 = vector.multi_reduction <add>, %191, %cst_85 [1] : vector<8x8xf32> to vector<8xf32>
    %193 = vector.shape_cast %192 : vector<8xf32> to vector<8x1xf32>
    %194 = vector.broadcast %193 : vector<8x1xf32> to vector<8x8xf32>
    %195 = arith.divf %191, %194 : vector<8x8xf32>
    %196 = vector.extract_strided_slice %10 {offsets = [0, 8], sizes = [8, 8], strides = [1, 1]} : vector<8x32xf32> to vector<8x8xf32>
    %cst_86 = arith.constant dense<0.000000e+00> : vector<8x8xf32>
    %197 = tpu.matmul %195, %196, %cst_86 {dimension_numbers = #tpu.dot_dimension_numbers<[1], [0], [0], [1], [0, 0, 1, 1], [], []>} : vector<8x8xf32>, vector<8x8xf32>, vector<8x8xf32> -> vector<8x8xf32>
    %c0_87 = arith.constant 0 : index
    %c8_88 = arith.constant 8 : index
    %198 = vector.load %arg24[%c0_87, %c8_88] : memref<8x32xf32, #tpu.memory_space<vmem>>, vector<8x8xf32>
    tpu.vector_store %arg24[%c0_87, %c8_88], %197 {strides = array<i32>} : memref<8x32xf32, #tpu.memory_space<vmem>>, vector<8x8xf32>,
    %199 = vector.extract_strided_slice %160 {offsets = [0, 16], sizes = [8, 8], strides = [1, 1]} : vector<8x32xf32> to vector<8x8xf32>
    %200 = vector.extract_strided_slice %9 {offsets = [0, 16], sizes = [8, 8], strides = [1, 1]} : vector<8x32xf32> to vector<8x8xf32>
    %cst_89 = arith.constant dense<0.000000e+00> : vector<8x8xf32>
    %201 = tpu.matmul %199, %200, %cst_89 {dimension_numbers = #tpu.dot_dimension_numbers<[1], [1], [0], [0], [0, 0, 1, 0], [], []>} : vector<8x8xf32>, vector<8x8xf32>, vector<8x8xf32> -> vector<8x8xf32>
    %cst_90 = arith.constant -1.000000e+09 : f32
    %202 = vector.shape_cast %18 : vector<1x8xi1> to vector<1x8xi1>
    %203 = vector.broadcast %202 : vector<1x8xi1> to vector<8x8xi1>
    %204 = vector.broadcast %cst_90 : f32 to vector<8x8xf32>
    %205 = arith.select %203, %204, %201 : vector<8x8xi1>, vector<8x8xf32>
    %cst_91 = arith.constant dense<0xFF800000> : vector<8xf32>
    %206 = vector.multi_reduction <maximumf>, %205, %cst_91 [1] : vector<8x8xf32> to vector<8xf32>
    %207 = vector.shape_cast %206 : vector<8xf32> to vector<8x1xf32>
    %208 = vector.broadcast %207 : vector<8x1xf32> to vector<8x8xf32>
    %209 = arith.subf %205, %208 : vector<8x8xf32>
    %210 = math.exp %209 : vector<8x8xf32>
    %cst_92 = arith.constant dense<0.000000e+00> : vector<8xf32>
    %211 = vector.multi_reduction <add>, %210, %cst_92 [1] : vector<8x8xf32> to vector<8xf32>
    %212 = vector.shape_cast %211 : vector<8xf32> to vector<8x1xf32>
    %213 = vector.broadcast %212 : vector<8x1xf32> to vector<8x8xf32>
    %214 = arith.divf %210, %213 : vector<8x8xf32>
    %215 = vector.extract_strided_slice %10 {offsets = [0, 16], sizes = [8, 8], strides = [1, 1]} : vector<8x32xf32> to vector<8x8xf32>
    %cst_93 = arith.constant dense<0.000000e+00> : vector<8x8xf32>
    %216 = tpu.matmul %214, %215, %cst_93 {dimension_numbers = #tpu.dot_dimension_numbers<[1], [0], [0], [1], [0, 0, 1, 1], [], []>} : vector<8x8xf32>, vector<8x8xf32>, vector<8x8xf32> -> vector<8x8xf32>
    %c0_94 = arith.constant 0 : index
    %c16_95 = arith.constant 16 : index
    %217 = vector.load %arg24[%c0_94, %c16_95] : memref<8x32xf32, #tpu.memory_space<vmem>>, vector<8x8xf32>
    tpu.vector_store %arg24[%c0_94, %c16_95], %216 {strides = array<i32>} : memref<8x32xf32, #tpu.memory_space<vmem>>, vector<8x8xf32>,
    %218 = vector.extract_strided_slice %160 {offsets = [0, 24], sizes = [8, 8], strides = [1, 1]} : vector<8x32xf32> to vector<8x8xf32>
    %219 = vector.extract_strided_slice %9 {offsets = [0, 24], sizes = [8, 8], strides = [1, 1]} : vector<8x32xf32> to vector<8x8xf32>
    %cst_96 = arith.constant dense<0.000000e+00> : vector<8x8xf32>
    %220 = tpu.matmul %218, %219, %cst_96 {dimension_numbers = #tpu.dot_dimension_numbers<[1], [1], [0], [0], [0, 0, 1, 0], [], []>} : vector<8x8xf32>, vector<8x8xf32>, vector<8x8xf32> -> vector<8x8xf32>
    %cst_97 = arith.constant -1.000000e+09 : f32
    %221 = vector.shape_cast %18 : vector<1x8xi1> to vector<1x8xi1>
    %222 = vector.broadcast %221 : vector<1x8xi1> to vector<8x8xi1>
    %223 = vector.broadcast %cst_97 : f32 to vector<8x8xf32>
    %224 = arith.select %222, %223, %220 : vector<8x8xi1>, vector<8x8xf32>
    %cst_98 = arith.constant dense<0xFF800000> : vector<8xf32>
    %225 = vector.multi_reduction <maximumf>, %224, %cst_98 [1] : vector<8x8xf32> to vector<8xf32>
    %226 = vector.shape_cast %225 : vector<8xf32> to vector<8x1xf32>
    %227 = vector.broadcast %226 : vector<8x1xf32> to vector<8x8xf32>
    %228 = arith.subf %224, %227 : vector<8x8xf32>
    %229 = math.exp %228 : vector<8x8xf32>
    %cst_99 = arith.constant dense<0.000000e+00> : vector<8xf32>
    %230 = vector.multi_reduction <add>, %229, %cst_99 [1] : vector<8x8xf32> to vector<8xf32>
    %231 = vector.shape_cast %230 : vector<8xf32> to vector<8x1xf32>
    %232 = vector.broadcast %231 : vector<8x1xf32> to vector<8x8xf32>
    %233 = arith.divf %229, %232 : vector<8x8xf32>
    %234 = vector.extract_strided_slice %10 {offsets = [0, 24], sizes = [8, 8], strides = [1, 1]} : vector<8x32xf32> to vector<8x8xf32>
    %cst_100 = arith.constant dense<0.000000e+00> : vector<8x8xf32>
    %235 = tpu.matmul %233, %234, %cst_100 {dimension_numbers = #tpu.dot_dimension_numbers<[1], [0], [0], [1], [0, 0, 1, 1], [], []>} : vector<8x8xf32>, vector<8x8xf32>, vector<8x8xf32> -> vector<8x8xf32>
    %c0_101 = arith.constant 0 : index
    %c24_102 = arith.constant 24 : index
    %236 = vector.load %arg24[%c0_101, %c24_102] : memref<8x32xf32, #tpu.memory_space<vmem>>, vector<8x8xf32>
    tpu.vector_store %arg24[%c0_101, %c24_102], %235 {strides = array<i32>} : memref<8x32xf32, #tpu.memory_space<vmem>>, vector<8x8xf32>,
    %c0_103 = arith.constant 0 : index
    %c0_104 = arith.constant 0 : index
    %237 = vector.load %arg24[%c0_103, %c0_104] : memref<8x32xf32, #tpu.memory_space<vmem>>, vector<8x32xf32>
    %c0_105 = arith.constant 0 : index
    %c0_106 = arith.constant 0 : index
    %238 = vector.load %arg17[%c0_105, %c0_106] : memref<32x32xf32, #tpu.memory_space<vmem>>, vector<32x32xf32>
    %cst_107 = arith.constant dense<0.000000e+00> : vector<8x32xf32>
    %239 = tpu.matmul %237, %238, %cst_107 {dimension_numbers = #tpu.dot_dimension_numbers<[1], [0], [0], [1], [0, 0, 1, 1], [], []>} : vector<8x32xf32>, vector<32x32xf32>, vector<8x32xf32> -> vector<8x32xf32>
    %c0_108 = arith.constant 0 : index
    %c0_109 = arith.constant 0 : index
    %240 = vector.load %arg18[%c0_108, %c0_109] : memref<1x32xf32, #tpu.memory_space<vmem>>, vector<1x32xf32>
    %241 = vector.broadcast %240 : vector<1x32xf32> to vector<8x32xf32>
    %242 = arith.addf %239, %241 : vector<8x32xf32>
    %243 = arith.addf %129, %242 : vector<8x32xf32>
    %244 = vector.extract_strided_slice %19 {offsets = [0, 2, 0], sizes = [1, 1, 32], strides = [1, 1, 1]} : vector<2x3x32xf32> to vector<1x1x32xf32>
    %245 = vector.shape_cast %244 : vector<1x1x32xf32> to vector<32xf32>
    %246 = vector.extract_strided_slice %20 {offsets = [0, 2, 0], sizes = [1, 1, 32], strides = [1, 1, 1]} : vector<2x3x32xf32> to vector<1x1x32xf32>
    %247 = vector.shape_cast %246 : vector<1x1x32xf32> to vector<32xf32>
    %cst_110 = arith.constant dense<0.000000e+00> : vector<8xf32>
    %248 = vector.multi_reduction <add>, %243, %cst_110 [1] : vector<8x32xf32> to vector<8xf32>
    %249 = vector.shape_cast %248 : vector<8xf32> to vector<8x1xf32>
    %cst_111 = arith.constant 3.200000e+01 : f32
    %250 = vector.broadcast %cst_111 : f32 to vector<8x1xf32>
    %251 = arith.divf %249, %250 : vector<8x1xf32>
    %252 = vector.broadcast %251 : vector<8x1xf32> to vector<8x32xf32>
    %253 = arith.subf %243, %252 : vector<8x32xf32>
    %254 = arith.mulf %253, %253 : vector<8x32xf32>
    %cst_112 = arith.constant dense<0.000000e+00> : vector<8xf32>
    %255 = vector.multi_reduction <add>, %254, %cst_112 [1] : vector<8x32xf32> to vector<8xf32>
    %256 = vector.shape_cast %255 : vector<8xf32> to vector<8x1xf32>
    %cst_113 = arith.constant 0.0322580636 : f32
    %257 = vector.broadcast %cst_113 : f32 to vector<8x1xf32>
    %258 = arith.mulf %256, %257 : vector<8x1xf32>
    %259 = vector.shape_cast %245 : vector<32xf32> to vector<1x32xf32>
    %260 = vector.broadcast %259 : vector<1x32xf32> to vector<8x32xf32>
    %261 = arith.mulf %260, %253 : vector<8x32xf32>
    %262 = math.sqrt %258 : vector<8x1xf32>
    %cst_114 = arith.constant 9.99999997E-7 : f32
    %263 = vector.broadcast %cst_114 : f32 to vector<8x1xf32>
    %264 = arith.addf %262, %263 : vector<8x1xf32>
    %265 = vector.broadcast %264 : vector<8x1xf32> to vector<8x32xf32>
    %266 = arith.divf %261, %265 : vector<8x32xf32>
    %267 = vector.shape_cast %247 : vector<32xf32> to vector<1x32xf32>
    %268 = vector.broadcast %267 : vector<1x32xf32> to vector<8x32xf32>
    %269 = arith.addf %266, %268 : vector<8x32xf32>
    %c0_115 = arith.constant 0 : index
    %c0_116 = arith.constant 0 : index
    %270 = vector.load %arg19[%c0_115, %c0_116] : memref<32x64xf32, #tpu.memory_space<vmem>>, vector<32x64xf32>
    %cst_117 = arith.constant dense<0.000000e+00> : vector<8x64xf32>
    %271 = tpu.matmul %269, %270, %cst_117 {dimension_numbers = #tpu.dot_dimension_numbers<[1], [0], [0], [1], [0, 0, 1, 1], [], []>} : vector<8x32xf32>, vector<32x64xf32>, vector<8x64xf32> -> vector<8x64xf32>
    %c0_118 = arith.constant 0 : index
    %c0_119 = arith.constant 0 : index
    %272 = vector.load %arg20[%c0_118, %c0_119] : memref<1x64xf32, #tpu.memory_space<vmem>>, vector<1x64xf32>
    %273 = vector.broadcast %272 : vector<1x64xf32> to vector<8x64xf32>
    %274 = arith.addf %271, %273 : vector<8x64xf32>
    %cst_120 = arith.constant 0.000000e+00 : f32
    %275 = vector.broadcast %cst_120 : f32 to vector<8x64xf32>
    %276 = arith.maximumf %274, %275 : vector<8x64xf32>
    %c0_121 = arith.constant 0 : index
    %c0_122 = arith.constant 0 : index
    %277 = vector.load %arg21[%c0_121, %c0_122] : memref<64x32xf32, #tpu.memory_space<vmem>>, vector<64x32xf32>
    %cst_123 = arith.constant dense<0.000000e+00> : vector<8x32xf32>
    %278 = tpu.matmul %276, %277, %cst_123 {dimension_numbers = #tpu.dot_dimension_numbers<[1], [0], [0], [1], [0, 0, 1, 1], [], []>} : vector<8x64xf32>, vector<64x32xf32>, vector<8x32xf32> -> vector<8x32xf32>
    %c0_124 = arith.constant 0 : index
    %c0_125 = arith.constant 0 : index
    %279 = vector.load %arg22[%c0_124, %c0_125] : memref<1x32xf32, #tpu.memory_space<vmem>>, vector<1x32xf32>
    %280 = vector.broadcast %279 : vector<1x32xf32> to vector<8x32xf32>
    %281 = arith.addf %278, %280 : vector<8x32xf32>
    %282 = arith.addf %243, %281 : vector<8x32xf32>
    %283 = vector.extract_strided_slice %19 {offsets = [1, 0, 0], sizes = [1, 1, 32], strides = [1, 1, 1]} : vector<2x3x32xf32> to vector<1x1x32xf32>
    %284 = vector.shape_cast %283 : vector<1x1x32xf32> to vector<32xf32>
    %285 = vector.extract_strided_slice %20 {offsets = [1, 0, 0], sizes = [1, 1, 32], strides = [1, 1, 1]} : vector<2x3x32xf32> to vector<1x1x32xf32>
    %286 = vector.shape_cast %285 : vector<1x1x32xf32> to vector<32xf32>
    %cst_126 = arith.constant dense<0.000000e+00> : vector<8xf32>
    %287 = vector.multi_reduction <add>, %282, %cst_126 [1] : vector<8x32xf32> to vector<8xf32>
    %288 = vector.shape_cast %287 : vector<8xf32> to vector<8x1xf32>
    %cst_127 = arith.constant 3.200000e+01 : f32
    %289 = vector.broadcast %cst_127 : f32 to vector<8x1xf32>
    %290 = arith.divf %288, %289 : vector<8x1xf32>
    %291 = vector.broadcast %290 : vector<8x1xf32> to vector<8x32xf32>
    %292 = arith.subf %282, %291 : vector<8x32xf32>
    %293 = arith.mulf %292, %292 : vector<8x32xf32>
    %cst_128 = arith.constant dense<0.000000e+00> : vector<8xf32>
    %294 = vector.multi_reduction <add>, %293, %cst_128 [1] : vector<8x32xf32> to vector<8xf32>
    %295 = vector.shape_cast %294 : vector<8xf32> to vector<8x1xf32>
    %cst_129 = arith.constant 0.0322580636 : f32
    %296 = vector.broadcast %cst_129 : f32 to vector<8x1xf32>
    %297 = arith.mulf %295, %296 : vector<8x1xf32>
    %298 = vector.shape_cast %284 : vector<32xf32> to vector<1x32xf32>
    %299 = vector.broadcast %298 : vector<1x32xf32> to vector<8x32xf32>
    %300 = arith.mulf %299, %292 : vector<8x32xf32>
    %301 = math.sqrt %297 : vector<8x1xf32>
    %cst_130 = arith.constant 9.99999997E-7 : f32
    %302 = vector.broadcast %cst_130 : f32 to vector<8x1xf32>
    %303 = arith.addf %301, %302 : vector<8x1xf32>
    %304 = vector.broadcast %303 : vector<8x1xf32> to vector<8x32xf32>
    %305 = arith.divf %300, %304 : vector<8x32xf32>
    %306 = vector.shape_cast %286 : vector<32xf32> to vector<1x32xf32>
    %307 = vector.broadcast %306 : vector<1x32xf32> to vector<8x32xf32>
    %308 = arith.addf %305, %307 : vector<8x32xf32>
    %c0_131 = arith.constant 0 : index
    %c0_132 = arith.constant 0 : index
    %309 = vector.load %arg9[%c0_131, %c0_132] : memref<32x96xf32, #tpu.memory_space<vmem>>, vector<32x96xf32>
    %cst_133 = arith.constant dense<0.000000e+00> : vector<8x96xf32>
    %310 = tpu.matmul %308, %309, %cst_133 {dimension_numbers = #tpu.dot_dimension_numbers<[1], [0], [0], [1], [0, 0, 1, 1], [], []>} : vector<8x32xf32>, vector<32x96xf32>, vector<8x96xf32> -> vector<8x96xf32>
    %c0_134 = arith.constant 0 : index
    %c0_135 = arith.constant 0 : index
    %311 = vector.load %arg10[%c0_134, %c0_135] : memref<1x96xf32, #tpu.memory_space<vmem>>, vector<1x96xf32>
    %312 = vector.broadcast %311 : vector<1x96xf32> to vector<8x96xf32>
    %313 = arith.addf %310, %312 : vector<8x96xf32>
    %314 = vector.extract_strided_slice %313 {offsets = [0, 0], sizes = [8, 32], strides = [1, 1]} : vector<8x96xf32> to vector<8x32xf32>
    %315 = vector.extract_strided_slice %313 {offsets = [0, 32], sizes = [8, 32], strides = [1, 1]} : vector<8x96xf32> to vector<8x32xf32>
    %316 = vector.extract_strided_slice %313 {offsets = [0, 64], sizes = [8, 32], strides = [1, 1]} : vector<8x96xf32> to vector<8x32xf32>
    %317 = vector.extract_strided_slice %314 {offsets = [0, 0], sizes = [8, 8], strides = [1, 1]} : vector<8x32xf32> to vector<8x8xf32>
    %318 = vector.extract_strided_slice %315 {offsets = [0, 0], sizes = [8, 8], strides = [1, 1]} : vector<8x32xf32> to vector<8x8xf32>
    %cst_136 = arith.constant dense<0.000000e+00> : vector<8x8xf32>
    %319 = tpu.matmul %317, %318, %cst_136 {dimension_numbers = #tpu.dot_dimension_numbers<[1], [1], [0], [0], [0, 0, 1, 0], [], []>} : vector<8x8xf32>, vector<8x8xf32>, vector<8x8xf32> -> vector<8x8xf32>
    %cst_137 = arith.constant -1.000000e+09 : f32
    %320 = vector.broadcast %cst_137 : f32 to vector<8x8xf32>
    %321 = arith.select %14, %320, %319 : vector<8x8xi1>, vector<8x8xf32>
    %cst_138 = arith.constant dense<0xFF800000> : vector<8xf32>
    %322 = vector.multi_reduction <maximumf>, %321, %cst_138 [1] : vector<8x8xf32> to vector<8xf32>
    %323 = vector.shape_cast %322 : vector<8xf32> to vector<8x1xf32>
    %324 = vector.broadcast %323 : vector<8x1xf32> to vector<8x8xf32>
    %325 = arith.subf %321, %324 : vector<8x8xf32>
    %326 = math.exp %325 : vector<8x8xf32>
    %cst_139 = arith.constant dense<0.000000e+00> : vector<8xf32>
    %327 = vector.multi_reduction <add>, %326, %cst_139 [1] : vector<8x8xf32> to vector<8xf32>
    %328 = vector.shape_cast %327 : vector<8xf32> to vector<8x1xf32>
    %329 = vector.broadcast %328 : vector<8x1xf32> to vector<8x8xf32>
    %330 = arith.divf %326, %329 : vector<8x8xf32>
    %331 = vector.extract_strided_slice %316 {offsets = [0, 0], sizes = [8, 8], strides = [1, 1]} : vector<8x32xf32> to vector<8x8xf32>
    %cst_140 = arith.constant dense<0.000000e+00> : vector<8x8xf32>
    %332 = tpu.matmul %330, %331, %cst_140 {dimension_numbers = #tpu.dot_dimension_numbers<[1], [0], [0], [1], [0, 0, 1, 1], [], []>} : vector<8x8xf32>, vector<8x8xf32>, vector<8x8xf32> -> vector<8x8xf32>
    %c0_141 = arith.constant 0 : index
    %c0_142 = arith.constant 0 : index
    %333 = vector.load %arg24[%c0_141, %c0_142] : memref<8x32xf32, #tpu.memory_space<vmem>>, vector<8x8xf32>
    tpu.vector_store %arg24[%c0_141, %c0_142], %332 {strides = array<i32>} : memref<8x32xf32, #tpu.memory_space<vmem>>, vector<8x8xf32>,
    %334 = vector.extract_strided_slice %314 {offsets = [0, 8], sizes = [8, 8], strides = [1, 1]} : vector<8x32xf32> to vector<8x8xf32>
    %335 = vector.extract_strided_slice %315 {offsets = [0, 8], sizes = [8, 8], strides = [1, 1]} : vector<8x32xf32> to vector<8x8xf32>
    %cst_143 = arith.constant dense<0.000000e+00> : vector<8x8xf32>
    %336 = tpu.matmul %334, %335, %cst_143 {dimension_numbers = #tpu.dot_dimension_numbers<[1], [1], [0], [0], [0, 0, 1, 0], [], []>} : vector<8x8xf32>, vector<8x8xf32>, vector<8x8xf32> -> vector<8x8xf32>
    %cst_144 = arith.constant -1.000000e+09 : f32
    %337 = vector.broadcast %cst_144 : f32 to vector<8x8xf32>
    %338 = arith.select %14, %337, %336 : vector<8x8xi1>, vector<8x8xf32>
    %cst_145 = arith.constant dense<0xFF800000> : vector<8xf32>
    %339 = vector.multi_reduction <maximumf>, %338, %cst_145 [1] : vector<8x8xf32> to vector<8xf32>
    %340 = vector.shape_cast %339 : vector<8xf32> to vector<8x1xf32>
    %341 = vector.broadcast %340 : vector<8x1xf32> to vector<8x8xf32>
    %342 = arith.subf %338, %341 : vector<8x8xf32>
    %343 = math.exp %342 : vector<8x8xf32>
    %cst_146 = arith.constant dense<0.000000e+00> : vector<8xf32>
    %344 = vector.multi_reduction <add>, %343, %cst_146 [1] : vector<8x8xf32> to vector<8xf32>
    %345 = vector.shape_cast %344 : vector<8xf32> to vector<8x1xf32>
    %346 = vector.broadcast %345 : vector<8x1xf32> to vector<8x8xf32>
    %347 = arith.divf %343, %346 : vector<8x8xf32>
    %348 = vector.extract_strided_slice %316 {offsets = [0, 8], sizes = [8, 8], strides = [1, 1]} : vector<8x32xf32> to vector<8x8xf32>
    %cst_147 = arith.constant dense<0.000000e+00> : vector<8x8xf32>
    %349 = tpu.matmul %347, %348, %cst_147 {dimension_numbers = #tpu.dot_dimension_numbers<[1], [0], [0], [1], [0, 0, 1, 1], [], []>} : vector<8x8xf32>, vector<8x8xf32>, vector<8x8xf32> -> vector<8x8xf32>
    %c0_148 = arith.constant 0 : index
    %c8_149 = arith.constant 8 : index
    %350 = vector.load %arg24[%c0_148, %c8_149] : memref<8x32xf32, #tpu.memory_space<vmem>>, vector<8x8xf32>
    tpu.vector_store %arg24[%c0_148, %c8_149], %349 {strides = array<i32>} : memref<8x32xf32, #tpu.memory_space<vmem>>, vector<8x8xf32>,
    %351 = vector.extract_strided_slice %314 {offsets = [0, 16], sizes = [8, 8], strides = [1, 1]} : vector<8x32xf32> to vector<8x8xf32>
    %352 = vector.extract_strided_slice %315 {offsets = [0, 16], sizes = [8, 8], strides = [1, 1]} : vector<8x32xf32> to vector<8x8xf32>
    %cst_150 = arith.constant dense<0.000000e+00> : vector<8x8xf32>
    %353 = tpu.matmul %351, %352, %cst_150 {dimension_numbers = #tpu.dot_dimension_numbers<[1], [1], [0], [0], [0, 0, 1, 0], [], []>} : vector<8x8xf32>, vector<8x8xf32>, vector<8x8xf32> -> vector<8x8xf32>
    %cst_151 = arith.constant -1.000000e+09 : f32
    %354 = vector.broadcast %cst_151 : f32 to vector<8x8xf32>
    %355 = arith.select %14, %354, %353 : vector<8x8xi1>, vector<8x8xf32>
    %cst_152 = arith.constant dense<0xFF800000> : vector<8xf32>
    %356 = vector.multi_reduction <maximumf>, %355, %cst_152 [1] : vector<8x8xf32> to vector<8xf32>
    %357 = vector.shape_cast %356 : vector<8xf32> to vector<8x1xf32>
    %358 = vector.broadcast %357 : vector<8x1xf32> to vector<8x8xf32>
    %359 = arith.subf %355, %358 : vector<8x8xf32>
    %360 = math.exp %359 : vector<8x8xf32>
    %cst_153 = arith.constant dense<0.000000e+00> : vector<8xf32>
    %361 = vector.multi_reduction <add>, %360, %cst_153 [1] : vector<8x8xf32> to vector<8xf32>
    %362 = vector.shape_cast %361 : vector<8xf32> to vector<8x1xf32>
    %363 = vector.broadcast %362 : vector<8x1xf32> to vector<8x8xf32>
    %364 = arith.divf %360, %363 : vector<8x8xf32>
    %365 = vector.extract_strided_slice %316 {offsets = [0, 16], sizes = [8, 8], strides = [1, 1]} : vector<8x32xf32> to vector<8x8xf32>
    %cst_154 = arith.constant dense<0.000000e+00> : vector<8x8xf32>
    %366 = tpu.matmul %364, %365, %cst_154 {dimension_numbers = #tpu.dot_dimension_numbers<[1], [0], [0], [1], [0, 0, 1, 1], [], []>} : vector<8x8xf32>, vector<8x8xf32>, vector<8x8xf32> -> vector<8x8xf32>
    %c0_155 = arith.constant 0 : index
    %c16_156 = arith.constant 16 : index
    %367 = vector.load %arg24[%c0_155, %c16_156] : memref<8x32xf32, #tpu.memory_space<vmem>>, vector<8x8xf32>
    tpu.vector_store %arg24[%c0_155, %c16_156], %366 {strides = array<i32>} : memref<8x32xf32, #tpu.memory_space<vmem>>, vector<8x8xf32>,
    %368 = vector.extract_strided_slice %314 {offsets = [0, 24], sizes = [8, 8], strides = [1, 1]} : vector<8x32xf32> to vector<8x8xf32>
    %369 = vector.extract_strided_slice %315 {offsets = [0, 24], sizes = [8, 8], strides = [1, 1]} : vector<8x32xf32> to vector<8x8xf32>
    %cst_157 = arith.constant dense<0.000000e+00> : vector<8x8xf32>
    %370 = tpu.matmul %368, %369, %cst_157 {dimension_numbers = #tpu.dot_dimension_numbers<[1], [1], [0], [0], [0, 0, 1, 0], [], []>} : vector<8x8xf32>, vector<8x8xf32>, vector<8x8xf32> -> vector<8x8xf32>
    %cst_158 = arith.constant -1.000000e+09 : f32
    %371 = vector.broadcast %cst_158 : f32 to vector<8x8xf32>
    %372 = arith.select %14, %371, %370 : vector<8x8xi1>, vector<8x8xf32>
    %cst_159 = arith.constant dense<0xFF800000> : vector<8xf32>
    %373 = vector.multi_reduction <maximumf>, %372, %cst_159 [1] : vector<8x8xf32> to vector<8xf32>
    %374 = vector.shape_cast %373 : vector<8xf32> to vector<8x1xf32>
    %375 = vector.broadcast %374 : vector<8x1xf32> to vector<8x8xf32>
    %376 = arith.subf %372, %375 : vector<8x8xf32>
    %377 = math.exp %376 : vector<8x8xf32>
    %cst_160 = arith.constant dense<0.000000e+00> : vector<8xf32>
    %378 = vector.multi_reduction <add>, %377, %cst_160 [1] : vector<8x8xf32> to vector<8xf32>
    %379 = vector.shape_cast %378 : vector<8xf32> to vector<8x1xf32>
    %380 = vector.broadcast %379 : vector<8x1xf32> to vector<8x8xf32>
    %381 = arith.divf %377, %380 : vector<8x8xf32>
    %382 = vector.extract_strided_slice %316 {offsets = [0, 24], sizes = [8, 8], strides = [1, 1]} : vector<8x32xf32> to vector<8x8xf32>
    %cst_161 = arith.constant dense<0.000000e+00> : vector<8x8xf32>
    %383 = tpu.matmul %381, %382, %cst_161 {dimension_numbers = #tpu.dot_dimension_numbers<[1], [0], [0], [1], [0, 0, 1, 1], [], []>} : vector<8x8xf32>, vector<8x8xf32>, vector<8x8xf32> -> vector<8x8xf32>
    %c0_162 = arith.constant 0 : index
    %c24_163 = arith.constant 24 : index
    %384 = vector.load %arg24[%c0_162, %c24_163] : memref<8x32xf32, #tpu.memory_space<vmem>>, vector<8x8xf32>
    tpu.vector_store %arg24[%c0_162, %c24_163], %383 {strides = array<i32>} : memref<8x32xf32, #tpu.memory_space<vmem>>, vector<8x8xf32>,
    %c0_164 = arith.constant 0 : index
    %c0_165 = arith.constant 0 : index
    %385 = vector.load %arg24[%c0_164, %c0_165] : memref<8x32xf32, #tpu.memory_space<vmem>>, vector<8x32xf32>
    %c0_166 = arith.constant 0 : index
    %c0_167 = arith.constant 0 : index
    %386 = vector.load %arg11[%c0_166, %c0_167] : memref<32x32xf32, #tpu.memory_space<vmem>>, vector<32x32xf32>
    %cst_168 = arith.constant dense<0.000000e+00> : vector<8x32xf32>
    %387 = tpu.matmul %385, %386, %cst_168 {dimension_numbers = #tpu.dot_dimension_numbers<[1], [0], [0], [1], [0, 0, 1, 1], [], []>} : vector<8x32xf32>, vector<32x32xf32>, vector<8x32xf32> -> vector<8x32xf32>
    %c0_169 = arith.constant 0 : index
    %c0_170 = arith.constant 0 : index
    %388 = vector.load %arg12[%c0_169, %c0_170] : memref<1x32xf32, #tpu.memory_space<vmem>>, vector<1x32xf32>
    %389 = vector.broadcast %388 : vector<1x32xf32> to vector<8x32xf32>
    %390 = arith.addf %387, %389 : vector<8x32xf32>
    %391 = arith.addf %282, %390 : vector<8x32xf32>
    %392 = vector.extract_strided_slice %19 {offsets = [1, 1, 0], sizes = [1, 1, 32], strides = [1, 1, 1]} : vector<2x3x32xf32> to vector<1x1x32xf32>
    %393 = vector.shape_cast %392 : vector<1x1x32xf32> to vector<32xf32>
    %394 = vector.extract_strided_slice %20 {offsets = [1, 1, 0], sizes = [1, 1, 32], strides = [1, 1, 1]} : vector<2x3x32xf32> to vector<1x1x32xf32>
    %395 = vector.shape_cast %394 : vector<1x1x32xf32> to vector<32xf32>
    %cst_171 = arith.constant dense<0.000000e+00> : vector<8xf32>
    %396 = vector.multi_reduction <add>, %391, %cst_171 [1] : vector<8x32xf32> to vector<8xf32>
    %397 = vector.shape_cast %396 : vector<8xf32> to vector<8x1xf32>
    %cst_172 = arith.constant 3.200000e+01 : f32
    %398 = vector.broadcast %cst_172 : f32 to vector<8x1xf32>
    %399 = arith.divf %397, %398 : vector<8x1xf32>
    %400 = vector.broadcast %399 : vector<8x1xf32> to vector<8x32xf32>
    %401 = arith.subf %391, %400 : vector<8x32xf32>
    %402 = arith.mulf %401, %401 : vector<8x32xf32>
    %cst_173 = arith.constant dense<0.000000e+00> : vector<8xf32>
    %403 = vector.multi_reduction <add>, %402, %cst_173 [1] : vector<8x32xf32> to vector<8xf32>
    %404 = vector.shape_cast %403 : vector<8xf32> to vector<8x1xf32>
    %cst_174 = arith.constant 0.0322580636 : f32
    %405 = vector.broadcast %cst_174 : f32 to vector<8x1xf32>
    %406 = arith.mulf %404, %405 : vector<8x1xf32>
    %407 = vector.shape_cast %393 : vector<32xf32> to vector<1x32xf32>
    %408 = vector.broadcast %407 : vector<1x32xf32> to vector<8x32xf32>
    %409 = arith.mulf %408, %401 : vector<8x32xf32>
    %410 = math.sqrt %406 : vector<8x1xf32>
    %cst_175 = arith.constant 9.99999997E-7 : f32
    %411 = vector.broadcast %cst_175 : f32 to vector<8x1xf32>
    %412 = arith.addf %410, %411 : vector<8x1xf32>
    %413 = vector.broadcast %412 : vector<8x1xf32> to vector<8x32xf32>
    %414 = arith.divf %409, %413 : vector<8x32xf32>
    %415 = vector.shape_cast %395 : vector<32xf32> to vector<1x32xf32>
    %416 = vector.broadcast %415 : vector<1x32xf32> to vector<8x32xf32>
    %417 = arith.addf %414, %416 : vector<8x32xf32>
    %c0_176 = arith.constant 0 : index
    %c0_177 = arith.constant 0 : index
    %418 = vector.load %arg13[%c0_176, %c0_177] : memref<32x32xf32, #tpu.memory_space<vmem>>, vector<32x32xf32>
    %cst_178 = arith.constant dense<0.000000e+00> : vector<8x32xf32>
    %419 = tpu.matmul %417, %418, %cst_178 {dimension_numbers = #tpu.dot_dimension_numbers<[1], [0], [0], [1], [0, 0, 1, 1], [], []>} : vector<8x32xf32>, vector<32x32xf32>, vector<8x32xf32> -> vector<8x32xf32>
    %c0_179 = arith.constant 0 : index
    %c0_180 = arith.constant 0 : index
    %420 = vector.load %arg14[%c0_179, %c0_180] : memref<1x32xf32, #tpu.memory_space<vmem>>, vector<1x32xf32>
    %421 = vector.broadcast %420 : vector<1x32xf32> to vector<8x32xf32>
    %422 = arith.addf %419, %421 : vector<8x32xf32>
    %423 = vector.extract_strided_slice %422 {offsets = [0, 0], sizes = [8, 8], strides = [1, 1]} : vector<8x32xf32> to vector<8x8xf32>
    %424 = vector.extract_strided_slice %9 {offsets = [0, 0], sizes = [8, 8], strides = [1, 1]} : vector<8x32xf32> to vector<8x8xf32>
    %cst_181 = arith.constant dense<0.000000e+00> : vector<8x8xf32>
    %425 = tpu.matmul %423, %424, %cst_181 {dimension_numbers = #tpu.dot_dimension_numbers<[1], [1], [0], [0], [0, 0, 1, 0], [], []>} : vector<8x8xf32>, vector<8x8xf32>, vector<8x8xf32> -> vector<8x8xf32>
    %cst_182 = arith.constant -1.000000e+09 : f32
    %426 = vector.shape_cast %18 : vector<1x8xi1> to vector<1x8xi1>
    %427 = vector.broadcast %426 : vector<1x8xi1> to vector<8x8xi1>
    %428 = vector.broadcast %cst_182 : f32 to vector<8x8xf32>
    %429 = arith.select %427, %428, %425 : vector<8x8xi1>, vector<8x8xf32>
    %cst_183 = arith.constant dense<0xFF800000> : vector<8xf32>
    %430 = vector.multi_reduction <maximumf>, %429, %cst_183 [1] : vector<8x8xf32> to vector<8xf32>
    %431 = vector.shape_cast %430 : vector<8xf32> to vector<8x1xf32>
    %432 = vector.broadcast %431 : vector<8x1xf32> to vector<8x8xf32>
    %433 = arith.subf %429, %432 : vector<8x8xf32>
    %434 = math.exp %433 : vector<8x8xf32>
    %cst_184 = arith.constant dense<0.000000e+00> : vector<8xf32>
    %435 = vector.multi_reduction <add>, %434, %cst_184 [1] : vector<8x8xf32> to vector<8xf32>
    %436 = vector.shape_cast %435 : vector<8xf32> to vector<8x1xf32>
    %437 = vector.broadcast %436 : vector<8x1xf32> to vector<8x8xf32>
    %438 = arith.divf %434, %437 : vector<8x8xf32>
    %439 = vector.extract_strided_slice %10 {offsets = [0, 0], sizes = [8, 8], strides = [1, 1]} : vector<8x32xf32> to vector<8x8xf32>
    %cst_185 = arith.constant dense<0.000000e+00> : vector<8x8xf32>
    %440 = tpu.matmul %438, %439, %cst_185 {dimension_numbers = #tpu.dot_dimension_numbers<[1], [0], [0], [1], [0, 0, 1, 1], [], []>} : vector<8x8xf32>, vector<8x8xf32>, vector<8x8xf32> -> vector<8x8xf32>
    %c0_186 = arith.constant 0 : index
    %c0_187 = arith.constant 0 : index
    %441 = vector.load %arg24[%c0_186, %c0_187] : memref<8x32xf32, #tpu.memory_space<vmem>>, vector<8x8xf32>
    tpu.vector_store %arg24[%c0_186, %c0_187], %440 {strides = array<i32>} : memref<8x32xf32, #tpu.memory_space<vmem>>, vector<8x8xf32>,
    %442 = vector.extract_strided_slice %422 {offsets = [0, 8], sizes = [8, 8], strides = [1, 1]} : vector<8x32xf32> to vector<8x8xf32>
    %443 = vector.extract_strided_slice %9 {offsets = [0, 8], sizes = [8, 8], strides = [1, 1]} : vector<8x32xf32> to vector<8x8xf32>
    %cst_188 = arith.constant dense<0.000000e+00> : vector<8x8xf32>
    %444 = tpu.matmul %442, %443, %cst_188 {dimension_numbers = #tpu.dot_dimension_numbers<[1], [1], [0], [0], [0, 0, 1, 0], [], []>} : vector<8x8xf32>, vector<8x8xf32>, vector<8x8xf32> -> vector<8x8xf32>
    %cst_189 = arith.constant -1.000000e+09 : f32
    %445 = vector.shape_cast %18 : vector<1x8xi1> to vector<1x8xi1>
    %446 = vector.broadcast %445 : vector<1x8xi1> to vector<8x8xi1>
    %447 = vector.broadcast %cst_189 : f32 to vector<8x8xf32>
    %448 = arith.select %446, %447, %444 : vector<8x8xi1>, vector<8x8xf32>
    %cst_190 = arith.constant dense<0xFF800000> : vector<8xf32>
    %449 = vector.multi_reduction <maximumf>, %448, %cst_190 [1] : vector<8x8xf32> to vector<8xf32>
    %450 = vector.shape_cast %449 : vector<8xf32> to vector<8x1xf32>
    %451 = vector.broadcast %450 : vector<8x1xf32> to vector<8x8xf32>
    %452 = arith.subf %448, %451 : vector<8x8xf32>
    %453 = math.exp %452 : vector<8x8xf32>
    %cst_191 = arith.constant dense<0.000000e+00> : vector<8xf32>
    %454 = vector.multi_reduction <add>, %453, %cst_191 [1] : vector<8x8xf32> to vector<8xf32>
    %455 = vector.shape_cast %454 : vector<8xf32> to vector<8x1xf32>
    %456 = vector.broadcast %455 : vector<8x1xf32> to vector<8x8xf32>
    %457 = arith.divf %453, %456 : vector<8x8xf32>
    %458 = vector.extract_strided_slice %10 {offsets = [0, 8], sizes = [8, 8], strides = [1, 1]} : vector<8x32xf32> to vector<8x8xf32>
    %cst_192 = arith.constant dense<0.000000e+00> : vector<8x8xf32>
    %459 = tpu.matmul %457, %458, %cst_192 {dimension_numbers = #tpu.dot_dimension_numbers<[1], [0], [0], [1], [0, 0, 1, 1], [], []>} : vector<8x8xf32>, vector<8x8xf32>, vector<8x8xf32> -> vector<8x8xf32>
    %c0_193 = arith.constant 0 : index
    %c8_194 = arith.constant 8 : index
    %460 = vector.load %arg24[%c0_193, %c8_194] : memref<8x32xf32, #tpu.memory_space<vmem>>, vector<8x8xf32>
    tpu.vector_store %arg24[%c0_193, %c8_194], %459 {strides = array<i32>} : memref<8x32xf32, #tpu.memory_space<vmem>>, vector<8x8xf32>,
    %461 = vector.extract_strided_slice %422 {offsets = [0, 16], sizes = [8, 8], strides = [1, 1]} : vector<8x32xf32> to vector<8x8xf32>
    %462 = vector.extract_strided_slice %9 {offsets = [0, 16], sizes = [8, 8], strides = [1, 1]} : vector<8x32xf32> to vector<8x8xf32>
    %cst_195 = arith.constant dense<0.000000e+00> : vector<8x8xf32>
    %463 = tpu.matmul %461, %462, %cst_195 {dimension_numbers = #tpu.dot_dimension_numbers<[1], [1], [0], [0], [0, 0, 1, 0], [], []>} : vector<8x8xf32>, vector<8x8xf32>, vector<8x8xf32> -> vector<8x8xf32>
    %cst_196 = arith.constant -1.000000e+09 : f32
    %464 = vector.shape_cast %18 : vector<1x8xi1> to vector<1x8xi1>
    %465 = vector.broadcast %464 : vector<1x8xi1> to vector<8x8xi1>
    %466 = vector.broadcast %cst_196 : f32 to vector<8x8xf32>
    %467 = arith.select %465, %466, %463 : vector<8x8xi1>, vector<8x8xf32>
    %cst_197 = arith.constant dense<0xFF800000> : vector<8xf32>
    %468 = vector.multi_reduction <maximumf>, %467, %cst_197 [1] : vector<8x8xf32> to vector<8xf32>
    %469 = vector.shape_cast %468 : vector<8xf32> to vector<8x1xf32>
    %470 = vector.broadcast %469 : vector<8x1xf32> to vector<8x8xf32>
    %471 = arith.subf %467, %470 : vector<8x8xf32>
    %472 = math.exp %471 : vector<8x8xf32>
    %cst_198 = arith.constant dense<0.000000e+00> : vector<8xf32>
    %473 = vector.multi_reduction <add>, %472, %cst_198 [1] : vector<8x8xf32> to vector<8xf32>
    %474 = vector.shape_cast %473 : vector<8xf32> to vector<8x1xf32>
    %475 = vector.broadcast %474 : vector<8x1xf32> to vector<8x8xf32>
    %476 = arith.divf %472, %475 : vector<8x8xf32>
    %477 = vector.extract_strided_slice %10 {offsets = [0, 16], sizes = [8, 8], strides = [1, 1]} : vector<8x32xf32> to vector<8x8xf32>
    %cst_199 = arith.constant dense<0.000000e+00> : vector<8x8xf32>
    %478 = tpu.matmul %476, %477, %cst_199 {dimension_numbers = #tpu.dot_dimension_numbers<[1], [0], [0], [1], [0, 0, 1, 1], [], []>} : vector<8x8xf32>, vector<8x8xf32>, vector<8x8xf32> -> vector<8x8xf32>
    %c0_200 = arith.constant 0 : index
    %c16_201 = arith.constant 16 : index
    %479 = vector.load %arg24[%c0_200, %c16_201] : memref<8x32xf32, #tpu.memory_space<vmem>>, vector<8x8xf32>
    tpu.vector_store %arg24[%c0_200, %c16_201], %478 {strides = array<i32>} : memref<8x32xf32, #tpu.memory_space<vmem>>, vector<8x8xf32>,
    %480 = vector.extract_strided_slice %422 {offsets = [0, 24], sizes = [8, 8], strides = [1, 1]} : vector<8x32xf32> to vector<8x8xf32>
    %481 = vector.extract_strided_slice %9 {offsets = [0, 24], sizes = [8, 8], strides = [1, 1]} : vector<8x32xf32> to vector<8x8xf32>
    %cst_202 = arith.constant dense<0.000000e+00> : vector<8x8xf32>
    %482 = tpu.matmul %480, %481, %cst_202 {dimension_numbers = #tpu.dot_dimension_numbers<[1], [1], [0], [0], [0, 0, 1, 0], [], []>} : vector<8x8xf32>, vector<8x8xf32>, vector<8x8xf32> -> vector<8x8xf32>
    %cst_203 = arith.constant -1.000000e+09 : f32
    %483 = vector.shape_cast %18 : vector<1x8xi1> to vector<1x8xi1>
    %484 = vector.broadcast %483 : vector<1x8xi1> to vector<8x8xi1>
    %485 = vector.broadcast %cst_203 : f32 to vector<8x8xf32>
    %486 = arith.select %484, %485, %482 : vector<8x8xi1>, vector<8x8xf32>
    %cst_204 = arith.constant dense<0xFF800000> : vector<8xf32>
    %487 = vector.multi_reduction <maximumf>, %486, %cst_204 [1] : vector<8x8xf32> to vector<8xf32>
    %488 = vector.shape_cast %487 : vector<8xf32> to vector<8x1xf32>
    %489 = vector.broadcast %488 : vector<8x1xf32> to vector<8x8xf32>
    %490 = arith.subf %486, %489 : vector<8x8xf32>
    %491 = math.exp %490 : vector<8x8xf32>
    %cst_205 = arith.constant dense<0.000000e+00> : vector<8xf32>
    %492 = vector.multi_reduction <add>, %491, %cst_205 [1] : vector<8x8xf32> to vector<8xf32>
    %493 = vector.shape_cast %492 : vector<8xf32> to vector<8x1xf32>
    %494 = vector.broadcast %493 : vector<8x1xf32> to vector<8x8xf32>
    %495 = arith.divf %491, %494 : vector<8x8xf32>
    %496 = vector.extract_strided_slice %10 {offsets = [0, 24], sizes = [8, 8], strides = [1, 1]} : vector<8x32xf32> to vector<8x8xf32>
    %cst_206 = arith.constant dense<0.000000e+00> : vector<8x8xf32>
    %497 = tpu.matmul %495, %496, %cst_206 {dimension_numbers = #tpu.dot_dimension_numbers<[1], [0], [0], [1], [0, 0, 1, 1], [], []>} : vector<8x8xf32>, vector<8x8xf32>, vector<8x8xf32> -> vector<8x8xf32>
    %c0_207 = arith.constant 0 : index
    %c24_208 = arith.constant 24 : index
    %498 = vector.load %arg24[%c0_207, %c24_208] : memref<8x32xf32, #tpu.memory_space<vmem>>, vector<8x8xf32>
    tpu.vector_store %arg24[%c0_207, %c24_208], %497 {strides = array<i32>} : memref<8x32xf32, #tpu.memory_space<vmem>>, vector<8x8xf32>,
    %c0_209 = arith.constant 0 : index
    %c0_210 = arith.constant 0 : index
    %499 = vector.load %arg24[%c0_209, %c0_210] : memref<8x32xf32, #tpu.memory_space<vmem>>, vector<8x32xf32>
    %c0_211 = arith.constant 0 : index
    %c0_212 = arith.constant 0 : index
    %500 = vector.load %arg17[%c0_211, %c0_212] : memref<32x32xf32, #tpu.memory_space<vmem>>, vector<32x32xf32>
    %cst_213 = arith.constant dense<0.000000e+00> : vector<8x32xf32>
    %501 = tpu.matmul %499, %500, %cst_213 {dimension_numbers = #tpu.dot_dimension_numbers<[1], [0], [0], [1], [0, 0, 1, 1], [], []>} : vector<8x32xf32>, vector<32x32xf32>, vector<8x32xf32> -> vector<8x32xf32>
    %c0_214 = arith.constant 0 : index
    %c0_215 = arith.constant 0 : index
    %502 = vector.load %arg18[%c0_214, %c0_215] : memref<1x32xf32, #tpu.memory_space<vmem>>, vector<1x32xf32>
    %503 = vector.broadcast %502 : vector<1x32xf32> to vector<8x32xf32>
    %504 = arith.addf %501, %503 : vector<8x32xf32>
    %505 = arith.addf %391, %504 : vector<8x32xf32>
    %506 = vector.extract_strided_slice %19 {offsets = [1, 2, 0], sizes = [1, 1, 32], strides = [1, 1, 1]} : vector<2x3x32xf32> to vector<1x1x32xf32>
    %507 = vector.shape_cast %506 : vector<1x1x32xf32> to vector<32xf32>
    %508 = vector.extract_strided_slice %20 {offsets = [1, 2, 0], sizes = [1, 1, 32], strides = [1, 1, 1]} : vector<2x3x32xf32> to vector<1x1x32xf32>
    %509 = vector.shape_cast %508 : vector<1x1x32xf32> to vector<32xf32>
    %cst_216 = arith.constant dense<0.000000e+00> : vector<8xf32>
    %510 = vector.multi_reduction <add>, %505, %cst_216 [1] : vector<8x32xf32> to vector<8xf32>
    %511 = vector.shape_cast %510 : vector<8xf32> to vector<8x1xf32>
    %cst_217 = arith.constant 3.200000e+01 : f32
    %512 = vector.broadcast %cst_217 : f32 to vector<8x1xf32>
    %513 = arith.divf %511, %512 : vector<8x1xf32>
    %514 = vector.broadcast %513 : vector<8x1xf32> to vector<8x32xf32>
    %515 = arith.subf %505, %514 : vector<8x32xf32>
    %516 = arith.mulf %515, %515 : vector<8x32xf32>
    %cst_218 = arith.constant dense<0.000000e+00> : vector<8xf32>
    %517 = vector.multi_reduction <add>, %516, %cst_218 [1] : vector<8x32xf32> to vector<8xf32>
    %518 = vector.shape_cast %517 : vector<8xf32> to vector<8x1xf32>
    %cst_219 = arith.constant 0.0322580636 : f32
    %519 = vector.broadcast %cst_219 : f32 to vector<8x1xf32>
    %520 = arith.mulf %518, %519 : vector<8x1xf32>
    %521 = vector.shape_cast %507 : vector<32xf32> to vector<1x32xf32>
    %522 = vector.broadcast %521 : vector<1x32xf32> to vector<8x32xf32>
    %523 = arith.mulf %522, %515 : vector<8x32xf32>
    %524 = math.sqrt %520 : vector<8x1xf32>
    %cst_220 = arith.constant 9.99999997E-7 : f32
    %525 = vector.broadcast %cst_220 : f32 to vector<8x1xf32>
    %526 = arith.addf %524, %525 : vector<8x1xf32>
    %527 = vector.broadcast %526 : vector<8x1xf32> to vector<8x32xf32>
    %528 = arith.divf %523, %527 : vector<8x32xf32>
    %529 = vector.shape_cast %509 : vector<32xf32> to vector<1x32xf32>
    %530 = vector.broadcast %529 : vector<1x32xf32> to vector<8x32xf32>
    %531 = arith.addf %528, %530 : vector<8x32xf32>
    %c0_221 = arith.constant 0 : index
    %c0_222 = arith.constant 0 : index
    %532 = vector.load %arg19[%c0_221, %c0_222] : memref<32x64xf32, #tpu.memory_space<vmem>>, vector<32x64xf32>
    %cst_223 = arith.constant dense<0.000000e+00> : vector<8x64xf32>
    %533 = tpu.matmul %531, %532, %cst_223 {dimension_numbers = #tpu.dot_dimension_numbers<[1], [0], [0], [1], [0, 0, 1, 1], [], []>} : vector<8x32xf32>, vector<32x64xf32>, vector<8x64xf32> -> vector<8x64xf32>
    %c0_224 = arith.constant 0 : index
    %c0_225 = arith.constant 0 : index
    %534 = vector.load %arg20[%c0_224, %c0_225] : memref<1x64xf32, #tpu.memory_space<vmem>>, vector<1x64xf32>
    %535 = vector.broadcast %534 : vector<1x64xf32> to vector<8x64xf32>
    %536 = arith.addf %533, %535 : vector<8x64xf32>
    %cst_226 = arith.constant 0.000000e+00 : f32
    %537 = vector.broadcast %cst_226 : f32 to vector<8x64xf32>
    %538 = arith.maximumf %536, %537 : vector<8x64xf32>
    %c0_227 = arith.constant 0 : index
    %c0_228 = arith.constant 0 : index
    %539 = vector.load %arg21[%c0_227, %c0_228] : memref<64x32xf32, #tpu.memory_space<vmem>>, vector<64x32xf32>
    %cst_229 = arith.constant dense<0.000000e+00> : vector<8x32xf32>
    %540 = tpu.matmul %538, %539, %cst_229 {dimension_numbers = #tpu.dot_dimension_numbers<[1], [0], [0], [1], [0, 0, 1, 1], [], []>} : vector<8x64xf32>, vector<64x32xf32>, vector<8x32xf32> -> vector<8x32xf32>
    %c0_230 = arith.constant 0 : index
    %c0_231 = arith.constant 0 : index
    %541 = vector.load %arg22[%c0_230, %c0_231] : memref<1x32xf32, #tpu.memory_space<vmem>>, vector<1x32xf32>
    %542 = vector.broadcast %541 : vector<1x32xf32> to vector<8x32xf32>
    %543 = arith.addf %540, %542 : vector<8x32xf32>
    %544 = arith.addf %505, %543 : vector<8x32xf32>
    %c0_232 = arith.constant 0 : index
    %c0_233 = arith.constant 0 : index
    %545 = vector.load %arg7[%c0_232, %c0_233] : memref<1x32xf32, #tpu.memory_space<vmem>>, vector<1x32xf32>
    %c0_234 = arith.constant 0 : index
    %c0_235 = arith.constant 0 : index
    %546 = vector.load %arg8[%c0_234, %c0_235] : memref<1x32xf32, #tpu.memory_space<vmem>>, vector<1x32xf32>
    %cst_236 = arith.constant dense<0.000000e+00> : vector<8xf32>
    %547 = vector.multi_reduction <add>, %544, %cst_236 [1] : vector<8x32xf32> to vector<8xf32>
    %548 = vector.shape_cast %547 : vector<8xf32> to vector<8x1xf32>
    %cst_237 = arith.constant 3.200000e+01 : f32
    %549 = vector.broadcast %cst_237 : f32 to vector<8x1xf32>
    %550 = arith.divf %548, %549 : vector<8x1xf32>
    %551 = vector.broadcast %550 : vector<8x1xf32> to vector<8x32xf32>
    %552 = arith.subf %544, %551 : vector<8x32xf32>
    %553 = arith.mulf %552, %552 : vector<8x32xf32>
    %cst_238 = arith.constant dense<0.000000e+00> : vector<8xf32>
    %554 = vector.multi_reduction <add>, %553, %cst_238 [1] : vector<8x32xf32> to vector<8xf32>
    %555 = vector.shape_cast %554 : vector<8xf32> to vector<8x1xf32>
    %cst_239 = arith.constant 0.0322580636 : f32
    %556 = vector.broadcast %cst_239 : f32 to vector<8x1xf32>
    %557 = arith.mulf %555, %556 : vector<8x1xf32>
    %558 = vector.broadcast %545 : vector<1x32xf32> to vector<8x32xf32>
    %559 = arith.mulf %558, %552 : vector<8x32xf32>
    %560 = math.sqrt %557 : vector<8x1xf32>
    %cst_240 = arith.constant 9.99999997E-7 : f32
    %561 = vector.broadcast %cst_240 : f32 to vector<8x1xf32>
    %562 = arith.addf %560, %561 : vector<8x1xf32>
    %563 = vector.broadcast %562 : vector<8x1xf32> to vector<8x32xf32>
    %564 = arith.divf %559, %563 : vector<8x32xf32>
    %565 = vector.broadcast %546 : vector<1x32xf32> to vector<8x32xf32>
    %566 = arith.addf %564, %565 : vector<8x32xf32>
    %c0_241 = arith.constant 0 : index
    %c0_242 = arith.constant 0 : index
    %c0_243 = arith.constant 0 : index
    %567 = vector.load %arg23[%c0_241, %c0_242, %c0_243] : memref<1x8x32xf32, #tpu.memory_space<vmem>>, vector<1x8x32xf32>
    %568 = vector.shape_cast %567 : vector<1x8x32xf32> to vector<8x32xf32>
    %569 = vector.shape_cast %566 : vector<8x32xf32> to vector<1x8x32xf32>
    tpu.vector_store %arg23[%c0_241, %c0_242, %c0_243], %569 {strides = array<i32>} : memref<1x8x32xf32, #tpu.memory_space<vmem>>, vector<1x8x32xf32>,
    return
  }
  func.func @transform_0(%arg0: i32) -> (i32, i32, i32) {
    %c0_i32 = arith.constant 0 : i32
    %c0_i32_0 = arith.constant 0 : i32
    %c0_i32_1 = arith.constant 0 : i32
    return %arg0, %c0_i32, %c0_i32_0 : i32, i32, i32
  }
  func.func @transform_1(%arg0: i32) -> (i32, i32, i32) {
    %c0_i32 = arith.constant 0 : i32
    %c0_i32_0 = arith.constant 0 : i32
    %c0_i32_1 = arith.constant 0 : i32
    return %arg0, %c0_i32, %c0_i32_0 : i32, i32, i32
  }
  func.func @transform_2(%arg0: i32) -> (i32, i32, i32) {
    %c0_i32 = arith.constant 0 : i32
    %c0_i32_0 = arith.constant 0 : i32
    %c0_i32_1 = arith.constant 0 : i32
    return %arg0, %c0_i32, %c0_i32_0 : i32, i32, i32
  }
  func.func @transform_3(%arg0: i32) -> (i32, i32, i32) {
    %c0_i32 = arith.constant 0 : i32
    %c0_i32_0 = arith.constant 0 : i32
    %c0_i32_1 = arith.constant 0 : i32
    return %arg0, %c0_i32, %c0_i32_0 : i32, i32, i32
  }
  func.func @transform_4(%arg0: i32) -> (i32, i32, i32) {
    %c0_i32 = arith.constant 0 : i32
    %c0_i32_0 = arith.constant 0 : i32
    %c0_i32_1 = arith.constant 0 : i32
    %c0_i32_2 = arith.constant 0 : i32
    return %c0_i32, %c0_i32_0, %c0_i32_1 : i32, i32, i32
  }
  func.func @transform_5(%arg0: i32) -> (i32, i32, i32) {
    %c0_i32 = arith.constant 0 : i32
    %c0_i32_0 = arith.constant 0 : i32
    %c0_i32_1 = arith.constant 0 : i32
    %c0_i32_2 = arith.constant 0 : i32
    return %c0_i32, %c0_i32_0, %c0_i32_1 : i32, i32, i32
  }
  func.func @transform_6(%arg0: i32) -> (i32, i32) {
    %c0_i32 = arith.constant 0 : i32
    %c0_i32_0 = arith.constant 0 : i32
    %c0_i32_1 = arith.constant 0 : i32
    return %c0_i32, %c0_i32_0 : i32, i32
  }
  func.func @transform_7(%arg0: i32) -> (i32, i32) {
    %c0_i32 = arith.constant 0 : i32
    %c0_i32_0 = arith.constant 0 : i32
    %c0_i32_1 = arith.constant 0 : i32
    return %c0_i32, %c0_i32_0 : i32, i32
  }
  func.func @transform_8(%arg0: i32) -> (i32, i32) {
    %c0_i32 = arith.constant 0 : i32
    %c0_i32_0 = arith.constant 0 : i32
    %c0_i32_1 = arith.constant 0 : i32
    return %c0_i32, %c0_i32_0 : i32, i32
  }
  func.func @transform_9(%arg0: i32) -> (i32, i32) {
    %c0_i32 = arith.constant 0 : i32
    %c0_i32_0 = arith.constant 0 : i32
    %c0_i32_1 = arith.constant 0 : i32
    return %c0_i32, %c0_i32_0 : i32, i32
  }
  func.func @transform_10(%arg0: i32) -> (i32, i32) {
    %c0_i32 = arith.constant 0 : i32
    %c0_i32_0 = arith.constant 0 : i32
    %c0_i32_1 = arith.constant 0 : i32
    return %c0_i32, %c0_i32_0 : i32, i32
  }
  func.func @transform_11(%arg0: i32) -> (i32, i32) {
    %c0_i32 = arith.constant 0 : i32
    %c0_i32_0 = arith.constant 0 : i32
    %c0_i32_1 = arith.constant 0 : i32
    return %c0_i32, %c0_i32_0 : i32, i32
  }
  func.func @transform_12(%arg0: i32) -> (i32, i32) {
    %c0_i32 = arith.constant 0 : i32
    %c0_i32_0 = arith.constant 0 : i32
    %c0_i32_1 = arith.constant 0 : i32
    return %c0_i32, %c0_i32_0 : i32, i32
  }
  func.func @transform_13(%arg0: i32) -> (i32, i32) {
    %c0_i32 = arith.constant 0 : i32
    %c0_i32_0 = arith.constant 0 : i32
    %c0_i32_1 = arith.constant 0 : i32
    return %c0_i32, %c0_i32_0 : i32, i32
  }
  func.func @transform_14(%arg0: i32) -> (i32, i32) {
    %c0_i32 = arith.constant 0 : i32
    %c0_i32_0 = arith.constant 0 : i32
    %c0_i32_1 = arith.constant 0 : i32
    return %c0_i32, %c0_i32_0 : i32, i32
  }
  func.func @transform_15(%arg0: i32) -> (i32, i32) {
    %c0_i32 = arith.constant 0 : i32
    %c0_i32_0 = arith.constant 0 : i32
    %c0_i32_1 = arith.constant 0 : i32
    return %c0_i32, %c0_i32_0 : i32, i32
  }
  func.func @transform_16(%arg0: i32) -> (i32, i32) {
    %c0_i32 = arith.constant 0 : i32
    %c0_i32_0 = arith.constant 0 : i32
    %c0_i32_1 = arith.constant 0 : i32
    return %c0_i32, %c0_i32_0 : i32, i32
  }
  func.func @transform_17(%arg0: i32) -> (i32, i32) {
    %c0_i32 = arith.constant 0 : i32
    %c0_i32_0 = arith.constant 0 : i32
    %c0_i32_1 = arith.constant 0 : i32
    return %c0_i32, %c0_i32_0 : i32, i32
  }
  func.func @transform_18(%arg0: i32) -> (i32, i32) {
    %c0_i32 = arith.constant 0 : i32
    %c0_i32_0 = arith.constant 0 : i32
    %c0_i32_1 = arith.constant 0 : i32
    return %c0_i32, %c0_i32_0 : i32, i32
  }
  func.func @transform_19(%arg0: i32) -> (i32, i32) {
    %c0_i32 = arith.constant 0 : i32
    %c0_i32_0 = arith.constant 0 : i32
    %c0_i32_1 = arith.constant 0 : i32
    return %c0_i32, %c0_i32_0 : i32, i32
  }
  func.func @transform_20(%arg0: i32) -> (i32, i32) {
    %c0_i32 = arith.constant 0 : i32
    %c0_i32_0 = arith.constant 0 : i32
    %c0_i32_1 = arith.constant 0 : i32
    return %c0_i32, %c0_i32_0 : i32, i32
  }
  func.func @transform_21(%arg0: i32) -> (i32, i32) {
    %c0_i32 = arith.constant 0 : i32
    %c0_i32_0 = arith.constant 0 : i32
    %c0_i32_1 = arith.constant 0 : i32
    return %c0_i32, %c0_i32_0 : i32, i32
  }
  func.func @transform_22(%arg0: i32) -> (i32, i32, i32) {
    %c0_i32 = arith.constant 0 : i32
    %c0_i32_0 = arith.constant 0 : i32
    %c0_i32_1 = arith.constant 0 : i32
    return %arg0, %c0_i32, %c0_i32_0 : i32, i32, i32
  }
}

</mosaic_0001>

<llo_original>
// kernel: decoder_forward.1
$region0: #{decoder_forward.1}
  #allocation0 [shape = 'u32[]', space=smem, size = 0x4, offset = 0x4, fixed_abs, tag = 'smem constant byte address 0x4 - core index']
  #allocation1 [shape = 'u32[144,128]{1,0:T(1,128)}', space=vmem, size = 0x12000, scoped, tag = 'internal scratch']
  #allocation2 [shape = 'f32[8,32]{1,0:T(8,128)}', space=vmem, size = 0x1000, scoped, tag = 'scratch operand']
  %s0 = inlined_call_operand.hbm [shape: f32[2,8,32], index: 0, kind: input, shape index: {}]
  %s1 = inlined_call_operand.hbm [shape: f32[2,8,32], index: 1, kind: input, shape index: {}]
  %s2 = inlined_call_operand.vmem [shape: f32[2,8,8], index: 2, kind: input, shape index: {}]
  %s3 = inlined_call_operand.hbm [shape: f32[2,1,8], index: 3, kind: input, shape index: {}]
  %s4 = inlined_call_operand.vmem [shape: f32[2,3,32], index: 4, kind: input, shape index: {}]
  %s5 = inlined_call_operand.vmem [shape: f32[2,3,32], index: 5, kind: input, shape index: {}]
  %s6 = inlined_call_operand.hbm [shape: f32[1,32], index: 6, kind: input, shape index: {}]
  %s7 = inlined_call_operand.hbm [shape: f32[1,32], index: 7, kind: input, shape index: {}]
  %s8 = inlined_call_operand.vmem [shape: f32[32,96], index: 8, kind: input, shape index: {}]
  %s9 = inlined_call_operand.hbm [shape: f32[1,96], index: 9, kind: input, shape index: {}]
  %s10 = inlined_call_operand.vmem [shape: f32[32,32], index: 10, kind: input, shape index: {}]
  %s11 = inlined_call_operand.hbm [shape: f32[1,32], index: 11, kind: input, shape index: {}]
  %s12 = inlined_call_operand.vmem [shape: f32[32,32], index: 12, kind: input, shape index: {}]
  %s13 = inlined_call_operand.hbm [shape: f32[1,32], index: 13, kind: input, shape index: {}]
  %s14 = inlined_call_operand.vmem [shape: f32[32,64], index: 14, kind: input, shape index: {}]
  %s15 = inlined_call_operand.hbm [shape: f32[1,64], index: 15, kind: input, shape index: {}]
  %s16 = inlined_call_operand.hbm [shape: f32[32,32], index: 16, kind: input, shape index: {}]
  %s17 = inlined_call_operand.hbm [shape: f32[1,32], index: 17, kind: input, shape index: {}]
  %s18 = inlined_call_operand.hbm [shape: f32[32,64], index: 18, kind: input, shape index: {}]
  %s19 = inlined_call_operand.hbm [shape: f32[1,64], index: 19, kind: input, shape index: {}]
  %s20 = inlined_call_operand.vmem [shape: f32[64,32], index: 20, kind: input, shape index: {}]
  %s21 = inlined_call_operand.hbm [shape: f32[1,32], index: 21, kind: input, shape index: {}]
  %s22 = inlined_call_operand.hbm [shape: f32[2,8,32], index: 22, kind: output, shape index: {}]
  %s23 = sld [smem:[#allocation0]]
  $region177: #{decoder_forward.1} parent=0
    _
  %s25 = ssub.s32 1, %s23
  %s26 = scalar_select 0, %s25, %s23
  $region1: #{decoder_forward.1} parent=0
    #allocation3 [shape = 'u8[8192]{0}', space=vmem, size = 0x2000, scoped, tag = 'input window, operand 0']
    #allocation4 [shape = 's32[2]{0}', space=sflag, size = 0x8, scoped, tag = 'scoped memory for decoder_forward.1']
    #allocation5 [shape = 's32[2]{0}', space=sflag, size = 0x8, scoped, tag = 'scoped memory for decoder_forward.1']
    #allocation6 [shape = 'u8[8192]{0}', space=vmem, size = 0x2000, scoped, tag = 'input window, operand 1']
    #allocation7 [shape = 's32[2]{0}', space=sflag, size = 0x8, scoped, tag = 'scoped memory for decoder_forward.1']
    #allocation8 [shape = 'u8[1024]{0}', space=vmem, size = 0x400, scoped, tag = 'input window, operand 3']
    #allocation9 [shape = 'u8[512]{0}', space=vmem, size = 0x400, scoped, tag = 'input window, operand 6, single buffered']
    #allocation10 [shape = 's32[1]{0}', space=sflag, size = 0x4, scoped, tag = 'scoped memory for decoder_forward.1']
    #allocation11 [shape = 'u8[512]{0}', space=vmem, size = 0x400, scoped, tag = 'input window, operand 7, single buffered']
    #allocation12 [shape = 'u8[512]{0}', space=vmem, size = 0x400, scoped, tag = 'input window, operand 9, single buffered']
    #allocation13 [shape = 's32[1]{0}', space=sflag, size = 0x4, scoped, tag = 'scoped memory for decoder_forward.1']
    #allocation14 [shape = 'u8[512]{0}', space=vmem, size = 0x400, scoped, tag = 'input window, operand 11, single buffered']
    #allocation15 [shape = 'u8[512]{0}', space=vmem, size = 0x400, scoped, tag = 'input window, operand 13, single buffered']
    #allocation16 [shape = 's32[1]{0}', space=sflag, size = 0x4, scoped, tag = 'scoped memory for decoder_forward.1']
    #allocation17 [shape = 'u8[512]{0}', space=vmem, size = 0x400, scoped, tag = 'input window, operand 15, single buffered']
    #allocation18 [shape = 'u8[16384]{0}', space=vmem, size = 0x4000, scoped, tag = 'input window, operand 16, single buffered']
    #allocation19 [shape = 's32[1]{0}', space=sflag, size = 0x4, scoped, tag = 'scoped memory for decoder_forward.1']
    #allocation20 [shape = 'u8[512]{0}', space=vmem, size = 0x400, scoped, tag = 'input window, operand 17, single buffered']
    #allocation21 [shape = 'u8[16384]{0}', space=vmem, size = 0x4000, scoped, tag = 'input window, operand 18, single buffered']
    #allocation22 [shape = 's32[1]{0}', space=sflag, size = 0x4, scoped, tag = 'scoped memory for decoder_forward.1']
    #allocation23 [shape = 'u8[512]{0}', space=vmem, size = 0x400, scoped, tag = 'input window, operand 19, single buffered']
    #allocation24 [shape = 'u8[512]{0}', space=vmem, size = 0x400, scoped, tag = 'input window, operand 21, single buffered']
    #allocation25 [shape = 's32[1]{0}', space=sflag, size = 0x4, scoped, tag = 'scoped memory for decoder_forward.1']
    #allocation26 [shape = 'u8[8192]{0}', space=vmem, size = 0x2000, scoped, tag = 'output window, operand 0']
    %27 = vsyncpa [#allocation4], 0
    %s28 = scalar_lea.sflag [#allocation4], 1
    %29 = vsyncpa %s28, 0
    %30 = vsyncpa [#allocation7], 0
    %s31 = scalar_lea.sflag [#allocation7], 1
    %32 = vsyncpa %s31, 0
    %33 = vsyncpa [#allocation10], 0
    %34 = vsyncpa [#allocation13], 0
    %35 = vsyncpa [#allocation16], 0
    %36 = vsyncpa [#allocation19], 0
    %37 = vsyncpa [#allocation22], 0
    %38 = vsyncpa [#allocation25], 0
    %39 = vsyncpa [#allocation5], 0
    %s40 = scalar_lea.sflag [#allocation5], 1
    %41 = vsyncpa %s40, 0
    loop: start=0, step=1, limit=4
    $region2: #{decoder_forward.1} parent=1 // loop_pre_header
      _
    $region3: #{decoder_forward.1} parent=1 // loop_header
      %s43 = sphi 0, %s47
      %p44 = scmp.ge.s32.totalorder %s43, 4
      %s53 = sphi 0, %s55
      %s56 = sphi 0, %s53
      %s57 = sphi 0, %s56
      %s73 = sphi 0, %s57
      %s79 = sphi 0, %s81
      %s82 = sphi 0, %s79
      %s83 = sphi 0, %s82
      %s99 = sphi 0, %s83
      %s105 = sphi 0, %s107
      %s108 = sphi 0, %s105
      %s109 = sphi 0, %s108
      %s125 = sphi 0, %s109
      %s131 = sphi 0, %s133
      %s134 = sphi 0, %s131
      %s135 = sphi 0, %s134
      %s151 = sphi 0, %s135
      %s155 = sphi 0, %s155
      %s157 = sphi 0, %s155
      %s158 = sphi 0, %s157
      %s172 = sphi 0, %s158
      %s176 = sphi 0, %s176
      %s178 = sphi 0, %s176
      %s179 = sphi 0, %s178
      %s193 = sphi 0, %s179
      %s197 = sphi 0, %s197
      %s199 = sphi 0, %s197
      %s200 = sphi 0, %s199
      %s214 = sphi 0, %s200
      %s218 = sphi 0, %s218
      %s220 = sphi 0, %s218
      %s221 = sphi 0, %s220
      %s235 = sphi 0, %s221
      %s239 = sphi 0, %s239
      %s241 = sphi 0, %s239
      %s242 = sphi 0, %s241
      %s256 = sphi 0, %s242
      %s260 = sphi 0, %s260
      %s262 = sphi 0, %s260
      %s263 = sphi 0, %s262
      %s277 = sphi 0, %s263
      %s281 = sphi 0, %s281
      %s283 = sphi 0, %s281
      %s284 = sphi 0, %s283
      %s298 = sphi 0, %s284
      %s302 = sphi 0, %s302
      %s304 = sphi 0, %s302
      %s305 = sphi 0, %s304
      %s319 = sphi 0, %s305
      %s323 = sphi 0, %s323
      %s325 = sphi 0, %s323
      %s326 = sphi 0, %s325
      %s340 = sphi 0, %s326
      %s344 = sphi 0, %s344
      %s346 = sphi 0, %s344
      %s347 = sphi 0, %s346
      %s361 = sphi 0, %s347
      %s365 = sphi 0, %s365
      %s367 = sphi 0, %s365
      %s368 = sphi 0, %s367
      %s382 = sphi 0, %s368
      %s386 = sphi 0, %s386
      %s388 = sphi 0, %s386
      %s389 = sphi 0, %s388
      %s403 = sphi 0, %s389
      %s407 = sphi 0, %s407
      %s409 = sphi 0, %s407
      %s410 = sphi 0, %s409
      %s424 = sphi 0, %s410
      %s428 = sphi 0, %s428
      %s430 = sphi 0, %s428
      %s431 = sphi 0, %s430
      %s445 = sphi 0, %s431
      %s449 = sphi 0, %s449
      %s451 = sphi 0, %s449
      %s452 = sphi 0, %s451
      %s466 = sphi 0, %s452
      %s470 = sphi 0, %s470
      %s472 = sphi 0, %s470
      %s473 = sphi 0, %s472
      %s487 = sphi 0, %s473
      %s491 = sphi 0, %s491
      %s493 = sphi 0, %s491
      %s494 = sphi 0, %s493
      %s508 = sphi 0, %s494
      %s512 = sphi 0, %s512
      %s514 = sphi 0, %s512
      %s515 = sphi 0, %s514
      %s529 = sphi 0, %s515
      %s535 = sphi 0, %s537
      %s538 = sphi 0, %s535
      %s539 = sphi 0, %s538
      %s555 = sphi 0, %s539
    $region4: #{decoder_forward.1} parent=1 // loop_header_branch
      %46 = sbr.rel (%p44) target = $region8
    $region5: #{decoder_forward.1} parent=1 // loop_body
      %s48 = ssub.s32 %s43, 1
      %s49 = ssub.s32 %s43, 2
      %s50 = sadd.s32 %s43, 1
      %s51 = ssub.s32 %s43, %s50
      %p52 = scmp.eq.s32.totalorder %s51, 0
      %s54 = sadd.s32 %s53, 1
      %s55 = scalar_select %p52, %s53, %s54
      %p58 = pneg %p52
      %p59 = scmp.eq.s32.totalorder %s43, 1
      %p60 = por %p58, %p59
      %p61 = scmp.ne.s32.totalorder %s53, %s56
      %p62 = scmp.eq.s32.totalorder %s43, 0
      %p63 = por %p61, %p62
      %p64 = scmp.ne.s32.totalorder %s53, %s56
      %p65 = scmp.eq.s32.totalorder %s48, 1
      %p66 = por %p64, %p65
      %p67 = scmp.ne.s32.totalorder %s56, %s57
      %p68 = scmp.eq.s32.totalorder %s48, 0
      %p69 = por %p67, %p68
      %p70 = scmp.ne.s32.totalorder %s56, %s57
      %p71 = scmp.eq.s32.totalorder %s49, 1
      %p72 = por %p70, %p71
      %p74 = scmp.ne.s32.totalorder %s57, %s73
      %p75 = scmp.eq.s32.totalorder %s49, 0
      %p76 = por %p74, %p75
      %s77 = ssub.s32 %s43, %s50
      %p78 = scmp.eq.s32.totalorder %s77, 0
      %s80 = sadd.s32 %s79, 1
      %s81 = scalar_select %p78, %s79, %s80
      %p84 = pneg %p78
      %p85 = scmp.eq.s32.totalorder %s43, 1
      %p86 = por %p84, %p85
      %p87 = scmp.ne.s32.totalorder %s79, %s82
      %p88 = scmp.eq.s32.totalorder %s43, 0
      %p89 = por %p87, %p88
      %p90 = scmp.ne.s32.totalorder %s79, %s82
      %p91 = scmp.eq.s32.totalorder %s48, 1
      %p92 = por %p90, %p91
      %p93 = scmp.ne.s32.totalorder %s82, %s83
      %p94 = scmp.eq.s32.totalorder %s48, 0
      %p95 = por %p93, %p94
      %p96 = scmp.ne.s32.totalorder %s82, %s83
      %p97 = scmp.eq.s32.totalorder %s49, 1
      %p98 = por %p96, %p97
      %p100 = scmp.ne.s32.totalorder %s83, %s99
      %p101 = scmp.eq.s32.totalorder %s49, 0
      %p102 = por %p100, %p101
      %s103 = ssub.s32 %s43, %s50
      %p104 = scmp.eq.s32.totalorder %s103, 0
      %s106 = sadd.s32 %s105, 1
      %s107 = scalar_select %p104, %s105, %s106
      %p110 = pneg %p104
      %p111 = scmp.eq.s32.totalorder %s43, 1
      %p112 = por %p110, %p111
      %p113 = scmp.ne.s32.totalorder %s105, %s108
      %p114 = scmp.eq.s32.totalorder %s43, 0
      %p115 = por %p113, %p114
      %p116 = scmp.ne.s32.totalorder %s105, %s108
      %p117 = scmp.eq.s32.totalorder %s48, 1
      %p118 = por %p116, %p117
      %p119 = scmp.ne.s32.totalorder %s108, %s109
      %p120 = scmp.eq.s32.totalorder %s48, 0
      %p121 = por %p119, %p120
      %p122 = scmp.ne.s32.totalorder %s108, %s109
      %p123 = scmp.eq.s32.totalorder %s49, 1
      %p124 = por %p122, %p123
      %p126 = scmp.ne.s32.totalorder %s109, %s125
      %p127 = scmp.eq.s32.totalorder %s49, 0
      %p128 = por %p126, %p127
      %s129 = ssub.s32 %s43, %s50
      %p130 = scmp.eq.s32.totalorder %s129, 0
      %s132 = sadd.s32 %s131, 1
      %s133 = scalar_select %p130, %s131, %s132
      %p136 = pneg %p130
      %p137 = scmp.eq.s32.totalorder %s43, 1
      %p138 = por %p136, %p137
      %p139 = scmp.ne.s32.totalorder %s131, %s134
      %p140 = scmp.eq.s32.totalorder %s43, 0
      %p141 = por %p139, %p140
      %p142 = scmp.ne.s32.totalorder %s131, %s134
      %p143 = scmp.eq.s32.totalorder %s48, 1
      %p144 = por %p142, %p143
      %p145 = scmp.ne.s32.totalorder %s134, %s135
      %p146 = scmp.eq.s32.totalorder %s48, 0
      %p147 = por %p145, %p146
      %p148 = scmp.ne.s32.totalorder %s134, %s135
      %p149 = scmp.eq.s32.totalorder %s49, 1
      %p150 = por %p148, %p149
      %p152 = scmp.ne.s32.totalorder %s135, %s151
      %p153 = scmp.eq.s32.totalorder %s49, 0
      %p154 = por %p152, %p153
      %s156 = sadd.s32 %s155, 1
      %p159 = scmp.eq.s32.totalorder %s43, 1
      %p160 = scmp.ne.s32.totalorder %s155, %s157
      %p161 = scmp.eq.s32.totalorder %s43, 0
      %p162 = por %p160, %p161
      %p163 = scmp.ne.s32.totalorder %s155, %s157
      %p164 = scmp.eq.s32.totalorder %s48, 1
      %p165 = por %p163, %p164
      %p166 = scmp.ne.s32.totalorder %s157, %s158
      %p167 = scmp.eq.s32.totalorder %s48, 0
      %p168 = por %p166, %p167
      %p169 = scmp.ne.s32.totalorder %s157, %s158
      %p170 = scmp.eq.s32.totalorder %s49, 1
      %p171 = por %p169, %p170
      %p173 = scmp.ne.s32.totalorder %s158, %s172
      %p174 = scmp.eq.s32.totalorder %s49, 0
      %p175 = por %p173, %p174
      %s177 = sadd.s32 %s176, 1
      %p180 = scmp.eq.s32.totalorder %s43, 1
      %p181 = scmp.ne.s32.totalorder %s176, %s178
      %p182 = scmp.eq.s32.totalorder %s43, 0
      %p183 = por %p181, %p182
      %p184 = scmp.ne.s32.totalorder %s176, %s178
      %p185 = scmp.eq.s32.totalorder %s48, 1
      %p186 = por %p184, %p185
      %p187 = scmp.ne.s32.totalorder %s178, %s179
      %p188 = scmp.eq.s32.totalorder %s48, 0
      %p189 = por %p187, %p188
      %p190 = scmp.ne.s32.totalorder %s178, %s179
      %p191 = scmp.eq.s32.totalorder %s49, 1
      %p192 = por %p190, %p191
      %p194 = scmp.ne.s32.totalorder %s179, %s193
      %p195 = scmp.eq.s32.totalorder %s49, 0
      %p196 = por %p194, %p195
      %s198 = sadd.s32 %s197, 1
      %p201 = scmp.eq.s32.totalorder %s43, 1
      %p202 = scmp.ne.s32.totalorder %s197, %s199
      %p203 = scmp.eq.s32.totalorder %s43, 0
      %p204 = por %p202, %p203
      %p205 = scmp.ne.s32.totalorder %s197, %s199
      %p206 = scmp.eq.s32.totalorder %s48, 1
      %p207 = por %p205, %p206
      %p208 = scmp.ne.s32.totalorder %s199, %s200
      %p209 = scmp.eq.s32.totalorder %s48, 0
      %p210 = por %p208, %p209
      %p211 = scmp.ne.s32.totalorder %s199, %s200
      %p212 = scmp.eq.s32.totalorder %s49, 1
      %p213 = por %p211, %p212
      %p215 = scmp.ne.s32.totalorder %s200, %s214
      %p216 = scmp.eq.s32.totalorder %s49, 0
      %p217 = por %p215, %p216
      %s219 = sadd.s32 %s218, 1
      %p222 = scmp.eq.s32.totalorder %s43, 1
      %p223 = scmp.ne.s32.totalorder %s218, %s220
      %p224 = scmp.eq.s32.totalorder %s43, 0
      %p225 = por %p223, %p224
      %p226 = scmp.ne.s32.totalorder %s218, %s220
      %p227 = scmp.eq.s32.totalorder %s48, 1
      %p228 = por %p226, %p227
      %p229 = scmp.ne.s32.totalorder %s220, %s221
      %p230 = scmp.eq.s32.totalorder %s48, 0
      %p231 = por %p229, %p230
      %p232 = scmp.ne.s32.totalorder %s220, %s221
      %p233 = scmp.eq.s32.totalorder %s49, 1
      %p234 = por %p232, %p233
      %p236 = scmp.ne.s32.totalorder %s221, %s235
      %p237 = scmp.eq.s32.totalorder %s49, 0
      %p238 = por %p236, %p237
      %s240 = sadd.s32 %s239, 1
      %p243 = scmp.eq.s32.totalorder %s43, 1
      %p244 = scmp.ne.s32.totalorder %s239, %s241
      %p245 = scmp.eq.s32.totalorder %s43, 0
      %p246 = por %p244, %p245
      %p247 = scmp.ne.s32.totalorder %s239, %s241
      %p248 = scmp.eq.s32.totalorder %s48, 1
      %p249 = por %p247, %p248
      %p250 = scmp.ne.s32.totalorder %s241, %s242
      %p251 = scmp.eq.s32.totalorder %s48, 0
      %p252 = por %p250, %p251
      %p253 = scmp.ne.s32.totalorder %s241, %s242
      %p254 = scmp.eq.s32.totalorder %s49, 1
      %p255 = por %p253, %p254
      %p257 = scmp.ne.s32.totalorder %s242, %s256
      %p258 = scmp.eq.s32.totalorder %s49, 0
      %p259 = por %p257, %p258
      %s261 = sadd.s32 %s260, 1
      %p264 = scmp.eq.s32.totalorder %s43, 1
      %p265 = scmp.ne.s32.totalorder %s260, %s262
      %p266 = scmp.eq.s32.totalorder %s43, 0
      %p267 = por %p265, %p266
      %p268 = scmp.ne.s32.totalorder %s260, %s262
      %p269 = scmp.eq.s32.totalorder %s48, 1
      %p270 = por %p268, %p269
      %p271 = scmp.ne.s32.totalorder %s262, %s263
      %p272 = scmp.eq.s32.totalorder %s48, 0
      %p273 = por %p271, %p272
      %p274 = scmp.ne.s32.totalorder %s262, %s263
      %p275 = scmp.eq.s32.totalorder %s49, 1
      %p276 = por %p274, %p275
      %p278 = scmp.ne.s32.totalorder %s263, %s277
      %p279 = scmp.eq.s32.totalorder %s49, 0
      %p280 = por %p278, %p279
      %s282 = sadd.s32 %s281, 1
      %p285 = scmp.eq.s32.totalorder %s43, 1
      %p286 = scmp.ne.s32.totalorder %s281, %s283
      %p287 = scmp.eq.s32.totalorder %s43, 0
      %p288 = por %p286, %p287
      %p289 = scmp.ne.s32.totalorder %s281, %s283
      %p290 = scmp.eq.s32.totalorder %s48, 1
      %p291 = por %p289, %p290
      %p292 = scmp.ne.s32.totalorder %s283, %s284
      %p293 = scmp.eq.s32.totalorder %s48, 0
      %p294 = por %p292, %p293
      %p295 = scmp.ne.s32.totalorder %s283, %s284
      %p296 = scmp.eq.s32.totalorder %s49, 1
      %p297 = por %p295, %p296
      %p299 = scmp.ne.s32.totalorder %s284, %s298
      %p300 = scmp.eq.s32.totalorder %s49, 0
      %p301 = por %p299, %p300
      %s303 = sadd.s32 %s302, 1
      %p306 = scmp.eq.s32.totalorder %s43, 1
      %p307 = scmp.ne.s32.totalorder %s302, %s304
      %p308 = scmp.eq.s32.totalorder %s43, 0
      %p309 = por %p307, %p308
      %p310 = scmp.ne.s32.totalorder %s302, %s304
      %p311 = scmp.eq.s32.totalorder %s48, 1
      %p312 = por %p310, %p311
      %p313 = scmp.ne.s32.totalorder %s304, %s305
      %p314 = scmp.eq.s32.totalorder %s48, 0
      %p315 = por %p313, %p314
      %p316 = scmp.ne.s32.totalorder %s304, %s305
      %p317 = scmp.eq.s32.totalorder %s49, 1
      %p318 = por %p316, %p317
      %p320 = scmp.ne.s32.totalorder %s305, %s319
      %p321 = scmp.eq.s32.totalorder %s49, 0
      %p322 = por %p320, %p321
      %s324 = sadd.s32 %s323, 1
      %p327 = scmp.eq.s32.totalorder %s43, 1
      %p328 = scmp.ne.s32.totalorder %s323, %s325
      %p329 = scmp.eq.s32.totalorder %s43, 0
      %p330 = por %p328, %p329
      %p331 = scmp.ne.s32.totalorder %s323, %s325
      %p332 = scmp.eq.s32.totalorder %s48, 1
      %p333 = por %p331, %p332
      %p334 = scmp.ne.s32.totalorder %s325, %s326
      %p335 = scmp.eq.s32.totalorder %s48, 0
      %p336 = por %p334, %p335
      %p337 = scmp.ne.s32.totalorder %s325, %s326
      %p338 = scmp.eq.s32.totalorder %s49, 1
      %p339 = por %p337, %p338
      %p341 = scmp.ne.s32.totalorder %s326, %s340
      %p342 = scmp.eq.s32.totalorder %s49, 0
      %p343 = por %p341, %p342
      %s345 = sadd.s32 %s344, 1
      %p348 = scmp.eq.s32.totalorder %s43, 1
      %p349 = scmp.ne.s32.totalorder %s344, %s346
      %p350 = scmp.eq.s32.totalorder %s43, 0
      %p351 = por %p349, %p350
      %p352 = scmp.ne.s32.totalorder %s344, %s346
      %p353 = scmp.eq.s32.totalorder %s48, 1
      %p354 = por %p352, %p353
      %p355 = scmp.ne.s32.totalorder %s346, %s347
      %p356 = scmp.eq.s32.totalorder %s48, 0
      %p357 = por %p355, %p356
      %p358 = scmp.ne.s32.totalorder %s346, %s347
      %p359 = scmp.eq.s32.totalorder %s49, 1
      %p360 = por %p358, %p359
      %p362 = scmp.ne.s32.totalorder %s347, %s361
      %p363 = scmp.eq.s32.totalorder %s49, 0
      %p364 = por %p362, %p363
      %s366 = sadd.s32 %s365, 1
      %p369 = scmp.eq.s32.totalorder %s43, 1
      %p370 = scmp.ne.s32.totalorder %s365, %s367
      %p371 = scmp.eq.s32.totalorder %s43, 0
      %p372 = por %p370, %p371
      %p373 = scmp.ne.s32.totalorder %s365, %s367
      %p374 = scmp.eq.s32.totalorder %s48, 1
      %p375 = por %p373, %p374
      %p376 = scmp.ne.s32.totalorder %s367, %s368
      %p377 = scmp.eq.s32.totalorder %s48, 0
      %p378 = por %p376, %p377
      %p379 = scmp.ne.s32.totalorder %s367, %s368
      %p380 = scmp.eq.s32.totalorder %s49, 1
      %p381 = por %p379, %p380
      %p383 = scmp.ne.s32.totalorder %s368, %s382
      %p384 = scmp.eq.s32.totalorder %s49, 0
      %p385 = por %p383, %p384
      %s387 = sadd.s32 %s386, 1
      %p390 = scmp.eq.s32.totalorder %s43, 1
      %p391 = scmp.ne.s32.totalorder %s386, %s388
      %p392 = scmp.eq.s32.totalorder %s43, 0
      %p393 = por %p391, %p392
      %p394 = scmp.ne.s32.totalorder %s386, %s388
      %p395 = scmp.eq.s32.totalorder %s48, 1
      %p396 = por %p394, %p395
      %p397 = scmp.ne.s32.totalorder %s388, %s389
      %p398 = scmp.eq.s32.totalorder %s48, 0
      %p399 = por %p397, %p398
      %p400 = scmp.ne.s32.totalorder %s388, %s389
      %p401 = scmp.eq.s32.totalorder %s49, 1
      %p402 = por %p400, %p401
      %p404 = scmp.ne.s32.totalorder %s389, %s403
      %p405 = scmp.eq.s32.totalorder %s49, 0
      %p406 = por %p404, %p405
      %s408 = sadd.s32 %s407, 1
      %p411 = scmp.eq.s32.totalorder %s43, 1
      %p412 = scmp.ne.s32.totalorder %s407, %s409
      %p413 = scmp.eq.s32.totalorder %s43, 0
      %p414 = por %p412, %p413
      %p415 = scmp.ne.s32.totalorder %s407, %s409
      %p416 = scmp.eq.s32.totalorder %s48, 1
      %p417 = por %p415, %p416
      %p418 = scmp.ne.s32.totalorder %s409, %s410
      %p419 = scmp.eq.s32.totalorder %s48, 0
      %p420 = por %p418, %p419
      %p421 = scmp.ne.s32.totalorder %s409, %s410
      %p422 = scmp.eq.s32.totalorder %s49, 1
      %p423 = por %p421, %p422
      %p425 = scmp.ne.s32.totalorder %s410, %s424
      %p426 = scmp.eq.s32.totalorder %s49, 0
      %p427 = por %p425, %p426
      %s429 = sadd.s32 %s428, 1
      %p432 = scmp.eq.s32.totalorder %s43, 1
      %p433 = scmp.ne.s32.totalorder %s428, %s430
      %p434 = scmp.eq.s32.totalorder %s43, 0
      %p435 = por %p433, %p434
      %p436 = scmp.ne.s32.totalorder %s428, %s430
      %p437 = scmp.eq.s32.totalorder %s48, 1
      %p438 = por %p436, %p437
      %p439 = scmp.ne.s32.totalorder %s430, %s431
      %p440 = scmp.eq.s32.totalorder %s48, 0
      %p441 = por %p439, %p440
      %p442 = scmp.ne.s32.totalorder %s430, %s431
      %p443 = scmp.eq.s32.totalorder %s49, 1
      %p444 = por %p442, %p443
      %p446 = scmp.ne.s32.totalorder %s431, %s445
      %p447 = scmp.eq.s32.totalorder %s49, 0
      %p448 = por %p446, %p447
      %s450 = sadd.s32 %s449, 1
      %p453 = scmp.eq.s32.totalorder %s43, 1
      %p454 = scmp.ne.s32.totalorder %s449, %s451
      %p455 = scmp.eq.s32.totalorder %s43, 0
      %p456 = por %p454, %p455
      %p457 = scmp.ne.s32.totalorder %s449, %s451
      %p458 = scmp.eq.s32.totalorder %s48, 1
      %p459 = por %p457, %p458
      %p460 = scmp.ne.s32.totalorder %s451, %s452
      %p461 = scmp.eq.s32.totalorder %s48, 0
      %p462 = por %p460, %p461
      %p463 = scmp.ne.s32.totalorder %s451, %s452
      %p464 = scmp.eq.s32.totalorder %s49, 1
      %p465 = por %p463, %p464
      %p467 = scmp.ne.s32.totalorder %s452, %s466
      %p468 = scmp.eq.s32.totalorder %s49, 0
      %p469 = por %p467, %p468
      %s471 = sadd.s32 %s470, 1
      %p474 = scmp.eq.s32.totalorder %s43, 1
      %p475 = scmp.ne.s32.totalorder %s470, %s472
      %p476 = scmp.eq.s32.totalorder %s43, 0
      %p477 = por %p475, %p476
      %p478 = scmp.ne.s32.totalorder %s470, %s472
      %p479 = scmp.eq.s32.totalorder %s48, 1
      %p480 = por %p478, %p479
      %p481 = scmp.ne.s32.totalorder %s472, %s473
      %p482 = scmp.eq.s32.totalorder %s48, 0
      %p483 = por %p481, %p482
      %p484 = scmp.ne.s32.totalorder %s472, %s473
      %p485 = scmp.eq.s32.totalorder %s49, 1
      %p486 = por %p484, %p485
      %p488 = scmp.ne.s32.totalorder %s473, %s487
      %p489 = scmp.eq.s32.totalorder %s49, 0
      %p490 = por %p488, %p489
      %s492 = sadd.s32 %s491, 1
      %p495 = scmp.eq.s32.totalorder %s43, 1
      %p496 = scmp.ne.s32.totalorder %s491, %s493
      %p497 = scmp.eq.s32.totalorder %s43, 0
      %p498 = por %p496, %p497
      %p499 = scmp.ne.s32.totalorder %s491, %s493
      %p500 = scmp.eq.s32.totalorder %s48, 1
      %p501 = por %p499, %p500
      %p502 = scmp.ne.s32.totalorder %s493, %s494
      %p503 = scmp.eq.s32.totalorder %s48, 0
      %p504 = por %p502, %p503
      %p505 = scmp.ne.s32.totalorder %s493, %s494
      %p506 = scmp.eq.s32.totalorder %s49, 1
      %p507 = por %p505, %p506
      %p509 = scmp.ne.s32.totalorder %s494, %s508
      %p510 = scmp.eq.s32.totalorder %s49, 0
      %p511 = por %p509, %p510
      %s513 = sadd.s32 %s512, 1
      %p516 = scmp.eq.s32.totalorder %s43, 1
      %p517 = scmp.ne.s32.totalorder %s512, %s514
      %p518 = scmp.eq.s32.totalorder %s43, 0
      %p519 = por %p517, %p518
      %p520 = scmp.ne.s32.totalorder %s512, %s514
      %p521 = scmp.eq.s32.totalorder %s48, 1
      %p522 = por %p520, %p521
      %p523 = scmp.ne.s32.totalorder %s514, %s515
      %p524 = scmp.eq.s32.totalorder %s48, 0
      %p525 = por %p523, %p524
      %p526 = scmp.ne.s32.totalorder %s514, %s515
      %p527 = scmp.eq.s32.totalorder %s49, 1
      %p528 = por %p526, %p527
      %p530 = scmp.ne.s32.totalorder %s515, %s529
      %p531 = scmp.eq.s32.totalorder %s49, 0
      %p532 = por %p530, %p531
      %s533 = ssub.s32 %s43, %s50
      %p534 = scmp.eq.s32.totalorder %s533, 0
      %s536 = sadd.s32 %s535, 1
      %s537 = scalar_select %p534, %s535, %s536
      %p540 = pneg %p534
      %p541 = scmp.eq.s32.totalorder %s43, 1
      %p542 = por %p540, %p541
      %p543 = scmp.ne.s32.totalorder %s535, %s538
      %p544 = scmp.eq.s32.totalorder %s43, 0
      %p545 = por %p543, %p544
      %p546 = scmp.ne.s32.totalorder %s535, %s538
      %p547 = scmp.eq.s32.totalorder %s48, 1
      %p548 = por %p546, %p547
      %p549 = scmp.ne.s32.totalorder %s538, %s539
      %p550 = scmp.eq.s32.totalorder %s48, 0
      %p551 = por %p549, %p550
      %p552 = scmp.ne.s32.totalorder %s538, %s539
      %p553 = scmp.eq.s32.totalorder %s49, 1
      %p554 = por %p552, %p553
      %p556 = scmp.ne.s32.totalorder %s539, %s555
      %p557 = scmp.eq.s32.totalorder %s49, 0
      %p558 = por %p556, %p557
      %p559 = scmp.le.s32.totalorder 1, %s43
      %p560 = scmp.lt.s32.totalorder %s43, 3
      %p561 = pnand %p559, %p560
      %p562 = pneg %p561
      // Predicated region
      $region9: #{decoder_forward.1} parent=5 // pred_check
        _
      $region10: #{decoder_forward.1} parent=5 // pred_check_branch
        %564 = sbr.rel (%p561) target = $region12
      $region11: #{decoder_forward.1} parent=5 // pred_region
        %s565 = ssub.s32 %s43, 1
        // Predicated region
        $region13: #{decoder_forward.1} parent=11 // pred_check
          %p566 = pneg %p168
        $region14: #{decoder_forward.1} parent=11 // pred_check_branch
          %568 = sbr.rel (%p566) target = $region16
        $region15: #{decoder_forward.1} parent=11 // pred_region
          _
        $region16: #{decoder_forward.1} parent=11 // pred_fallthru
          _
        // Predicated region
        $region17: #{decoder_forward.1} parent=11 // pred_check
          %p569 = pneg %p189
        $region18: #{decoder_forward.1} parent=11 // pred_check_branch
          %571 = sbr.rel (%p569) target = $region20
        $region19: #{decoder_forward.1} parent=11 // pred_region
          _
        $region20: #{decoder_forward.1} parent=11 // pred_fallthru
          _
        // Predicated region
        $region21: #{decoder_forward.1} parent=11 // pred_check
          %p572 = pneg %p210
        $region22: #{decoder_forward.1} parent=11 // pred_check_branch
          %574 = sbr.rel (%p572) target = $region24
        $region23: #{decoder_forward.1} parent=11 // pred_region
          %s576 = ssub.s32 16, 16
          %577 = vsyncadd [#allocation10], %s576
          %s579 = sshll.u32 [#allocation9], 4
          %s580 = int_to_ptr.vmem [resolvable:$true] %s579
          %582 = dma.hbm_to_vmem [thread:$0]  %s6, 16, %s580, [#allocation10]
        $region24: #{decoder_forward.1} parent=11 // pred_fallthru
          _
        // Predicated region
        $region25: #{decoder_forward.1} parent=11 // pred_check
          %p583 = pneg %p231
        $region26: #{decoder_forward.1} parent=11 // pred_check_branch
          %585 = sbr.rel (%p583) target = $region28
        $region27: #{decoder_forward.1} parent=11 // pred_region
          %s587 = ssub.s32 16, 16
          %588 = vsyncadd [#allocation10], %s587
          %s590 = sshll.u32 [#allocation11], 4
          %s591 = int_to_ptr.vmem [resolvable:$true] %s590
          %593 = dma.hbm_to_vmem [thread:$0]  %s7, 16, %s591, [#allocation10]
        $region28: #{decoder_forward.1} parent=11 // pred_fallthru
          _
        // Predicated region
        $region29: #{decoder_forward.1} parent=11 // pred_check
          %p594 = pneg %p252
        $region30: #{decoder_forward.1} parent=11 // pred_check_branch
          %596 = sbr.rel (%p594) target = $region32
        $region31: #{decoder_forward.1} parent=11 // pred_region
          _
        $region32: #{decoder_forward.1} parent=11 // pred_fallthru
          _
        // Predicated region
        $region33: #{decoder_forward.1} parent=11 // pred_check
          %p597 = pneg %p273
        $region34: #{decoder_forward.1} parent=11 // pred_check_branch
          %599 = sbr.rel (%p597) target = $region36
        $region35: #{decoder_forward.1} parent=11 // pred_region
          %s601 = ssub.s32 16, 16
          %602 = vsyncadd [#allocation13], %s601
          %s604 = sshll.u32 [#allocation12], 4
          %s605 = int_to_ptr.vmem [resolvable:$true] %s604
          %607 = dma.hbm_to_vmem [thread:$0]  %s9, 16, %s605, [#allocation13]
        $region36: #{decoder_forward.1} parent=11 // pred_fallthru
          _
        // Predicated region
        $region37: #{decoder_forward.1} parent=11 // pred_check
          %p608 = pneg %p294
        $region38: #{decoder_forward.1} parent=11 // pred_check_branch
          %610 = sbr.rel (%p608) target = $region40
        $region39: #{decoder_forward.1} parent=11 // pred_region
          _
        $region40: #{decoder_forward.1} parent=11 // pred_fallthru
          _
        // Predicated region
        $region41: #{decoder_forward.1} parent=11 // pred_check
          %p611 = pneg %p315
        $region42: #{decoder_forward.1} parent=11 // pred_check_branch
          %613 = sbr.rel (%p611) target = $region44
        $region43: #{decoder_forward.1} parent=11 // pred_region
          %s615 = ssub.s32 16, 16
          %616 = vsyncadd [#allocation13], %s615
          %s618 = sshll.u32 [#allocation14], 4
          %s619 = int_to_ptr.vmem [resolvable:$true] %s618
          %621 = dma.hbm_to_vmem [thread:$0]  %s11, 16, %s619, [#allocation13]
        $region44: #{decoder_forward.1} parent=11 // pred_fallthru
          _
        // Predicated region
        $region45: #{decoder_forward.1} parent=11 // pred_check
          %p622 = pneg %p336
        $region46: #{decoder_forward.1} parent=11 // pred_check_branch
          %624 = sbr.rel (%p622) target = $region48
        $region47: #{decoder_forward.1} parent=11 // pred_region
          _
        $region48: #{decoder_forward.1} parent=11 // pred_fallthru
          _
        // Predicated region
        $region49: #{decoder_forward.1} parent=11 // pred_check
          %p625 = pneg %p357
        $region50: #{decoder_forward.1} parent=11 // pred_check_branch
          %627 = sbr.rel (%p625) target = $region52
        $region51: #{decoder_forward.1} parent=11 // pred_region
          %s629 = ssub.s32 16, 16
          %630 = vsyncadd [#allocation16], %s629
          %s632 = sshll.u32 [#allocation15], 4
          %s633 = int_to_ptr.vmem [resolvable:$true] %s632
          %635 = dma.hbm_to_vmem [thread:$0]  %s13, 16, %s633, [#allocation16]
        $region52: #{decoder_forward.1} parent=11 // pred_fallthru
          _
        // Predicated region
        $region53: #{decoder_forward.1} parent=11 // pred_check
          %p636 = pneg %p378
        $region54: #{decoder_forward.1} parent=11 // pred_check_branch
          %638 = sbr.rel (%p636) target = $region56
        $region55: #{decoder_forward.1} parent=11 // pred_region
          _
        $region56: #{decoder_forward.1} parent=11 // pred_fallthru
          _
        // Predicated region
        $region57: #{decoder_forward.1} parent=11 // pred_check
          %p639 = pneg %p399
        $region58: #{decoder_forward.1} parent=11 // pred_check_branch
          %641 = sbr.rel (%p639) target = $region60
        $region59: #{decoder_forward.1} parent=11 // pred_region
          %s643 = ssub.s32 16, 16
          %644 = vsyncadd [#allocation16], %s643
          %s646 = sshll.u32 [#allocation17], 4
          %s647 = int_to_ptr.vmem [resolvable:$true] %s646
          %649 = dma.hbm_to_vmem [thread:$0]  %s15, 16, %s647, [#allocation16]
        $region60: #{decoder_forward.1} parent=11 // pred_fallthru
          _
        // Predicated region
        $region61: #{decoder_forward.1} parent=11 // pred_check
          %p650 = pneg %p420
        $region62: #{decoder_forward.1} parent=11 // pred_check_branch
          %652 = sbr.rel (%p650) target = $region64
        $region63: #{decoder_forward.1} parent=11 // pred_region
          %s654 = ssub.s32 512, 512
          %655 = vsyncadd [#allocation19], %s654
          %s656 = sshll.u32 [#allocation18], 4
          %s657 = int_to_ptr.vmem [resolvable:$true] %s656
          %662 = dma.hbm_to_vmem [thread:$0]  %s16, 512, %s657, [#allocation19], 128, 128, 8
        $region64: #{decoder_forward.1} parent=11 // pred_fallthru
          _
        // Predicated region
        $region65: #{decoder_forward.1} parent=11 // pred_check
          %p663 = pneg %p441
        $region66: #{decoder_forward.1} parent=11 // pred_check_branch
          %665 = sbr.rel (%p663) target = $region68
        $region67: #{decoder_forward.1} parent=11 // pred_region
          %s667 = ssub.s32 16, 16
          %668 = vsyncadd [#allocation19], %s667
          %s670 = sshll.u32 [#allocation20], 4
          %s671 = int_to_ptr.vmem [resolvable:$true] %s670
          %673 = dma.hbm_to_vmem [thread:$0]  %s17, 16, %s671, [#allocation19]
        $region68: #{decoder_forward.1} parent=11 // pred_fallthru
          _
        // Predicated region
        $region69: #{decoder_forward.1} parent=11 // pred_check
          %p674 = pneg %p462
        $region70: #{decoder_forward.1} parent=11 // pred_check_branch
          %676 = sbr.rel (%p674) target = $region72
        $region71: #{decoder_forward.1} parent=11 // pred_region
          %s678 = ssub.s32 512, 512
          %679 = vsyncadd [#allocation22], %s678
          %s680 = sshll.u32 [#allocation21], 4
          %s681 = int_to_ptr.vmem [resolvable:$true] %s680
          %686 = dma.hbm_to_vmem [thread:$0]  %s18, 512, %s681, [#allocation22], 128, 128, 8
        $region72: #{decoder_forward.1} parent=11 // pred_fallthru
          _
        // Predicated region
        $region73: #{decoder_forward.1} parent=11 // pred_check
          %p687 = pneg %p483
        $region74: #{decoder_forward.1} parent=11 // pred_check_branch
          %689 = sbr.rel (%p687) target = $region76
        $region75: #{decoder_forward.1} parent=11 // pred_region
          %s691 = ssub.s32 16, 16
          %692 = vsyncadd [#allocation22], %s691
          %s694 = sshll.u32 [#allocation23], 4
          %s695 = int_to_ptr.vmem [resolvable:$true] %s694
          %697 = dma.hbm_to_vmem [thread:$0]  %s19, 16, %s695, [#allocation22]
        $region76: #{decoder_forward.1} parent=11 // pred_fallthru
          _
        // Predicated region
        $region77: #{decoder_forward.1} parent=11 // pred_check
          %p698 = pneg %p504
        $region78: #{decoder_forward.1} parent=11 // pred_check_branch
          %700 = sbr.rel (%p698) target = $region80
        $region79: #{decoder_forward.1} parent=11 // pred_region
          _
        $region80: #{decoder_forward.1} parent=11 // pred_fallthru
          _
        // Predicated region
        $region81: #{decoder_forward.1} parent=11 // pred_check
          %p701 = pneg %p525
        $region82: #{decoder_forward.1} parent=11 // pred_check_branch
          %703 = sbr.rel (%p701) target = $region84
        $region83: #{decoder_forward.1} parent=11 // pred_region
          %s705 = ssub.s32 16, 16
          %706 = vsyncadd [#allocation25], %s705
          %s708 = sshll.u32 [#allocation24], 4
          %s709 = int_to_ptr.vmem [resolvable:$true] %s708
          %711 = dma.hbm_to_vmem [thread:$0]  %s21, 16, %s709, [#allocation25]
        $region84: #{decoder_forward.1} parent=11 // pred_fallthru
          _
      $region12: #{decoder_forward.1} parent=5 // pred_fallthru
        _
      %p712 = scmp.lt.s32.totalorder %s43, 2
      // Predicated region
      $region85: #{decoder_forward.1} parent=5 // pred_check
        %p713 = pneg %p712
      $region86: #{decoder_forward.1} parent=5 // pred_check_branch
        %715 = sbr.rel (%p713) target = $region88
      $region87: #{decoder_forward.1} parent=5 // pred_region
        // Predicated region
        $region89: #{decoder_forward.1} parent=87 // pred_check
          %p716 = pneg %p63
        $region90: #{decoder_forward.1} parent=87 // pred_check_branch
          %718 = sbr.rel (%p716) target = $region92
        $region91: #{decoder_forward.1} parent=87 // pred_region
          %s719 = sand.u32 %s53, 1
          %s720 = scalar_lea.sflag [#allocation4], %s719
          %s721 = sand.u32 %s53, 1
          %s722 = smul.addr %s721, 8
          %s723 = scalar_lea.vmem [#allocation3], %s722
          %s725 = ssub.s32 128, 128
          %726 = vsyncadd %s720, %s725
          %s727 = smul.addr %s43, 128
          %s728 = scalar_lea.hbm %s0, %s727
          %s730 = sshll.u32 %s723, 4
          %s731 = int_to_ptr.vmem [resolvable:$true] %s730
          %733 = dma.hbm_to_vmem [thread:$0]  %s728, 128, %s731, %s720
        $region92: #{decoder_forward.1} parent=87 // pred_fallthru
          _
        // Predicated region
        $region93: #{decoder_forward.1} parent=87 // pred_check
          %p734 = pneg %p89
        $region94: #{decoder_forward.1} parent=87 // pred_check_branch
          %736 = sbr.rel (%p734) target = $region96
        $region95: #{decoder_forward.1} parent=87 // pred_region
          %s737 = sand.u32 %s43, 1
          %s738 = scalar_lea.sflag [#allocation7], %s737
          %s739 = sand.u32 %s79, 1
          %s740 = smul.addr %s739, 8
          %s741 = scalar_lea.vmem [#allocation6], %s740
          %s743 = ssub.s32 128, 128
          %744 = vsyncadd %s738, %s743
          %s745 = smul.addr %s43, 128
          %s746 = scalar_lea.hbm %s1, %s745
          %s748 = sshll.u32 %s741, 4
          %s749 = int_to_ptr.vmem [resolvable:$true] %s748
          %751 = dma.hbm_to_vmem [thread:$0]  %s746, 128, %s749, %s738
        $region96: #{decoder_forward.1} parent=87 // pred_fallthru
          _
        // Predicated region
        $region97: #{decoder_forward.1} parent=87 // pred_check
          %p752 = pneg %p115
        $region98: #{decoder_forward.1} parent=87 // pred_check_branch
          %754 = sbr.rel (%p752) target = $region100
        $region99: #{decoder_forward.1} parent=87 // pred_region
          %p755 = scmp.lt.s32.totalorder %s43, 1
          %s756 = scalar_select %p755, %s43, 1
          %s757 = smul.addr %s756, 8
          %s758 = scalar_lea.vmem %s2, %s757
        $region100: #{decoder_forward.1} parent=87 // pred_fallthru
          _
        // Predicated region
        $region101: #{decoder_forward.1} parent=87 // pred_check
          %p759 = pneg %p141
        $region102: #{decoder_forward.1} parent=87 // pred_check_branch
          %761 = sbr.rel (%p759) target = $region104
        $region103: #{decoder_forward.1} parent=87 // pred_region
          %s762 = sand.u32 %s43, 1
          %s763 = scalar_lea.sflag [#allocation7], %s762
          %s764 = sand.u32 %s131, 1
          %s765 = scalar_lea.vmem [#allocation8], %s764
          %s767 = ssub.s32 16, 16
          %768 = vsyncadd %s763, %s767
          %s769 = smul.addr %s43, 16
          %s770 = scalar_lea.hbm %s3, %s769
          %s772 = sshll.u32 %s765, 4
          %s773 = int_to_ptr.vmem [resolvable:$true] %s772
          %775 = dma.hbm_to_vmem [thread:$0]  %s770, 16, %s773, %s763
        $region104: #{decoder_forward.1} parent=87 // pred_fallthru
          _
      $region88: #{decoder_forward.1} parent=5 // pred_fallthru
        _
      %p776 = scmp.le.s32.totalorder 1, %s43
      %p777 = scmp.lt.s32.totalorder %s43, 3
      %p778 = pnand %p776, %p777
      %p779 = pneg %p778
      // Predicated region
      $region105: #{decoder_forward.1} parent=5 // pred_check
        _
      $region106: #{decoder_forward.1} parent=5 // pred_check_branch
        %781 = sbr.rel (%p778) target = $region108
      $region107: #{decoder_forward.1} parent=5 // pred_region
        %s782 = ssub.s32 %s43, 1
        %s783 = sand.u32 %s56, 1
        %s784 = scalar_lea.sflag [#allocation4], %s783
        %s785 = sand.u32 %s56, 1
        %s786 = smul.addr %s785, 8
        %s787 = scalar_lea.vmem [#allocation3], %s786
        // Predicated region
        $region109: #{decoder_forward.1} parent=107 // pred_check
          %p788 = pneg %p69
        $region110: #{decoder_forward.1} parent=107 // pred_check_branch
          %790 = sbr.rel (%p788) target = $region112
        $region111: #{decoder_forward.1} parent=107 // pred_region
          %791 = dma.done %s784, 128
        $region112: #{decoder_forward.1} parent=107 // pred_fallthru
          _
        %s792 = sand.u32 %s48, 1
        %s793 = scalar_lea.sflag [#allocation7], %s792
        %s794 = sand.u32 %s82, 1
        %s795 = smul.addr %s794, 8
        %s796 = scalar_lea.vmem [#allocation6], %s795
        // Predicated region
        $region113: #{decoder_forward.1} parent=107 // pred_check
          %p797 = pneg %p95
        $region114: #{decoder_forward.1} parent=107 // pred_check_branch
          %799 = sbr.rel (%p797) target = $region116
        $region115: #{decoder_forward.1} parent=107 // pred_region
          %800 = dma.done %s793, 128
        $region116: #{decoder_forward.1} parent=107 // pred_fallthru
          _
        %s801 = sand.u32 %s48, 1
        %s802 = scalar_lea.sflag [#allocation7], %s801
        %s803 = sand.u32 %s134, 1
        %s804 = scalar_lea.vmem [#allocation8], %s803
        // Predicated region
        $region117: #{decoder_forward.1} parent=107 // pred_check
          %p805 = pneg %p147
        $region118: #{decoder_forward.1} parent=107 // pred_check_branch
          %807 = sbr.rel (%p805) target = $region120
        $region119: #{decoder_forward.1} parent=107 // pred_region
          %808 = dma.done %s802, 16
        $region120: #{decoder_forward.1} parent=107 // pred_fallthru
          _
        // Predicated region
        $region121: #{decoder_forward.1} parent=107 // pred_check
          %p809 = pneg %p210
        $region122: #{decoder_forward.1} parent=107 // pred_check_branch
          %811 = sbr.rel (%p809) target = $region124
        $region123: #{decoder_forward.1} parent=107 // pred_region
          %812 = dma.done [#allocation10], 16
        $region124: #{decoder_forward.1} parent=107 // pred_fallthru
          _
        // Predicated region
        $region125: #{decoder_forward.1} parent=107 // pred_check
          %p813 = pneg %p231
        $region126: #{decoder_forward.1} parent=107 // pred_check_branch
          %815 = sbr.rel (%p813) target = $region128
        $region127: #{decoder_forward.1} parent=107 // pred_region
          %816 = dma.done [#allocation10], 16
        $region128: #{decoder_forward.1} parent=107 // pred_fallthru
          _
        // Predicated region
        $region129: #{decoder_forward.1} parent=107 // pred_check
          %p817 = pneg %p273
        $region130: #{decoder_forward.1} parent=107 // pred_check_branch
          %819 = sbr.rel (%p817) target = $region132
        $region131: #{decoder_forward.1} parent=107 // pred_region
          %820 = dma.done [#allocation13], 16
        $region132: #{decoder_forward.1} parent=107 // pred_fallthru
          _
        // Predicated region
        $region133: #{decoder_forward.1} parent=107 // pred_check
          %p821 = pneg %p315
        $region134: #{decoder_forward.1} parent=107 // pred_check_branch
          %823 = sbr.rel (%p821) target = $region136
        $region135: #{decoder_forward.1} parent=107 // pred_region
          %824 = dma.done [#allocation13], 16
        $region136: #{decoder_forward.1} parent=107 // pred_fallthru
          _
        // Predicated region
        $region137: #{decoder_forward.1} parent=107 // pred_check
          %p825 = pneg %p357
        $region138: #{decoder_forward.1} parent=107 // pred_check_branch
          %827 = sbr.rel (%p825) target = $region140
        $region139: #{decoder_forward.1} parent=107 // pred_region
          %828 = dma.done [#allocation16], 16
        $region140: #{decoder_forward.1} parent=107 // pred_fallthru
          _
        // Predicated region
        $region141: #{decoder_forward.1} parent=107 // pred_check
          %p829 = pneg %p399
        $region142: #{decoder_forward.1} parent=107 // pred_check_branch
          %831 = sbr.rel (%p829) target = $region144
        $region143: #{decoder_forward.1} parent=107 // pred_region
          %832 = dma.done [#allocation16], 16
        $region144: #{decoder_forward.1} parent=107 // pred_fallthru
          _
        // Predicated region
        $region145: #{decoder_forward.1} parent=107 // pred_check
          %p833 = pneg %p420
        $region146: #{decoder_forward.1} parent=107 // pred_check_branch
          %835 = sbr.rel (%p833) target = $region148
        $region147: #{decoder_forward.1} parent=107 // pred_region
          %836 = dma.done [#allocation19], 512
        $region148: #{decoder_forward.1} parent=107 // pred_fallthru
          _
        // Predicated region
        $region149: #{decoder_forward.1} parent=107 // pred_check
          %p837 = pneg %p441
        $region150: #{decoder_forward.1} parent=107 // pred_check_branch
          %839 = sbr.rel (%p837) target = $region152
        $region151: #{decoder_forward.1} parent=107 // pred_region
          %840 = dma.done [#allocation19], 16
        $region152: #{decoder_forward.1} parent=107 // pred_fallthru
          _
        // Predicated region
        $region153: #{decoder_forward.1} parent=107 // pred_check
          %p841 = pneg %p462
        $region154: #{decoder_forward.1} parent=107 // pred_check_branch
          %843 = sbr.rel (%p841) target = $region156
        $region155: #{decoder_forward.1} parent=107 // pred_region
          %844 = dma.done [#allocation22], 512
        $region156: #{decoder_forward.1} parent=107 // pred_fallthru
          _
        // Predicated region
        $region157: #{decoder_forward.1} parent=107 // pred_check
          %p845 = pneg %p483
        $region158: #{decoder_forward.1} parent=107 // pred_check_branch
          %847 = sbr.rel (%p845) target = $region160
        $region159: #{decoder_forward.1} parent=107 // pred_region
          %848 = dma.done [#allocation22], 16
        $region160: #{decoder_forward.1} parent=107 // pred_fallthru
          _
        // Predicated region
        $region161: #{decoder_forward.1} parent=107 // pred_check
          %p849 = pneg %p525
        $region162: #{decoder_forward.1} parent=107 // pred_check_branch
          %851 = sbr.rel (%p849) target = $region164
        $region163: #{decoder_forward.1} parent=107 // pred_region
          %852 = dma.done [#allocation25], 16
        $region164: #{decoder_forward.1} parent=107 // pred_fallthru
          _
        %s853 = sand.u32 %s56, 1
        %s854 = scalar_lea.sflag [#allocation4], %s853
        %s855 = sand.u32 %s56, 1
        %s856 = smul.addr %s855, 8
        %s857 = scalar_lea.vmem [#allocation3], %s856
        %p858 = pneg %p69
        %p859 = pneg %p66
        %s860 = sand.u32 %s48, 1
        %s861 = scalar_lea.sflag [#allocation7], %s860
        %s862 = sand.u32 %s82, 1
        %s863 = smul.addr %s862, 8
        %s864 = scalar_lea.vmem [#allocation6], %s863
        %p865 = pneg %p95
        %p866 = pneg %p92
        %p867 = scmp.lt.s32.totalorder %s48, 1
        %s868 = scalar_select %p867, %s48, 1
        %s869 = smul.addr %s868, 8
        %s870 = scalar_lea.vmem %s2, %s869
        %p871 = pneg %p121
        %p872 = pneg %p118
        %s873 = sand.u32 %s48, 1
        %s874 = scalar_lea.sflag [#allocation7], %s873
        %s875 = sand.u32 %s134, 1
        %s876 = scalar_lea.vmem [#allocation8], %s875
        %p877 = pneg %p147
        %p878 = pneg %p144
        %p879 = pneg %p168
        %p880 = pneg %p165
        %p881 = pneg %p189
        %p882 = pneg %p186
        %p883 = pneg %p210
        %p884 = pneg %p207
        %p885 = pneg %p231
        %p886 = pneg %p228
        %p887 = pneg %p252
        %p888 = pneg %p249
        %p889 = pneg %p273
        %p890 = pneg %p270
        %p891 = pneg %p294
        %p892 = pneg %p291
        %p893 = pneg %p315
        %p894 = pneg %p312
        %p895 = pneg %p336
        %p896 = pneg %p333
        %p897 = pneg %p357
        %p898 = pneg %p354
        %p899 = pneg %p378
        %p900 = pneg %p375
        %p901 = pneg %p399
        %p902 = pneg %p396
        %p903 = pneg %p420
        %p904 = pneg %p417
        %p905 = pneg %p441
        %p906 = pneg %p438
        %p907 = pneg %p462
        %p908 = pneg %p459
        %p909 = pneg %p483
        %p910 = pneg %p480
        %p911 = pneg %p504
        %p912 = pneg %p501
        %p913 = pneg %p525
        %p914 = pneg %p522
        %p915 = pneg %p551
        %p916 = pneg %p548
        %s917 = sand.u32 %s538, 1
        %s918 = scalar_lea.sflag [#allocation5], %s917
        %s919 = sand.u32 %s538, 1
        %s920 = smul.addr %s919, 8
        %s921 = scalar_lea.vmem [#allocation26], %s920
        %p922 = scmp.lt.s32.totalorder %s48, 1
        %s923 = scalar_select %p922, %s48, 1
        %s924 = smul.addr %s923, 8
        %s925 = scalar_lea.vmem %s2, %s924
        %v926 = vld [vmem:[%s787] sm:$0xff]
        %v927 = vld [vmem:[%s796] sm:$0xff]
        %v928 = vld [vmem:[%s14] sm:$0xff]
        %v929 = vld [vmem:[%s14 + $0x8] sm:$0xff]
        %v930 = vld [vmem:[%s14 + $0x10] sm:$0xff]
        %v931 = vld [vmem:[%s14 + $0x18] sm:$0xff]
        %v932 = vld [vmem:[#allocation17] sm:$0x1]
        %v934 = vlaneseq
        %v935 = vshrl.u32 %v934, 7
        %v936 = vsub.s32 0, %v935
        %v937 = vrot.slane %v932, %v936
        %vm939 = vcmask 261120
        %v941 = vsel %vm939, %v927, 0
        %943 = vmatprep.subr.mxu0 0.0
        %944 = vmatpush1.msra.mxu0 0.0
        %945 = vmatprep.subr.mxu0 0.0
        %946 = vmatpush1.msra.mxu0 0.0
        %947 = vmatprep.subr.mxu0 0.0
        %948 = vmatpush1.msra.mxu0 0.0
        %949 = vmatprep.subr.mxu0 0.0
        %950 = vmatpush1.msra.mxu0 0.0
        %951 = vmatprep.subr.mxu0 0.0
        %952 = vmatpush1.msra.mxu0 0.0
        %953 = vmatprep.subr.mxu0 0.0
        %954 = vmatpush1.msra.mxu0 0.0
        %955 = vmatprep.subr.mxu0 0.0
        %956 = vmatpush1.msra.mxu0 0.0
        %957 = vmatprep.subr.mxu0 0.0
        %958 = vmatpush1.msra.mxu0 0.0
        %959 = vmatprep.subr.mxu0 0.0
        %960 = vmatpush1.msra.mxu0 0.0
        %961 = vmatprep.subr.mxu0 0.0
        %962 = vmatpush1.msra.mxu0 0.0
        %963 = vmatprep.subr.mxu0 0.0
        %964 = vmatpush1.msra.mxu0 0.0
        %965 = vmatprep.subr.mxu0 0.0
        %966 = vmatpush1.msra.mxu0 0.0
        %967 = vmatprep.subr.mxu0 0.0
        %968 = vmatpush1.msra.mxu0 %v931
        %969 = vmatprep.subr.mxu0 0.0
        %970 = vmatpush1.msra.mxu0 %v930
        %971 = vmatprep.subr.mxu0 0.0
        %972 = vmatpush1.msra.mxu0 %v929
        %973 = vmatprep.subr.mxu0 0.0
        %974 = vmatpush1.msra.mxu0 %v928
        %975 = vmatprep.subr.mxu0 0.0
        %976 = vmatpush2.msra.mxu0 0.0
        %977 = vmatprep.subr.mxu0 0.0
        %978 = vmatpush2.msra.mxu0 0.0
        %979 = vmatprep.subr.mxu0 0.0
        %980 = vmatpush2.msra.mxu0 0.0
        %981 = vmatprep.subr.mxu0 0.0
        %982 = vmatpush2.msra.mxu0 0.0
        %983 = vmatprep.subr.mxu0 0.0
        %984 = vmatpush2.msra.mxu0 0.0
        %985 = vmatprep.subr.mxu0 0.0
        %986 = vmatpush2.msra.mxu0 0.0
        %987 = vmatprep.subr.mxu0 0.0
        %988 = vmatpush2.msra.mxu0 0.0
        %989 = vmatprep.subr.mxu0 0.0
        %990 = vmatpush2.msra.mxu0 0.0
        %991 = vmatprep.subr.mxu0 0.0
        %992 = vmatpush2.msra.mxu0 0.0
        %993 = vmatprep.subr.mxu0 0.0
        %994 = vmatpush2.msra.mxu0 0.0
        %995 = vmatprep.subr.mxu0 0.0
        %996 = vmatpush2.msra.mxu0 0.0
        %997 = vmatprep.subr.mxu0 0.0
        %998 = vmatpush2.msra.mxu0 0.0
        %999 = vmatprep.subr.mxu0 0.0
        %1000 = vmatpush2.msra.mxu0 0.0
        %1001 = vmatprep.subr.mxu0 0.0
        %1002 = vmatpush2.msra.mxu0 0.0
        %1003 = vmatprep.subr.mxu0 0.0
        %1004 = vmatpush2.msra.mxu0 0.0
        %1005 = vmatprep.subr.mxu0 0.0
        %1006 = vmatpush2.msra.mxu0 0.0
        %1007 = vmatprep.mubr.f32.mxu0 0.0
        %1008 = vmatmul.mubr.f32.gmra.mxu0 %v941
        %v1009 = vpop.f32.mrf.mxu0
        %v1010 = vadd.f32 %v937, %v1009
        %v1011 = vpop.f32.mrf.mxu0
        %1012 = vdwg.mxu0
        %v1013 = vld [vmem:[%s925] sm:$0xff]
        %vm1014 = vcmp.eq.f32.partialorder %v1013, 0.0
        %v1015 = vld [vmem:[%s804] sm:$0x1]
        %vm1016 = vcmp.eq.f32.partialorder %v1015, 0.0
        %v1017 = vld [vmem:[%s4] sm:$0x7]
        %v1018 = vld [vmem:[%s4 + $0x4] sm:$0x7]
        %v1019 = vld [vmem:[%s5] sm:$0x7]
        %v1020 = vld [vmem:[%s5 + $0x4] sm:$0x7]
        %v1021 = vsel %vm939, %v926, 0.0
        %1022 = vadd.xlane.f32.xlu0 %v1021
        %v1023 = vpop.xlane.xlu0 %1022
        %v1024 = vrcp.pop 32.0
        %v1025 = vmul.f32 %v1023, %v1024
        %v1026 = vsub.f32 %v926, %v1025
        %v1027 = vmul.f32 %v1026, %v1026
        %v1028 = vsel %vm939, %v1027, 0.0
        %1029 = vadd.xlane.f32.xlu0 %v1028
        %v1030 = vpop.xlane.xlu0 %1029
        %v1031 = vmul.f32 %v1030, 0.032258064
        %v1032 = vlaneseq
        %v1033 = vshrl.u32 %v1032, 7
        %v1034 = vsub.s32 0, %v1033
        %v1035 = vrot.slane %v1017, %v1034
        %v1036 = vmul.f32 %v1035, %v1026
        %v1037 = vrsqrt.pop %v1031
        %v1038 = vmul.f32 %v1031, %v1037
        %vm1039 = vcmp.eq.f32.partialorder %v1031, inf
        %v1040 = vsel %vm1039, %v1031, %v1038
        %vm1041 = vcmp.eq.f32.partialorder %v1031, 0.0
        %v1042 = vand.u32 %v1031, 2147483648
        %v1043 = vsel %vm1041, %v1042, %v1040
        %v1044 = vadd.f32 %v1043, 1e-06
        %v1045 = vrcp.pop %v1044
        %v1046 = vmul.f32 %v1036, %v1045
        %v1047 = vlaneseq
        %v1048 = vshrl.u32 %v1047, 7
        %v1049 = vsub.s32 0, %v1048
        %v1050 = vrot.slane %v1019, %v1049
        %v1051 = vadd.f32 %v1046, %v1050
        %v1052 = vld [vmem:[%s8] sm:$0xff]
        %v1053 = vld [vmem:[%s8 + $0x8] sm:$0xff]
        %v1054 = vld [vmem:[%s8 + $0x10] sm:$0xff]
        %v1055 = vld [vmem:[%s8 + $0x18] sm:$0xff]
        %v1056 = vld [vmem:[#allocation12] sm:$0x1]
        %v1058 = vlaneseq
        %v1059 = vshrl.u32 %v1058, 7
        %v1060 = vsub.s32 0, %v1059
        %v1061 = vrot.slane %v1056, %v1060
        %v1064 = vsel %vm939, %v1051, 0
        %1066 = vmatprep.subr.mxu0 0.0
        %1067 = vmatpush1.msra.mxu0 0.0
        %1068 = vmatprep.subr.mxu0 0.0
        %1069 = vmatpush1.msra.mxu0 0.0
        %1070 = vmatprep.subr.mxu0 0.0
        %1071 = vmatpush1.msra.mxu0 0.0
        %1072 = vmatprep.subr.mxu0 0.0
        %1073 = vmatpush1.msra.mxu0 0.0
        %1074 = vmatprep.subr.mxu0 0.0
        %1075 = vmatpush1.msra.mxu0 0.0
        %1076 = vmatprep.subr.mxu0 0.0
        %1077 = vmatpush1.msra.mxu0 0.0
        %1078 = vmatprep.subr.mxu0 0.0
        %1079 = vmatpush1.msra.mxu0 0.0
        %1080 = vmatprep.subr.mxu0 0.0
        %1081 = vmatpush1.msra.mxu0 0.0
        %1082 = vmatprep.subr.mxu0 0.0
        %1083 = vmatpush1.msra.mxu0 0.0
        %1084 = vmatprep.subr.mxu0 0.0
        %1085 = vmatpush1.msra.mxu0 0.0
        %1086 = vmatprep.subr.mxu0 0.0
        %1087 = vmatpush1.msra.mxu0 0.0
        %1088 = vmatprep.subr.mxu0 0.0
        %1089 = vmatpush1.msra.mxu0 0.0
        %1090 = vmatprep.subr.mxu0 0.0
        %1091 = vmatpush1.msra.mxu0 %v1055
        %1092 = vmatprep.subr.mxu0 0.0
        %1093 = vmatpush1.msra.mxu0 %v1054
        %1094 = vmatprep.subr.mxu0 0.0
        %1095 = vmatpush1.msra.mxu0 %v1053
        %1096 = vmatprep.subr.mxu0 0.0
        %1097 = vmatpush1.msra.mxu0 %v1052
        %1098 = vmatprep.subr.mxu0 0.0
        %1099 = vmatpush2.msra.mxu0 0.0
        %1100 = vmatprep.subr.mxu0 0.0
        %1101 = vmatpush2.msra.mxu0 0.0
        %1102 = vmatprep.subr.mxu0 0.0
        %1103 = vmatpush2.msra.mxu0 0.0
        %1104 = vmatprep.subr.mxu0 0.0
        %1105 = vmatpush2.msra.mxu0 0.0
        %1106 = vmatprep.subr.mxu0 0.0
        %1107 = vmatpush2.msra.mxu0 0.0
        %1108 = vmatprep.subr.mxu0 0.0
        %1109 = vmatpush2.msra.mxu0 0.0
        %1110 = vmatprep.subr.mxu0 0.0
        %1111 = vmatpush2.msra.mxu0 0.0
        %1112 = vmatprep.subr.mxu0 0.0
        %1113 = vmatpush2.msra.mxu0 0.0
        %1114 = vmatprep.subr.mxu0 0.0
        %1115 = vmatpush2.msra.mxu0 0.0
        %1116 = vmatprep.subr.mxu0 0.0
        %1117 = vmatpush2.msra.mxu0 0.0
        %1118 = vmatprep.subr.mxu0 0.0
        %1119 = vmatpush2.msra.mxu0 0.0
        %1120 = vmatprep.subr.mxu0 0.0
        %1121 = vmatpush2.msra.mxu0 0.0
        %1122 = vmatprep.subr.mxu0 0.0
        %1123 = vmatpush2.msra.mxu0 0.0
        %1124 = vmatprep.subr.mxu0 0.0
        %1125 = vmatpush2.msra.mxu0 0.0
        %1126 = vmatprep.subr.mxu0 0.0
        %1127 = vmatpush2.msra.mxu0 0.0
        %1128 = vmatprep.subr.mxu0 0.0
        %1129 = vmatpush2.msra.mxu0 0.0
        %1130 = vmatprep.mubr.f32.mxu0 0.0
        %1131 = vmatmul.mubr.f32.gmra.mxu0 %v1064
        %v1132 = vpop.f32.mrf.mxu0
        %v1133 = vadd.f32 %v1061, %v1132
        %v1134 = vpop.f32.mrf.mxu0
        %1135 = vdwg.mxu0
        %1137 = vrot.lane.b32.xlu0 %v1133, 96
        %v1138 = vpop.permute.xlu0 %1137
        %vm1139 = vcmask 64512
        %v1140 = vsel %vm1139, %v1133, 0
        %v1142 = vsel %vm1139, %v1138, 0
        %1144 = vmatprep.subr.mxu0 0.0
        %1145 = vmatpush1.xpose.msra.mxu0 0.0
        %1146 = vmatprep.subr.mxu0 0.0
        %1147 = vmatpush1.xpose.msra.mxu0 0.0
        %1148 = vmatprep.subr.mxu0 0.0
        %1149 = vmatpush1.xpose.msra.mxu0 0.0
        %1150 = vmatprep.subr.mxu0 0.0
        %1151 = vmatpush1.xpose.msra.mxu0 0.0
        %1152 = vmatprep.subr.mxu0 0.0
        %1153 = vmatpush1.xpose.msra.mxu0 0.0
        %1154 = vmatprep.subr.mxu0 0.0
        %1155 = vmatpush1.xpose.msra.mxu0 0.0
        %1156 = vmatprep.subr.mxu0 0.0
        %1157 = vmatpush1.xpose.msra.mxu0 0.0
        %1158 = vmatprep.subr.mxu0 0.0
        %1159 = vmatpush1.xpose.msra.mxu0 0.0
        %1160 = vmatprep.subr.mxu0 0.0
        %1161 = vmatpush1.xpose.msra.mxu0 0.0
        %1162 = vmatprep.subr.mxu0 0.0
        %1163 = vmatpush1.xpose.msra.mxu0 0.0
        %1164 = vmatprep.subr.mxu0 0.0
        %1165 = vmatpush1.xpose.msra.mxu0 0.0
        %1166 = vmatprep.subr.mxu0 0.0
        %1167 = vmatpush1.xpose.msra.mxu0 0.0
        %1168 = vmatprep.subr.mxu0 0.0
        %1169 = vmatpush1.xpose.msra.mxu0 0.0
        %1170 = vmatprep.subr.mxu0 0.0
        %1171 = vmatpush1.xpose.msra.mxu0 0.0
        %1172 = vmatprep.subr.mxu0 0.0
        %1173 = vmatpush1.xpose.msra.mxu0 0.0
        %1174 = vmatprep.subr.mxu0 0.0
        %1175 = vmatpush1.xpose.msra.mxu0 %v1142
        %1176 = vmatprep.subr.mxu0 0.0
        %1177 = vmatpush2.xpose.msra.mxu0 0.0
        %1178 = vmatprep.subr.mxu0 0.0
        %1179 = vmatpush2.xpose.msra.mxu0 0.0
        %1180 = vmatprep.subr.mxu0 0.0
        %1181 = vmatpush2.xpose.msra.mxu0 0.0
        %1182 = vmatprep.subr.mxu0 0.0
        %1183 = vmatpush2.xpose.msra.mxu0 0.0
        %1184 = vmatprep.subr.mxu0 0.0
        %1185 = vmatpush2.xpose.msra.mxu0 0.0
        %1186 = vmatprep.subr.mxu0 0.0
        %1187 = vmatpush2.xpose.msra.mxu0 0.0
        %1188 = vmatprep.subr.mxu0 0.0
        %1189 = vmatpush2.xpose.msra.mxu0 0.0
        %1190 = vmatprep.subr.mxu0 0.0
        %1191 = vmatpush2.xpose.msra.mxu0 0.0
        %1192 = vmatprep.subr.mxu0 0.0
        %1193 = vmatpush2.xpose.msra.mxu0 0.0
        %1194 = vmatprep.subr.mxu0 0.0
        %1195 = vmatpush2.xpose.msra.mxu0 0.0
        %1196 = vmatprep.subr.mxu0 0.0
        %1197 = vmatpush2.xpose.msra.mxu0 0.0
        %1198 = vmatprep.subr.mxu0 0.0
        %1199 = vmatpush2.xpose.msra.mxu0 0.0
        %1200 = vmatprep.subr.mxu0 0.0
        %1201 = vmatpush2.xpose.msra.mxu0 0.0
        %1202 = vmatprep.subr.mxu0 0.0
        %1203 = vmatpush2.xpose.msra.mxu0 0.0
        %1204 = vmatprep.subr.mxu0 0.0
        %1205 = vmatpush2.xpose.msra.mxu0 0.0
        %1206 = vmatprep.subr.mxu0 0.0
        %1207 = vmatpush2.xpose.msra.mxu0 0.0
        %1208 = vmatprep.mubr.f32.mxu0 0.0
        %1209 = vmatmul.mubr.f32.gmra.mxu0 %v1140
        %v1210 = vpop.f32.mrf.mxu0
        %v1211 = vadd.f32 0.0, %v1210
        %v1212 = vpop.f32.mrf.mxu0
        %1213 = vdwg.mxu0
        %v1214 = vsel %vm1014, -1e+09, %v1211
        %v1215 = vsel %vm1139, %v1214, -inf
        %1216 = vmax.xlane.f32.xlu0 %v1215
        %v1217 = vpop.xlane.xlu0 %1216
        %v1218 = vsub.f32 %v1214, %v1217
        %v1219 = vmul.f32 %v1218, 1.442695
        %v1220 = vpow.pop %v1219
        %v1221 = vsel %vm1139, %v1220, 0.0
        %1222 = vadd.xlane.f32.xlu0 %v1221
        %v1223 = vpop.xlane.xlu0 %1222
        %v1224 = vrcp.pop %v1223
        %v1225 = vmul.f32 %v1220, %v1224
        %1226 = vrot.lane.b32.xlu0 %v1133, 64
        %v1227 = vpop.permute.xlu0 %1226
        %v1230 = vsel %vm1139, %v1225, 0
        %1232 = vmatprep.subr.mxu0 0.0
        %1233 = vmatpush1.msra.mxu0 0.0
        %1234 = vmatprep.subr.mxu0 0.0
        %1235 = vmatpush1.msra.mxu0 0.0
        %1236 = vmatprep.subr.mxu0 0.0
        %1237 = vmatpush1.msra.mxu0 0.0
        %1238 = vmatprep.subr.mxu0 0.0
        %1239 = vmatpush1.msra.mxu0 0.0
        %1240 = vmatprep.subr.mxu0 0.0
        %1241 = vmatpush1.msra.mxu0 0.0
        %1242 = vmatprep.subr.mxu0 0.0
        %1243 = vmatpush1.msra.mxu0 0.0
        %1244 = vmatprep.subr.mxu0 0.0
        %1245 = vmatpush1.msra.mxu0 0.0
        %1246 = vmatprep.subr.mxu0 0.0
        %1247 = vmatpush1.msra.mxu0 0.0
        %1248 = vmatprep.subr.mxu0 0.0
        %1249 = vmatpush1.msra.mxu0 0.0
        %1250 = vmatprep.subr.mxu0 0.0
        %1251 = vmatpush1.msra.mxu0 0.0
        %1252 = vmatprep.subr.mxu0 0.0
        %1253 = vmatpush1.msra.mxu0 0.0
        %1254 = vmatprep.subr.mxu0 0.0
        %1255 = vmatpush1.msra.mxu0 0.0
        %1256 = vmatprep.subr.mxu0 0.0
        %1257 = vmatpush1.msra.mxu0 0.0
        %1258 = vmatprep.subr.mxu0 0.0
        %1259 = vmatpush1.msra.mxu0 0.0
        %1260 = vmatprep.subr.mxu0 0.0
        %1261 = vmatpush1.msra.mxu0 0.0
        %1262 = vmatprep.subr.mxu0 0.0
        %1263 = vmatpush1.msra.mxu0 %v1227
        %1264 = vmatprep.subr.mxu0 0.0
        %1265 = vmatpush2.msra.mxu0 0.0
        %1266 = vmatprep.subr.mxu0 0.0
        %1267 = vmatpush2.msra.mxu0 0.0
        %1268 = vmatprep.subr.mxu0 0.0
        %1269 = vmatpush2.msra.mxu0 0.0
        %1270 = vmatprep.subr.mxu0 0.0
        %1271 = vmatpush2.msra.mxu0 0.0
        %1272 = vmatprep.subr.mxu0 0.0
        %1273 = vmatpush2.msra.mxu0 0.0
        %1274 = vmatprep.subr.mxu0 0.0
        %1275 = vmatpush2.msra.mxu0 0.0
        %1276 = vmatprep.subr.mxu0 0.0
        %1277 = vmatpush2.msra.mxu0 0.0
        %1278 = vmatprep.subr.mxu0 0.0
        %1279 = vmatpush2.msra.mxu0 0.0
        %1280 = vmatprep.subr.mxu0 0.0
        %1281 = vmatpush2.msra.mxu0 0.0
        %1282 = vmatprep.subr.mxu0 0.0
        %1283 = vmatpush2.msra.mxu0 0.0
        %1284 = vmatprep.subr.mxu0 0.0
        %1285 = vmatpush2.msra.mxu0 0.0
        %1286 = vmatprep.subr.mxu0 0.0
        %1287 = vmatpush2.msra.mxu0 0.0
        %1288 = vmatprep.subr.mxu0 0.0
        %1289 = vmatpush2.msra.mxu0 0.0
        %1290 = vmatprep.subr.mxu0 0.0
        %1291 = vmatpush2.msra.mxu0 0.0
        %1292 = vmatprep.subr.mxu0 0.0
        %1293 = vmatpush2.msra.mxu0 0.0
        %1294 = vmatprep.subr.mxu0 0.0
        %1295 = vmatpush2.msra.mxu0 0.0
        %1296 = vmatprep.mubr.f32.mxu0 0.0
        %1297 = vmatmul.mubr.f32.gmra.mxu0 %v1230
        %v1298 = vpop.f32.mrf.mxu0
        %v1299 = vadd.f32 0.0, %v1298
        %v1300 = vpop.f32.mrf.mxu0
        %1301 = vdwg.mxu0
        %1302 = vst.msk [vmem:[#allocation2] sm:$0xff] %vm1139, %v1299
        %1303 = vrot.lane.b32.xlu0 %v1133, 120
        %v1304 = vpop.permute.xlu0 %1303
        %1305 = vrot.lane.b32.xlu0 %v1133, 88
        %v1306 = vpop.permute.xlu0 %1305
        %v1307 = vsel %vm1139, %v1304, 0
        %v1309 = vsel %vm1139, %v1306, 0
        %1311 = vmatprep.subr.mxu0 0.0
        %1312 = vmatpush1.xpose.msra.mxu0 0.0
        %1313 = vmatprep.subr.mxu0 0.0
        %1314 = vmatpush1.xpose.msra.mxu0 0.0
        %1315 = vmatprep.subr.mxu0 0.0
        %1316 = vmatpush1.xpose.msra.mxu0 0.0
        %1317 = vmatprep.subr.mxu0 0.0
        %1318 = vmatpush1.xpose.msra.mxu0 0.0
        %1319 = vmatprep.subr.mxu0 0.0
        %1320 = vmatpush1.xpose.msra.mxu0 0.0
        %1321 = vmatprep.subr.mxu0 0.0
        %1322 = vmatpush1.xpose.msra.mxu0 0.0
        %1323 = vmatprep.subr.mxu0 0.0
        %1324 = vmatpush1.xpose.msra.mxu0 0.0
        %1325 = vmatprep.subr.mxu0 0.0
        %1326 = vmatpush1.xpose.msra.mxu0 0.0
        %1327 = vmatprep.subr.mxu0 0.0
        %1328 = vmatpush1.xpose.msra.mxu0 0.0
        %1329 = vmatprep.subr.mxu0 0.0
        %1330 = vmatpush1.xpose.msra.mxu0 0.0
        %1331 = vmatprep.subr.mxu0 0.0
        %1332 = vmatpush1.xpose.msra.mxu0 0.0
        %1333 = vmatprep.subr.mxu0 0.0
        %1334 = vmatpush1.xpose.msra.mxu0 0.0
        %1335 = vmatprep.subr.mxu0 0.0
        %1336 = vmatpush1.xpose.msra.mxu0 0.0
        %1337 = vmatprep.subr.mxu0 0.0
        %1338 = vmatpush1.xpose.msra.mxu0 0.0
        %1339 = vmatprep.subr.mxu0 0.0
        %1340 = vmatpush1.xpose.msra.mxu0 0.0
        %1341 = vmatprep.subr.mxu0 0.0
        %1342 = vmatpush1.xpose.msra.mxu0 %v1309
        %1343 = vmatprep.subr.mxu0 0.0
        %1344 = vmatpush2.xpose.msra.mxu0 0.0
        %1345 = vmatprep.subr.mxu0 0.0
        %1346 = vmatpush2.xpose.msra.mxu0 0.0
        %1347 = vmatprep.subr.mxu0 0.0
        %1348 = vmatpush2.xpose.msra.mxu0 0.0
        %1349 = vmatprep.subr.mxu0 0.0
        %1350 = vmatpush2.xpose.msra.mxu0 0.0
        %1351 = vmatprep.subr.mxu0 0.0
        %1352 = vmatpush2.xpose.msra.mxu0 0.0
        %1353 = vmatprep.subr.mxu0 0.0
        %1354 = vmatpush2.xpose.msra.mxu0 0.0
        %1355 = vmatprep.subr.mxu0 0.0
        %1356 = vmatpush2.xpose.msra.mxu0 0.0
        %1357 = vmatprep.subr.mxu0 0.0
        %1358 = vmatpush2.xpose.msra.mxu0 0.0
        %1359 = vmatprep.subr.mxu0 0.0
        %1360 = vmatpush2.xpose.msra.mxu0 0.0
        %1361 = vmatprep.subr.mxu0 0.0
        %1362 = vmatpush2.xpose.msra.mxu0 0.0
        %1363 = vmatprep.subr.mxu0 0.0
        %1364 = vmatpush2.xpose.msra.mxu0 0.0
        %1365 = vmatprep.subr.mxu0 0.0
        %1366 = vmatpush2.xpose.msra.mxu0 0.0
        %1367 = vmatprep.subr.mxu0 0.0
        %1368 = vmatpush2.xpose.msra.mxu0 0.0
        %1369 = vmatprep.subr.mxu0 0.0
        %1370 = vmatpush2.xpose.msra.mxu0 0.0
        %1371 = vmatprep.subr.mxu0 0.0
        %1372 = vmatpush2.xpose.msra.mxu0 0.0
        %1373 = vmatprep.subr.mxu0 0.0
        %1374 = vmatpush2.xpose.msra.mxu0 0.0
        %1375 = vmatprep.mubr.f32.mxu0 0.0
        %1376 = vmatmul.mubr.f32.gmra.mxu0 %v1307
        %v1377 = vpop.f32.mrf.mxu0
        %v1378 = vadd.f32 0.0, %v1377
        %v1379 = vpop.f32.mrf.mxu0
        %1380 = vdwg.mxu0
        %v1381 = vsel %vm1014, -1e+09, %v1378
        %v1382 = vsel %vm1139, %v1381, -inf
        %1383 = vmax.xlane.f32.xlu0 %v1382
        %v1384 = vpop.xlane.xlu0 %1383
        %v1385 = vsub.f32 %v1381, %v1384
        %v1386 = vmul.f32 %v1385, 1.442695
        %v1387 = vpow.pop %v1386
        %v1388 = vsel %vm1139, %v1387, 0.0
        %1389 = vadd.xlane.f32.xlu0 %v1388
        %v1390 = vpop.xlane.xlu0 %1389
        %v1391 = vrcp.pop %v1390
        %v1392 = vmul.f32 %v1387, %v1391
        %1393 = vrot.lane.b32.xlu0 %v1133, 56
        %v1394 = vpop.permute.xlu0 %1393
        %v1397 = vsel %vm1139, %v1392, 0
        %1399 = vmatprep.subr.mxu0 0.0
        %1400 = vmatpush1.msra.mxu0 0.0
        %1401 = vmatprep.subr.mxu0 0.0
        %1402 = vmatpush1.msra.mxu0 0.0
        %1403 = vmatprep.subr.mxu0 0.0
        %1404 = vmatpush1.msra.mxu0 0.0
        %1405 = vmatprep.subr.mxu0 0.0
        %1406 = vmatpush1.msra.mxu0 0.0
        %1407 = vmatprep.subr.mxu0 0.0
        %1408 = vmatpush1.msra.mxu0 0.0
        %1409 = vmatprep.subr.mxu0 0.0
        %1410 = vmatpush1.msra.mxu0 0.0
        %1411 = vmatprep.subr.mxu0 0.0
        %1412 = vmatpush1.msra.mxu0 0.0
        %1413 = vmatprep.subr.mxu0 0.0
        %1414 = vmatpush1.msra.mxu0 0.0
        %1415 = vmatprep.subr.mxu0 0.0
        %1416 = vmatpush1.msra.mxu0 0.0
        %1417 = vmatprep.subr.mxu0 0.0
        %1418 = vmatpush1.msra.mxu0 0.0
        %1419 = vmatprep.subr.mxu0 0.0
        %1420 = vmatpush1.msra.mxu0 0.0
        %1421 = vmatprep.subr.mxu0 0.0
        %1422 = vmatpush1.msra.mxu0 0.0
        %1423 = vmatprep.subr.mxu0 0.0
        %1424 = vmatpush1.msra.mxu0 0.0
        %1425 = vmatprep.subr.mxu0 0.0
        %1426 = vmatpush1.msra.mxu0 0.0
        %1427 = vmatprep.subr.mxu0 0.0
        %1428 = vmatpush1.msra.mxu0 0.0
        %1429 = vmatprep.subr.mxu0 0.0
        %1430 = vmatpush1.msra.mxu0 %v1394
        %1431 = vmatprep.subr.mxu0 0.0
        %1432 = vmatpush2.msra.mxu0 0.0
        %1433 = vmatprep.subr.mxu0 0.0
        %1434 = vmatpush2.msra.mxu0 0.0
        %1435 = vmatprep.subr.mxu0 0.0
        %1436 = vmatpush2.msra.mxu0 0.0
        %1437 = vmatprep.subr.mxu0 0.0
        %1438 = vmatpush2.msra.mxu0 0.0
        %1439 = vmatprep.subr.mxu0 0.0
        %1440 = vmatpush2.msra.mxu0 0.0
        %1441 = vmatprep.subr.mxu0 0.0
        %1442 = vmatpush2.msra.mxu0 0.0
        %1443 = vmatprep.subr.mxu0 0.0
        %1444 = vmatpush2.msra.mxu0 0.0
        %1445 = vmatprep.subr.mxu0 0.0
        %1446 = vmatpush2.msra.mxu0 0.0
        %1447 = vmatprep.subr.mxu0 0.0
        %1448 = vmatpush2.msra.mxu0 0.0
        %1449 = vmatprep.subr.mxu0 0.0
        %1450 = vmatpush2.msra.mxu0 0.0
        %1451 = vmatprep.subr.mxu0 0.0
        %1452 = vmatpush2.msra.mxu0 0.0
        %1453 = vmatprep.subr.mxu0 0.0
        %1454 = vmatpush2.msra.mxu0 0.0
        %1455 = vmatprep.subr.mxu0 0.0
        %1456 = vmatpush2.msra.mxu0 0.0
        %1457 = vmatprep.subr.mxu0 0.0
        %1458 = vmatpush2.msra.mxu0 0.0
        %1459 = vmatprep.subr.mxu0 0.0
        %1460 = vmatpush2.msra.mxu0 0.0
        %1461 = vmatprep.subr.mxu0 0.0
        %1462 = vmatpush2.msra.mxu0 0.0
        %1463 = vmatprep.mubr.f32.mxu0 0.0
        %1464 = vmatmul.mubr.f32.gmra.mxu0 %v1397
        %v1465 = vpop.f32.mrf.mxu0
        %v1466 = vadd.f32 0.0, %v1465
        %v1467 = vpop.f32.mrf.mxu0
        %1468 = vdwg.mxu0
        %1470 = vrot.lane.b32.xlu0 %v1466, 8
        %v1471 = vpop.permute.xlu0 %1470
        %vm1473 = vcmask 130112
        %1474 = vst.msk [vmem:[#allocation2] sm:$0xff] %vm1473, %v1471
        %1475 = vrot.lane.b32.xlu0 %v1133, 112
        %v1476 = vpop.permute.xlu0 %1475
        %1477 = vrot.lane.b32.xlu0 %v1133, 80
        %v1478 = vpop.permute.xlu0 %1477
        %v1479 = vsel %vm1139, %v1476, 0
        %v1481 = vsel %vm1139, %v1478, 0
        %1483 = vmatprep.subr.mxu0 0.0
        %1484 = vmatpush1.xpose.msra.mxu0 0.0
        %1485 = vmatprep.subr.mxu0 0.0
        %1486 = vmatpush1.xpose.msra.mxu0 0.0
        %1487 = vmatprep.subr.mxu0 0.0
        %1488 = vmatpush1.xpose.msra.mxu0 0.0
        %1489 = vmatprep.subr.mxu0 0.0
        %1490 = vmatpush1.xpose.msra.mxu0 0.0
        %1491 = vmatprep.subr.mxu0 0.0
        %1492 = vmatpush1.xpose.msra.mxu0 0.0
        %1493 = vmatprep.subr.mxu0 0.0
        %1494 = vmatpush1.xpose.msra.mxu0 0.0
        %1495 = vmatprep.subr.mxu0 0.0
        %1496 = vmatpush1.xpose.msra.mxu0 0.0
        %1497 = vmatprep.subr.mxu0 0.0
        %1498 = vmatpush1.xpose.msra.mxu0 0.0
        %1499 = vmatprep.subr.mxu0 0.0
        %1500 = vmatpush1.xpose.msra.mxu0 0.0
        %1501 = vmatprep.subr.mxu0 0.0
        %1502 = vmatpush1.xpose.msra.mxu0 0.0
        %1503 = vmatprep.subr.mxu0 0.0
        %1504 = vmatpush1.xpose.msra.mxu0 0.0
        %1505 = vmatprep.subr.mxu0 0.0
        %1506 = vmatpush1.xpose.msra.mxu0 0.0
        %1507 = vmatprep.subr.mxu0 0.0
        %1508 = vmatpush1.xpose.msra.mxu0 0.0
        %1509 = vmatprep.subr.mxu0 0.0
        %1510 = vmatpush1.xpose.msra.mxu0 0.0
        %1511 = vmatprep.subr.mxu0 0.0
        %1512 = vmatpush1.xpose.msra.mxu0 0.0
        %1513 = vmatprep.subr.mxu0 0.0
        %1514 = vmatpush1.xpose.msra.mxu0 %v1481
        %1515 = vmatprep.subr.mxu0 0.0
        %1516 = vmatpush2.xpose.msra.mxu0 0.0
        %1517 = vmatprep.subr.mxu0 0.0
        %1518 = vmatpush2.xpose.msra.mxu0 0.0
        %1519 = vmatprep.subr.mxu0 0.0
        %1520 = vmatpush2.xpose.msra.mxu0 0.0
        %1521 = vmatprep.subr.mxu0 0.0
        %1522 = vmatpush2.xpose.msra.mxu0 0.0
        %1523 = vmatprep.subr.mxu0 0.0
        %1524 = vmatpush2.xpose.msra.mxu0 0.0
        %1525 = vmatprep.subr.mxu0 0.0
        %1526 = vmatpush2.xpose.msra.mxu0 0.0
        %1527 = vmatprep.subr.mxu0 0.0
        %1528 = vmatpush2.xpose.msra.mxu0 0.0
        %1529 = vmatprep.subr.mxu0 0.0
        %1530 = vmatpush2.xpose.msra.mxu0 0.0
        %1531 = vmatprep.subr.mxu0 0.0
        %1532 = vmatpush2.xpose.msra.mxu0 0.0
        %1533 = vmatprep.subr.mxu0 0.0
        %1534 = vmatpush2.xpose.msra.mxu0 0.0
        %1535 = vmatprep.subr.mxu0 0.0
        %1536 = vmatpush2.xpose.msra.mxu0 0.0
        %1537 = vmatprep.subr.mxu0 0.0
        %1538 = vmatpush2.xpose.msra.mxu0 0.0
        %1539 = vmatprep.subr.mxu0 0.0
        %1540 = vmatpush2.xpose.msra.mxu0 0.0
        %1541 = vmatprep.subr.mxu0 0.0
        %1542 = vmatpush2.xpose.msra.mxu0 0.0
        %1543 = vmatprep.subr.mxu0 0.0
        %1544 = vmatpush2.xpose.msra.mxu0 0.0
        %1545 = vmatprep.subr.mxu0 0.0
        %1546 = vmatpush2.xpose.msra.mxu0 0.0
        %1547 = vmatprep.mubr.f32.mxu0 0.0
        %1548 = vmatmul.mubr.f32.gmra.mxu0 %v1479
        %v1549 = vpop.f32.mrf.mxu0
        %v1550 = vadd.f32 0.0, %v1549
        %v1551 = vpop.f32.mrf.mxu0
        %1552 = vdwg.mxu0
        %v1553 = vsel %vm1014, -1e+09, %v1550
        %v1554 = vsel %vm1139, %v1553, -inf
        %1555 = vmax.xlane.f32.xlu0 %v1554
        %v1556 = vpop.xlane.xlu0 %1555
        %v1557 = vsub.f32 %v1553, %v1556
        %v1558 = vmul.f32 %v1557, 1.442695
        %v1559 = vpow.pop %v1558
        %v1560 = vsel %vm1139, %v1559, 0.0
        %1561 = vadd.xlane.f32.xlu0 %v1560
        %v1562 = vpop.xlane.xlu0 %1561
        %v1563 = vrcp.pop %v1562
        %v1564 = vmul.f32 %v1559, %v1563
        %1565 = vrot.lane.b32.xlu0 %v1133, 48
        %v1566 = vpop.permute.xlu0 %1565
        %v1569 = vsel %vm1139, %v1564, 0
        %1571 = vmatprep.subr.mxu0 0.0
        %1572 = vmatpush1.msra.mxu0 0.0
        %1573 = vmatprep.subr.mxu0 0.0
        %1574 = vmatpush1.msra.mxu0 0.0
        %1575 = vmatprep.subr.mxu0 0.0
        %1576 = vmatpush1.msra.mxu0 0.0
        %1577 = vmatprep.subr.mxu0 0.0
        %1578 = vmatpush1.msra.mxu0 0.0
        %1579 = vmatprep.subr.mxu0 0.0
        %1580 = vmatpush1.msra.mxu0 0.0
        %1581 = vmatprep.subr.mxu0 0.0
        %1582 = vmatpush1.msra.mxu0 0.0
        %1583 = vmatprep.subr.mxu0 0.0
        %1584 = vmatpush1.msra.mxu0 0.0
        %1585 = vmatprep.subr.mxu0 0.0
        %1586 = vmatpush1.msra.mxu0 0.0
        %1587 = vmatprep.subr.mxu0 0.0
        %1588 = vmatpush1.msra.mxu0 0.0
        %1589 = vmatprep.subr.mxu0 0.0
        %1590 = vmatpush1.msra.mxu0 0.0
        %1591 = vmatprep.subr.mxu0 0.0
        %1592 = vmatpush1.msra.mxu0 0.0
        %1593 = vmatprep.subr.mxu0 0.0
        %1594 = vmatpush1.msra.mxu0 0.0
        %1595 = vmatprep.subr.mxu0 0.0
        %1596 = vmatpush1.msra.mxu0 0.0
        %1597 = vmatprep.subr.mxu0 0.0
        %1598 = vmatpush1.msra.mxu0 0.0
        %1599 = vmatprep.subr.mxu0 0.0
        %1600 = vmatpush1.msra.mxu0 0.0
        %1601 = vmatprep.subr.mxu0 0.0
        %1602 = vmatpush1.msra.mxu0 %v1566
        %1603 = vmatprep.subr.mxu0 0.0
        %1604 = vmatpush2.msra.mxu0 0.0
        %1605 = vmatprep.subr.mxu0 0.0
        %1606 = vmatpush2.msra.mxu0 0.0
        %1607 = vmatprep.subr.mxu0 0.0
        %1608 = vmatpush2.msra.mxu0 0.0
        %1609 = vmatprep.subr.mxu0 0.0
        %1610 = vmatpush2.msra.mxu0 0.0
        %1611 = vmatprep.subr.mxu0 0.0
        %1612 = vmatpush2.msra.mxu0 0.0
        %1613 = vmatprep.subr.mxu0 0.0
        %1614 = vmatpush2.msra.mxu0 0.0
        %1615 = vmatprep.subr.mxu0 0.0
        %1616 = vmatpush2.msra.mxu0 0.0
        %1617 = vmatprep.subr.mxu0 0.0
        %1618 = vmatpush2.msra.mxu0 0.0
        %1619 = vmatprep.subr.mxu0 0.0
        %1620 = vmatpush2.msra.mxu0 0.0
        %1621 = vmatprep.subr.mxu0 0.0
        %1622 = vmatpush2.msra.mxu0 0.0
        %1623 = vmatprep.subr.mxu0 0.0
        %1624 = vmatpush2.msra.mxu0 0.0
        %1625 = vmatprep.subr.mxu0 0.0
        %1626 = vmatpush2.msra.mxu0 0.0
        %1627 = vmatprep.subr.mxu0 0.0
        %1628 = vmatpush2.msra.mxu0 0.0
        %1629 = vmatprep.subr.mxu0 0.0
        %1630 = vmatpush2.msra.mxu0 0.0
        %1631 = vmatprep.subr.mxu0 0.0
        %1632 = vmatpush2.msra.mxu0 0.0
        %1633 = vmatprep.subr.mxu0 0.0
        %1634 = vmatpush2.msra.mxu0 0.0
        %1635 = vmatprep.mubr.f32.mxu0 0.0
        %1636 = vmatmul.mubr.f32.gmra.mxu0 %v1569
        %v1637 = vpop.f32.mrf.mxu0
        %v1638 = vadd.f32 0.0, %v1637
        %v1639 = vpop.f32.mrf.mxu0
        %1640 = vdwg.mxu0
        %1642 = vrot.lane.b32.xlu0 %v1638, 16
        %v1643 = vpop.permute.xlu0 %1642
        %vm1645 = vcmask 195712
        %1646 = vst.msk [vmem:[#allocation2] sm:$0xff] %vm1645, %v1643
        %1647 = vrot.lane.b32.xlu0 %v1133, 104
        %v1648 = vpop.permute.xlu0 %1647
        %1649 = vrot.lane.b32.xlu0 %v1133, 72
        %v1650 = vpop.permute.xlu0 %1649
        %v1651 = vsel %vm1139, %v1648, 0
        %v1653 = vsel %vm1139, %v1650, 0
        %1655 = vmatprep.subr.mxu0 0.0
        %1656 = vmatpush1.xpose.msra.mxu0 0.0
        %1657 = vmatprep.subr.mxu0 0.0
        %1658 = vmatpush1.xpose.msra.mxu0 0.0
        %1659 = vmatprep.subr.mxu0 0.0
        %1660 = vmatpush1.xpose.msra.mxu0 0.0
        %1661 = vmatprep.subr.mxu0 0.0
        %1662 = vmatpush1.xpose.msra.mxu0 0.0
        %1663 = vmatprep.subr.mxu0 0.0
        %1664 = vmatpush1.xpose.msra.mxu0 0.0
        %1665 = vmatprep.subr.mxu0 0.0
        %1666 = vmatpush1.xpose.msra.mxu0 0.0
        %1667 = vmatprep.subr.mxu0 0.0
        %1668 = vmatpush1.xpose.msra.mxu0 0.0
        %1669 = vmatprep.subr.mxu0 0.0
        %1670 = vmatpush1.xpose.msra.mxu0 0.0
        %1671 = vmatprep.subr.mxu0 0.0
        %1672 = vmatpush1.xpose.msra.mxu0 0.0
        %1673 = vmatprep.subr.mxu0 0.0
        %1674 = vmatpush1.xpose.msra.mxu0 0.0
        %1675 = vmatprep.subr.mxu0 0.0
        %1676 = vmatpush1.xpose.msra.mxu0 0.0
        %1677 = vmatprep.subr.mxu0 0.0
        %1678 = vmatpush1.xpose.msra.mxu0 0.0
        %1679 = vmatprep.subr.mxu0 0.0
        %1680 = vmatpush1.xpose.msra.mxu0 0.0
        %1681 = vmatprep.subr.mxu0 0.0
        %1682 = vmatpush1.xpose.msra.mxu0 0.0
        %1683 = vmatprep.subr.mxu0 0.0
        %1684 = vmatpush1.xpose.msra.mxu0 0.0
        %1685 = vmatprep.subr.mxu0 0.0
        %1686 = vmatpush1.xpose.msra.mxu0 %v1653
        %1687 = vmatprep.subr.mxu0 0.0
        %1688 = vmatpush2.xpose.msra.mxu0 0.0
        %1689 = vmatprep.subr.mxu0 0.0
        %1690 = vmatpush2.xpose.msra.mxu0 0.0
        %1691 = vmatprep.subr.mxu0 0.0
        %1692 = vmatpush2.xpose.msra.mxu0 0.0
        %1693 = vmatprep.subr.mxu0 0.0
        %1694 = vmatpush2.xpose.msra.mxu0 0.0
        %1695 = vmatprep.subr.mxu0 0.0
        %1696 = vmatpush2.xpose.msra.mxu0 0.0
        %1697 = vmatprep.subr.mxu0 0.0
        %1698 = vmatpush2.xpose.msra.mxu0 0.0
        %1699 = vmatprep.subr.mxu0 0.0
        %1700 = vmatpush2.xpose.msra.mxu0 0.0
        %1701 = vmatprep.subr.mxu0 0.0
        %1702 = vmatpush2.xpose.msra.mxu0 0.0
        %1703 = vmatprep.subr.mxu0 0.0
        %1704 = vmatpush2.xpose.msra.mxu0 0.0
        %1705 = vmatprep.subr.mxu0 0.0
        %1706 = vmatpush2.xpose.msra.mxu0 0.0
        %1707 = vmatprep.subr.mxu0 0.0
        %1708 = vmatpush2.xpose.msra.mxu0 0.0
        %1709 = vmatprep.subr.mxu0 0.0
        %1710 = vmatpush2.xpose.msra.mxu0 0.0
        %1711 = vmatprep.subr.mxu0 0.0
        %1712 = vmatpush2.xpose.msra.mxu0 0.0
        %1713 = vmatprep.subr.mxu0 0.0
        %1714 = vmatpush2.xpose.msra.mxu0 0.0
        %1715 = vmatprep.subr.mxu0 0.0
        %1716 = vmatpush2.xpose.msra.mxu0 0.0
        %1717 = vmatprep.subr.mxu0 0.0
        %1718 = vmatpush2.xpose.msra.mxu0 0.0
        %1719 = vmatprep.mubr.f32.mxu0 0.0
        %1720 = vmatmul.mubr.f32.gmra.mxu0 %v1651
        %v1721 = vpop.f32.mrf.mxu0
        %v1722 = vadd.f32 0.0, %v1721
        %v1723 = vpop.f32.mrf.mxu0
        %1724 = vdwg.mxu0
        %v1725 = vsel %vm1014, -1e+09, %v1722
        %v1726 = vsel %vm1139, %v1725, -inf
        %1727 = vmax.xlane.f32.xlu0 %v1726
        %v1728 = vpop.xlane.xlu0 %1727
        %v1729 = vsub.f32 %v1725, %v1728
        %v1730 = vmul.f32 %v1729, 1.442695
        %v1731 = vpow.pop %v1730
        %v1732 = vsel %vm1139, %v1731, 0.0
        %1733 = vadd.xlane.f32.xlu0 %v1732
        %v1734 = vpop.xlane.xlu0 %1733
        %v1735 = vrcp.pop %v1734
        %v1736 = vmul.f32 %v1731, %v1735
        %1737 = vrot.lane.b32.xlu0 %v1133, 40
        %v1738 = vpop.permute.xlu0 %1737
        %v1741 = vsel %vm1139, %v1736, 0
        %1743 = vmatprep.subr.mxu0 0.0
        %1744 = vmatpush1.msra.mxu0 0.0
        %1745 = vmatprep.subr.mxu0 0.0
        %1746 = vmatpush1.msra.mxu0 0.0
        %1747 = vmatprep.subr.mxu0 0.0
        %1748 = vmatpush1.msra.mxu0 0.0
        %1749 = vmatprep.subr.mxu0 0.0
        %1750 = vmatpush1.msra.mxu0 0.0
        %1751 = vmatprep.subr.mxu0 0.0
        %1752 = vmatpush1.msra.mxu0 0.0
        %1753 = vmatprep.subr.mxu0 0.0
        %1754 = vmatpush1.msra.mxu0 0.0
        %1755 = vmatprep.subr.mxu0 0.0
        %1756 = vmatpush1.msra.mxu0 0.0
        %1757 = vmatprep.subr.mxu0 0.0
        %1758 = vmatpush1.msra.mxu0 0.0
        %1759 = vmatprep.subr.mxu0 0.0
        %1760 = vmatpush1.msra.mxu0 0.0
        %1761 = vmatprep.subr.mxu0 0.0
        %1762 = vmatpush1.msra.mxu0 0.0
        %1763 = vmatprep.subr.mxu0 0.0
        %1764 = vmatpush1.msra.mxu0 0.0
        %1765 = vmatprep.subr.mxu0 0.0
        %1766 = vmatpush1.msra.mxu0 0.0
        %1767 = vmatprep.subr.mxu0 0.0
        %1768 = vmatpush1.msra.mxu0 0.0
        %1769 = vmatprep.subr.mxu0 0.0
        %1770 = vmatpush1.msra.mxu0 0.0
        %1771 = vmatprep.subr.mxu0 0.0
        %1772 = vmatpush1.msra.mxu0 0.0
        %1773 = vmatprep.subr.mxu0 0.0
        %1774 = vmatpush1.msra.mxu0 %v1738
        %1775 = vmatprep.subr.mxu0 0.0
        %1776 = vmatpush2.msra.mxu0 0.0
        %1777 = vmatprep.subr.mxu0 0.0
        %1778 = vmatpush2.msra.mxu0 0.0
        %1779 = vmatprep.subr.mxu0 0.0
        %1780 = vmatpush2.msra.mxu0 0.0
        %1781 = vmatprep.subr.mxu0 0.0
        %1782 = vmatpush2.msra.mxu0 0.0
        %1783 = vmatprep.subr.mxu0 0.0
        %1784 = vmatpush2.msra.mxu0 0.0
        %1785 = vmatprep.subr.mxu0 0.0
        %1786 = vmatpush2.msra.mxu0 0.0
        %1787 = vmatprep.subr.mxu0 0.0
        %1788 = vmatpush2.msra.mxu0 0.0
        %1789 = vmatprep.subr.mxu0 0.0
        %1790 = vmatpush2.msra.mxu0 0.0
        %1791 = vmatprep.subr.mxu0 0.0
        %1792 = vmatpush2.msra.mxu0 0.0
        %1793 = vmatprep.subr.mxu0 0.0
        %1794 = vmatpush2.msra.mxu0 0.0
        %1795 = vmatprep.subr.mxu0 0.0
        %1796 = vmatpush2.msra.mxu0 0.0
        %1797 = vmatprep.subr.mxu0 0.0
        %1798 = vmatpush2.msra.mxu0 0.0
        %1799 = vmatprep.subr.mxu0 0.0
        %1800 = vmatpush2.msra.mxu0 0.0
        %1801 = vmatprep.subr.mxu0 0.0
        %1802 = vmatpush2.msra.mxu0 0.0
        %1803 = vmatprep.subr.mxu0 0.0
        %1804 = vmatpush2.msra.mxu0 0.0
        %1805 = vmatprep.subr.mxu0 0.0
        %1806 = vmatpush2.msra.mxu0 0.0
        %1807 = vmatprep.mubr.f32.mxu0 0.0
        %1808 = vmatmul.mubr.f32.gmra.mxu0 %v1741
        %v1809 = vpop.f32.mrf.mxu0
        %v1810 = vadd.f32 0.0, %v1809
        %v1811 = vpop.f32.mrf.mxu0
        %1812 = vdwg.mxu0
        %1814 = vrot.lane.b32.xlu0 %v1810, 24
        %v1815 = vpop.permute.xlu0 %1814
        %vm1817 = vcmask 261312
        %1818 = vst.msk [vmem:[#allocation2] sm:$0xff] %vm1817, %v1815
        %v1819 = vld [vmem:[#allocation2] sm:$0xff]
        %v1820 = vld [vmem:[%s10] sm:$0xff]
        %v1821 = vld [vmem:[%s10 + $0x8] sm:$0xff]
        %v1822 = vld [vmem:[%s10 + $0x10] sm:$0xff]
        %v1823 = vld [vmem:[%s10 + $0x18] sm:$0xff]
        %v1824 = vld [vmem:[#allocation14] sm:$0x1]
        %v1826 = vlaneseq
        %v1827 = vshrl.u32 %v1826, 7
        %v1828 = vsub.s32 0, %v1827
        %v1829 = vrot.slane %v1824, %v1828
        %v1832 = vsel %vm939, %v1819, 0
        %1834 = vmatprep.subr.mxu0 0.0
        %1835 = vmatpush1.msra.mxu0 0.0
        %1836 = vmatprep.subr.mxu0 0.0
        %1837 = vmatpush1.msra.mxu0 0.0
        %1838 = vmatprep.subr.mxu0 0.0
        %1839 = vmatpush1.msra.mxu0 0.0
        %1840 = vmatprep.subr.mxu0 0.0
        %1841 = vmatpush1.msra.mxu0 0.0
        %1842 = vmatprep.subr.mxu0 0.0
        %1843 = vmatpush1.msra.mxu0 0.0
        %1844 = vmatprep.subr.mxu0 0.0
        %1845 = vmatpush1.msra.mxu0 0.0
        %1846 = vmatprep.subr.mxu0 0.0
        %1847 = vmatpush1.msra.mxu0 0.0
        %1848 = vmatprep.subr.mxu0 0.0
        %1849 = vmatpush1.msra.mxu0 0.0
        %1850 = vmatprep.subr.mxu0 0.0
        %1851 = vmatpush1.msra.mxu0 0.0
        %1852 = vmatprep.subr.mxu0 0.0
        %1853 = vmatpush1.msra.mxu0 0.0
        %1854 = vmatprep.subr.mxu0 0.0
        %1855 = vmatpush1.msra.mxu0 0.0
        %1856 = vmatprep.subr.mxu0 0.0
        %1857 = vmatpush1.msra.mxu0 0.0
        %1858 = vmatprep.subr.mxu0 0.0
        %1859 = vmatpush1.msra.mxu0 %v1823
        %1860 = vmatprep.subr.mxu0 0.0
        %1861 = vmatpush1.msra.mxu0 %v1822
        %1862 = vmatprep.subr.mxu0 0.0
        %1863 = vmatpush1.msra.mxu0 %v1821
        %1864 = vmatprep.subr.mxu0 0.0
        %1865 = vmatpush1.msra.mxu0 %v1820
        %1866 = vmatprep.subr.mxu0 0.0
        %1867 = vmatpush2.msra.mxu0 0.0
        %1868 = vmatprep.subr.mxu0 0.0
        %1869 = vmatpush2.msra.mxu0 0.0
        %1870 = vmatprep.subr.mxu0 0.0
        %1871 = vmatpush2.msra.mxu0 0.0
        %1872 = vmatprep.subr.mxu0 0.0
        %1873 = vmatpush2.msra.mxu0 0.0
        %1874 = vmatprep.subr.mxu0 0.0
        %1875 = vmatpush2.msra.mxu0 0.0
        %1876 = vmatprep.subr.mxu0 0.0
        %1877 = vmatpush2.msra.mxu0 0.0
        %1878 = vmatprep.subr.mxu0 0.0
        %1879 = vmatpush2.msra.mxu0 0.0
        %1880 = vmatprep.subr.mxu0 0.0
        %1881 = vmatpush2.msra.mxu0 0.0
        %1882 = vmatprep.subr.mxu0 0.0
        %1883 = vmatpush2.msra.mxu0 0.0
        %1884 = vmatprep.subr.mxu0 0.0
        %1885 = vmatpush2.msra.mxu0 0.0
        %1886 = vmatprep.subr.mxu0 0.0
        %1887 = vmatpush2.msra.mxu0 0.0
        %1888 = vmatprep.subr.mxu0 0.0
        %1889 = vmatpush2.msra.mxu0 0.0
        %1890 = vmatprep.subr.mxu0 0.0
        %1891 = vmatpush2.msra.mxu0 0.0
        %1892 = vmatprep.subr.mxu0 0.0
        %1893 = vmatpush2.msra.mxu0 0.0
        %1894 = vmatprep.subr.mxu0 0.0
        %1895 = vmatpush2.msra.mxu0 0.0
        %1896 = vmatprep.subr.mxu0 0.0
        %1897 = vmatpush2.msra.mxu0 0.0
        %1898 = vmatprep.mubr.f32.mxu0 0.0
        %1899 = vmatmul.mubr.f32.gmra.mxu0 %v1832
        %v1900 = vpop.f32.mrf.mxu0
        %v1901 = vadd.f32 %v1829, %v1900
        %v1902 = vpop.f32.mrf.mxu0
        %1903 = vdwg.mxu0
        %v1904 = vadd.f32 %v926, %v1901
        %v1905 = vsel %vm939, %v1904, 0.0
        %1906 = vadd.xlane.f32.xlu0 %v1905
        %v1907 = vpop.xlane.xlu0 %1906
        %v1908 = vmul.f32 %v1907, %v1024
        %v1909 = vsub.f32 %v1904, %v1908
        %v1910 = vmul.f32 %v1909, %v1909
        %v1911 = vsel %vm939, %v1910, 0.0
        %1912 = vadd.xlane.f32.xlu0 %v1911
        %v1913 = vpop.xlane.xlu0 %1912
        %v1914 = vmul.f32 %v1913, 0.032258064
        %v1915 = vlaneseq
        %v1916 = vshrl.u32 %v1915, 7
        %v1917 = vsub.s32 1, %v1916
        %v1918 = vrot.slane %v1017, %v1917
        %v1919 = vmul.f32 %v1918, %v1909
        %v1920 = vrsqrt.pop %v1914
        %v1921 = vmul.f32 %v1914, %v1920
        %vm1922 = vcmp.eq.f32.partialorder %v1914, inf
        %v1923 = vsel %vm1922, %v1914, %v1921
        %vm1924 = vcmp.eq.f32.partialorder %v1914, 0.0
        %v1925 = vand.u32 %v1914, 2147483648
        %v1926 = vsel %vm1924, %v1925, %v1923
        %v1927 = vadd.f32 %v1926, 1e-06
        %v1928 = vrcp.pop %v1927
        %v1929 = vmul.f32 %v1919, %v1928
        %v1930 = vlaneseq
        %v1931 = vshrl.u32 %v1930, 7
        %v1932 = vsub.s32 1, %v1931
        %v1933 = vrot.slane %v1019, %v1932
        %v1934 = vadd.f32 %v1929, %v1933
        %v1935 = vld [vmem:[%s12] sm:$0xff]
        %v1936 = vld [vmem:[%s12 + $0x8] sm:$0xff]
        %v1937 = vld [vmem:[%s12 + $0x10] sm:$0xff]
        %v1938 = vld [vmem:[%s12 + $0x18] sm:$0xff]
        %v1939 = vld [vmem:[#allocation15] sm:$0x1]
        %v1941 = vlaneseq
        %v1942 = vshrl.u32 %v1941, 7
        %v1943 = vsub.s32 0, %v1942
        %v1944 = vrot.slane %v1939, %v1943
        %v1947 = vsel %vm939, %v1934, 0
        %1949 = vmatprep.subr.mxu0 0.0
        %1950 = vmatpush1.msra.mxu0 0.0
        %1951 = vmatprep.subr.mxu0 0.0
        %1952 = vmatpush1.msra.mxu0 0.0
        %1953 = vmatprep.subr.mxu0 0.0
        %1954 = vmatpush1.msra.mxu0 0.0
        %1955 = vmatprep.subr.mxu0 0.0
        %1956 = vmatpush1.msra.mxu0 0.0
        %1957 = vmatprep.subr.mxu0 0.0
        %1958 = vmatpush1.msra.mxu0 0.0
        %1959 = vmatprep.subr.mxu0 0.0
        %1960 = vmatpush1.msra.mxu0 0.0
        %1961 = vmatprep.subr.mxu0 0.0
        %1962 = vmatpush1.msra.mxu0 0.0
        %1963 = vmatprep.subr.mxu0 0.0
        %1964 = vmatpush1.msra.mxu0 0.0
        %1965 = vmatprep.subr.mxu0 0.0
        %1966 = vmatpush1.msra.mxu0 0.0
        %1967 = vmatprep.subr.mxu0 0.0
        %1968 = vmatpush1.msra.mxu0 0.0
        %1969 = vmatprep.subr.mxu0 0.0
        %1970 = vmatpush1.msra.mxu0 0.0
        %1971 = vmatprep.subr.mxu0 0.0
        %1972 = vmatpush1.msra.mxu0 0.0
        %1973 = vmatprep.subr.mxu0 0.0
        %1974 = vmatpush1.msra.mxu0 %v1938
        %1975 = vmatprep.subr.mxu0 0.0
        %1976 = vmatpush1.msra.mxu0 %v1937
        %1977 = vmatprep.subr.mxu0 0.0
        %1978 = vmatpush1.msra.mxu0 %v1936
        %1979 = vmatprep.subr.mxu0 0.0
        %1980 = vmatpush1.msra.mxu0 %v1935
        %1981 = vmatprep.subr.mxu0 0.0
        %1982 = vmatpush2.msra.mxu0 0.0
        %1983 = vmatprep.subr.mxu0 0.0
        %1984 = vmatpush2.msra.mxu0 0.0
        %1985 = vmatprep.subr.mxu0 0.0
        %1986 = vmatpush2.msra.mxu0 0.0
        %1987 = vmatprep.subr.mxu0 0.0
        %1988 = vmatpush2.msra.mxu0 0.0
        %1989 = vmatprep.subr.mxu0 0.0
        %1990 = vmatpush2.msra.mxu0 0.0
        %1991 = vmatprep.subr.mxu0 0.0
        %1992 = vmatpush2.msra.mxu0 0.0
        %1993 = vmatprep.subr.mxu0 0.0
        %1994 = vmatpush2.msra.mxu0 0.0
        %1995 = vmatprep.subr.mxu0 0.0
        %1996 = vmatpush2.msra.mxu0 0.0
        %1997 = vmatprep.subr.mxu0 0.0
        %1998 = vmatpush2.msra.mxu0 0.0
        %1999 = vmatprep.subr.mxu0 0.0
        %2000 = vmatpush2.msra.mxu0 0.0
        %2001 = vmatprep.subr.mxu0 0.0
        %2002 = vmatpush2.msra.mxu0 0.0
        %2003 = vmatprep.subr.mxu0 0.0
        %2004 = vmatpush2.msra.mxu0 0.0
        %2005 = vmatprep.subr.mxu0 0.0
        %2006 = vmatpush2.msra.mxu0 0.0
        %2007 = vmatprep.subr.mxu0 0.0
        %2008 = vmatpush2.msra.mxu0 0.0
        %2009 = vmatprep.subr.mxu0 0.0
        %2010 = vmatpush2.msra.mxu0 0.0
        %2011 = vmatprep.subr.mxu0 0.0
        %2012 = vmatpush2.msra.mxu0 0.0
        %2013 = vmatprep.mubr.f32.mxu0 0.0
        %2014 = vmatmul.mubr.f32.gmra.mxu0 %v1947
        %v2015 = vpop.f32.mrf.mxu0
        %v2016 = vadd.f32 %v1944, %v2015
        %v2017 = vpop.f32.mrf.mxu0
        %2018 = vdwg.mxu0
        %v2020 = vsel %vm1139, %v2016, 0
        %v2023 = vsel %vm1139, %v1010, 0
        %2025 = vmatprep.subr.mxu0 0.0
        %2026 = vmatpush1.xpose.msra.mxu0 0.0
        %2027 = vmatprep.subr.mxu0 0.0
        %2028 = vmatpush1.xpose.msra.mxu0 0.0
        %2029 = vmatprep.subr.mxu0 0.0
        %2030 = vmatpush1.xpose.msra.mxu0 0.0
        %2031 = vmatprep.subr.mxu0 0.0
        %2032 = vmatpush1.xpose.msra.mxu0 0.0
        %2033 = vmatprep.subr.mxu0 0.0
        %2034 = vmatpush1.xpose.msra.mxu0 0.0
        %2035 = vmatprep.subr.mxu0 0.0
        %2036 = vmatpush1.xpose.msra.mxu0 0.0
        %2037 = vmatprep.subr.mxu0 0.0
        %2038 = vmatpush1.xpose.msra.mxu0 0.0
        %2039 = vmatprep.subr.mxu0 0.0
        %2040 = vmatpush1.xpose.msra.mxu0 0.0
        %2041 = vmatprep.subr.mxu0 0.0
        %2042 = vmatpush1.xpose.msra.mxu0 0.0
        %2043 = vmatprep.subr.mxu0 0.0
        %2044 = vmatpush1.xpose.msra.mxu0 0.0
        %2045 = vmatprep.subr.mxu0 0.0
        %2046 = vmatpush1.xpose.msra.mxu0 0.0
        %2047 = vmatprep.subr.mxu0 0.0
        %2048 = vmatpush1.xpose.msra.mxu0 0.0
        %2049 = vmatprep.subr.mxu0 0.0
        %2050 = vmatpush1.xpose.msra.mxu0 0.0
        %2051 = vmatprep.subr.mxu0 0.0
        %2052 = vmatpush1.xpose.msra.mxu0 0.0
        %2053 = vmatprep.subr.mxu0 0.0
        %2054 = vmatpush1.xpose.msra.mxu0 0.0
        %2055 = vmatprep.subr.mxu0 0.0
        %2056 = vmatpush1.xpose.msra.mxu0 %v2023
        %2057 = vmatprep.subr.mxu0 0.0
        %2058 = vmatpush2.xpose.msra.mxu0 0.0
        %2059 = vmatprep.subr.mxu0 0.0
        %2060 = vmatpush2.xpose.msra.mxu0 0.0
        %2061 = vmatprep.subr.mxu0 0.0
        %2062 = vmatpush2.xpose.msra.mxu0 0.0
        %2063 = vmatprep.subr.mxu0 0.0
        %2064 = vmatpush2.xpose.msra.mxu0 0.0
        %2065 = vmatprep.subr.mxu0 0.0
        %2066 = vmatpush2.xpose.msra.mxu0 0.0
        %2067 = vmatprep.subr.mxu0 0.0
        %2068 = vmatpush2.xpose.msra.mxu0 0.0
        %2069 = vmatprep.subr.mxu0 0.0
        %2070 = vmatpush2.xpose.msra.mxu0 0.0
        %2071 = vmatprep.subr.mxu0 0.0
        %2072 = vmatpush2.xpose.msra.mxu0 0.0
        %2073 = vmatprep.subr.mxu0 0.0
        %2074 = vmatpush2.xpose.msra.mxu0 0.0
        %2075 = vmatprep.subr.mxu0 0.0
        %2076 = vmatpush2.xpose.msra.mxu0 0.0
        %2077 = vmatprep.subr.mxu0 0.0
        %2078 = vmatpush2.xpose.msra.mxu0 0.0
        %2079 = vmatprep.subr.mxu0 0.0
        %2080 = vmatpush2.xpose.msra.mxu0 0.0
        %2081 = vmatprep.subr.mxu0 0.0
        %2082 = vmatpush2.xpose.msra.mxu0 0.0
        %2083 = vmatprep.subr.mxu0 0.0
        %2084 = vmatpush2.xpose.msra.mxu0 0.0
        %2085 = vmatprep.subr.mxu0 0.0
        %2086 = vmatpush2.xpose.msra.mxu0 0.0
        %2087 = vmatprep.subr.mxu0 0.0
        %2088 = vmatpush2.xpose.msra.mxu0 0.0
        %2089 = vmatprep.mubr.f32.mxu0 0.0
        %2090 = vmatmul.mubr.f32.gmra.mxu0 %v2020
        %v2091 = vpop.f32.mrf.mxu0
        %v2092 = vadd.f32 0.0, %v2091
        %v2093 = vpop.f32.mrf.mxu0
        %2094 = vdwg.mxu0
        %v2095 = vsel %vm1016, 1, 0
        %v2096 = vlaneseq
        %v2097 = vshrl.u32 %v2096, 7
        %v2098 = vsub.s32 0, %v2097
        %v2099 = vrot.slane %v2095, %v2098
        %vm2100 = vcmp.eq.s32.totalorder %v2099, 1
        %v2101 = vsel %vm2100, -1e+09, %v2092
        %v2102 = vsel %vm1139, %v2101, -inf
        %2103 = vmax.xlane.f32.xlu0 %v2102
        %v2104 = vpop.xlane.xlu0 %2103
        %v2105 = vsub.f32 %v2101, %v2104
        %v2106 = vmul.f32 %v2105, 1.442695
        %v2107 = vpow.pop %v2106
        %v2108 = vsel %vm1139, %v2107, 0.0
        %2109 = vadd.xlane.f32.xlu0 %v2108
        %v2110 = vpop.xlane.xlu0 %2109
        %v2111 = vrcp.pop %v2110
        %v2112 = vmul.f32 %v2107, %v2111
        %2113 = vrot.lane.b32.xlu0 %v1010, 96
        %v2114 = vpop.permute.xlu0 %2113
        %v2117 = vsel %vm1139, %v2112, 0
        %2119 = vmatprep.subr.mxu0 0.0
        %2120 = vmatpush1.msra.mxu0 0.0
        %2121 = vmatprep.subr.mxu0 0.0
        %2122 = vmatpush1.msra.mxu0 0.0
        %2123 = vmatprep.subr.mxu0 0.0
        %2124 = vmatpush1.msra.mxu0 0.0
        %2125 = vmatprep.subr.mxu0 0.0
        %2126 = vmatpush1.msra.mxu0 0.0
        %2127 = vmatprep.subr.mxu0 0.0
        %2128 = vmatpush1.msra.mxu0 0.0
        %2129 = vmatprep.subr.mxu0 0.0
        %2130 = vmatpush1.msra.mxu0 0.0
        %2131 = vmatprep.subr.mxu0 0.0
        %2132 = vmatpush1.msra.mxu0 0.0
        %2133 = vmatprep.subr.mxu0 0.0
        %2134 = vmatpush1.msra.mxu0 0.0
        %2135 = vmatprep.subr.mxu0 0.0
        %2136 = vmatpush1.msra.mxu0 0.0
        %2137 = vmatprep.subr.mxu0 0.0
        %2138 = vmatpush1.msra.mxu0 0.0
        %2139 = vmatprep.subr.mxu0 0.0
        %2140 = vmatpush1.msra.mxu0 0.0
        %2141 = vmatprep.subr.mxu0 0.0
        %2142 = vmatpush1.msra.mxu0 0.0
        %2143 = vmatprep.subr.mxu0 0.0
        %2144 = vmatpush1.msra.mxu0 0.0
        %2145 = vmatprep.subr.mxu0 0.0
        %2146 = vmatpush1.msra.mxu0 0.0
        %2147 = vmatprep.subr.mxu0 0.0
        %2148 = vmatpush1.msra.mxu0 0.0
        %2149 = vmatprep.subr.mxu0 0.0
        %2150 = vmatpush1.msra.mxu0 %v2114
        %2151 = vmatprep.subr.mxu0 0.0
        %2152 = vmatpush2.msra.mxu0 0.0
        %2153 = vmatprep.subr.mxu0 0.0
        %2154 = vmatpush2.msra.mxu0 0.0
        %2155 = vmatprep.subr.mxu0 0.0
        %2156 = vmatpush2.msra.mxu0 0.0
        %2157 = vmatprep.subr.mxu0 0.0
        %2158 = vmatpush2.msra.mxu0 0.0
        %2159 = vmatprep.subr.mxu0 0.0
        %2160 = vmatpush2.msra.mxu0 0.0
        %2161 = vmatprep.subr.mxu0 0.0
        %2162 = vmatpush2.msra.mxu0 0.0
        %2163 = vmatprep.subr.mxu0 0.0
        %2164 = vmatpush2.msra.mxu0 0.0
        %2165 = vmatprep.subr.mxu0 0.0
        %2166 = vmatpush2.msra.mxu0 0.0
        %2167 = vmatprep.subr.mxu0 0.0
        %2168 = vmatpush2.msra.mxu0 0.0
        %2169 = vmatprep.subr.mxu0 0.0
        %2170 = vmatpush2.msra.mxu0 0.0
        %2171 = vmatprep.subr.mxu0 0.0
        %2172 = vmatpush2.msra.mxu0 0.0
        %2173 = vmatprep.subr.mxu0 0.0
        %2174 = vmatpush2.msra.mxu0 0.0
        %2175 = vmatprep.subr.mxu0 0.0
        %2176 = vmatpush2.msra.mxu0 0.0
        %2177 = vmatprep.subr.mxu0 0.0
        %2178 = vmatpush2.msra.mxu0 0.0
        %2179 = vmatprep.subr.mxu0 0.0
        %2180 = vmatpush2.msra.mxu0 0.0
        %2181 = vmatprep.subr.mxu0 0.0
        %2182 = vmatpush2.msra.mxu0 0.0
        %2183 = vmatprep.mubr.f32.mxu0 0.0
        %2184 = vmatmul.mubr.f32.gmra.mxu0 %v2117
        %v2185 = vpop.f32.mrf.mxu0
        %v2186 = vadd.f32 0.0, %v2185
        %v2187 = vpop.f32.mrf.mxu0
        %2188 = vdwg.mxu0
        %2189 = vst.msk [vmem:[#allocation2] sm:$0xff] %vm1139, %v2186
        %2190 = vrot.lane.b32.xlu0 %v2016, 120
        %v2191 = vpop.permute.xlu0 %2190
        %2192 = vrot.lane.b32.xlu0 %v1010, 120
        %v2193 = vpop.permute.xlu0 %2192
        %v2194 = vsel %vm1139, %v2191, 0
        %v2196 = vsel %vm1139, %v2193, 0
        %2198 = vmatprep.subr.mxu0 0.0
        %2199 = vmatpush1.xpose.msra.mxu0 0.0
        %2200 = vmatprep.subr.mxu0 0.0
        %2201 = vmatpush1.xpose.msra.mxu0 0.0
        %2202 = vmatprep.subr.mxu0 0.0
        %2203 = vmatpush1.xpose.msra.mxu0 0.0
        %2204 = vmatprep.subr.mxu0 0.0
        %2205 = vmatpush1.xpose.msra.mxu0 0.0
        %2206 = vmatprep.subr.mxu0 0.0
        %2207 = vmatpush1.xpose.msra.mxu0 0.0
        %2208 = vmatprep.subr.mxu0 0.0
        %2209 = vmatpush1.xpose.msra.mxu0 0.0
        %2210 = vmatprep.subr.mxu0 0.0
        %2211 = vmatpush1.xpose.msra.mxu0 0.0
        %2212 = vmatprep.subr.mxu0 0.0
        %2213 = vmatpush1.xpose.msra.mxu0 0.0
        %2214 = vmatprep.subr.mxu0 0.0
        %2215 = vmatpush1.xpose.msra.mxu0 0.0
        %2216 = vmatprep.subr.mxu0 0.0
        %2217 = vmatpush1.xpose.msra.mxu0 0.0
        %2218 = vmatprep.subr.mxu0 0.0
        %2219 = vmatpush1.xpose.msra.mxu0 0.0
        %2220 = vmatprep.subr.mxu0 0.0
        %2221 = vmatpush1.xpose.msra.mxu0 0.0
        %2222 = vmatprep.subr.mxu0 0.0
        %2223 = vmatpush1.xpose.msra.mxu0 0.0
        %2224 = vmatprep.subr.mxu0 0.0
        %2225 = vmatpush1.xpose.msra.mxu0 0.0
        %2226 = vmatprep.subr.mxu0 0.0
        %2227 = vmatpush1.xpose.msra.mxu0 0.0
        %2228 = vmatprep.subr.mxu0 0.0
        %2229 = vmatpush1.xpose.msra.mxu0 %v2196
        %2230 = vmatprep.subr.mxu0 0.0
        %2231 = vmatpush2.xpose.msra.mxu0 0.0
        %2232 = vmatprep.subr.mxu0 0.0
        %2233 = vmatpush2.xpose.msra.mxu0 0.0
        %2234 = vmatprep.subr.mxu0 0.0
        %2235 = vmatpush2.xpose.msra.mxu0 0.0
        %2236 = vmatprep.subr.mxu0 0.0
        %2237 = vmatpush2.xpose.msra.mxu0 0.0
        %2238 = vmatprep.subr.mxu0 0.0
        %2239 = vmatpush2.xpose.msra.mxu0 0.0
        %2240 = vmatprep.subr.mxu0 0.0
        %2241 = vmatpush2.xpose.msra.mxu0 0.0
        %2242 = vmatprep.subr.mxu0 0.0
        %2243 = vmatpush2.xpose.msra.mxu0 0.0
        %2244 = vmatprep.subr.mxu0 0.0
        %2245 = vmatpush2.xpose.msra.mxu0 0.0
        %2246 = vmatprep.subr.mxu0 0.0
        %2247 = vmatpush2.xpose.msra.mxu0 0.0
        %2248 = vmatprep.subr.mxu0 0.0
        %2249 = vmatpush2.xpose.msra.mxu0 0.0
        %2250 = vmatprep.subr.mxu0 0.0
        %2251 = vmatpush2.xpose.msra.mxu0 0.0
        %2252 = vmatprep.subr.mxu0 0.0
        %2253 = vmatpush2.xpose.msra.mxu0 0.0
        %2254 = vmatprep.subr.mxu0 0.0
        %2255 = vmatpush2.xpose.msra.mxu0 0.0
        %2256 = vmatprep.subr.mxu0 0.0
        %2257 = vmatpush2.xpose.msra.mxu0 0.0
        %2258 = vmatprep.subr.mxu0 0.0
        %2259 = vmatpush2.xpose.msra.mxu0 0.0
        %2260 = vmatprep.subr.mxu0 0.0
        %2261 = vmatpush2.xpose.msra.mxu0 0.0
        %2262 = vmatprep.mubr.f32.mxu0 0.0
        %2263 = vmatmul.mubr.f32.gmra.mxu0 %v2194
        %v2264 = vpop.f32.mrf.mxu0
        %v2265 = vadd.f32 0.0, %v2264
        %v2266 = vpop.f32.mrf.mxu0
        %2267 = vdwg.mxu0
        %v2268 = vsel %vm2100, -1e+09, %v2265
        %v2269 = vsel %vm1139, %v2268, -inf
        %2270 = vmax.xlane.f32.xlu0 %v2269
        %v2271 = vpop.xlane.xlu0 %2270
        %v2272 = vsub.f32 %v2268, %v2271
        %v2273 = vmul.f32 %v2272, 1.442695
        %v2274 = vpow.pop %v2273
        %v2275 = vsel %vm1139, %v2274, 0.0
        %2276 = vadd.xlane.f32.xlu0 %v2275
        %v2277 = vpop.xlane.xlu0 %2276
        %v2278 = vrcp.pop %v2277
        %v2279 = vmul.f32 %v2274, %v2278
        %2280 = vrot.lane.b32.xlu0 %v1010, 88
        %v2281 = vpop.permute.xlu0 %2280
        %v2284 = vsel %vm1139, %v2279, 0
        %2286 = vmatprep.subr.mxu0 0.0
        %2287 = vmatpush1.msra.mxu0 0.0
        %2288 = vmatprep.subr.mxu0 0.0
        %2289 = vmatpush1.msra.mxu0 0.0
        %2290 = vmatprep.subr.mxu0 0.0
        %2291 = vmatpush1.msra.mxu0 0.0
        %2292 = vmatprep.subr.mxu0 0.0
        %2293 = vmatpush1.msra.mxu0 0.0
        %2294 = vmatprep.subr.mxu0 0.0
        %2295 = vmatpush1.msra.mxu0 0.0
        %2296 = vmatprep.subr.mxu0 0.0
        %2297 = vmatpush1.msra.mxu0 0.0
        %2298 = vmatprep.subr.mxu0 0.0
        %2299 = vmatpush1.msra.mxu0 0.0
        %2300 = vmatprep.subr.mxu0 0.0
        %2301 = vmatpush1.msra.mxu0 0.0
        %2302 = vmatprep.subr.mxu0 0.0
        %2303 = vmatpush1.msra.mxu0 0.0
        %2304 = vmatprep.subr.mxu0 0.0
        %2305 = vmatpush1.msra.mxu0 0.0
        %2306 = vmatprep.subr.mxu0 0.0
        %2307 = vmatpush1.msra.mxu0 0.0
        %2308 = vmatprep.subr.mxu0 0.0
        %2309 = vmatpush1.msra.mxu0 0.0
        %2310 = vmatprep.subr.mxu0 0.0
        %2311 = vmatpush1.msra.mxu0 0.0
        %2312 = vmatprep.subr.mxu0 0.0
        %2313 = vmatpush1.msra.mxu0 0.0
        %2314 = vmatprep.subr.mxu0 0.0
        %2315 = vmatpush1.msra.mxu0 0.0
        %2316 = vmatprep.subr.mxu0 0.0
        %2317 = vmatpush1.msra.mxu0 %v2281
        %2318 = vmatprep.subr.mxu0 0.0
        %2319 = vmatpush2.msra.mxu0 0.0
        %2320 = vmatprep.subr.mxu0 0.0
        %2321 = vmatpush2.msra.mxu0 0.0
        %2322 = vmatprep.subr.mxu0 0.0
        %2323 = vmatpush2.msra.mxu0 0.0
        %2324 = vmatprep.subr.mxu0 0.0
        %2325 = vmatpush2.msra.mxu0 0.0
        %2326 = vmatprep.subr.mxu0 0.0
        %2327 = vmatpush2.msra.mxu0 0.0
        %2328 = vmatprep.subr.mxu0 0.0
        %2329 = vmatpush2.msra.mxu0 0.0
        %2330 = vmatprep.subr.mxu0 0.0
        %2331 = vmatpush2.msra.mxu0 0.0
        %2332 = vmatprep.subr.mxu0 0.0
        %2333 = vmatpush2.msra.mxu0 0.0
        %2334 = vmatprep.subr.mxu0 0.0
        %2335 = vmatpush2.msra.mxu0 0.0
        %2336 = vmatprep.subr.mxu0 0.0
        %2337 = vmatpush2.msra.mxu0 0.0
        %2338 = vmatprep.subr.mxu0 0.0
        %2339 = vmatpush2.msra.mxu0 0.0
        %2340 = vmatprep.subr.mxu0 0.0
        %2341 = vmatpush2.msra.mxu0 0.0
        %2342 = vmatprep.subr.mxu0 0.0
        %2343 = vmatpush2.msra.mxu0 0.0
        %2344 = vmatprep.subr.mxu0 0.0
        %2345 = vmatpush2.msra.mxu0 0.0
        %2346 = vmatprep.subr.mxu0 0.0
        %2347 = vmatpush2.msra.mxu0 0.0
        %2348 = vmatprep.subr.mxu0 0.0
        %2349 = vmatpush2.msra.mxu0 0.0
        %2350 = vmatprep.mubr.f32.mxu0 0.0
        %2351 = vmatmul.mubr.f32.gmra.mxu0 %v2284
        %v2352 = vpop.f32.mrf.mxu0
        %v2353 = vadd.f32 0.0, %v2352
        %v2354 = vpop.f32.mrf.mxu0
        %2355 = vdwg.mxu0
        %2357 = vrot.lane.b32.xlu0 %v2353, 8
        %v2358 = vpop.permute.xlu0 %2357
        %2360 = vst.msk [vmem:[#allocation2] sm:$0xff] %vm1473, %v2358
        %2361 = vrot.lane.b32.xlu0 %v2016, 112
        %v2362 = vpop.permute.xlu0 %2361
        %2363 = vrot.lane.b32.xlu0 %v1010, 112
        %v2364 = vpop.permute.xlu0 %2363
        %v2365 = vsel %vm1139, %v2362, 0
        %v2367 = vsel %vm1139, %v2364, 0
        %2369 = vmatprep.subr.mxu0 0.0
        %2370 = vmatpush1.xpose.msra.mxu0 0.0
        %2371 = vmatprep.subr.mxu0 0.0
        %2372 = vmatpush1.xpose.msra.mxu0 0.0
        %2373 = vmatprep.subr.mxu0 0.0
        %2374 = vmatpush1.xpose.msra.mxu0 0.0
        %2375 = vmatprep.subr.mxu0 0.0
        %2376 = vmatpush1.xpose.msra.mxu0 0.0
        %2377 = vmatprep.subr.mxu0 0.0
        %2378 = vmatpush1.xpose.msra.mxu0 0.0
        %2379 = vmatprep.subr.mxu0 0.0
        %2380 = vmatpush1.xpose.msra.mxu0 0.0
        %2381 = vmatprep.subr.mxu0 0.0
        %2382 = vmatpush1.xpose.msra.mxu0 0.0
        %2383 = vmatprep.subr.mxu0 0.0
        %2384 = vmatpush1.xpose.msra.mxu0 0.0
        %2385 = vmatprep.subr.mxu0 0.0
        %2386 = vmatpush1.xpose.msra.mxu0 0.0
        %2387 = vmatprep.subr.mxu0 0.0
        %2388 = vmatpush1.xpose.msra.mxu0 0.0
        %2389 = vmatprep.subr.mxu0 0.0
        %2390 = vmatpush1.xpose.msra.mxu0 0.0
        %2391 = vmatprep.subr.mxu0 0.0
        %2392 = vmatpush1.xpose.msra.mxu0 0.0
        %2393 = vmatprep.subr.mxu0 0.0
        %2394 = vmatpush1.xpose.msra.mxu0 0.0
        %2395 = vmatprep.subr.mxu0 0.0
        %2396 = vmatpush1.xpose.msra.mxu0 0.0
        %2397 = vmatprep.subr.mxu0 0.0
        %2398 = vmatpush1.xpose.msra.mxu0 0.0
        %2399 = vmatprep.subr.mxu0 0.0
        %2400 = vmatpush1.xpose.msra.mxu0 %v2367
        %2401 = vmatprep.subr.mxu0 0.0
        %2402 = vmatpush2.xpose.msra.mxu0 0.0
        %2403 = vmatprep.subr.mxu0 0.0
        %2404 = vmatpush2.xpose.msra.mxu0 0.0
        %2405 = vmatprep.subr.mxu0 0.0
        %2406 = vmatpush2.xpose.msra.mxu0 0.0
        %2407 = vmatprep.subr.mxu0 0.0
        %2408 = vmatpush2.xpose.msra.mxu0 0.0
        %2409 = vmatprep.subr.mxu0 0.0
        %2410 = vmatpush2.xpose.msra.mxu0 0.0
        %2411 = vmatprep.subr.mxu0 0.0
        %2412 = vmatpush2.xpose.msra.mxu0 0.0
        %2413 = vmatprep.subr.mxu0 0.0
        %2414 = vmatpush2.xpose.msra.mxu0 0.0
        %2415 = vmatprep.subr.mxu0 0.0
        %2416 = vmatpush2.xpose.msra.mxu0 0.0
        %2417 = vmatprep.subr.mxu0 0.0
        %2418 = vmatpush2.xpose.msra.mxu0 0.0
        %2419 = vmatprep.subr.mxu0 0.0
        %2420 = vmatpush2.xpose.msra.mxu0 0.0
        %2421 = vmatprep.subr.mxu0 0.0
        %2422 = vmatpush2.xpose.msra.mxu0 0.0
        %2423 = vmatprep.subr.mxu0 0.0
        %2424 = vmatpush2.xpose.msra.mxu0 0.0
        %2425 = vmatprep.subr.mxu0 0.0
        %2426 = vmatpush2.xpose.msra.mxu0 0.0
        %2427 = vmatprep.subr.mxu0 0.0
        %2428 = vmatpush2.xpose.msra.mxu0 0.0
        %2429 = vmatprep.subr.mxu0 0.0
        %2430 = vmatpush2.xpose.msra.mxu0 0.0
        %2431 = vmatprep.subr.mxu0 0.0
        %2432 = vmatpush2.xpose.msra.mxu0 0.0
        %2433 = vmatprep.mubr.f32.mxu0 0.0
        %2434 = vmatmul.mubr.f32.gmra.mxu0 %v2365
        %v2435 = vpop.f32.mrf.mxu0
        %v2436 = vadd.f32 0.0, %v2435
        %v2437 = vpop.f32.mrf.mxu0
        %2438 = vdwg.mxu0
        %v2439 = vsel %vm2100, -1e+09, %v2436
        %v2440 = vsel %vm1139, %v2439, -inf
        %2441 = vmax.xlane.f32.xlu0 %v2440
        %v2442 = vpop.xlane.xlu0 %2441
        %v2443 = vsub.f32 %v2439, %v2442
        %v2444 = vmul.f32 %v2443, 1.442695
        %v2445 = vpow.pop %v2444
        %v2446 = vsel %vm1139, %v2445, 0.0
        %2447 = vadd.xlane.f32.xlu0 %v2446
        %v2448 = vpop.xlane.xlu0 %2447
        %v2449 = vrcp.pop %v2448
        %v2450 = vmul.f32 %v2445, %v2449
        %2451 = vrot.lane.b32.xlu0 %v1010, 80
        %v2452 = vpop.permute.xlu0 %2451
        %v2455 = vsel %vm1139, %v2450, 0
        %2457 = vmatprep.subr.mxu0 0.0
        %2458 = vmatpush1.msra.mxu0 0.0
        %2459 = vmatprep.subr.mxu0 0.0
        %2460 = vmatpush1.msra.mxu0 0.0
        %2461 = vmatprep.subr.mxu0 0.0
        %2462 = vmatpush1.msra.mxu0 0.0
        %2463 = vmatprep.subr.mxu0 0.0
        %2464 = vmatpush1.msra.mxu0 0.0
        %2465 = vmatprep.subr.mxu0 0.0
        %2466 = vmatpush1.msra.mxu0 0.0
        %2467 = vmatprep.subr.mxu0 0.0
        %2468 = vmatpush1.msra.mxu0 0.0
        %2469 = vmatprep.subr.mxu0 0.0
        %2470 = vmatpush1.msra.mxu0 0.0
        %2471 = vmatprep.subr.mxu0 0.0
        %2472 = vmatpush1.msra.mxu0 0.0
        %2473 = vmatprep.subr.mxu0 0.0
        %2474 = vmatpush1.msra.mxu0 0.0
        %2475 = vmatprep.subr.mxu0 0.0
        %2476 = vmatpush1.msra.mxu0 0.0
        %2477 = vmatprep.subr.mxu0 0.0
        %2478 = vmatpush1.msra.mxu0 0.0
        %2479 = vmatprep.subr.mxu0 0.0
        %2480 = vmatpush1.msra.mxu0 0.0
        %2481 = vmatprep.subr.mxu0 0.0
        %2482 = vmatpush1.msra.mxu0 0.0
        %2483 = vmatprep.subr.mxu0 0.0
        %2484 = vmatpush1.msra.mxu0 0.0
        %2485 = vmatprep.subr.mxu0 0.0
        %2486 = vmatpush1.msra.mxu0 0.0
        %2487 = vmatprep.subr.mxu0 0.0
        %2488 = vmatpush1.msra.mxu0 %v2452
        %2489 = vmatprep.subr.mxu0 0.0
        %2490 = vmatpush2.msra.mxu0 0.0
        %2491 = vmatprep.subr.mxu0 0.0
        %2492 = vmatpush2.msra.mxu0 0.0
        %2493 = vmatprep.subr.mxu0 0.0
        %2494 = vmatpush2.msra.mxu0 0.0
        %2495 = vmatprep.subr.mxu0 0.0
        %2496 = vmatpush2.msra.mxu0 0.0
        %2497 = vmatprep.subr.mxu0 0.0
        %2498 = vmatpush2.msra.mxu0 0.0
        %2499 = vmatprep.subr.mxu0 0.0
        %2500 = vmatpush2.msra.mxu0 0.0
        %2501 = vmatprep.subr.mxu0 0.0
        %2502 = vmatpush2.msra.mxu0 0.0
        %2503 = vmatprep.subr.mxu0 0.0
        %2504 = vmatpush2.msra.mxu0 0.0
        %2505 = vmatprep.subr.mxu0 0.0
        %2506 = vmatpush2.msra.mxu0 0.0
        %2507 = vmatprep.subr.mxu0 0.0
        %2508 = vmatpush2.msra.mxu0 0.0
        %2509 = vmatprep.subr.mxu0 0.0
        %2510 = vmatpush2.msra.mxu0 0.0
        %2511 = vmatprep.subr.mxu0 0.0
        %2512 = vmatpush2.msra.mxu0 0.0
        %2513 = vmatprep.subr.mxu0 0.0
        %2514 = vmatpush2.msra.mxu0 0.0
        %2515 = vmatprep.subr.mxu0 0.0
        %2516 = vmatpush2.msra.mxu0 0.0
        %2517 = vmatprep.subr.mxu0 0.0
        %2518 = vmatpush2.msra.mxu0 0.0
        %2519 = vmatprep.subr.mxu0 0.0
        %2520 = vmatpush2.msra.mxu0 0.0
        %2521 = vmatprep.mubr.f32.mxu0 0.0
        %2522 = vmatmul.mubr.f32.gmra.mxu0 %v2455
        %v2523 = vpop.f32.mrf.mxu0
        %v2524 = vadd.f32 0.0, %v2523
        %v2525 = vpop.f32.mrf.mxu0
        %2526 = vdwg.mxu0
        %2528 = vrot.lane.b32.xlu0 %v2524, 16
        %v2529 = vpop.permute.xlu0 %2528
        %2531 = vst.msk [vmem:[#allocation2] sm:$0xff] %vm1645, %v2529
        %2532 = vrot.lane.b32.xlu0 %v2016, 104
        %v2533 = vpop.permute.xlu0 %2532
        %2534 = vrot.lane.b32.xlu0 %v1010, 104
        %v2535 = vpop.permute.xlu0 %2534
        %v2536 = vsel %vm1139, %v2533, 0
        %v2538 = vsel %vm1139, %v2535, 0
        %2540 = vmatprep.subr.mxu0 0.0
        %2541 = vmatpush1.xpose.msra.mxu0 0.0
        %2542 = vmatprep.subr.mxu0 0.0
        %2543 = vmatpush1.xpose.msra.mxu0 0.0
        %2544 = vmatprep.subr.mxu0 0.0
        %2545 = vmatpush1.xpose.msra.mxu0 0.0
        %2546 = vmatprep.subr.mxu0 0.0
        %2547 = vmatpush1.xpose.msra.mxu0 0.0
        %2548 = vmatprep.subr.mxu0 0.0
        %2549 = vmatpush1.xpose.msra.mxu0 0.0
        %2550 = vmatprep.subr.mxu0 0.0
        %2551 = vmatpush1.xpose.msra.mxu0 0.0
        %2552 = vmatprep.subr.mxu0 0.0
        %2553 = vmatpush1.xpose.msra.mxu0 0.0
        %2554 = vmatprep.subr.mxu0 0.0
        %2555 = vmatpush1.xpose.msra.mxu0 0.0
        %2556 = vmatprep.subr.mxu0 0.0
        %2557 = vmatpush1.xpose.msra.mxu0 0.0
        %2558 = vmatprep.subr.mxu0 0.0
        %2559 = vmatpush1.xpose.msra.mxu0 0.0
        %2560 = vmatprep.subr.mxu0 0.0
        %2561 = vmatpush1.xpose.msra.mxu0 0.0
        %2562 = vmatprep.subr.mxu0 0.0
        %2563 = vmatpush1.xpose.msra.mxu0 0.0
        %2564 = vmatprep.subr.mxu0 0.0
        %2565 = vmatpush1.xpose.msra.mxu0 0.0
        %2566 = vmatprep.subr.mxu0 0.0
        %2567 = vmatpush1.xpose.msra.mxu0 0.0
        %2568 = vmatprep.subr.mxu0 0.0
        %2569 = vmatpush1.xpose.msra.mxu0 0.0
        %2570 = vmatprep.subr.mxu0 0.0
        %2571 = vmatpush1.xpose.msra.mxu0 %v2538
        %2572 = vmatprep.subr.mxu0 0.0
        %2573 = vmatpush2.xpose.msra.mxu0 0.0
        %2574 = vmatprep.subr.mxu0 0.0
        %2575 = vmatpush2.xpose.msra.mxu0 0.0
        %2576 = vmatprep.subr.mxu0 0.0
        %2577 = vmatpush2.xpose.msra.mxu0 0.0
        %2578 = vmatprep.subr.mxu0 0.0
        %2579 = vmatpush2.xpose.msra.mxu0 0.0
        %2580 = vmatprep.subr.mxu0 0.0
        %2581 = vmatpush2.xpose.msra.mxu0 0.0
        %2582 = vmatprep.subr.mxu0 0.0
        %2583 = vmatpush2.xpose.msra.mxu0 0.0
        %2584 = vmatprep.subr.mxu0 0.0
        %2585 = vmatpush2.xpose.msra.mxu0 0.0
        %2586 = vmatprep.subr.mxu0 0.0
        %2587 = vmatpush2.xpose.msra.mxu0 0.0
        %2588 = vmatprep.subr.mxu0 0.0
        %2589 = vmatpush2.xpose.msra.mxu0 0.0
        %2590 = vmatprep.subr.mxu0 0.0
        %2591 = vmatpush2.xpose.msra.mxu0 0.0
        %2592 = vmatprep.subr.mxu0 0.0
        %2593 = vmatpush2.xpose.msra.mxu0 0.0
        %2594 = vmatprep.subr.mxu0 0.0
        %2595 = vmatpush2.xpose.msra.mxu0 0.0
        %2596 = vmatprep.subr.mxu0 0.0
        %2597 = vmatpush2.xpose.msra.mxu0 0.0
        %2598 = vmatprep.subr.mxu0 0.0
        %2599 = vmatpush2.xpose.msra.mxu0 0.0
        %2600 = vmatprep.subr.mxu0 0.0
        %2601 = vmatpush2.xpose.msra.mxu0 0.0
        %2602 = vmatprep.subr.mxu0 0.0
        %2603 = vmatpush2.xpose.msra.mxu0 0.0
        %2604 = vmatprep.mubr.f32.mxu0 0.0
        %2605 = vmatmul.mubr.f32.gmra.mxu0 %v2536
        %v2606 = vpop.f32.mrf.mxu0
        %v2607 = vadd.f32 0.0, %v2606
        %v2608 = vpop.f32.mrf.mxu0
        %2609 = vdwg.mxu0
        %v2610 = vsel %vm2100, -1e+09, %v2607
        %v2611 = vsel %vm1139, %v2610, -inf
        %2612 = vmax.xlane.f32.xlu0 %v2611
        %v2613 = vpop.xlane.xlu0 %2612
        %v2614 = vsub.f32 %v2610, %v2613
        %v2615 = vmul.f32 %v2614, 1.442695
        %v2616 = vpow.pop %v2615
        %v2617 = vsel %vm1139, %v2616, 0.0
        %2618 = vadd.xlane.f32.xlu0 %v2617
        %v2619 = vpop.xlane.xlu0 %2618
        %v2620 = vrcp.pop %v2619
        %v2621 = vmul.f32 %v2616, %v2620
        %2622 = vrot.lane.b32.xlu0 %v1010, 72
        %v2623 = vpop.permute.xlu0 %2622
        %v2626 = vsel %vm1139, %v2621, 0
        %2628 = vmatprep.subr.mxu0 0.0
        %2629 = vmatpush1.msra.mxu0 0.0
        %2630 = vmatprep.subr.mxu0 0.0
        %2631 = vmatpush1.msra.mxu0 0.0
        %2632 = vmatprep.subr.mxu0 0.0
        %2633 = vmatpush1.msra.mxu0 0.0
        %2634 = vmatprep.subr.mxu0 0.0
        %2635 = vmatpush1.msra.mxu0 0.0
        %2636 = vmatprep.subr.mxu0 0.0
        %2637 = vmatpush1.msra.mxu0 0.0
        %2638 = vmatprep.subr.mxu0 0.0
        %2639 = vmatpush1.msra.mxu0 0.0
        %2640 = vmatprep.subr.mxu0 0.0
        %2641 = vmatpush1.msra.mxu0 0.0
        %2642 = vmatprep.subr.mxu0 0.0
        %2643 = vmatpush1.msra.mxu0 0.0
        %2644 = vmatprep.subr.mxu0 0.0
        %2645 = vmatpush1.msra.mxu0 0.0
        %2646 = vmatprep.subr.mxu0 0.0
        %2647 = vmatpush1.msra.mxu0 0.0
        %2648 = vmatprep.subr.mxu0 0.0
        %2649 = vmatpush1.msra.mxu0 0.0
        %2650 = vmatprep.subr.mxu0 0.0
        %2651 = vmatpush1.msra.mxu0 0.0
        %2652 = vmatprep.subr.mxu0 0.0
        %2653 = vmatpush1.msra.mxu0 0.0
        %2654 = vmatprep.subr.mxu0 0.0
        %2655 = vmatpush1.msra.mxu0 0.0
        %2656 = vmatprep.subr.mxu0 0.0
        %2657 = vmatpush1.msra.mxu0 0.0
        %2658 = vmatprep.subr.mxu0 0.0
        %2659 = vmatpush1.msra.mxu0 %v2623
        %2660 = vmatprep.subr.mxu0 0.0
        %2661 = vmatpush2.msra.mxu0 0.0
        %2662 = vmatprep.subr.mxu0 0.0
        %2663 = vmatpush2.msra.mxu0 0.0
        %2664 = vmatprep.subr.mxu0 0.0
        %2665 = vmatpush2.msra.mxu0 0.0
        %2666 = vmatprep.subr.mxu0 0.0
        %2667 = vmatpush2.msra.mxu0 0.0
        %2668 = vmatprep.subr.mxu0 0.0
        %2669 = vmatpush2.msra.mxu0 0.0
        %2670 = vmatprep.subr.mxu0 0.0
        %2671 = vmatpush2.msra.mxu0 0.0
        %2672 = vmatprep.subr.mxu0 0.0
        %2673 = vmatpush2.msra.mxu0 0.0
        %2674 = vmatprep.subr.mxu0 0.0
        %2675 = vmatpush2.msra.mxu0 0.0
        %2676 = vmatprep.subr.mxu0 0.0
        %2677 = vmatpush2.msra.mxu0 0.0
        %2678 = vmatprep.subr.mxu0 0.0
        %2679 = vmatpush2.msra.mxu0 0.0
        %2680 = vmatprep.subr.mxu0 0.0
        %2681 = vmatpush2.msra.mxu0 0.0
        %2682 = vmatprep.subr.mxu0 0.0
        %2683 = vmatpush2.msra.mxu0 0.0
        %2684 = vmatprep.subr.mxu0 0.0
        %2685 = vmatpush2.msra.mxu0 0.0
        %2686 = vmatprep.subr.mxu0 0.0
        %2687 = vmatpush2.msra.mxu0 0.0
        %2688 = vmatprep.subr.mxu0 0.0
        %2689 = vmatpush2.msra.mxu0 0.0
        %2690 = vmatprep.subr.mxu0 0.0
        %2691 = vmatpush2.msra.mxu0 0.0
        %2692 = vmatprep.mubr.f32.mxu0 0.0
        %2693 = vmatmul.mubr.f32.gmra.mxu0 %v2626
        %v2694 = vpop.f32.mrf.mxu0
        %v2695 = vadd.f32 0.0, %v2694
        %v2696 = vpop.f32.mrf.mxu0
        %2697 = vdwg.mxu0
        %2699 = vrot.lane.b32.xlu0 %v2695, 24
        %v2700 = vpop.permute.xlu0 %2699
        %2702 = vst.msk [vmem:[#allocation2] sm:$0xff] %vm1817, %v2700
        %v2703 = vld [vmem:[#allocation2] sm:$0xff]
        %v2704 = vld [vmem:[#allocation18] sm:$0xff]
        %v2705 = vld [vmem:[#allocation18 + $0x8] sm:$0xff]
        %v2706 = vld [vmem:[#allocation18 + $0x10] sm:$0xff]
        %v2707 = vld [vmem:[#allocation18 + $0x18] sm:$0xff]
        %v2708 = vld [vmem:[#allocation20] sm:$0x1]
        %v2710 = vlaneseq
        %v2711 = vshrl.u32 %v2710, 7
        %v2712 = vsub.s32 0, %v2711
        %v2713 = vrot.slane %v2708, %v2712
        %v2716 = vsel %vm939, %v2703, 0
        %2718 = vmatprep.subr.mxu0 0.0
        %2719 = vmatpush1.msra.mxu0 0.0
        %2720 = vmatprep.subr.mxu0 0.0
        %2721 = vmatpush1.msra.mxu0 0.0
        %2722 = vmatprep.subr.mxu0 0.0
        %2723 = vmatpush1.msra.mxu0 0.0
        %2724 = vmatprep.subr.mxu0 0.0
        %2725 = vmatpush1.msra.mxu0 0.0
        %2726 = vmatprep.subr.mxu0 0.0
        %2727 = vmatpush1.msra.mxu0 0.0
        %2728 = vmatprep.subr.mxu0 0.0
        %2729 = vmatpush1.msra.mxu0 0.0
        %2730 = vmatprep.subr.mxu0 0.0
        %2731 = vmatpush1.msra.mxu0 0.0
        %2732 = vmatprep.subr.mxu0 0.0
        %2733 = vmatpush1.msra.mxu0 0.0
        %2734 = vmatprep.subr.mxu0 0.0
        %2735 = vmatpush1.msra.mxu0 0.0
        %2736 = vmatprep.subr.mxu0 0.0
        %2737 = vmatpush1.msra.mxu0 0.0
        %2738 = vmatprep.subr.mxu0 0.0
        %2739 = vmatpush1.msra.mxu0 0.0
        %2740 = vmatprep.subr.mxu0 0.0
        %2741 = vmatpush1.msra.mxu0 0.0
        %2742 = vmatprep.subr.mxu0 0.0
        %2743 = vmatpush1.msra.mxu0 %v2707
        %2744 = vmatprep.subr.mxu0 0.0
        %2745 = vmatpush1.msra.mxu0 %v2706
        %2746 = vmatprep.subr.mxu0 0.0
        %2747 = vmatpush1.msra.mxu0 %v2705
        %2748 = vmatprep.subr.mxu0 0.0
        %2749 = vmatpush1.msra.mxu0 %v2704
        %2750 = vmatprep.subr.mxu0 0.0
        %2751 = vmatpush2.msra.mxu0 0.0
        %2752 = vmatprep.subr.mxu0 0.0
        %2753 = vmatpush2.msra.mxu0 0.0
        %2754 = vmatprep.subr.mxu0 0.0
        %2755 = vmatpush2.msra.mxu0 0.0
        %2756 = vmatprep.subr.mxu0 0.0
        %2757 = vmatpush2.msra.mxu0 0.0
        %2758 = vmatprep.subr.mxu0 0.0
        %2759 = vmatpush2.msra.mxu0 0.0
        %2760 = vmatprep.subr.mxu0 0.0
        %2761 = vmatpush2.msra.mxu0 0.0
        %2762 = vmatprep.subr.mxu0 0.0
        %2763 = vmatpush2.msra.mxu0 0.0
        %2764 = vmatprep.subr.mxu0 0.0
        %2765 = vmatpush2.msra.mxu0 0.0
        %2766 = vmatprep.subr.mxu0 0.0
        %2767 = vmatpush2.msra.mxu0 0.0
        %2768 = vmatprep.subr.mxu0 0.0
        %2769 = vmatpush2.msra.mxu0 0.0
        %2770 = vmatprep.subr.mxu0 0.0
        %2771 = vmatpush2.msra.mxu0 0.0
        %2772 = vmatprep.subr.mxu0 0.0
        %2773 = vmatpush2.msra.mxu0 0.0
        %2774 = vmatprep.subr.mxu0 0.0
        %2775 = vmatpush2.msra.mxu0 0.0
        %2776 = vmatprep.subr.mxu0 0.0
        %2777 = vmatpush2.msra.mxu0 0.0
        %2778 = vmatprep.subr.mxu0 0.0
        %2779 = vmatpush2.msra.mxu0 0.0
        %2780 = vmatprep.subr.mxu0 0.0
        %2781 = vmatpush2.msra.mxu0 0.0
        %2782 = vmatprep.mubr.f32.mxu0 0.0
        %2783 = vmatmul.mubr.f32.gmra.mxu0 %v2716
        %v2784 = vpop.f32.mrf.mxu0
        %v2785 = vadd.f32 %v2713, %v2784
        %v2786 = vpop.f32.mrf.mxu0
        %2787 = vdwg.mxu0
        %v2788 = vadd.f32 %v1904, %v2785
        %v2789 = vsel %vm939, %v2788, 0.0
        %2790 = vadd.xlane.f32.xlu0 %v2789
        %v2791 = vpop.xlane.xlu0 %2790
        %v2792 = vmul.f32 %v2791, %v1024
        %v2793 = vsub.f32 %v2788, %v2792
        %v2794 = vmul.f32 %v2793, %v2793
        %v2795 = vsel %vm939, %v2794, 0.0
        %2796 = vadd.xlane.f32.xlu0 %v2795
        %v2797 = vpop.xlane.xlu0 %2796
        %v2798 = vmul.f32 %v2797, 0.032258064
        %v2799 = vlaneseq
        %v2800 = vshrl.u32 %v2799, 7
        %v2801 = vsub.s32 2, %v2800
        %v2802 = vrot.slane %v1017, %v2801
        %v2803 = vmul.f32 %v2802, %v2793
        %v2804 = vrsqrt.pop %v2798
        %v2805 = vmul.f32 %v2798, %v2804
        %vm2806 = vcmp.eq.f32.partialorder %v2798, inf
        %v2807 = vsel %vm2806, %v2798, %v2805
        %vm2808 = vcmp.eq.f32.partialorder %v2798, 0.0
        %v2809 = vand.u32 %v2798, 2147483648
        %v2810 = vsel %vm2808, %v2809, %v2807
        %v2811 = vadd.f32 %v2810, 1e-06
        %v2812 = vrcp.pop %v2811
        %v2813 = vmul.f32 %v2803, %v2812
        %v2814 = vlaneseq
        %v2815 = vshrl.u32 %v2814, 7
        %v2816 = vsub.s32 2, %v2815
        %v2817 = vrot.slane %v1019, %v2816
        %v2818 = vadd.f32 %v2813, %v2817
        %v2819 = vld [vmem:[#allocation21] sm:$0xff]
        %v2820 = vld [vmem:[#allocation21 + $0x8] sm:$0xff]
        %v2821 = vld [vmem:[#allocation21 + $0x10] sm:$0xff]
        %v2822 = vld [vmem:[#allocation21 + $0x18] sm:$0xff]
        %v2823 = vld [vmem:[#allocation23] sm:$0x1]
        %v2825 = vlaneseq
        %v2826 = vshrl.u32 %v2825, 7
        %v2827 = vsub.s32 0, %v2826
        %v2828 = vrot.slane %v2823, %v2827
        %v2831 = vsel %vm939, %v2818, 0
        %2833 = vmatprep.subr.mxu0 0.0
        %2834 = vmatpush1.msra.mxu0 0.0
        %2835 = vmatprep.subr.mxu0 0.0
        %2836 = vmatpush1.msra.mxu0 0.0
        %2837 = vmatprep.subr.mxu0 0.0
        %2838 = vmatpush1.msra.mxu0 0.0
        %2839 = vmatprep.subr.mxu0 0.0
        %2840 = vmatpush1.msra.mxu0 0.0
        %2841 = vmatprep.subr.mxu0 0.0
        %2842 = vmatpush1.msra.mxu0 0.0
        %2843 = vmatprep.subr.mxu0 0.0
        %2844 = vmatpush1.msra.mxu0 0.0
        %2845 = vmatprep.subr.mxu0 0.0
        %2846 = vmatpush1.msra.mxu0 0.0
        %2847 = vmatprep.subr.mxu0 0.0
        %2848 = vmatpush1.msra.mxu0 0.0
        %2849 = vmatprep.subr.mxu0 0.0
        %2850 = vmatpush1.msra.mxu0 0.0
        %2851 = vmatprep.subr.mxu0 0.0
        %2852 = vmatpush1.msra.mxu0 0.0
        %2853 = vmatprep.subr.mxu0 0.0
        %2854 = vmatpush1.msra.mxu0 0.0
        %2855 = vmatprep.subr.mxu0 0.0
        %2856 = vmatpush1.msra.mxu0 0.0
        %2857 = vmatprep.subr.mxu0 0.0
        %2858 = vmatpush1.msra.mxu0 %v2822
        %2859 = vmatprep.subr.mxu0 0.0
        %2860 = vmatpush1.msra.mxu0 %v2821
        %2861 = vmatprep.subr.mxu0 0.0
        %2862 = vmatpush1.msra.mxu0 %v2820
        %2863 = vmatprep.subr.mxu0 0.0
        %2864 = vmatpush1.msra.mxu0 %v2819
        %2865 = vmatprep.subr.mxu0 0.0
        %2866 = vmatpush2.msra.mxu0 0.0
        %2867 = vmatprep.subr.mxu0 0.0
        %2868 = vmatpush2.msra.mxu0 0.0
        %2869 = vmatprep.subr.mxu0 0.0
        %2870 = vmatpush2.msra.mxu0 0.0
        %2871 = vmatprep.subr.mxu0 0.0
        %2872 = vmatpush2.msra.mxu0 0.0
        %2873 = vmatprep.subr.mxu0 0.0
        %2874 = vmatpush2.msra.mxu0 0.0
        %2875 = vmatprep.subr.mxu0 0.0
        %2876 = vmatpush2.msra.mxu0 0.0
        %2877 = vmatprep.subr.mxu0 0.0
        %2878 = vmatpush2.msra.mxu0 0.0
        %2879 = vmatprep.subr.mxu0 0.0
        %2880 = vmatpush2.msra.mxu0 0.0
        %2881 = vmatprep.subr.mxu0 0.0
        %2882 = vmatpush2.msra.mxu0 0.0
        %2883 = vmatprep.subr.mxu0 0.0
        %2884 = vmatpush2.msra.mxu0 0.0
        %2885 = vmatprep.subr.mxu0 0.0
        %2886 = vmatpush2.msra.mxu0 0.0
        %2887 = vmatprep.subr.mxu0 0.0
        %2888 = vmatpush2.msra.mxu0 0.0
        %2889 = vmatprep.subr.mxu0 0.0
        %2890 = vmatpush2.msra.mxu0 0.0
        %2891 = vmatprep.subr.mxu0 0.0
        %2892 = vmatpush2.msra.mxu0 0.0
        %2893 = vmatprep.subr.mxu0 0.0
        %2894 = vmatpush2.msra.mxu0 0.0
        %2895 = vmatprep.subr.mxu0 0.0
        %2896 = vmatpush2.msra.mxu0 0.0
        %2897 = vmatprep.mubr.f32.mxu0 0.0
        %2898 = vmatmul.mubr.f32.gmra.mxu0 %v2831
        %v2899 = vpop.f32.mrf.mxu0
        %v2900 = vadd.f32 %v2828, %v2899
        %v2901 = vpop.f32.mrf.mxu0
        %2902 = vdwg.mxu0
        %v2903 = vmax.f32 %v2900, 0.0
        %v2904 = vld [vmem:[%s20] sm:$0xff]
        %v2905 = vld [vmem:[%s20 + $0x8] sm:$0xff]
        %v2906 = vld [vmem:[%s20 + $0x10] sm:$0xff]
        %v2907 = vld [vmem:[%s20 + $0x18] sm:$0xff]
        %v2908 = vld [vmem:[%s20 + $0x20] sm:$0xff]
        %v2909 = vld [vmem:[%s20 + $0x28] sm:$0xff]
        %v2910 = vld [vmem:[%s20 + $0x30] sm:$0xff]
        %v2911 = vld [vmem:[%s20 + $0x38] sm:$0xff]
        %v2912 = vld [vmem:[#allocation24] sm:$0x1]
        %v2914 = vlaneseq
        %v2915 = vshrl.u32 %v2914, 7
        %v2916 = vsub.s32 0, %v2915
        %v2917 = vrot.slane %v2912, %v2916
        %vm2919 = vcmask 523264
        %v2921 = vsel %vm2919, %v2903, 0
        %2923 = vmatprep.subr.mxu0 0.0
        %2924 = vmatpush1.msra.mxu0 0.0
        %2925 = vmatprep.subr.mxu0 0.0
        %2926 = vmatpush1.msra.mxu0 0.0
        %2927 = vmatprep.subr.mxu0 0.0
        %2928 = vmatpush1.msra.mxu0 0.0
        %2929 = vmatprep.subr.mxu0 0.0
        %2930 = vmatpush1.msra.mxu0 0.0
        %2931 = vmatprep.subr.mxu0 0.0
        %2932 = vmatpush1.msra.mxu0 0.0
        %2933 = vmatprep.subr.mxu0 0.0
        %2934 = vmatpush1.msra.mxu0 0.0
        %2935 = vmatprep.subr.mxu0 0.0
        %2936 = vmatpush1.msra.mxu0 0.0
        %2937 = vmatprep.subr.mxu0 0.0
        %2938 = vmatpush1.msra.mxu0 0.0
        %2939 = vmatprep.subr.mxu0 0.0
        %2940 = vmatpush1.msra.mxu0 %v2911
        %2941 = vmatprep.subr.mxu0 0.0
        %2942 = vmatpush1.msra.mxu0 %v2910
        %2943 = vmatprep.subr.mxu0 0.0
        %2944 = vmatpush1.msra.mxu0 %v2909
        %2945 = vmatprep.subr.mxu0 0.0
        %2946 = vmatpush1.msra.mxu0 %v2908
        %2947 = vmatprep.subr.mxu0 0.0
        %2948 = vmatpush1.msra.mxu0 %v2907
        %2949 = vmatprep.subr.mxu0 0.0
        %2950 = vmatpush1.msra.mxu0 %v2906
        %2951 = vmatprep.subr.mxu0 0.0
        %2952 = vmatpush1.msra.mxu0 %v2905
        %2953 = vmatprep.subr.mxu0 0.0
        %2954 = vmatpush1.msra.mxu0 %v2904
        %2955 = vmatprep.subr.mxu0 0.0
        %2956 = vmatpush2.msra.mxu0 0.0
        %2957 = vmatprep.subr.mxu0 0.0
        %2958 = vmatpush2.msra.mxu0 0.0
        %2959 = vmatprep.subr.mxu0 0.0
        %2960 = vmatpush2.msra.mxu0 0.0
        %2961 = vmatprep.subr.mxu0 0.0
        %2962 = vmatpush2.msra.mxu0 0.0
        %2963 = vmatprep.subr.mxu0 0.0
        %2964 = vmatpush2.msra.mxu0 0.0
        %2965 = vmatprep.subr.mxu0 0.0
        %2966 = vmatpush2.msra.mxu0 0.0
        %2967 = vmatprep.subr.mxu0 0.0
        %2968 = vmatpush2.msra.mxu0 0.0
        %2969 = vmatprep.subr.mxu0 0.0
        %2970 = vmatpush2.msra.mxu0 0.0
        %2971 = vmatprep.subr.mxu0 0.0
        %2972 = vmatpush2.msra.mxu0 0.0
        %2973 = vmatprep.subr.mxu0 0.0
        %2974 = vmatpush2.msra.mxu0 0.0
        %2975 = vmatprep.subr.mxu0 0.0
        %2976 = vmatpush2.msra.mxu0 0.0
        %2977 = vmatprep.subr.mxu0 0.0
        %2978 = vmatpush2.msra.mxu0 0.0
        %2979 = vmatprep.subr.mxu0 0.0
        %2980 = vmatpush2.msra.mxu0 0.0
        %2981 = vmatprep.subr.mxu0 0.0
        %2982 = vmatpush2.msra.mxu0 0.0
        %2983 = vmatprep.subr.mxu0 0.0
        %2984 = vmatpush2.msra.mxu0 0.0
        %2985 = vmatprep.subr.mxu0 0.0
        %2986 = vmatpush2.msra.mxu0 0.0
        %2987 = vmatprep.mubr.f32.mxu0 0.0
        %2988 = vmatmul.mubr.f32.gmra.mxu0 %v2921
        %v2989 = vpop.f32.mrf.mxu0
        %v2990 = vadd.f32 %v2917, %v2989
        %v2991 = vpop.f32.mrf.mxu0
        %2992 = vdwg.mxu0
        %v2993 = vadd.f32 %v2788, %v2990
        %v2994 = vsel %vm939, %v2993, 0.0
        %2995 = vadd.xlane.f32.xlu0 %v2994
        %v2996 = vpop.xlane.xlu0 %2995
        %v2997 = vmul.f32 %v2996, %v1024
        %v2998 = vsub.f32 %v2993, %v2997
        %v2999 = vmul.f32 %v2998, %v2998
        %v3000 = vsel %vm939, %v2999, 0.0
        %3001 = vadd.xlane.f32.xlu0 %v3000
        %v3002 = vpop.xlane.xlu0 %3001
        %v3003 = vmul.f32 %v3002, 0.032258064
        %v3004 = vlaneseq
        %v3005 = vshrl.u32 %v3004, 7
        %v3006 = vsub.s32 0, %v3005
        %v3007 = vrot.slane %v1018, %v3006
        %v3008 = vmul.f32 %v3007, %v2998
        %v3009 = vrsqrt.pop %v3003
        %v3010 = vmul.f32 %v3003, %v3009
        %vm3011 = vcmp.eq.f32.partialorder %v3003, inf
        %v3012 = vsel %vm3011, %v3003, %v3010
        %vm3013 = vcmp.eq.f32.partialorder %v3003, 0.0
        %v3014 = vand.u32 %v3003, 2147483648
        %v3015 = vsel %vm3013, %v3014, %v3012
        %v3016 = vadd.f32 %v3015, 1e-06
        %v3017 = vrcp.pop %v3016
        %v3018 = vmul.f32 %v3008, %v3017
        %v3019 = vlaneseq
        %v3020 = vshrl.u32 %v3019, 7
        %v3021 = vsub.s32 0, %v3020
        %v3022 = vrot.slane %v1020, %v3021
        %v3023 = vadd.f32 %v3018, %v3022
        %v3024 = vld [vmem:[%s8] sm:$0xff]
        %v3025 = vld [vmem:[%s8 + $0x8] sm:$0xff]
        %v3026 = vld [vmem:[%s8 + $0x10] sm:$0xff]
        %v3027 = vld [vmem:[%s8 + $0x18] sm:$0xff]
        %v3028 = vld [vmem:[#allocation12] sm:$0x1]
        %v3030 = vlaneseq
        %v3031 = vshrl.u32 %v3030, 7
        %v3032 = vsub.s32 0, %v3031
        %v3033 = vrot.slane %v3028, %v3032
        %v3036 = vsel %vm939, %v3023, 0
        %3038 = vmatprep.subr.mxu0 0.0
        %3039 = vmatpush1.msra.mxu0 0.0
        %3040 = vmatprep.subr.mxu0 0.0
        %3041 = vmatpush1.msra.mxu0 0.0
        %3042 = vmatprep.subr.mxu0 0.0
        %3043 = vmatpush1.msra.mxu0 0.0
        %3044 = vmatprep.subr.mxu0 0.0
        %3045 = vmatpush1.msra.mxu0 0.0
        %3046 = vmatprep.subr.mxu0 0.0
        %3047 = vmatpush1.msra.mxu0 0.0
        %3048 = vmatprep.subr.mxu0 0.0
        %3049 = vmatpush1.msra.mxu0 0.0
        %3050 = vmatprep.subr.mxu0 0.0
        %3051 = vmatpush1.msra.mxu0 0.0
        %3052 = vmatprep.subr.mxu0 0.0
        %3053 = vmatpush1.msra.mxu0 0.0
        %3054 = vmatprep.subr.mxu0 0.0
        %3055 = vmatpush1.msra.mxu0 0.0
        %3056 = vmatprep.subr.mxu0 0.0
        %3057 = vmatpush1.msra.mxu0 0.0
        %3058 = vmatprep.subr.mxu0 0.0
        %3059 = vmatpush1.msra.mxu0 0.0
        %3060 = vmatprep.subr.mxu0 0.0
        %3061 = vmatpush1.msra.mxu0 0.0
        %3062 = vmatprep.subr.mxu0 0.0
        %3063 = vmatpush1.msra.mxu0 %v3027
        %3064 = vmatprep.subr.mxu0 0.0
        %3065 = vmatpush1.msra.mxu0 %v3026
        %3066 = vmatprep.subr.mxu0 0.0
        %3067 = vmatpush1.msra.mxu0 %v3025
        %3068 = vmatprep.subr.mxu0 0.0
        %3069 = vmatpush1.msra.mxu0 %v3024
        %3070 = vmatprep.subr.mxu0 0.0
        %3071 = vmatpush2.msra.mxu0 0.0
        %3072 = vmatprep.subr.mxu0 0.0
        %3073 = vmatpush2.msra.mxu0 0.0
        %3074 = vmatprep.subr.mxu0 0.0
        %3075 = vmatpush2.msra.mxu0 0.0
        %3076 = vmatprep.subr.mxu0 0.0
        %3077 = vmatpush2.msra.mxu0 0.0
        %3078 = vmatprep.subr.mxu0 0.0
        %3079 = vmatpush2.msra.mxu0 0.0
        %3080 = vmatprep.subr.mxu0 0.0
        %3081 = vmatpush2.msra.mxu0 0.0
        %3082 = vmatprep.subr.mxu0 0.0
        %3083 = vmatpush2.msra.mxu0 0.0
        %3084 = vmatprep.subr.mxu0 0.0
        %3085 = vmatpush2.msra.mxu0 0.0
        %3086 = vmatprep.subr.mxu0 0.0
        %3087 = vmatpush2.msra.mxu0 0.0
        %3088 = vmatprep.subr.mxu0 0.0
        %3089 = vmatpush2.msra.mxu0 0.0
        %3090 = vmatprep.subr.mxu0 0.0
        %3091 = vmatpush2.msra.mxu0 0.0
        %3092 = vmatprep.subr.mxu0 0.0
        %3093 = vmatpush2.msra.mxu0 0.0
        %3094 = vmatprep.subr.mxu0 0.0
        %3095 = vmatpush2.msra.mxu0 0.0
        %3096 = vmatprep.subr.mxu0 0.0
        %3097 = vmatpush2.msra.mxu0 0.0
        %3098 = vmatprep.subr.mxu0 0.0
        %3099 = vmatpush2.msra.mxu0 0.0
        %3100 = vmatprep.subr.mxu0 0.0
        %3101 = vmatpush2.msra.mxu0 0.0
        %3102 = vmatprep.mubr.f32.mxu0 0.0
        %3103 = vmatmul.mubr.f32.gmra.mxu0 %v3036
        %v3104 = vpop.f32.mrf.mxu0
        %v3105 = vadd.f32 %v3033, %v3104
        %v3106 = vpop.f32.mrf.mxu0
        %3107 = vdwg.mxu0
        %3109 = vrot.lane.b32.xlu0 %v3105, 96
        %v3110 = vpop.permute.xlu0 %3109
        %v3111 = vsel %vm1139, %v3105, 0
        %v3113 = vsel %vm1139, %v3110, 0
        %3115 = vmatprep.subr.mxu0 0.0
        %3116 = vmatpush1.xpose.msra.mxu0 0.0
        %3117 = vmatprep.subr.mxu0 0.0
        %3118 = vmatpush1.xpose.msra.mxu0 0.0
        %3119 = vmatprep.subr.mxu0 0.0
        %3120 = vmatpush1.xpose.msra.mxu0 0.0
        %3121 = vmatprep.subr.mxu0 0.0
        %3122 = vmatpush1.xpose.msra.mxu0 0.0
        %3123 = vmatprep.subr.mxu0 0.0
        %3124 = vmatpush1.xpose.msra.mxu0 0.0
        %3125 = vmatprep.subr.mxu0 0.0
        %3126 = vmatpush1.xpose.msra.mxu0 0.0
        %3127 = vmatprep.subr.mxu0 0.0
        %3128 = vmatpush1.xpose.msra.mxu0 0.0
        %3129 = vmatprep.subr.mxu0 0.0
        %3130 = vmatpush1.xpose.msra.mxu0 0.0
        %3131 = vmatprep.subr.mxu0 0.0
        %3132 = vmatpush1.xpose.msra.mxu0 0.0
        %3133 = vmatprep.subr.mxu0 0.0
        %3134 = vmatpush1.xpose.msra.mxu0 0.0
        %3135 = vmatprep.subr.mxu0 0.0
        %3136 = vmatpush1.xpose.msra.mxu0 0.0
        %3137 = vmatprep.subr.mxu0 0.0
        %3138 = vmatpush1.xpose.msra.mxu0 0.0
        %3139 = vmatprep.subr.mxu0 0.0
        %3140 = vmatpush1.xpose.msra.mxu0 0.0
        %3141 = vmatprep.subr.mxu0 0.0
        %3142 = vmatpush1.xpose.msra.mxu0 0.0
        %3143 = vmatprep.subr.mxu0 0.0
        %3144 = vmatpush1.xpose.msra.mxu0 0.0
        %3145 = vmatprep.subr.mxu0 0.0
        %3146 = vmatpush1.xpose.msra.mxu0 %v3113
        %3147 = vmatprep.subr.mxu0 0.0
        %3148 = vmatpush2.xpose.msra.mxu0 0.0
        %3149 = vmatprep.subr.mxu0 0.0
        %3150 = vmatpush2.xpose.msra.mxu0 0.0
        %3151 = vmatprep.subr.mxu0 0.0
        %3152 = vmatpush2.xpose.msra.mxu0 0.0
        %3153 = vmatprep.subr.mxu0 0.0
        %3154 = vmatpush2.xpose.msra.mxu0 0.0
        %3155 = vmatprep.subr.mxu0 0.0
        %3156 = vmatpush2.xpose.msra.mxu0 0.0
        %3157 = vmatprep.subr.mxu0 0.0
        %3158 = vmatpush2.xpose.msra.mxu0 0.0
        %3159 = vmatprep.subr.mxu0 0.0
        %3160 = vmatpush2.xpose.msra.mxu0 0.0
        %3161 = vmatprep.subr.mxu0 0.0
        %3162 = vmatpush2.xpose.msra.mxu0 0.0
        %3163 = vmatprep.subr.mxu0 0.0
        %3164 = vmatpush2.xpose.msra.mxu0 0.0
        %3165 = vmatprep.subr.mxu0 0.0
        %3166 = vmatpush2.xpose.msra.mxu0 0.0
        %3167 = vmatprep.subr.mxu0 0.0
        %3168 = vmatpush2.xpose.msra.mxu0 0.0
        %3169 = vmatprep.subr.mxu0 0.0
        %3170 = vmatpush2.xpose.msra.mxu0 0.0
        %3171 = vmatprep.subr.mxu0 0.0
        %3172 = vmatpush2.xpose.msra.mxu0 0.0
        %3173 = vmatprep.subr.mxu0 0.0
        %3174 = vmatpush2.xpose.msra.mxu0 0.0
        %3175 = vmatprep.subr.mxu0 0.0
        %3176 = vmatpush2.xpose.msra.mxu0 0.0
        %3177 = vmatprep.subr.mxu0 0.0
        %3178 = vmatpush2.xpose.msra.mxu0 0.0
        %3179 = vmatprep.mubr.f32.mxu0 0.0
        %3180 = vmatmul.mubr.f32.gmra.mxu0 %v3111
        %v3181 = vpop.f32.mrf.mxu0
        %v3182 = vadd.f32 0.0, %v3181
        %v3183 = vpop.f32.mrf.mxu0
        %3184 = vdwg.mxu0
        %v3185 = vsel %vm1014, -1e+09, %v3182
        %v3186 = vsel %vm1139, %v3185, -inf
        %3187 = vmax.xlane.f32.xlu0 %v3186
        %v3188 = vpop.xlane.xlu0 %3187
        %v3189 = vsub.f32 %v3185, %v3188
        %v3190 = vmul.f32 %v3189, 1.442695
        %v3191 = vpow.pop %v3190
        %v3192 = vsel %vm1139, %v3191, 0.0
        %3193 = vadd.xlane.f32.xlu0 %v3192
        %v3194 = vpop.xlane.xlu0 %3193
        %v3195 = vrcp.pop %v3194
        %v3196 = vmul.f32 %v3191, %v3195
        %3197 = vrot.lane.b32.xlu0 %v3105, 64
        %v3198 = vpop.permute.xlu0 %3197
        %v3201 = vsel %vm1139, %v3196, 0
        %3203 = vmatprep.subr.mxu0 0.0
        %3204 = vmatpush1.msra.mxu0 0.0
        %3205 = vmatprep.subr.mxu0 0.0
        %3206 = vmatpush1.msra.mxu0 0.0
        %3207 = vmatprep.subr.mxu0 0.0
        %3208 = vmatpush1.msra.mxu0 0.0
        %3209 = vmatprep.subr.mxu0 0.0
        %3210 = vmatpush1.msra.mxu0 0.0
        %3211 = vmatprep.subr.mxu0 0.0
        %3212 = vmatpush1.msra.mxu0 0.0
        %3213 = vmatprep.subr.mxu0 0.0
        %3214 = vmatpush1.msra.mxu0 0.0
        %3215 = vmatprep.subr.mxu0 0.0
        %3216 = vmatpush1.msra.mxu0 0.0
        %3217 = vmatprep.subr.mxu0 0.0
        %3218 = vmatpush1.msra.mxu0 0.0
        %3219 = vmatprep.subr.mxu0 0.0
        %3220 = vmatpush1.msra.mxu0 0.0
        %3221 = vmatprep.subr.mxu0 0.0
        %3222 = vmatpush1.msra.mxu0 0.0
        %3223 = vmatprep.subr.mxu0 0.0
        %3224 = vmatpush1.msra.mxu0 0.0
        %3225 = vmatprep.subr.mxu0 0.0
        %3226 = vmatpush1.msra.mxu0 0.0
        %3227 = vmatprep.subr.mxu0 0.0
        %3228 = vmatpush1.msra.mxu0 0.0
        %3229 = vmatprep.subr.mxu0 0.0
        %3230 = vmatpush1.msra.mxu0 0.0
        %3231 = vmatprep.subr.mxu0 0.0
        %3232 = vmatpush1.msra.mxu0 0.0
        %3233 = vmatprep.subr.mxu0 0.0
        %3234 = vmatpush1.msra.mxu0 %v3198
        %3235 = vmatprep.subr.mxu0 0.0
        %3236 = vmatpush2.msra.mxu0 0.0
        %3237 = vmatprep.subr.mxu0 0.0
        %3238 = vmatpush2.msra.mxu0 0.0
        %3239 = vmatprep.subr.mxu0 0.0
        %3240 = vmatpush2.msra.mxu0 0.0
        %3241 = vmatprep.subr.mxu0 0.0
        %3242 = vmatpush2.msra.mxu0 0.0
        %3243 = vmatprep.subr.mxu0 0.0
        %3244 = vmatpush2.msra.mxu0 0.0
        %3245 = vmatprep.subr.mxu0 0.0
        %3246 = vmatpush2.msra.mxu0 0.0
        %3247 = vmatprep.subr.mxu0 0.0
        %3248 = vmatpush2.msra.mxu0 0.0
        %3249 = vmatprep.subr.mxu0 0.0
        %3250 = vmatpush2.msra.mxu0 0.0
        %3251 = vmatprep.subr.mxu0 0.0
        %3252 = vmatpush2.msra.mxu0 0.0
        %3253 = vmatprep.subr.mxu0 0.0
        %3254 = vmatpush2.msra.mxu0 0.0
        %3255 = vmatprep.subr.mxu0 0.0
        %3256 = vmatpush2.msra.mxu0 0.0
        %3257 = vmatprep.subr.mxu0 0.0
        %3258 = vmatpush2.msra.mxu0 0.0
        %3259 = vmatprep.subr.mxu0 0.0
        %3260 = vmatpush2.msra.mxu0 0.0
        %3261 = vmatprep.subr.mxu0 0.0
        %3262 = vmatpush2.msra.mxu0 0.0
        %3263 = vmatprep.subr.mxu0 0.0
        %3264 = vmatpush2.msra.mxu0 0.0
        %3265 = vmatprep.subr.mxu0 0.0
        %3266 = vmatpush2.msra.mxu0 0.0
        %3267 = vmatprep.mubr.f32.mxu0 0.0
        %3268 = vmatmul.mubr.f32.gmra.mxu0 %v3201
        %v3269 = vpop.f32.mrf.mxu0
        %v3270 = vadd.f32 0.0, %v3269
        %v3271 = vpop.f32.mrf.mxu0
        %3272 = vdwg.mxu0
        %3273 = vst.msk [vmem:[#allocation2] sm:$0xff] %vm1139, %v3270
        %3274 = vrot.lane.b32.xlu0 %v3105, 120
        %v3275 = vpop.permute.xlu0 %3274
        %3276 = vrot.lane.b32.xlu0 %v3105, 88
        %v3277 = vpop.permute.xlu0 %3276
        %v3278 = vsel %vm1139, %v3275, 0
        %v3280 = vsel %vm1139, %v3277, 0
        %3282 = vmatprep.subr.mxu0 0.0
        %3283 = vmatpush1.xpose.msra.mxu0 0.0
        %3284 = vmatprep.subr.mxu0 0.0
        %3285 = vmatpush1.xpose.msra.mxu0 0.0
        %3286 = vmatprep.subr.mxu0 0.0
        %3287 = vmatpush1.xpose.msra.mxu0 0.0
        %3288 = vmatprep.subr.mxu0 0.0
        %3289 = vmatpush1.xpose.msra.mxu0 0.0
        %3290 = vmatprep.subr.mxu0 0.0
        %3291 = vmatpush1.xpose.msra.mxu0 0.0
        %3292 = vmatprep.subr.mxu0 0.0
        %3293 = vmatpush1.xpose.msra.mxu0 0.0
        %3294 = vmatprep.subr.mxu0 0.0
        %3295 = vmatpush1.xpose.msra.mxu0 0.0
        %3296 = vmatprep.subr.mxu0 0.0
        %3297 = vmatpush1.xpose.msra.mxu0 0.0
        %3298 = vmatprep.subr.mxu0 0.0
        %3299 = vmatpush1.xpose.msra.mxu0 0.0
        %3300 = vmatprep.subr.mxu0 0.0
        %3301 = vmatpush1.xpose.msra.mxu0 0.0
        %3302 = vmatprep.subr.mxu0 0.0
        %3303 = vmatpush1.xpose.msra.mxu0 0.0
        %3304 = vmatprep.subr.mxu0 0.0
        %3305 = vmatpush1.xpose.msra.mxu0 0.0
        %3306 = vmatprep.subr.mxu0 0.0
        %3307 = vmatpush1.xpose.msra.mxu0 0.0
        %3308 = vmatprep.subr.mxu0 0.0
        %3309 = vmatpush1.xpose.msra.mxu0 0.0
        %3310 = vmatprep.subr.mxu0 0.0
        %3311 = vmatpush1.xpose.msra.mxu0 0.0
        %3312 = vmatprep.subr.mxu0 0.0
        %3313 = vmatpush1.xpose.msra.mxu0 %v3280
        %3314 = vmatprep.subr.mxu0 0.0
        %3315 = vmatpush2.xpose.msra.mxu0 0.0
        %3316 = vmatprep.subr.mxu0 0.0
        %3317 = vmatpush2.xpose.msra.mxu0 0.0
        %3318 = vmatprep.subr.mxu0 0.0
        %3319 = vmatpush2.xpose.msra.mxu0 0.0
        %3320 = vmatprep.subr.mxu0 0.0
        %3321 = vmatpush2.xpose.msra.mxu0 0.0
        %3322 = vmatprep.subr.mxu0 0.0
        %3323 = vmatpush2.xpose.msra.mxu0 0.0
        %3324 = vmatprep.subr.mxu0 0.0
        %3325 = vmatpush2.xpose.msra.mxu0 0.0
        %3326 = vmatprep.subr.mxu0 0.0
        %3327 = vmatpush2.xpose.msra.mxu0 0.0
        %3328 = vmatprep.subr.mxu0 0.0
        %3329 = vmatpush2.xpose.msra.mxu0 0.0
        %3330 = vmatprep.subr.mxu0 0.0
        %3331 = vmatpush2.xpose.msra.mxu0 0.0
        %3332 = vmatprep.subr.mxu0 0.0
        %3333 = vmatpush2.xpose.msra.mxu0 0.0
        %3334 = vmatprep.subr.mxu0 0.0
        %3335 = vmatpush2.xpose.msra.mxu0 0.0
        %3336 = vmatprep.subr.mxu0 0.0
        %3337 = vmatpush2.xpose.msra.mxu0 0.0
        %3338 = vmatprep.subr.mxu0 0.0
        %3339 = vmatpush2.xpose.msra.mxu0 0.0
        %3340 = vmatprep.subr.mxu0 0.0
        %3341 = vmatpush2.xpose.msra.mxu0 0.0
        %3342 = vmatprep.subr.mxu0 0.0
        %3343 = vmatpush2.xpose.msra.mxu0 0.0
        %3344 = vmatprep.subr.mxu0 0.0
        %3345 = vmatpush2.xpose.msra.mxu0 0.0
        %3346 = vmatprep.mubr.f32.mxu0 0.0
        %3347 = vmatmul.mubr.f32.gmra.mxu0 %v3278
        %v3348 = vpop.f32.mrf.mxu0
        %v3349 = vadd.f32 0.0, %v3348
        %v3350 = vpop.f32.mrf.mxu0
        %3351 = vdwg.mxu0
        %v3352 = vsel %vm1014, -1e+09, %v3349
        %v3353 = vsel %vm1139, %v3352, -inf
        %3354 = vmax.xlane.f32.xlu0 %v3353
        %v3355 = vpop.xlane.xlu0 %3354
        %v3356 = vsub.f32 %v3352, %v3355
        %v3357 = vmul.f32 %v3356, 1.442695
        %v3358 = vpow.pop %v3357
        %v3359 = vsel %vm1139, %v3358, 0.0
        %3360 = vadd.xlane.f32.xlu0 %v3359
        %v3361 = vpop.xlane.xlu0 %3360
        %v3362 = vrcp.pop %v3361
        %v3363 = vmul.f32 %v3358, %v3362
        %3364 = vrot.lane.b32.xlu0 %v3105, 56
        %v3365 = vpop.permute.xlu0 %3364
        %v3368 = vsel %vm1139, %v3363, 0
        %3370 = vmatprep.subr.mxu0 0.0
        %3371 = vmatpush1.msra.mxu0 0.0
        %3372 = vmatprep.subr.mxu0 0.0
        %3373 = vmatpush1.msra.mxu0 0.0
        %3374 = vmatprep.subr.mxu0 0.0
        %3375 = vmatpush1.msra.mxu0 0.0
        %3376 = vmatprep.subr.mxu0 0.0
        %3377 = vmatpush1.msra.mxu0 0.0
        %3378 = vmatprep.subr.mxu0 0.0
        %3379 = vmatpush1.msra.mxu0 0.0
        %3380 = vmatprep.subr.mxu0 0.0
        %3381 = vmatpush1.msra.mxu0 0.0
        %3382 = vmatprep.subr.mxu0 0.0
        %3383 = vmatpush1.msra.mxu0 0.0
        %3384 = vmatprep.subr.mxu0 0.0
        %3385 = vmatpush1.msra.mxu0 0.0
        %3386 = vmatprep.subr.mxu0 0.0
        %3387 = vmatpush1.msra.mxu0 0.0
        %3388 = vmatprep.subr.mxu0 0.0
        %3389 = vmatpush1.msra.mxu0 0.0
        %3390 = vmatprep.subr.mxu0 0.0
        %3391 = vmatpush1.msra.mxu0 0.0
        %3392 = vmatprep.subr.mxu0 0.0
        %3393 = vmatpush1.msra.mxu0 0.0
        %3394 = vmatprep.subr.mxu0 0.0
        %3395 = vmatpush1.msra.mxu0 0.0
        %3396 = vmatprep.subr.mxu0 0.0
        %3397 = vmatpush1.msra.mxu0 0.0
        %3398 = vmatprep.subr.mxu0 0.0
        %3399 = vmatpush1.msra.mxu0 0.0
        %3400 = vmatprep.subr.mxu0 0.0
        %3401 = vmatpush1.msra.mxu0 %v3365
        %3402 = vmatprep.subr.mxu0 0.0
        %3403 = vmatpush2.msra.mxu0 0.0
        %3404 = vmatprep.subr.mxu0 0.0
        %3405 = vmatpush2.msra.mxu0 0.0
        %3406 = vmatprep.subr.mxu0 0.0
        %3407 = vmatpush2.msra.mxu0 0.0
        %3408 = vmatprep.subr.mxu0 0.0
        %3409 = vmatpush2.msra.mxu0 0.0
        %3410 = vmatprep.subr.mxu0 0.0
        %3411 = vmatpush2.msra.mxu0 0.0
        %3412 = vmatprep.subr.mxu0 0.0
        %3413 = vmatpush2.msra.mxu0 0.0
        %3414 = vmatprep.subr.mxu0 0.0
        %3415 = vmatpush2.msra.mxu0 0.0
        %3416 = vmatprep.subr.mxu0 0.0
        %3417 = vmatpush2.msra.mxu0 0.0
        %3418 = vmatprep.subr.mxu0 0.0
        %3419 = vmatpush2.msra.mxu0 0.0
        %3420 = vmatprep.subr.mxu0 0.0
        %3421 = vmatpush2.msra.mxu0 0.0
        %3422 = vmatprep.subr.mxu0 0.0
        %3423 = vmatpush2.msra.mxu0 0.0
        %3424 = vmatprep.subr.mxu0 0.0
        %3425 = vmatpush2.msra.mxu0 0.0
        %3426 = vmatprep.subr.mxu0 0.0
        %3427 = vmatpush2.msra.mxu0 0.0
        %3428 = vmatprep.subr.mxu0 0.0
        %3429 = vmatpush2.msra.mxu0 0.0
        %3430 = vmatprep.subr.mxu0 0.0
        %3431 = vmatpush2.msra.mxu0 0.0
        %3432 = vmatprep.subr.mxu0 0.0
        %3433 = vmatpush2.msra.mxu0 0.0
        %3434 = vmatprep.mubr.f32.mxu0 0.0
        %3435 = vmatmul.mubr.f32.gmra.mxu0 %v3368
        %v3436 = vpop.f32.mrf.mxu0
        %v3437 = vadd.f32 0.0, %v3436
        %v3438 = vpop.f32.mrf.mxu0
        %3439 = vdwg.mxu0
        %3441 = vrot.lane.b32.xlu0 %v3437, 8
        %v3442 = vpop.permute.xlu0 %3441
        %3444 = vst.msk [vmem:[#allocation2] sm:$0xff] %vm1473, %v3442
        %3445 = vrot.lane.b32.xlu0 %v3105, 112
        %v3446 = vpop.permute.xlu0 %3445
        %3447 = vrot.lane.b32.xlu0 %v3105, 80
        %v3448 = vpop.permute.xlu0 %3447
        %v3449 = vsel %vm1139, %v3446, 0
        %v3451 = vsel %vm1139, %v3448, 0
        %3453 = vmatprep.subr.mxu0 0.0
        %3454 = vmatpush1.xpose.msra.mxu0 0.0
        %3455 = vmatprep.subr.mxu0 0.0
        %3456 = vmatpush1.xpose.msra.mxu0 0.0
        %3457 = vmatprep.subr.mxu0 0.0
        %3458 = vmatpush1.xpose.msra.mxu0 0.0
        %3459 = vmatprep.subr.mxu0 0.0
        %3460 = vmatpush1.xpose.msra.mxu0 0.0
        %3461 = vmatprep.subr.mxu0 0.0
        %3462 = vmatpush1.xpose.msra.mxu0 0.0
        %3463 = vmatprep.subr.mxu0 0.0
        %3464 = vmatpush1.xpose.msra.mxu0 0.0
        %3465 = vmatprep.subr.mxu0 0.0
        %3466 = vmatpush1.xpose.msra.mxu0 0.0
        %3467 = vmatprep.subr.mxu0 0.0
        %3468 = vmatpush1.xpose.msra.mxu0 0.0
        %3469 = vmatprep.subr.mxu0 0.0
        %3470 = vmatpush1.xpose.msra.mxu0 0.0
        %3471 = vmatprep.subr.mxu0 0.0
        %3472 = vmatpush1.xpose.msra.mxu0 0.0
        %3473 = vmatprep.subr.mxu0 0.0
        %3474 = vmatpush1.xpose.msra.mxu0 0.0
        %3475 = vmatprep.subr.mxu0 0.0
        %3476 = vmatpush1.xpose.msra.mxu0 0.0
        %3477 = vmatprep.subr.mxu0 0.0
        %3478 = vmatpush1.xpose.msra.mxu0 0.0
        %3479 = vmatprep.subr.mxu0 0.0
        %3480 = vmatpush1.xpose.msra.mxu0 0.0
        %3481 = vmatprep.subr.mxu0 0.0
        %3482 = vmatpush1.xpose.msra.mxu0 0.0
        %3483 = vmatprep.subr.mxu0 0.0
        %3484 = vmatpush1.xpose.msra.mxu0 %v3451
        %3485 = vmatprep.subr.mxu0 0.0
        %3486 = vmatpush2.xpose.msra.mxu0 0.0
        %3487 = vmatprep.subr.mxu0 0.0
        %3488 = vmatpush2.xpose.msra.mxu0 0.0
        %3489 = vmatprep.subr.mxu0 0.0
        %3490 = vmatpush2.xpose.msra.mxu0 0.0
        %3491 = vmatprep.subr.mxu0 0.0
        %3492 = vmatpush2.xpose.msra.mxu0 0.0
        %3493 = vmatprep.subr.mxu0 0.0
        %3494 = vmatpush2.xpose.msra.mxu0 0.0
        %3495 = vmatprep.subr.mxu0 0.0
        %3496 = vmatpush2.xpose.msra.mxu0 0.0
        %3497 = vmatprep.subr.mxu0 0.0
        %3498 = vmatpush2.xpose.msra.mxu0 0.0
        %3499 = vmatprep.subr.mxu0 0.0
        %3500 = vmatpush2.xpose.msra.mxu0 0.0
        %3501 = vmatprep.subr.mxu0 0.0
        %3502 = vmatpush2.xpose.msra.mxu0 0.0
        %3503 = vmatprep.subr.mxu0 0.0
        %3504 = vmatpush2.xpose.msra.mxu0 0.0
        %3505 = vmatprep.subr.mxu0 0.0
        %3506 = vmatpush2.xpose.msra.mxu0 0.0
        %3507 = vmatprep.subr.mxu0 0.0
        %3508 = vmatpush2.xpose.msra.mxu0 0.0
        %3509 = vmatprep.subr.mxu0 0.0
        %3510 = vmatpush2.xpose.msra.mxu0 0.0
        %3511 = vmatprep.subr.mxu0 0.0
        %3512 = vmatpush2.xpose.msra.mxu0 0.0
        %3513 = vmatprep.subr.mxu0 0.0
        %3514 = vmatpush2.xpose.msra.mxu0 0.0
        %3515 = vmatprep.subr.mxu0 0.0
        %3516 = vmatpush2.xpose.msra.mxu0 0.0
        %3517 = vmatprep.mubr.f32.mxu0 0.0
        %3518 = vmatmul.mubr.f32.gmra.mxu0 %v3449
        %v3519 = vpop.f32.mrf.mxu0
        %v3520 = vadd.f32 0.0, %v3519
        %v3521 = vpop.f32.mrf.mxu0
        %3522 = vdwg.mxu0
        %v3523 = vsel %vm1014, -1e+09, %v3520
        %v3524 = vsel %vm1139, %v3523, -inf
        %3525 = vmax.xlane.f32.xlu0 %v3524
        %v3526 = vpop.xlane.xlu0 %3525
        %v3527 = vsub.f32 %v3523, %v3526
        %v3528 = vmul.f32 %v3527, 1.442695
        %v3529 = vpow.pop %v3528
        %v3530 = vsel %vm1139, %v3529, 0.0
        %3531 = vadd.xlane.f32.xlu0 %v3530
        %v3532 = vpop.xlane.xlu0 %3531
        %v3533 = vrcp.pop %v3532
        %v3534 = vmul.f32 %v3529, %v3533
        %3535 = vrot.lane.b32.xlu0 %v3105, 48
        %v3536 = vpop.permute.xlu0 %3535
        %v3539 = vsel %vm1139, %v3534, 0
        %3541 = vmatprep.subr.mxu0 0.0
        %3542 = vmatpush1.msra.mxu0 0.0
        %3543 = vmatprep.subr.mxu0 0.0
        %3544 = vmatpush1.msra.mxu0 0.0
        %3545 = vmatprep.subr.mxu0 0.0
        %3546 = vmatpush1.msra.mxu0 0.0
        %3547 = vmatprep.subr.mxu0 0.0
        %3548 = vmatpush1.msra.mxu0 0.0
        %3549 = vmatprep.subr.mxu0 0.0
        %3550 = vmatpush1.msra.mxu0 0.0
        %3551 = vmatprep.subr.mxu0 0.0
        %3552 = vmatpush1.msra.mxu0 0.0
        %3553 = vmatprep.subr.mxu0 0.0
        %3554 = vmatpush1.msra.mxu0 0.0
        %3555 = vmatprep.subr.mxu0 0.0
        %3556 = vmatpush1.msra.mxu0 0.0
        %3557 = vmatprep.subr.mxu0 0.0
        %3558 = vmatpush1.msra.mxu0 0.0
        %3559 = vmatprep.subr.mxu0 0.0
        %3560 = vmatpush1.msra.mxu0 0.0
        %3561 = vmatprep.subr.mxu0 0.0
        %3562 = vmatpush1.msra.mxu0 0.0
        %3563 = vmatprep.subr.mxu0 0.0
        %3564 = vmatpush1.msra.mxu0 0.0
        %3565 = vmatprep.subr.mxu0 0.0
        %3566 = vmatpush1.msra.mxu0 0.0
        %3567 = vmatprep.subr.mxu0 0.0
        %3568 = vmatpush1.msra.mxu0 0.0
        %3569 = vmatprep.subr.mxu0 0.0
        %3570 = vmatpush1.msra.mxu0 0.0
        %3571 = vmatprep.subr.mxu0 0.0
        %3572 = vmatpush1.msra.mxu0 %v3536
        %3573 = vmatprep.subr.mxu0 0.0
        %3574 = vmatpush2.msra.mxu0 0.0
        %3575 = vmatprep.subr.mxu0 0.0
        %3576 = vmatpush2.msra.mxu0 0.0
        %3577 = vmatprep.subr.mxu0 0.0
        %3578 = vmatpush2.msra.mxu0 0.0
        %3579 = vmatprep.subr.mxu0 0.0
        %3580 = vmatpush2.msra.mxu0 0.0
        %3581 = vmatprep.subr.mxu0 0.0
        %3582 = vmatpush2.msra.mxu0 0.0
        %3583 = vmatprep.subr.mxu0 0.0
        %3584 = vmatpush2.msra.mxu0 0.0
        %3585 = vmatprep.subr.mxu0 0.0
        %3586 = vmatpush2.msra.mxu0 0.0
        %3587 = vmatprep.subr.mxu0 0.0
        %3588 = vmatpush2.msra.mxu0 0.0
        %3589 = vmatprep.subr.mxu0 0.0
        %3590 = vmatpush2.msra.mxu0 0.0
        %3591 = vmatprep.subr.mxu0 0.0
        %3592 = vmatpush2.msra.mxu0 0.0
        %3593 = vmatprep.subr.mxu0 0.0
        %3594 = vmatpush2.msra.mxu0 0.0
        %3595 = vmatprep.subr.mxu0 0.0
        %3596 = vmatpush2.msra.mxu0 0.0
        %3597 = vmatprep.subr.mxu0 0.0
        %3598 = vmatpush2.msra.mxu0 0.0
        %3599 = vmatprep.subr.mxu0 0.0
        %3600 = vmatpush2.msra.mxu0 0.0
        %3601 = vmatprep.subr.mxu0 0.0
        %3602 = vmatpush2.msra.mxu0 0.0
        %3603 = vmatprep.subr.mxu0 0.0
        %3604 = vmatpush2.msra.mxu0 0.0
        %3605 = vmatprep.mubr.f32.mxu0 0.0
        %3606 = vmatmul.mubr.f32.gmra.mxu0 %v3539
        %v3607 = vpop.f32.mrf.mxu0
        %v3608 = vadd.f32 0.0, %v3607
        %v3609 = vpop.f32.mrf.mxu0
        %3610 = vdwg.mxu0
        %3612 = vrot.lane.b32.xlu0 %v3608, 16
        %v3613 = vpop.permute.xlu0 %3612
        %3615 = vst.msk [vmem:[#allocation2] sm:$0xff] %vm1645, %v3613
        %3616 = vrot.lane.b32.xlu0 %v3105, 104
        %v3617 = vpop.permute.xlu0 %3616
        %3618 = vrot.lane.b32.xlu0 %v3105, 72
        %v3619 = vpop.permute.xlu0 %3618
        %v3620 = vsel %vm1139, %v3617, 0
        %v3622 = vsel %vm1139, %v3619, 0
        %3624 = vmatprep.subr.mxu0 0.0
        %3625 = vmatpush1.xpose.msra.mxu0 0.0
        %3626 = vmatprep.subr.mxu0 0.0
        %3627 = vmatpush1.xpose.msra.mxu0 0.0
        %3628 = vmatprep.subr.mxu0 0.0
        %3629 = vmatpush1.xpose.msra.mxu0 0.0
        %3630 = vmatprep.subr.mxu0 0.0
        %3631 = vmatpush1.xpose.msra.mxu0 0.0
        %3632 = vmatprep.subr.mxu0 0.0
        %3633 = vmatpush1.xpose.msra.mxu0 0.0
        %3634 = vmatprep.subr.mxu0 0.0
        %3635 = vmatpush1.xpose.msra.mxu0 0.0
        %3636 = vmatprep.subr.mxu0 0.0
        %3637 = vmatpush1.xpose.msra.mxu0 0.0
        %3638 = vmatprep.subr.mxu0 0.0
        %3639 = vmatpush1.xpose.msra.mxu0 0.0
        %3640 = vmatprep.subr.mxu0 0.0
        %3641 = vmatpush1.xpose.msra.mxu0 0.0
        %3642 = vmatprep.subr.mxu0 0.0
        %3643 = vmatpush1.xpose.msra.mxu0 0.0
        %3644 = vmatprep.subr.mxu0 0.0
        %3645 = vmatpush1.xpose.msra.mxu0 0.0
        %3646 = vmatprep.subr.mxu0 0.0
        %3647 = vmatpush1.xpose.msra.mxu0 0.0
        %3648 = vmatprep.subr.mxu0 0.0
        %3649 = vmatpush1.xpose.msra.mxu0 0.0
        %3650 = vmatprep.subr.mxu0 0.0
        %3651 = vmatpush1.xpose.msra.mxu0 0.0
        %3652 = vmatprep.subr.mxu0 0.0
        %3653 = vmatpush1.xpose.msra.mxu0 0.0
        %3654 = vmatprep.subr.mxu0 0.0
        %3655 = vmatpush1.xpose.msra.mxu0 %v3622
        %3656 = vmatprep.subr.mxu0 0.0
        %3657 = vmatpush2.xpose.msra.mxu0 0.0
        %3658 = vmatprep.subr.mxu0 0.0
        %3659 = vmatpush2.xpose.msra.mxu0 0.0
        %3660 = vmatprep.subr.mxu0 0.0
        %3661 = vmatpush2.xpose.msra.mxu0 0.0
        %3662 = vmatprep.subr.mxu0 0.0
        %3663 = vmatpush2.xpose.msra.mxu0 0.0
        %3664 = vmatprep.subr.mxu0 0.0
        %3665 = vmatpush2.xpose.msra.mxu0 0.0
        %3666 = vmatprep.subr.mxu0 0.0
        %3667 = vmatpush2.xpose.msra.mxu0 0.0
        %3668 = vmatprep.subr.mxu0 0.0
        %3669 = vmatpush2.xpose.msra.mxu0 0.0
        %3670 = vmatprep.subr.mxu0 0.0
        %3671 = vmatpush2.xpose.msra.mxu0 0.0
        %3672 = vmatprep.subr.mxu0 0.0
        %3673 = vmatpush2.xpose.msra.mxu0 0.0
        %3674 = vmatprep.subr.mxu0 0.0
        %3675 = vmatpush2.xpose.msra.mxu0 0.0
        %3676 = vmatprep.subr.mxu0 0.0
        %3677 = vmatpush2.xpose.msra.mxu0 0.0
        %3678 = vmatprep.subr.mxu0 0.0
        %3679 = vmatpush2.xpose.msra.mxu0 0.0
        %3680 = vmatprep.subr.mxu0 0.0
        %3681 = vmatpush2.xpose.msra.mxu0 0.0
        %3682 = vmatprep.subr.mxu0 0.0
        %3683 = vmatpush2.xpose.msra.mxu0 0.0
        %3684 = vmatprep.subr.mxu0 0.0
        %3685 = vmatpush2.xpose.msra.mxu0 0.0
        %3686 = vmatprep.subr.mxu0 0.0
        %3687 = vmatpush2.xpose.msra.mxu0 0.0
        %3688 = vmatprep.mubr.f32.mxu0 0.0
        %3689 = vmatmul.mubr.f32.gmra.mxu0 %v3620
        %v3690 = vpop.f32.mrf.mxu0
        %v3691 = vadd.f32 0.0, %v3690
        %v3692 = vpop.f32.mrf.mxu0
        %3693 = vdwg.mxu0
        %v3694 = vsel %vm1014, -1e+09, %v3691
        %v3695 = vsel %vm1139, %v3694, -inf
        %3696 = vmax.xlane.f32.xlu0 %v3695
        %v3697 = vpop.xlane.xlu0 %3696
        %v3698 = vsub.f32 %v3694, %v3697
        %v3699 = vmul.f32 %v3698, 1.442695
        %v3700 = vpow.pop %v3699
        %v3701 = vsel %vm1139, %v3700, 0.0
        %3702 = vadd.xlane.f32.xlu0 %v3701
        %v3703 = vpop.xlane.xlu0 %3702
        %v3704 = vrcp.pop %v3703
        %v3705 = vmul.f32 %v3700, %v3704
        %3706 = vrot.lane.b32.xlu0 %v3105, 40
        %v3707 = vpop.permute.xlu0 %3706
        %v3710 = vsel %vm1139, %v3705, 0
        %3712 = vmatprep.subr.mxu0 0.0
        %3713 = vmatpush1.msra.mxu0 0.0
        %3714 = vmatprep.subr.mxu0 0.0
        %3715 = vmatpush1.msra.mxu0 0.0
        %3716 = vmatprep.subr.mxu0 0.0
        %3717 = vmatpush1.msra.mxu0 0.0
        %3718 = vmatprep.subr.mxu0 0.0
        %3719 = vmatpush1.msra.mxu0 0.0
        %3720 = vmatprep.subr.mxu0 0.0
        %3721 = vmatpush1.msra.mxu0 0.0
        %3722 = vmatprep.subr.mxu0 0.0
        %3723 = vmatpush1.msra.mxu0 0.0
        %3724 = vmatprep.subr.mxu0 0.0
        %3725 = vmatpush1.msra.mxu0 0.0
        %3726 = vmatprep.subr.mxu0 0.0
        %3727 = vmatpush1.msra.mxu0 0.0
        %3728 = vmatprep.subr.mxu0 0.0
        %3729 = vmatpush1.msra.mxu0 0.0
        %3730 = vmatprep.subr.mxu0 0.0
        %3731 = vmatpush1.msra.mxu0 0.0
        %3732 = vmatprep.subr.mxu0 0.0
        %3733 = vmatpush1.msra.mxu0 0.0
        %3734 = vmatprep.subr.mxu0 0.0
        %3735 = vmatpush1.msra.mxu0 0.0
        %3736 = vmatprep.subr.mxu0 0.0
        %3737 = vmatpush1.msra.mxu0 0.0
        %3738 = vmatprep.subr.mxu0 0.0
        %3739 = vmatpush1.msra.mxu0 0.0
        %3740 = vmatprep.subr.mxu0 0.0
        %3741 = vmatpush1.msra.mxu0 0.0
        %3742 = vmatprep.subr.mxu0 0.0
        %3743 = vmatpush1.msra.mxu0 %v3707
        %3744 = vmatprep.subr.mxu0 0.0
        %3745 = vmatpush2.msra.mxu0 0.0
        %3746 = vmatprep.subr.mxu0 0.0
        %3747 = vmatpush2.msra.mxu0 0.0
        %3748 = vmatprep.subr.mxu0 0.0
        %3749 = vmatpush2.msra.mxu0 0.0
        %3750 = vmatprep.subr.mxu0 0.0
        %3751 = vmatpush2.msra.mxu0 0.0
        %3752 = vmatprep.subr.mxu0 0.0
        %3753 = vmatpush2.msra.mxu0 0.0
        %3754 = vmatprep.subr.mxu0 0.0
        %3755 = vmatpush2.msra.mxu0 0.0
        %3756 = vmatprep.subr.mxu0 0.0
        %3757 = vmatpush2.msra.mxu0 0.0
        %3758 = vmatprep.subr.mxu0 0.0
        %3759 = vmatpush2.msra.mxu0 0.0
        %3760 = vmatprep.subr.mxu0 0.0
        %3761 = vmatpush2.msra.mxu0 0.0
        %3762 = vmatprep.subr.mxu0 0.0
        %3763 = vmatpush2.msra.mxu0 0.0
        %3764 = vmatprep.subr.mxu0 0.0
        %3765 = vmatpush2.msra.mxu0 0.0
        %3766 = vmatprep.subr.mxu0 0.0
        %3767 = vmatpush2.msra.mxu0 0.0
        %3768 = vmatprep.subr.mxu0 0.0
        %3769 = vmatpush2.msra.mxu0 0.0
        %3770 = vmatprep.subr.mxu0 0.0
        %3771 = vmatpush2.msra.mxu0 0.0
        %3772 = vmatprep.subr.mxu0 0.0
        %3773 = vmatpush2.msra.mxu0 0.0
        %3774 = vmatprep.subr.mxu0 0.0
        %3775 = vmatpush2.msra.mxu0 0.0
        %3776 = vmatprep.mubr.f32.mxu0 0.0
        %3777 = vmatmul.mubr.f32.gmra.mxu0 %v3710
        %v3778 = vpop.f32.mrf.mxu0
        %v3779 = vadd.f32 0.0, %v3778
        %v3780 = vpop.f32.mrf.mxu0
        %3781 = vdwg.mxu0
        %3783 = vrot.lane.b32.xlu0 %v3779, 24
        %v3784 = vpop.permute.xlu0 %3783
        %3786 = vst.msk [vmem:[#allocation2] sm:$0xff] %vm1817, %v3784
        %v3787 = vld [vmem:[#allocation2] sm:$0xff]
        %v3788 = vld [vmem:[%s10] sm:$0xff]
        %v3789 = vld [vmem:[%s10 + $0x8] sm:$0xff]
        %v3790 = vld [vmem:[%s10 + $0x10] sm:$0xff]
        %v3791 = vld [vmem:[%s10 + $0x18] sm:$0xff]
        %v3792 = vld [vmem:[#allocation14] sm:$0x1]
        %v3794 = vlaneseq
        %v3795 = vshrl.u32 %v3794, 7
        %v3796 = vsub.s32 0, %v3795
        %v3797 = vrot.slane %v3792, %v3796
        %v3800 = vsel %vm939, %v3787, 0
        %3802 = vmatprep.subr.mxu0 0.0
        %3803 = vmatpush1.msra.mxu0 0.0
        %3804 = vmatprep.subr.mxu0 0.0
        %3805 = vmatpush1.msra.mxu0 0.0
        %3806 = vmatprep.subr.mxu0 0.0
        %3807 = vmatpush1.msra.mxu0 0.0
        %3808 = vmatprep.subr.mxu0 0.0
        %3809 = vmatpush1.msra.mxu0 0.0
        %3810 = vmatprep.subr.mxu0 0.0
        %3811 = vmatpush1.msra.mxu0 0.0
        %3812 = vmatprep.subr.mxu0 0.0
        %3813 = vmatpush1.msra.mxu0 0.0
        %3814 = vmatprep.subr.mxu0 0.0
        %3815 = vmatpush1.msra.mxu0 0.0
        %3816 = vmatprep.subr.mxu0 0.0
        %3817 = vmatpush1.msra.mxu0 0.0
        %3818 = vmatprep.subr.mxu0 0.0
        %3819 = vmatpush1.msra.mxu0 0.0
        %3820 = vmatprep.subr.mxu0 0.0
        %3821 = vmatpush1.msra.mxu0 0.0
        %3822 = vmatprep.subr.mxu0 0.0
        %3823 = vmatpush1.msra.mxu0 0.0
        %3824 = vmatprep.subr.mxu0 0.0
        %3825 = vmatpush1.msra.mxu0 0.0
        %3826 = vmatprep.subr.mxu0 0.0
        %3827 = vmatpush1.msra.mxu0 %v3791
        %3828 = vmatprep.subr.mxu0 0.0
        %3829 = vmatpush1.msra.mxu0 %v3790
        %3830 = vmatprep.subr.mxu0 0.0
        %3831 = vmatpush1.msra.mxu0 %v3789
        %3832 = vmatprep.subr.mxu0 0.0
        %3833 = vmatpush1.msra.mxu0 %v3788
        %3834 = vmatprep.subr.mxu0 0.0
        %3835 = vmatpush2.msra.mxu0 0.0
        %3836 = vmatprep.subr.mxu0 0.0
        %3837 = vmatpush2.msra.mxu0 0.0
        %3838 = vmatprep.subr.mxu0 0.0
        %3839 = vmatpush2.msra.mxu0 0.0
        %3840 = vmatprep.subr.mxu0 0.0
        %3841 = vmatpush2.msra.mxu0 0.0
        %3842 = vmatprep.subr.mxu0 0.0
        %3843 = vmatpush2.msra.mxu0 0.0
        %3844 = vmatprep.subr.mxu0 0.0
        %3845 = vmatpush2.msra.mxu0 0.0
        %3846 = vmatprep.subr.mxu0 0.0
        %3847 = vmatpush2.msra.mxu0 0.0
        %3848 = vmatprep.subr.mxu0 0.0
        %3849 = vmatpush2.msra.mxu0 0.0
        %3850 = vmatprep.subr.mxu0 0.0
        %3851 = vmatpush2.msra.mxu0 0.0
        %3852 = vmatprep.subr.mxu0 0.0
        %3853 = vmatpush2.msra.mxu0 0.0
        %3854 = vmatprep.subr.mxu0 0.0
        %3855 = vmatpush2.msra.mxu0 0.0
        %3856 = vmatprep.subr.mxu0 0.0
        %3857 = vmatpush2.msra.mxu0 0.0
        %3858 = vmatprep.subr.mxu0 0.0
        %3859 = vmatpush2.msra.mxu0 0.0
        %3860 = vmatprep.subr.mxu0 0.0
        %3861 = vmatpush2.msra.mxu0 0.0
        %3862 = vmatprep.subr.mxu0 0.0
        %3863 = vmatpush2.msra.mxu0 0.0
        %3864 = vmatprep.subr.mxu0 0.0
        %3865 = vmatpush2.msra.mxu0 0.0
        %3866 = vmatprep.mubr.f32.mxu0 0.0
        %3867 = vmatmul.mubr.f32.gmra.mxu0 %v3800
        %v3868 = vpop.f32.mrf.mxu0
        %v3869 = vadd.f32 %v3797, %v3868
        %v3870 = vpop.f32.mrf.mxu0
        %3871 = vdwg.mxu0
        %v3872 = vadd.f32 %v2993, %v3869
        %v3873 = vsel %vm939, %v3872, 0.0
        %3874 = vadd.xlane.f32.xlu0 %v3873
        %v3875 = vpop.xlane.xlu0 %3874
        %v3876 = vmul.f32 %v3875, %v1024
        %v3877 = vsub.f32 %v3872, %v3876
        %v3878 = vmul.f32 %v3877, %v3877
        %v3879 = vsel %vm939, %v3878, 0.0
        %3880 = vadd.xlane.f32.xlu0 %v3879
        %v3881 = vpop.xlane.xlu0 %3880
        %v3882 = vmul.f32 %v3881, 0.032258064
        %v3883 = vlaneseq
        %v3884 = vshrl.u32 %v3883, 7
        %v3885 = vsub.s32 1, %v3884
        %v3886 = vrot.slane %v1018, %v3885
        %v3887 = vmul.f32 %v3886, %v3877
        %v3888 = vrsqrt.pop %v3882
        %v3889 = vmul.f32 %v3882, %v3888
        %vm3890 = vcmp.eq.f32.partialorder %v3882, inf
        %v3891 = vsel %vm3890, %v3882, %v3889
        %vm3892 = vcmp.eq.f32.partialorder %v3882, 0.0
        %v3893 = vand.u32 %v3882, 2147483648
        %v3894 = vsel %vm3892, %v3893, %v3891
        %v3895 = vadd.f32 %v3894, 1e-06
        %v3896 = vrcp.pop %v3895
        %v3897 = vmul.f32 %v3887, %v3896
        %v3898 = vlaneseq
        %v3899 = vshrl.u32 %v3898, 7
        %v3900 = vsub.s32 1, %v3899
        %v3901 = vrot.slane %v1020, %v3900
        %v3902 = vadd.f32 %v3897, %v3901
        %v3903 = vld [vmem:[%s12] sm:$0xff]
        %v3904 = vld [vmem:[%s12 + $0x8] sm:$0xff]
        %v3905 = vld [vmem:[%s12 + $0x10] sm:$0xff]
        %v3906 = vld [vmem:[%s12 + $0x18] sm:$0xff]
        %v3907 = vld [vmem:[#allocation15] sm:$0x1]
        %v3909 = vlaneseq
        %v3910 = vshrl.u32 %v3909, 7
        %v3911 = vsub.s32 0, %v3910
        %v3912 = vrot.slane %v3907, %v3911
        %v3915 = vsel %vm939, %v3902, 0
        %3917 = vmatprep.subr.mxu0 0.0
        %3918 = vmatpush1.msra.mxu0 0.0
        %3919 = vmatprep.subr.mxu0 0.0
        %3920 = vmatpush1.msra.mxu0 0.0
        %3921 = vmatprep.subr.mxu0 0.0
        %3922 = vmatpush1.msra.mxu0 0.0
        %3923 = vmatprep.subr.mxu0 0.0
        %3924 = vmatpush1.msra.mxu0 0.0
        %3925 = vmatprep.subr.mxu0 0.0
        %3926 = vmatpush1.msra.mxu0 0.0
        %3927 = vmatprep.subr.mxu0 0.0
        %3928 = vmatpush1.msra.mxu0 0.0
        %3929 = vmatprep.subr.mxu0 0.0
        %3930 = vmatpush1.msra.mxu0 0.0
        %3931 = vmatprep.subr.mxu0 0.0
        %3932 = vmatpush1.msra.mxu0 0.0
        %3933 = vmatprep.subr.mxu0 0.0
        %3934 = vmatpush1.msra.mxu0 0.0
        %3935 = vmatprep.subr.mxu0 0.0
        %3936 = vmatpush1.msra.mxu0 0.0
        %3937 = vmatprep.subr.mxu0 0.0
        %3938 = vmatpush1.msra.mxu0 0.0
        %3939 = vmatprep.subr.mxu0 0.0
        %3940 = vmatpush1.msra.mxu0 0.0
        %3941 = vmatprep.subr.mxu0 0.0
        %3942 = vmatpush1.msra.mxu0 %v3906
        %3943 = vmatprep.subr.mxu0 0.0
        %3944 = vmatpush1.msra.mxu0 %v3905
        %3945 = vmatprep.subr.mxu0 0.0
        %3946 = vmatpush1.msra.mxu0 %v3904
        %3947 = vmatprep.subr.mxu0 0.0
        %3948 = vmatpush1.msra.mxu0 %v3903
        %3949 = vmatprep.subr.mxu0 0.0
        %3950 = vmatpush2.msra.mxu0 0.0
        %3951 = vmatprep.subr.mxu0 0.0
        %3952 = vmatpush2.msra.mxu0 0.0
        %3953 = vmatprep.subr.mxu0 0.0
        %3954 = vmatpush2.msra.mxu0 0.0
        %3955 = vmatprep.subr.mxu0 0.0
        %3956 = vmatpush2.msra.mxu0 0.0
        %3957 = vmatprep.subr.mxu0 0.0
        %3958 = vmatpush2.msra.mxu0 0.0
        %3959 = vmatprep.subr.mxu0 0.0
        %3960 = vmatpush2.msra.mxu0 0.0
        %3961 = vmatprep.subr.mxu0 0.0
        %3962 = vmatpush2.msra.mxu0 0.0
        %3963 = vmatprep.subr.mxu0 0.0
        %3964 = vmatpush2.msra.mxu0 0.0
        %3965 = vmatprep.subr.mxu0 0.0
        %3966 = vmatpush2.msra.mxu0 0.0
        %3967 = vmatprep.subr.mxu0 0.0
        %3968 = vmatpush2.msra.mxu0 0.0
        %3969 = vmatprep.subr.mxu0 0.0
        %3970 = vmatpush2.msra.mxu0 0.0
        %3971 = vmatprep.subr.mxu0 0.0
        %3972 = vmatpush2.msra.mxu0 0.0
        %3973 = vmatprep.subr.mxu0 0.0
        %3974 = vmatpush2.msra.mxu0 0.0
        %3975 = vmatprep.subr.mxu0 0.0
        %3976 = vmatpush2.msra.mxu0 0.0
        %3977 = vmatprep.subr.mxu0 0.0
        %3978 = vmatpush2.msra.mxu0 0.0
        %3979 = vmatprep.subr.mxu0 0.0
        %3980 = vmatpush2.msra.mxu0 0.0
        %3981 = vmatprep.mubr.f32.mxu0 0.0
        %3982 = vmatmul.mubr.f32.gmra.mxu0 %v3915
        %v3983 = vpop.f32.mrf.mxu0
        %v3984 = vadd.f32 %v3912, %v3983
        %v3985 = vpop.f32.mrf.mxu0
        %3986 = vdwg.mxu0
        %v3988 = vsel %vm1139, %v3984, 0
        %3990 = vmatprep.subr.mxu0 0.0
        %3991 = vmatpush1.xpose.msra.mxu0 0.0
        %3992 = vmatprep.subr.mxu0 0.0
        %3993 = vmatpush1.xpose.msra.mxu0 0.0
        %3994 = vmatprep.subr.mxu0 0.0
        %3995 = vmatpush1.xpose.msra.mxu0 0.0
        %3996 = vmatprep.subr.mxu0 0.0
        %3997 = vmatpush1.xpose.msra.mxu0 0.0
        %3998 = vmatprep.subr.mxu0 0.0
        %3999 = vmatpush1.xpose.msra.mxu0 0.0
        %4000 = vmatprep.subr.mxu0 0.0
        %4001 = vmatpush1.xpose.msra.mxu0 0.0
        %4002 = vmatprep.subr.mxu0 0.0
        %4003 = vmatpush1.xpose.msra.mxu0 0.0
        %4004 = vmatprep.subr.mxu0 0.0
        %4005 = vmatpush1.xpose.msra.mxu0 0.0
        %4006 = vmatprep.subr.mxu0 0.0
        %4007 = vmatpush1.xpose.msra.mxu0 0.0
        %4008 = vmatprep.subr.mxu0 0.0
        %4009 = vmatpush1.xpose.msra.mxu0 0.0
        %4010 = vmatprep.subr.mxu0 0.0
        %4011 = vmatpush1.xpose.msra.mxu0 0.0
        %4012 = vmatprep.subr.mxu0 0.0
        %4013 = vmatpush1.xpose.msra.mxu0 0.0
        %4014 = vmatprep.subr.mxu0 0.0
        %4015 = vmatpush1.xpose.msra.mxu0 0.0
        %4016 = vmatprep.subr.mxu0 0.0
        %4017 = vmatpush1.xpose.msra.mxu0 0.0
        %4018 = vmatprep.subr.mxu0 0.0
        %4019 = vmatpush1.xpose.msra.mxu0 0.0
        %4020 = vmatprep.subr.mxu0 0.0
        %4021 = vmatpush1.xpose.msra.mxu0 %v2023
        %4022 = vmatprep.subr.mxu0 0.0
        %4023 = vmatpush2.xpose.msra.mxu0 0.0
        %4024 = vmatprep.subr.mxu0 0.0
        %4025 = vmatpush2.xpose.msra.mxu0 0.0
        %4026 = vmatprep.subr.mxu0 0.0
        %4027 = vmatpush2.xpose.msra.mxu0 0.0
        %4028 = vmatprep.subr.mxu0 0.0
        %4029 = vmatpush2.xpose.msra.mxu0 0.0
        %4030 = vmatprep.subr.mxu0 0.0
        %4031 = vmatpush2.xpose.msra.mxu0 0.0
        %4032 = vmatprep.subr.mxu0 0.0
        %4033 = vmatpush2.xpose.msra.mxu0 0.0
        %4034 = vmatprep.subr.mxu0 0.0
        %4035 = vmatpush2.xpose.msra.mxu0 0.0
        %4036 = vmatprep.subr.mxu0 0.0
        %4037 = vmatpush2.xpose.msra.mxu0 0.0
        %4038 = vmatprep.subr.mxu0 0.0
        %4039 = vmatpush2.xpose.msra.mxu0 0.0
        %4040 = vmatprep.subr.mxu0 0.0
        %4041 = vmatpush2.xpose.msra.mxu0 0.0
        %4042 = vmatprep.subr.mxu0 0.0
        %4043 = vmatpush2.xpose.msra.mxu0 0.0
        %4044 = vmatprep.subr.mxu0 0.0
        %4045 = vmatpush2.xpose.msra.mxu0 0.0
        %4046 = vmatprep.subr.mxu0 0.0
        %4047 = vmatpush2.xpose.msra.mxu0 0.0
        %4048 = vmatprep.subr.mxu0 0.0
        %4049 = vmatpush2.xpose.msra.mxu0 0.0
        %4050 = vmatprep.subr.mxu0 0.0
        %4051 = vmatpush2.xpose.msra.mxu0 0.0
        %4052 = vmatprep.subr.mxu0 0.0
        %4053 = vmatpush2.xpose.msra.mxu0 0.0
        %4054 = vmatprep.mubr.f32.mxu0 0.0
        %4055 = vmatmul.mubr.f32.gmra.mxu0 %v3988
        %v4056 = vpop.f32.mrf.mxu0
        %v4057 = vadd.f32 0.0, %v4056
        %v4058 = vpop.f32.mrf.mxu0
        %4059 = vdwg.mxu0
        %v4060 = vsel %vm2100, -1e+09, %v4057
        %v4061 = vsel %vm1139, %v4060, -inf
        %4062 = vmax.xlane.f32.xlu0 %v4061
        %v4063 = vpop.xlane.xlu0 %4062
        %v4064 = vsub.f32 %v4060, %v4063
        %v4065 = vmul.f32 %v4064, 1.442695
        %v4066 = vpow.pop %v4065
        %v4067 = vsel %vm1139, %v4066, 0.0
        %4068 = vadd.xlane.f32.xlu0 %v4067
        %v4069 = vpop.xlane.xlu0 %4068
        %v4070 = vrcp.pop %v4069
        %v4071 = vmul.f32 %v4066, %v4070
        %v4073 = vsel %vm1139, %v4071, 0
        %4075 = vmatprep.subr.mxu0 0.0
        %4076 = vmatpush1.msra.mxu0 0.0
        %4077 = vmatprep.subr.mxu0 0.0
        %4078 = vmatpush1.msra.mxu0 0.0
        %4079 = vmatprep.subr.mxu0 0.0
        %4080 = vmatpush1.msra.mxu0 0.0
        %4081 = vmatprep.subr.mxu0 0.0
        %4082 = vmatpush1.msra.mxu0 0.0
        %4083 = vmatprep.subr.mxu0 0.0
        %4084 = vmatpush1.msra.mxu0 0.0
        %4085 = vmatprep.subr.mxu0 0.0
        %4086 = vmatpush1.msra.mxu0 0.0
        %4087 = vmatprep.subr.mxu0 0.0
        %4088 = vmatpush1.msra.mxu0 0.0
        %4089 = vmatprep.subr.mxu0 0.0
        %4090 = vmatpush1.msra.mxu0 0.0
        %4091 = vmatprep.subr.mxu0 0.0
        %4092 = vmatpush1.msra.mxu0 0.0
        %4093 = vmatprep.subr.mxu0 0.0
        %4094 = vmatpush1.msra.mxu0 0.0
        %4095 = vmatprep.subr.mxu0 0.0
        %4096 = vmatpush1.msra.mxu0 0.0
        %4097 = vmatprep.subr.mxu0 0.0
        %4098 = vmatpush1.msra.mxu0 0.0
        %4099 = vmatprep.subr.mxu0 0.0
        %4100 = vmatpush1.msra.mxu0 0.0
        %4101 = vmatprep.subr.mxu0 0.0
        %4102 = vmatpush1.msra.mxu0 0.0
        %4103 = vmatprep.subr.mxu0 0.0
        %4104 = vmatpush1.msra.mxu0 0.0
        %4105 = vmatprep.subr.mxu0 0.0
        %4106 = vmatpush1.msra.mxu0 %v2114
        %4107 = vmatprep.subr.mxu0 0.0
        %4108 = vmatpush2.msra.mxu0 0.0
        %4109 = vmatprep.subr.mxu0 0.0
        %4110 = vmatpush2.msra.mxu0 0.0
        %4111 = vmatprep.subr.mxu0 0.0
        %4112 = vmatpush2.msra.mxu0 0.0
        %4113 = vmatprep.subr.mxu0 0.0
        %4114 = vmatpush2.msra.mxu0 0.0
        %4115 = vmatprep.subr.mxu0 0.0
        %4116 = vmatpush2.msra.mxu0 0.0
        %4117 = vmatprep.subr.mxu0 0.0
        %4118 = vmatpush2.msra.mxu0 0.0
        %4119 = vmatprep.subr.mxu0 0.0
        %4120 = vmatpush2.msra.mxu0 0.0
        %4121 = vmatprep.subr.mxu0 0.0
        %4122 = vmatpush2.msra.mxu0 0.0
        %4123 = vmatprep.subr.mxu0 0.0
        %4124 = vmatpush2.msra.mxu0 0.0
        %4125 = vmatprep.subr.mxu0 0.0
        %4126 = vmatpush2.msra.mxu0 0.0
        %4127 = vmatprep.subr.mxu0 0.0
        %4128 = vmatpush2.msra.mxu0 0.0
        %4129 = vmatprep.subr.mxu0 0.0
        %4130 = vmatpush2.msra.mxu0 0.0
        %4131 = vmatprep.subr.mxu0 0.0
        %4132 = vmatpush2.msra.mxu0 0.0
        %4133 = vmatprep.subr.mxu0 0.0
        %4134 = vmatpush2.msra.mxu0 0.0
        %4135 = vmatprep.subr.mxu0 0.0
        %4136 = vmatpush2.msra.mxu0 0.0
        %4137 = vmatprep.subr.mxu0 0.0
        %4138 = vmatpush2.msra.mxu0 0.0
        %4139 = vmatprep.mubr.f32.mxu0 0.0
        %4140 = vmatmul.mubr.f32.gmra.mxu0 %v4073
        %v4141 = vpop.f32.mrf.mxu0
        %v4142 = vadd.f32 0.0, %v4141
        %v4143 = vpop.f32.mrf.mxu0
        %4144 = vdwg.mxu0
        %4145 = vst.msk [vmem:[#allocation2] sm:$0xff] %vm1139, %v4142
        %4146 = vrot.lane.b32.xlu0 %v3984, 120
        %v4147 = vpop.permute.xlu0 %4146
        %v4148 = vsel %vm1139, %v4147, 0
        %4150 = vmatprep.subr.mxu0 0.0
        %4151 = vmatpush1.xpose.msra.mxu0 0.0
        %4152 = vmatprep.subr.mxu0 0.0
        %4153 = vmatpush1.xpose.msra.mxu0 0.0
        %4154 = vmatprep.subr.mxu0 0.0
        %4155 = vmatpush1.xpose.msra.mxu0 0.0
        %4156 = vmatprep.subr.mxu0 0.0
        %4157 = vmatpush1.xpose.msra.mxu0 0.0
        %4158 = vmatprep.subr.mxu0 0.0
        %4159 = vmatpush1.xpose.msra.mxu0 0.0
        %4160 = vmatprep.subr.mxu0 0.0
        %4161 = vmatpush1.xpose.msra.mxu0 0.0
        %4162 = vmatprep.subr.mxu0 0.0
        %4163 = vmatpush1.xpose.msra.mxu0 0.0
        %4164 = vmatprep.subr.mxu0 0.0
        %4165 = vmatpush1.xpose.msra.mxu0 0.0
        %4166 = vmatprep.subr.mxu0 0.0
        %4167 = vmatpush1.xpose.msra.mxu0 0.0
        %4168 = vmatprep.subr.mxu0 0.0
        %4169 = vmatpush1.xpose.msra.mxu0 0.0
        %4170 = vmatprep.subr.mxu0 0.0
        %4171 = vmatpush1.xpose.msra.mxu0 0.0
        %4172 = vmatprep.subr.mxu0 0.0
        %4173 = vmatpush1.xpose.msra.mxu0 0.0
        %4174 = vmatprep.subr.mxu0 0.0
        %4175 = vmatpush1.xpose.msra.mxu0 0.0
        %4176 = vmatprep.subr.mxu0 0.0
        %4177 = vmatpush1.xpose.msra.mxu0 0.0
        %4178 = vmatprep.subr.mxu0 0.0
        %4179 = vmatpush1.xpose.msra.mxu0 0.0
        %4180 = vmatprep.subr.mxu0 0.0
        %4181 = vmatpush1.xpose.msra.mxu0 %v2196
        %4182 = vmatprep.subr.mxu0 0.0
        %4183 = vmatpush2.xpose.msra.mxu0 0.0
        %4184 = vmatprep.subr.mxu0 0.0
        %4185 = vmatpush2.xpose.msra.mxu0 0.0
        %4186 = vmatprep.subr.mxu0 0.0
        %4187 = vmatpush2.xpose.msra.mxu0 0.0
        %4188 = vmatprep.subr.mxu0 0.0
        %4189 = vmatpush2.xpose.msra.mxu0 0.0
        %4190 = vmatprep.subr.mxu0 0.0
        %4191 = vmatpush2.xpose.msra.mxu0 0.0
        %4192 = vmatprep.subr.mxu0 0.0
        %4193 = vmatpush2.xpose.msra.mxu0 0.0
        %4194 = vmatprep.subr.mxu0 0.0
        %4195 = vmatpush2.xpose.msra.mxu0 0.0
        %4196 = vmatprep.subr.mxu0 0.0
        %4197 = vmatpush2.xpose.msra.mxu0 0.0
        %4198 = vmatprep.subr.mxu0 0.0
        %4199 = vmatpush2.xpose.msra.mxu0 0.0
        %4200 = vmatprep.subr.mxu0 0.0
        %4201 = vmatpush2.xpose.msra.mxu0 0.0
        %4202 = vmatprep.subr.mxu0 0.0
        %4203 = vmatpush2.xpose.msra.mxu0 0.0
        %4204 = vmatprep.subr.mxu0 0.0
        %4205 = vmatpush2.xpose.msra.mxu0 0.0
        %4206 = vmatprep.subr.mxu0 0.0
        %4207 = vmatpush2.xpose.msra.mxu0 0.0
        %4208 = vmatprep.subr.mxu0 0.0
        %4209 = vmatpush2.xpose.msra.mxu0 0.0
        %4210 = vmatprep.subr.mxu0 0.0
        %4211 = vmatpush2.xpose.msra.mxu0 0.0
        %4212 = vmatprep.subr.mxu0 0.0
        %4213 = vmatpush2.xpose.msra.mxu0 0.0
        %4214 = vmatprep.mubr.f32.mxu0 0.0
        %4215 = vmatmul.mubr.f32.gmra.mxu0 %v4148
        %v4216 = vpop.f32.mrf.mxu0
        %v4217 = vadd.f32 0.0, %v4216
        %v4218 = vpop.f32.mrf.mxu0
        %4219 = vdwg.mxu0
        %v4220 = vsel %vm2100, -1e+09, %v4217
        %v4221 = vsel %vm1139, %v4220, -inf
        %4222 = vmax.xlane.f32.xlu0 %v4221
        %v4223 = vpop.xlane.xlu0 %4222
        %v4224 = vsub.f32 %v4220, %v4223
        %v4225 = vmul.f32 %v4224, 1.442695
        %v4226 = vpow.pop %v4225
        %v4227 = vsel %vm1139, %v4226, 0.0
        %4228 = vadd.xlane.f32.xlu0 %v4227
        %v4229 = vpop.xlane.xlu0 %4228
        %v4230 = vrcp.pop %v4229
        %v4231 = vmul.f32 %v4226, %v4230
        %v4233 = vsel %vm1139, %v4231, 0
        %4235 = vmatprep.subr.mxu0 0.0
        %4236 = vmatpush1.msra.mxu0 0.0
        %4237 = vmatprep.subr.mxu0 0.0
        %4238 = vmatpush1.msra.mxu0 0.0
        %4239 = vmatprep.subr.mxu0 0.0
        %4240 = vmatpush1.msra.mxu0 0.0
        %4241 = vmatprep.subr.mxu0 0.0
        %4242 = vmatpush1.msra.mxu0 0.0
        %4243 = vmatprep.subr.mxu0 0.0
        %4244 = vmatpush1.msra.mxu0 0.0
        %4245 = vmatprep.subr.mxu0 0.0
        %4246 = vmatpush1.msra.mxu0 0.0
        %4247 = vmatprep.subr.mxu0 0.0
        %4248 = vmatpush1.msra.mxu0 0.0
        %4249 = vmatprep.subr.mxu0 0.0
        %4250 = vmatpush1.msra.mxu0 0.0
        %4251 = vmatprep.subr.mxu0 0.0
        %4252 = vmatpush1.msra.mxu0 0.0
        %4253 = vmatprep.subr.mxu0 0.0
        %4254 = vmatpush1.msra.mxu0 0.0
        %4255 = vmatprep.subr.mxu0 0.0
        %4256 = vmatpush1.msra.mxu0 0.0
        %4257 = vmatprep.subr.mxu0 0.0
        %4258 = vmatpush1.msra.mxu0 0.0
        %4259 = vmatprep.subr.mxu0 0.0
        %4260 = vmatpush1.msra.mxu0 0.0
        %4261 = vmatprep.subr.mxu0 0.0
        %4262 = vmatpush1.msra.mxu0 0.0
        %4263 = vmatprep.subr.mxu0 0.0
        %4264 = vmatpush1.msra.mxu0 0.0
        %4265 = vmatprep.subr.mxu0 0.0
        %4266 = vmatpush1.msra.mxu0 %v2281
        %4267 = vmatprep.subr.mxu0 0.0
        %4268 = vmatpush2.msra.mxu0 0.0
        %4269 = vmatprep.subr.mxu0 0.0
        %4270 = vmatpush2.msra.mxu0 0.0
        %4271 = vmatprep.subr.mxu0 0.0
        %4272 = vmatpush2.msra.mxu0 0.0
        %4273 = vmatprep.subr.mxu0 0.0
        %4274 = vmatpush2.msra.mxu0 0.0
        %4275 = vmatprep.subr.mxu0 0.0
        %4276 = vmatpush2.msra.mxu0 0.0
        %4277 = vmatprep.subr.mxu0 0.0
        %4278 = vmatpush2.msra.mxu0 0.0
        %4279 = vmatprep.subr.mxu0 0.0
        %4280 = vmatpush2.msra.mxu0 0.0
        %4281 = vmatprep.subr.mxu0 0.0
        %4282 = vmatpush2.msra.mxu0 0.0
        %4283 = vmatprep.subr.mxu0 0.0
        %4284 = vmatpush2.msra.mxu0 0.0
        %4285 = vmatprep.subr.mxu0 0.0
        %4286 = vmatpush2.msra.mxu0 0.0
        %4287 = vmatprep.subr.mxu0 0.0
        %4288 = vmatpush2.msra.mxu0 0.0
        %4289 = vmatprep.subr.mxu0 0.0
        %4290 = vmatpush2.msra.mxu0 0.0
        %4291 = vmatprep.subr.mxu0 0.0
        %4292 = vmatpush2.msra.mxu0 0.0
        %4293 = vmatprep.subr.mxu0 0.0
        %4294 = vmatpush2.msra.mxu0 0.0
        %4295 = vmatprep.subr.mxu0 0.0
        %4296 = vmatpush2.msra.mxu0 0.0
        %4297 = vmatprep.subr.mxu0 0.0
        %4298 = vmatpush2.msra.mxu0 0.0
        %4299 = vmatprep.mubr.f32.mxu0 0.0
        %4300 = vmatmul.mubr.f32.gmra.mxu0 %v4233
        %v4301 = vpop.f32.mrf.mxu0
        %v4302 = vadd.f32 0.0, %v4301
        %v4303 = vpop.f32.mrf.mxu0
        %4304 = vdwg.mxu0
        %4306 = vrot.lane.b32.xlu0 %v4302, 8
        %v4307 = vpop.permute.xlu0 %4306
        %4309 = vst.msk [vmem:[#allocation2] sm:$0xff] %vm1473, %v4307
        %4310 = vrot.lane.b32.xlu0 %v3984, 112
        %v4311 = vpop.permute.xlu0 %4310
        %v4312 = vsel %vm1139, %v4311, 0
        %4314 = vmatprep.subr.mxu0 0.0
        %4315 = vmatpush1.xpose.msra.mxu0 0.0
        %4316 = vmatprep.subr.mxu0 0.0
        %4317 = vmatpush1.xpose.msra.mxu0 0.0
        %4318 = vmatprep.subr.mxu0 0.0
        %4319 = vmatpush1.xpose.msra.mxu0 0.0
        %4320 = vmatprep.subr.mxu0 0.0
        %4321 = vmatpush1.xpose.msra.mxu0 0.0
        %4322 = vmatprep.subr.mxu0 0.0
        %4323 = vmatpush1.xpose.msra.mxu0 0.0
        %4324 = vmatprep.subr.mxu0 0.0
        %4325 = vmatpush1.xpose.msra.mxu0 0.0
        %4326 = vmatprep.subr.mxu0 0.0
        %4327 = vmatpush1.xpose.msra.mxu0 0.0
        %4328 = vmatprep.subr.mxu0 0.0
        %4329 = vmatpush1.xpose.msra.mxu0 0.0
        %4330 = vmatprep.subr.mxu0 0.0
        %4331 = vmatpush1.xpose.msra.mxu0 0.0
        %4332 = vmatprep.subr.mxu0 0.0
        %4333 = vmatpush1.xpose.msra.mxu0 0.0
        %4334 = vmatprep.subr.mxu0 0.0
        %4335 = vmatpush1.xpose.msra.mxu0 0.0
        %4336 = vmatprep.subr.mxu0 0.0
        %4337 = vmatpush1.xpose.msra.mxu0 0.0
        %4338 = vmatprep.subr.mxu0 0.0
        %4339 = vmatpush1.xpose.msra.mxu0 0.0
        %4340 = vmatprep.subr.mxu0 0.0
        %4341 = vmatpush1.xpose.msra.mxu0 0.0
        %4342 = vmatprep.subr.mxu0 0.0
        %4343 = vmatpush1.xpose.msra.mxu0 0.0
        %4344 = vmatprep.subr.mxu0 0.0
        %4345 = vmatpush1.xpose.msra.mxu0 %v2367
        %4346 = vmatprep.subr.mxu0 0.0
        %4347 = vmatpush2.xpose.msra.mxu0 0.0
        %4348 = vmatprep.subr.mxu0 0.0
        %4349 = vmatpush2.xpose.msra.mxu0 0.0
        %4350 = vmatprep.subr.mxu0 0.0
        %4351 = vmatpush2.xpose.msra.mxu0 0.0
        %4352 = vmatprep.subr.mxu0 0.0
        %4353 = vmatpush2.xpose.msra.mxu0 0.0
        %4354 = vmatprep.subr.mxu0 0.0
        %4355 = vmatpush2.xpose.msra.mxu0 0.0
        %4356 = vmatprep.subr.mxu0 0.0
        %4357 = vmatpush2.xpose.msra.mxu0 0.0
        %4358 = vmatprep.subr.mxu0 0.0
        %4359 = vmatpush2.xpose.msra.mxu0 0.0
        %4360 = vmatprep.subr.mxu0 0.0
        %4361 = vmatpush2.xpose.msra.mxu0 0.0
        %4362 = vmatprep.subr.mxu0 0.0
        %4363 = vmatpush2.xpose.msra.mxu0 0.0
        %4364 = vmatprep.subr.mxu0 0.0
        %4365 = vmatpush2.xpose.msra.mxu0 0.0
        %4366 = vmatprep.subr.mxu0 0.0
        %4367 = vmatpush2.xpose.msra.mxu0 0.0
        %4368 = vmatprep.subr.mxu0 0.0
        %4369 = vmatpush2.xpose.msra.mxu0 0.0
        %4370 = vmatprep.subr.mxu0 0.0
        %4371 = vmatpush2.xpose.msra.mxu0 0.0
        %4372 = vmatprep.subr.mxu0 0.0
        %4373 = vmatpush2.xpose.msra.mxu0 0.0
        %4374 = vmatprep.subr.mxu0 0.0
        %4375 = vmatpush2.xpose.msra.mxu0 0.0
        %4376 = vmatprep.subr.mxu0 0.0
        %4377 = vmatpush2.xpose.msra.mxu0 0.0
        %4378 = vmatprep.mubr.f32.mxu0 0.0
        %4379 = vmatmul.mubr.f32.gmra.mxu0 %v4312
        %v4380 = vpop.f32.mrf.mxu0
        %v4381 = vadd.f32 0.0, %v4380
        %v4382 = vpop.f32.mrf.mxu0
        %4383 = vdwg.mxu0
        %v4384 = vsel %vm2100, -1e+09, %v4381
        %v4385 = vsel %vm1139, %v4384, -inf
        %4386 = vmax.xlane.f32.xlu0 %v4385
        %v4387 = vpop.xlane.xlu0 %4386
        %v4388 = vsub.f32 %v4384, %v4387
        %v4389 = vmul.f32 %v4388, 1.442695
        %v4390 = vpow.pop %v4389
        %v4391 = vsel %vm1139, %v4390, 0.0
        %4392 = vadd.xlane.f32.xlu0 %v4391
        %v4393 = vpop.xlane.xlu0 %4392
        %v4394 = vrcp.pop %v4393
        %v4395 = vmul.f32 %v4390, %v4394
        %v4397 = vsel %vm1139, %v4395, 0
        %4399 = vmatprep.subr.mxu0 0.0
        %4400 = vmatpush1.msra.mxu0 0.0
        %4401 = vmatprep.subr.mxu0 0.0
        %4402 = vmatpush1.msra.mxu0 0.0
        %4403 = vmatprep.subr.mxu0 0.0
        %4404 = vmatpush1.msra.mxu0 0.0
        %4405 = vmatprep.subr.mxu0 0.0
        %4406 = vmatpush1.msra.mxu0 0.0
        %4407 = vmatprep.subr.mxu0 0.0
        %4408 = vmatpush1.msra.mxu0 0.0
        %4409 = vmatprep.subr.mxu0 0.0
        %4410 = vmatpush1.msra.mxu0 0.0
        %4411 = vmatprep.subr.mxu0 0.0
        %4412 = vmatpush1.msra.mxu0 0.0
        %4413 = vmatprep.subr.mxu0 0.0
        %4414 = vmatpush1.msra.mxu0 0.0
        %4415 = vmatprep.subr.mxu0 0.0
        %4416 = vmatpush1.msra.mxu0 0.0
        %4417 = vmatprep.subr.mxu0 0.0
        %4418 = vmatpush1.msra.mxu0 0.0
        %4419 = vmatprep.subr.mxu0 0.0
        %4420 = vmatpush1.msra.mxu0 0.0
        %4421 = vmatprep.subr.mxu0 0.0
        %4422 = vmatpush1.msra.mxu0 0.0
        %4423 = vmatprep.subr.mxu0 0.0
        %4424 = vmatpush1.msra.mxu0 0.0
        %4425 = vmatprep.subr.mxu0 0.0
        %4426 = vmatpush1.msra.mxu0 0.0
        %4427 = vmatprep.subr.mxu0 0.0
        %4428 = vmatpush1.msra.mxu0 0.0
        %4429 = vmatprep.subr.mxu0 0.0
        %4430 = vmatpush1.msra.mxu0 %v2452
        %4431 = vmatprep.subr.mxu0 0.0
        %4432 = vmatpush2.msra.mxu0 0.0
        %4433 = vmatprep.subr.mxu0 0.0
        %4434 = vmatpush2.msra.mxu0 0.0
        %4435 = vmatprep.subr.mxu0 0.0
        %4436 = vmatpush2.msra.mxu0 0.0
        %4437 = vmatprep.subr.mxu0 0.0
        %4438 = vmatpush2.msra.mxu0 0.0
        %4439 = vmatprep.subr.mxu0 0.0
        %4440 = vmatpush2.msra.mxu0 0.0
        %4441 = vmatprep.subr.mxu0 0.0
        %4442 = vmatpush2.msra.mxu0 0.0
        %4443 = vmatprep.subr.mxu0 0.0
        %4444 = vmatpush2.msra.mxu0 0.0
        %4445 = vmatprep.subr.mxu0 0.0
        %4446 = vmatpush2.msra.mxu0 0.0
        %4447 = vmatprep.subr.mxu0 0.0
        %4448 = vmatpush2.msra.mxu0 0.0
        %4449 = vmatprep.subr.mxu0 0.0
        %4450 = vmatpush2.msra.mxu0 0.0
        %4451 = vmatprep.subr.mxu0 0.0
        %4452 = vmatpush2.msra.mxu0 0.0
        %4453 = vmatprep.subr.mxu0 0.0
        %4454 = vmatpush2.msra.mxu0 0.0
        %4455 = vmatprep.subr.mxu0 0.0
        %4456 = vmatpush2.msra.mxu0 0.0
        %4457 = vmatprep.subr.mxu0 0.0
        %4458 = vmatpush2.msra.mxu0 0.0
        %4459 = vmatprep.subr.mxu0 0.0
        %4460 = vmatpush2.msra.mxu0 0.0
        %4461 = vmatprep.subr.mxu0 0.0
        %4462 = vmatpush2.msra.mxu0 0.0
        %4463 = vmatprep.mubr.f32.mxu0 0.0
        %4464 = vmatmul.mubr.f32.gmra.mxu0 %v4397
        %v4465 = vpop.f32.mrf.mxu0
        %v4466 = vadd.f32 0.0, %v4465
        %v4467 = vpop.f32.mrf.mxu0
        %4468 = vdwg.mxu0
        %4470 = vrot.lane.b32.xlu0 %v4466, 16
        %v4471 = vpop.permute.xlu0 %4470
        %4473 = vst.msk [vmem:[#allocation2] sm:$0xff] %vm1645, %v4471
        %4474 = vrot.lane.b32.xlu0 %v3984, 104
        %v4475 = vpop.permute.xlu0 %4474
        %v4476 = vsel %vm1139, %v4475, 0
        %4478 = vmatprep.subr.mxu0 0.0
        %4479 = vmatpush1.xpose.msra.mxu0 0.0
        %4480 = vmatprep.subr.mxu0 0.0
        %4481 = vmatpush1.xpose.msra.mxu0 0.0
        %4482 = vmatprep.subr.mxu0 0.0
        %4483 = vmatpush1.xpose.msra.mxu0 0.0
        %4484 = vmatprep.subr.mxu0 0.0
        %4485 = vmatpush1.xpose.msra.mxu0 0.0
        %4486 = vmatprep.subr.mxu0 0.0
        %4487 = vmatpush1.xpose.msra.mxu0 0.0
        %4488 = vmatprep.subr.mxu0 0.0
        %4489 = vmatpush1.xpose.msra.mxu0 0.0
        %4490 = vmatprep.subr.mxu0 0.0
        %4491 = vmatpush1.xpose.msra.mxu0 0.0
        %4492 = vmatprep.subr.mxu0 0.0
        %4493 = vmatpush1.xpose.msra.mxu0 0.0
        %4494 = vmatprep.subr.mxu0 0.0
        %4495 = vmatpush1.xpose.msra.mxu0 0.0
        %4496 = vmatprep.subr.mxu0 0.0
        %4497 = vmatpush1.xpose.msra.mxu0 0.0
        %4498 = vmatprep.subr.mxu0 0.0
        %4499 = vmatpush1.xpose.msra.mxu0 0.0
        %4500 = vmatprep.subr.mxu0 0.0
        %4501 = vmatpush1.xpose.msra.mxu0 0.0
        %4502 = vmatprep.subr.mxu0 0.0
        %4503 = vmatpush1.xpose.msra.mxu0 0.0
        %4504 = vmatprep.subr.mxu0 0.0
        %4505 = vmatpush1.xpose.msra.mxu0 0.0
        %4506 = vmatprep.subr.mxu0 0.0
        %4507 = vmatpush1.xpose.msra.mxu0 0.0
        %4508 = vmatprep.subr.mxu0 0.0
        %4509 = vmatpush1.xpose.msra.mxu0 %v2538
        %4510 = vmatprep.subr.mxu0 0.0
        %4511 = vmatpush2.xpose.msra.mxu0 0.0
        %4512 = vmatprep.subr.mxu0 0.0
        %4513 = vmatpush2.xpose.msra.mxu0 0.0
        %4514 = vmatprep.subr.mxu0 0.0
        %4515 = vmatpush2.xpose.msra.mxu0 0.0
        %4516 = vmatprep.subr.mxu0 0.0
        %4517 = vmatpush2.xpose.msra.mxu0 0.0
        %4518 = vmatprep.subr.mxu0 0.0
        %4519 = vmatpush2.xpose.msra.mxu0 0.0
        %4520 = vmatprep.subr.mxu0 0.0
        %4521 = vmatpush2.xpose.msra.mxu0 0.0
        %4522 = vmatprep.subr.mxu0 0.0
        %4523 = vmatpush2.xpose.msra.mxu0 0.0
        %4524 = vmatprep.subr.mxu0 0.0
        %4525 = vmatpush2.xpose.msra.mxu0 0.0
        %4526 = vmatprep.subr.mxu0 0.0
        %4527 = vmatpush2.xpose.msra.mxu0 0.0
        %4528 = vmatprep.subr.mxu0 0.0
        %4529 = vmatpush2.xpose.msra.mxu0 0.0
        %4530 = vmatprep.subr.mxu0 0.0
        %4531 = vmatpush2.xpose.msra.mxu0 0.0
        %4532 = vmatprep.subr.mxu0 0.0
        %4533 = vmatpush2.xpose.msra.mxu0 0.0
        %4534 = vmatprep.subr.mxu0 0.0
        %4535 = vmatpush2.xpose.msra.mxu0 0.0
        %4536 = vmatprep.subr.mxu0 0.0
        %4537 = vmatpush2.xpose.msra.mxu0 0.0
        %4538 = vmatprep.subr.mxu0 0.0
        %4539 = vmatpush2.xpose.msra.mxu0 0.0
        %4540 = vmatprep.subr.mxu0 0.0
        %4541 = vmatpush2.xpose.msra.mxu0 0.0
        %4542 = vmatprep.mubr.f32.mxu0 0.0
        %4543 = vmatmul.mubr.f32.gmra.mxu0 %v4476
        %v4544 = vpop.f32.mrf.mxu0
        %v4545 = vadd.f32 0.0, %v4544
        %v4546 = vpop.f32.mrf.mxu0
        %4547 = vdwg.mxu0
        %v4548 = vsel %vm2100, -1e+09, %v4545
        %v4549 = vsel %vm1139, %v4548, -inf
        %4550 = vmax.xlane.f32.xlu0 %v4549
        %v4551 = vpop.xlane.xlu0 %4550
        %v4552 = vsub.f32 %v4548, %v4551
        %v4553 = vmul.f32 %v4552, 1.442695
        %v4554 = vpow.pop %v4553
        %v4555 = vsel %vm1139, %v4554, 0.0
        %4556 = vadd.xlane.f32.xlu0 %v4555
        %v4557 = vpop.xlane.xlu0 %4556
        %v4558 = vrcp.pop %v4557
        %v4559 = vmul.f32 %v4554, %v4558
        %v4561 = vsel %vm1139, %v4559, 0
        %4563 = vmatprep.subr.mxu0 0.0
        %4564 = vmatpush1.msra.mxu0 0.0
        %4565 = vmatprep.subr.mxu0 0.0
        %4566 = vmatpush1.msra.mxu0 0.0
        %4567 = vmatprep.subr.mxu0 0.0
        %4568 = vmatpush1.msra.mxu0 0.0
        %4569 = vmatprep.subr.mxu0 0.0
        %4570 = vmatpush1.msra.mxu0 0.0
        %4571 = vmatprep.subr.mxu0 0.0
        %4572 = vmatpush1.msra.mxu0 0.0
        %4573 = vmatprep.subr.mxu0 0.0
        %4574 = vmatpush1.msra.mxu0 0.0
        %4575 = vmatprep.subr.mxu0 0.0
        %4576 = vmatpush1.msra.mxu0 0.0
        %4577 = vmatprep.subr.mxu0 0.0
        %4578 = vmatpush1.msra.mxu0 0.0
        %4579 = vmatprep.subr.mxu0 0.0
        %4580 = vmatpush1.msra.mxu0 0.0
        %4581 = vmatprep.subr.mxu0 0.0
        %4582 = vmatpush1.msra.mxu0 0.0
        %4583 = vmatprep.subr.mxu0 0.0
        %4584 = vmatpush1.msra.mxu0 0.0
        %4585 = vmatprep.subr.mxu0 0.0
        %4586 = vmatpush1.msra.mxu0 0.0
        %4587 = vmatprep.subr.mxu0 0.0
        %4588 = vmatpush1.msra.mxu0 0.0
        %4589 = vmatprep.subr.mxu0 0.0
        %4590 = vmatpush1.msra.mxu0 0.0
        %4591 = vmatprep.subr.mxu0 0.0
        %4592 = vmatpush1.msra.mxu0 0.0
        %4593 = vmatprep.subr.mxu0 0.0
        %4594 = vmatpush1.msra.mxu0 %v2623
        %4595 = vmatprep.subr.mxu0 0.0
        %4596 = vmatpush2.msra.mxu0 0.0
        %4597 = vmatprep.subr.mxu0 0.0
        %4598 = vmatpush2.msra.mxu0 0.0
        %4599 = vmatprep.subr.mxu0 0.0
        %4600 = vmatpush2.msra.mxu0 0.0
        %4601 = vmatprep.subr.mxu0 0.0
        %4602 = vmatpush2.msra.mxu0 0.0
        %4603 = vmatprep.subr.mxu0 0.0
        %4604 = vmatpush2.msra.mxu0 0.0
        %4605 = vmatprep.subr.mxu0 0.0
        %4606 = vmatpush2.msra.mxu0 0.0
        %4607 = vmatprep.subr.mxu0 0.0
        %4608 = vmatpush2.msra.mxu0 0.0
        %4609 = vmatprep.subr.mxu0 0.0
        %4610 = vmatpush2.msra.mxu0 0.0
        %4611 = vmatprep.subr.mxu0 0.0
        %4612 = vmatpush2.msra.mxu0 0.0
        %4613 = vmatprep.subr.mxu0 0.0
        %4614 = vmatpush2.msra.mxu0 0.0
        %4615 = vmatprep.subr.mxu0 0.0
        %4616 = vmatpush2.msra.mxu0 0.0
        %4617 = vmatprep.subr.mxu0 0.0
        %4618 = vmatpush2.msra.mxu0 0.0
        %4619 = vmatprep.subr.mxu0 0.0
        %4620 = vmatpush2.msra.mxu0 0.0
        %4621 = vmatprep.subr.mxu0 0.0
        %4622 = vmatpush2.msra.mxu0 0.0
        %4623 = vmatprep.subr.mxu0 0.0
        %4624 = vmatpush2.msra.mxu0 0.0
        %4625 = vmatprep.subr.mxu0 0.0
        %4626 = vmatpush2.msra.mxu0 0.0
        %4627 = vmatprep.mubr.f32.mxu0 0.0
        %4628 = vmatmul.mubr.f32.gmra.mxu0 %v4561
        %v4629 = vpop.f32.mrf.mxu0
        %v4630 = vadd.f32 0.0, %v4629
        %v4631 = vpop.f32.mrf.mxu0
        %4632 = vdwg.mxu0
        %4634 = vrot.lane.b32.xlu0 %v4630, 24
        %v4635 = vpop.permute.xlu0 %4634
        %4637 = vst.msk [vmem:[#allocation2] sm:$0xff] %vm1817, %v4635
        %v4638 = vld [vmem:[#allocation2] sm:$0xff]
        %v4639 = vld [vmem:[#allocation18] sm:$0xff]
        %v4640 = vld [vmem:[#allocation18 + $0x8] sm:$0xff]
        %v4641 = vld [vmem:[#allocation18 + $0x10] sm:$0xff]
        %v4642 = vld [vmem:[#allocation18 + $0x18] sm:$0xff]
        %v4643 = vld [vmem:[#allocation20] sm:$0x1]
        %v4645 = vlaneseq
        %v4646 = vshrl.u32 %v4645, 7
        %v4647 = vsub.s32 0, %v4646
        %v4648 = vrot.slane %v4643, %v4647
        %v4651 = vsel %vm939, %v4638, 0
        %4653 = vmatprep.subr.mxu0 0.0
        %4654 = vmatpush1.msra.mxu0 0.0
        %4655 = vmatprep.subr.mxu0 0.0
        %4656 = vmatpush1.msra.mxu0 0.0
        %4657 = vmatprep.subr.mxu0 0.0
        %4658 = vmatpush1.msra.mxu0 0.0
        %4659 = vmatprep.subr.mxu0 0.0
        %4660 = vmatpush1.msra.mxu0 0.0
        %4661 = vmatprep.subr.mxu0 0.0
        %4662 = vmatpush1.msra.mxu0 0.0
        %4663 = vmatprep.subr.mxu0 0.0
        %4664 = vmatpush1.msra.mxu0 0.0
        %4665 = vmatprep.subr.mxu0 0.0
        %4666 = vmatpush1.msra.mxu0 0.0
        %4667 = vmatprep.subr.mxu0 0.0
        %4668 = vmatpush1.msra.mxu0 0.0
        %4669 = vmatprep.subr.mxu0 0.0
        %4670 = vmatpush1.msra.mxu0 0.0
        %4671 = vmatprep.subr.mxu0 0.0
        %4672 = vmatpush1.msra.mxu0 0.0
        %4673 = vmatprep.subr.mxu0 0.0
        %4674 = vmatpush1.msra.mxu0 0.0
        %4675 = vmatprep.subr.mxu0 0.0
        %4676 = vmatpush1.msra.mxu0 0.0
        %4677 = vmatprep.subr.mxu0 0.0
        %4678 = vmatpush1.msra.mxu0 %v4642
        %4679 = vmatprep.subr.mxu0 0.0
        %4680 = vmatpush1.msra.mxu0 %v4641
        %4681 = vmatprep.subr.mxu0 0.0
        %4682 = vmatpush1.msra.mxu0 %v4640
        %4683 = vmatprep.subr.mxu0 0.0
        %4684 = vmatpush1.msra.mxu0 %v4639
        %4685 = vmatprep.subr.mxu0 0.0
        %4686 = vmatpush2.msra.mxu0 0.0
        %4687 = vmatprep.subr.mxu0 0.0
        %4688 = vmatpush2.msra.mxu0 0.0
        %4689 = vmatprep.subr.mxu0 0.0
        %4690 = vmatpush2.msra.mxu0 0.0
        %4691 = vmatprep.subr.mxu0 0.0
        %4692 = vmatpush2.msra.mxu0 0.0
        %4693 = vmatprep.subr.mxu0 0.0
        %4694 = vmatpush2.msra.mxu0 0.0
        %4695 = vmatprep.subr.mxu0 0.0
        %4696 = vmatpush2.msra.mxu0 0.0
        %4697 = vmatprep.subr.mxu0 0.0
        %4698 = vmatpush2.msra.mxu0 0.0
        %4699 = vmatprep.subr.mxu0 0.0
        %4700 = vmatpush2.msra.mxu0 0.0
        %4701 = vmatprep.subr.mxu0 0.0
        %4702 = vmatpush2.msra.mxu0 0.0
        %4703 = vmatprep.subr.mxu0 0.0
        %4704 = vmatpush2.msra.mxu0 0.0
        %4705 = vmatprep.subr.mxu0 0.0
        %4706 = vmatpush2.msra.mxu0 0.0
        %4707 = vmatprep.subr.mxu0 0.0
        %4708 = vmatpush2.msra.mxu0 0.0
        %4709 = vmatprep.subr.mxu0 0.0
        %4710 = vmatpush2.msra.mxu0 0.0
        %4711 = vmatprep.subr.mxu0 0.0
        %4712 = vmatpush2.msra.mxu0 0.0
        %4713 = vmatprep.subr.mxu0 0.0
        %4714 = vmatpush2.msra.mxu0 0.0
        %4715 = vmatprep.subr.mxu0 0.0
        %4716 = vmatpush2.msra.mxu0 0.0
        %4717 = vmatprep.mubr.f32.mxu0 0.0
        %4718 = vmatmul.mubr.f32.gmra.mxu0 %v4651
        %v4719 = vpop.f32.mrf.mxu0
        %v4720 = vadd.f32 %v4648, %v4719
        %v4721 = vpop.f32.mrf.mxu0
        %4722 = vdwg.mxu0
        %v4723 = vadd.f32 %v3872, %v4720
        %v4724 = vsel %vm939, %v4723, 0.0
        %4725 = vadd.xlane.f32.xlu0 %v4724
        %v4726 = vpop.xlane.xlu0 %4725
        %v4727 = vmul.f32 %v4726, %v1024
        %v4728 = vsub.f32 %v4723, %v4727
        %v4729 = vmul.f32 %v4728, %v4728
        %v4730 = vsel %vm939, %v4729, 0.0
        %4731 = vadd.xlane.f32.xlu0 %v4730
        %v4732 = vpop.xlane.xlu0 %4731
        %v4733 = vmul.f32 %v4732, 0.032258064
        %v4734 = vlaneseq
        %v4735 = vshrl.u32 %v4734, 7
        %v4736 = vsub.s32 2, %v4735
        %v4737 = vrot.slane %v1018, %v4736
        %v4738 = vmul.f32 %v4737, %v4728
        %v4739 = vrsqrt.pop %v4733
        %v4740 = vmul.f32 %v4733, %v4739
        %vm4741 = vcmp.eq.f32.partialorder %v4733, inf
        %v4742 = vsel %vm4741, %v4733, %v4740
        %vm4743 = vcmp.eq.f32.partialorder %v4733, 0.0
        %v4744 = vand.u32 %v4733, 2147483648
        %v4745 = vsel %vm4743, %v4744, %v4742
        %v4746 = vadd.f32 %v4745, 1e-06
        %v4747 = vrcp.pop %v4746
        %v4748 = vmul.f32 %v4738, %v4747
        %v4749 = vlaneseq
        %v4750 = vshrl.u32 %v4749, 7
        %v4751 = vsub.s32 2, %v4750
        %v4752 = vrot.slane %v1020, %v4751
        %v4753 = vadd.f32 %v4748, %v4752
        %v4754 = vld [vmem:[#allocation21] sm:$0xff]
        %v4755 = vld [vmem:[#allocation21 + $0x8] sm:$0xff]
        %v4756 = vld [vmem:[#allocation21 + $0x10] sm:$0xff]
        %v4757 = vld [vmem:[#allocation21 + $0x18] sm:$0xff]
        %v4758 = vld [vmem:[#allocation23] sm:$0x1]
        %v4760 = vlaneseq
        %v4761 = vshrl.u32 %v4760, 7
        %v4762 = vsub.s32 0, %v4761
        %v4763 = vrot.slane %v4758, %v4762
        %v4766 = vsel %vm939, %v4753, 0
        %4768 = vmatprep.subr.mxu0 0.0
        %4769 = vmatpush1.msra.mxu0 0.0
        %4770 = vmatprep.subr.mxu0 0.0
        %4771 = vmatpush1.msra.mxu0 0.0
        %4772 = vmatprep.subr.mxu0 0.0
        %4773 = vmatpush1.msra.mxu0 0.0
        %4774 = vmatprep.subr.mxu0 0.0
        %4775 = vmatpush1.msra.mxu0 0.0
        %4776 = vmatprep.subr.mxu0 0.0
        %4777 = vmatpush1.msra.mxu0 0.0
        %4778 = vmatprep.subr.mxu0 0.0
        %4779 = vmatpush1.msra.mxu0 0.0
        %4780 = vmatprep.subr.mxu0 0.0
        %4781 = vmatpush1.msra.mxu0 0.0
        %4782 = vmatprep.subr.mxu0 0.0
        %4783 = vmatpush1.msra.mxu0 0.0
        %4784 = vmatprep.subr.mxu0 0.0
        %4785 = vmatpush1.msra.mxu0 0.0
        %4786 = vmatprep.subr.mxu0 0.0
        %4787 = vmatpush1.msra.mxu0 0.0
        %4788 = vmatprep.subr.mxu0 0.0
        %4789 = vmatpush1.msra.mxu0 0.0
        %4790 = vmatprep.subr.mxu0 0.0
        %4791 = vmatpush1.msra.mxu0 0.0
        %4792 = vmatprep.subr.mxu0 0.0
        %4793 = vmatpush1.msra.mxu0 %v4757
        %4794 = vmatprep.subr.mxu0 0.0
        %4795 = vmatpush1.msra.mxu0 %v4756
        %4796 = vmatprep.subr.mxu0 0.0
        %4797 = vmatpush1.msra.mxu0 %v4755
        %4798 = vmatprep.subr.mxu0 0.0
        %4799 = vmatpush1.msra.mxu0 %v4754
        %4800 = vmatprep.subr.mxu0 0.0
        %4801 = vmatpush2.msra.mxu0 0.0
        %4802 = vmatprep.subr.mxu0 0.0
        %4803 = vmatpush2.msra.mxu0 0.0
        %4804 = vmatprep.subr.mxu0 0.0
        %4805 = vmatpush2.msra.mxu0 0.0
        %4806 = vmatprep.subr.mxu0 0.0
        %4807 = vmatpush2.msra.mxu0 0.0
        %4808 = vmatprep.subr.mxu0 0.0
        %4809 = vmatpush2.msra.mxu0 0.0
        %4810 = vmatprep.subr.mxu0 0.0
        %4811 = vmatpush2.msra.mxu0 0.0
        %4812 = vmatprep.subr.mxu0 0.0
        %4813 = vmatpush2.msra.mxu0 0.0
        %4814 = vmatprep.subr.mxu0 0.0
        %4815 = vmatpush2.msra.mxu0 0.0
        %4816 = vmatprep.subr.mxu0 0.0
        %4817 = vmatpush2.msra.mxu0 0.0
        %4818 = vmatprep.subr.mxu0 0.0
        %4819 = vmatpush2.msra.mxu0 0.0
        %4820 = vmatprep.subr.mxu0 0.0
        %4821 = vmatpush2.msra.mxu0 0.0
        %4822 = vmatprep.subr.mxu0 0.0
        %4823 = vmatpush2.msra.mxu0 0.0
        %4824 = vmatprep.subr.mxu0 0.0
        %4825 = vmatpush2.msra.mxu0 0.0
        %4826 = vmatprep.subr.mxu0 0.0
        %4827 = vmatpush2.msra.mxu0 0.0
        %4828 = vmatprep.subr.mxu0 0.0
        %4829 = vmatpush2.msra.mxu0 0.0
        %4830 = vmatprep.subr.mxu0 0.0
        %4831 = vmatpush2.msra.mxu0 0.0
        %4832 = vmatprep.mubr.f32.mxu0 0.0
        %4833 = vmatmul.mubr.f32.gmra.mxu0 %v4766
        %v4834 = vpop.f32.mrf.mxu0
        %v4835 = vadd.f32 %v4763, %v4834
        %v4836 = vpop.f32.mrf.mxu0
        %4837 = vdwg.mxu0
        %v4838 = vmax.f32 %v4835, 0.0
        %v4839 = vld [vmem:[%s20] sm:$0xff]
        %v4840 = vld [vmem:[%s20 + $0x8] sm:$0xff]
        %v4841 = vld [vmem:[%s20 + $0x10] sm:$0xff]
        %v4842 = vld [vmem:[%s20 + $0x18] sm:$0xff]
        %v4843 = vld [vmem:[%s20 + $0x20] sm:$0xff]
        %v4844 = vld [vmem:[%s20 + $0x28] sm:$0xff]
        %v4845 = vld [vmem:[%s20 + $0x30] sm:$0xff]
        %v4846 = vld [vmem:[%s20 + $0x38] sm:$0xff]
        %v4847 = vld [vmem:[#allocation24] sm:$0x1]
        %v4849 = vlaneseq
        %v4850 = vshrl.u32 %v4849, 7
        %v4851 = vsub.s32 0, %v4850
        %v4852 = vrot.slane %v4847, %v4851
        %v4855 = vsel %vm2919, %v4838, 0
        %4857 = vmatprep.subr.mxu0 0.0
        %4858 = vmatpush1.msra.mxu0 0.0
        %4859 = vmatprep.subr.mxu0 0.0
        %4860 = vmatpush1.msra.mxu0 0.0
        %4861 = vmatprep.subr.mxu0 0.0
        %4862 = vmatpush1.msra.mxu0 0.0
        %4863 = vmatprep.subr.mxu0 0.0
        %4864 = vmatpush1.msra.mxu0 0.0
        %4865 = vmatprep.subr.mxu0 0.0
        %4866 = vmatpush1.msra.mxu0 0.0
        %4867 = vmatprep.subr.mxu0 0.0
        %4868 = vmatpush1.msra.mxu0 0.0
        %4869 = vmatprep.subr.mxu0 0.0
        %4870 = vmatpush1.msra.mxu0 0.0
        %4871 = vmatprep.subr.mxu0 0.0
        %4872 = vmatpush1.msra.mxu0 0.0
        %4873 = vmatprep.subr.mxu0 0.0
        %4874 = vmatpush1.msra.mxu0 %v4846
        %4875 = vmatprep.subr.mxu0 0.0
        %4876 = vmatpush1.msra.mxu0 %v4845
        %4877 = vmatprep.subr.mxu0 0.0
        %4878 = vmatpush1.msra.mxu0 %v4844
        %4879 = vmatprep.subr.mxu0 0.0
        %4880 = vmatpush1.msra.mxu0 %v4843
        %4881 = vmatprep.subr.mxu0 0.0
        %4882 = vmatpush1.msra.mxu0 %v4842
        %4883 = vmatprep.subr.mxu0 0.0
        %4884 = vmatpush1.msra.mxu0 %v4841
        %4885 = vmatprep.subr.mxu0 0.0
        %4886 = vmatpush1.msra.mxu0 %v4840
        %4887 = vmatprep.subr.mxu0 0.0
        %4888 = vmatpush1.msra.mxu0 %v4839
        %4889 = vmatprep.subr.mxu0 0.0
        %4890 = vmatpush2.msra.mxu0 0.0
        %4891 = vmatprep.subr.mxu0 0.0
        %4892 = vmatpush2.msra.mxu0 0.0
        %4893 = vmatprep.subr.mxu0 0.0
        %4894 = vmatpush2.msra.mxu0 0.0
        %4895 = vmatprep.subr.mxu0 0.0
        %4896 = vmatpush2.msra.mxu0 0.0
        %4897 = vmatprep.subr.mxu0 0.0
        %4898 = vmatpush2.msra.mxu0 0.0
        %4899 = vmatprep.subr.mxu0 0.0
        %4900 = vmatpush2.msra.mxu0 0.0
        %4901 = vmatprep.subr.mxu0 0.0
        %4902 = vmatpush2.msra.mxu0 0.0
        %4903 = vmatprep.subr.mxu0 0.0
        %4904 = vmatpush2.msra.mxu0 0.0
        %4905 = vmatprep.subr.mxu0 0.0
        %4906 = vmatpush2.msra.mxu0 0.0
        %4907 = vmatprep.subr.mxu0 0.0
        %4908 = vmatpush2.msra.mxu0 0.0
        %4909 = vmatprep.subr.mxu0 0.0
        %4910 = vmatpush2.msra.mxu0 0.0
        %4911 = vmatprep.subr.mxu0 0.0
        %4912 = vmatpush2.msra.mxu0 0.0
        %4913 = vmatprep.subr.mxu0 0.0
        %4914 = vmatpush2.msra.mxu0 0.0
        %4915 = vmatprep.subr.mxu0 0.0
        %4916 = vmatpush2.msra.mxu0 0.0
        %4917 = vmatprep.subr.mxu0 0.0
        %4918 = vmatpush2.msra.mxu0 0.0
        %4919 = vmatprep.subr.mxu0 0.0
        %4920 = vmatpush2.msra.mxu0 0.0
        %4921 = vmatprep.mubr.f32.mxu0 0.0
        %4922 = vmatmul.mubr.f32.gmra.mxu0 %v4855
        %v4923 = vpop.f32.mrf.mxu0
        %v4924 = vadd.f32 %v4852, %v4923
        %v4925 = vpop.f32.mrf.mxu0
        %4926 = vdwg.mxu0
        %v4927 = vadd.f32 %v4723, %v4924
        %v4928 = vld [vmem:[#allocation9] sm:$0x1]
        %v4929 = vld [vmem:[#allocation11] sm:$0x1]
        %v4930 = vsel %vm939, %v4927, 0.0
        %4931 = vadd.xlane.f32.xlu0 %v4930
        %v4932 = vpop.xlane.xlu0 %4931
        %v4933 = vmul.f32 %v4932, %v1024
        %v4934 = vsub.f32 %v4927, %v4933
        %v4935 = vmul.f32 %v4934, %v4934
        %v4936 = vsel %vm939, %v4935, 0.0
        %4937 = vadd.xlane.f32.xlu0 %v4936
        %v4938 = vpop.xlane.xlu0 %4937
        %v4939 = vmul.f32 %v4938, 0.032258064
        %v4941 = vlaneseq
        %v4942 = vshrl.u32 %v4941, 7
        %v4943 = vsub.s32 0, %v4942
        %v4944 = vrot.slane %v4928, %v4943
        %v4946 = vmul.f32 %v4944, %v4934
        %v4947 = vrsqrt.pop %v4939
        %v4948 = vmul.f32 %v4939, %v4947
        %vm4949 = vcmp.eq.f32.partialorder %v4939, inf
        %v4950 = vsel %vm4949, %v4939, %v4948
        %vm4951 = vcmp.eq.f32.partialorder %v4939, 0.0
        %v4952 = vand.u32 %v4939, 2147483648
        %v4953 = vsel %vm4951, %v4952, %v4950
        %v4954 = vadd.f32 %v4953, 1e-06
        %v4955 = vrcp.pop %v4954
        %v4956 = vmul.f32 %v4946, %v4955
        %v4958 = vlaneseq
        %v4959 = vshrl.u32 %v4958, 7
        %v4960 = vsub.s32 0, %v4959
        %v4961 = vrot.slane %v4929, %v4960
        %v4963 = vadd.f32 %v4956, %v4961
        %4964 = vst.msk [vmem:[%s921] sm:$0xff] %vm939, %v4963
        %s4965 = sand.u32 %s538, 1
        %s4966 = scalar_lea.sflag [#allocation5], %s4965
        %s4967 = sand.u32 %s538, 1
        %s4968 = smul.addr %s4967, 8
        %s4969 = scalar_lea.vmem [#allocation26], %s4968
        // Predicated region
        $region165: #{decoder_forward.1} parent=107 // pred_check
          %p4970 = pneg %p548
        $region166: #{decoder_forward.1} parent=107 // pred_check_branch
          %4972 = sbr.rel (%p4970) target = $region168
        $region167: #{decoder_forward.1} parent=107 // pred_region
          %s4974 = ssub.s32 128, 128
          %4975 = vsyncadd %s4966, %s4974
          %s4976 = smul.addr %s48, 128
          %s4977 = scalar_lea.hbm %s22, %s4976
          %s4979 = sshll.u32 %s4969, 4
          %s4980 = int_to_ptr.vmem [resolvable:$true] %s4979
          %4982 = dma.vmem_to_hbm [thread:$0]  %s4980, 128, %s4977, %s4966
        $region168: #{decoder_forward.1} parent=107 // pred_fallthru
          _
      $region108: #{decoder_forward.1} parent=5 // pred_fallthru
        _
      %p4983 = scmp.le.s32.totalorder 2, %s43
      // Predicated region
      $region169: #{decoder_forward.1} parent=5 // pred_check
        %p4984 = pneg %p4983
      $region170: #{decoder_forward.1} parent=5 // pred_check_branch
        %4986 = sbr.rel (%p4984) target = $region172
      $region171: #{decoder_forward.1} parent=5 // pred_region
        %s4987 = ssub.s32 %s43, 2
        // Predicated region
        $region173: #{decoder_forward.1} parent=171 // pred_check
          %p4988 = pneg %p554
        $region174: #{decoder_forward.1} parent=171 // pred_check_branch
          %4990 = sbr.rel (%p4988) target = $region176
        $region175: #{decoder_forward.1} parent=171 // pred_region
          %s4991 = sand.u32 %s539, 1
          %s4992 = scalar_lea.sflag [#allocation5], %s4991
          %s4993 = sand.u32 %s539, 1
          %s4994 = smul.addr %s4993, 8
          %s4995 = scalar_lea.vmem [#allocation26], %s4994
          %4996 = dma.done %s4992, 128
        $region176: #{decoder_forward.1} parent=171 // pred_fallthru
          _
      $region172: #{decoder_forward.1} parent=5 // pred_fallthru
        _
    $region6: #{decoder_forward.1} parent=1 // loop_footer
      %s47 = sadd.s32 1, %s43
    $region7: #{decoder_forward.1} parent=1 // loop_footer_branch
      %42 = sbr.rel target = $region3
    $region8: #{decoder_forward.1} parent=1 // loop_exit
      _
    %4997 = vsyncpa [#allocation4], 1
    %s4998 = scalar_lea.sflag [#allocation4], 1
    %4999 = vsyncpa %s4998, 1
    %5000 = vsyncpa [#allocation7], 1
    %s5001 = scalar_lea.sflag [#allocation7], 1
    %5002 = vsyncpa %s5001, 1
    %5003 = vsyncpa [#allocation10], 1
    %5004 = vsyncpa [#allocation13], 1
    %5005 = vsyncpa [#allocation16], 1
    %5006 = vsyncpa [#allocation19], 1
    %5007 = vsyncpa [#allocation22], 1
    %5008 = vsyncpa [#allocation25], 1
    %5009 = vsyncpa [#allocation5], 1
    %s5010 = scalar_lea.sflag [#allocation5], 1
    %5011 = vsyncpa %s5010, 1

</llo_original>
